<compile_context>
chip_gen: v7x
topology: tpu7x:2x2x1
jax: 0.10.0
libtpu: 0.0.40
codegen_flags: <defaults>
</compile_context>

<pallas_src>
import numpy as np

import jax
import jax.numpy as jnp
from jax.experimental import pallas as pl
from jax.experimental.pallas import tpu as pltpu


# --------------------------------------------------------------------------
# Static layer configuration
# --------------------------------------------------------------------------
def _layer_dims(spatial, channels):
    """Returns encoder / decoder layer dims as (input_spatial, Cin, Cout)."""
    enc = []
    H = spatial
    cins = (1,) + tuple(channels[:3])
    for i in range(4):
        enc.append((H, cins[i], channels[i]))
        H //= 2
    dec = []
    dins = (channels[3], channels[2], channels[1], channels[0])
    douts = (channels[2], channels[1], channels[0], 1)
    for i in range(4):
        dec.append((H, dins[i], douts[i]))
        H *= 2
    return enc, dec


# --------------------------------------------------------------------------
# One-time weight preprocessing (hoisted out of the forward pass)
# --------------------------------------------------------------------------
def prepare_params(params, channels=(16, 32, 64, 128), spatial=16,
                   band_dtype=jnp.bfloat16):
    """Build merged banded weight matrices + tiled bias rows (runs once, on host).

    Activation layout inside the kernel is a per-sample 2D "slab":
        rows  = spatial rows (plus zero pad rows),
        lanes = spatial_column * C + channel            (128 lanes everywhere).
    Bands are stored in bf16 (MXU-native); accumulation stays f32.
    """
    enc, dec = _layer_dims(spatial, channels)
    fp = {}

    # Encoder: Conv2d(k=5, pad=2) followed by MaxPool2d(2)+ReLU.
    # One band per layer; lanes [0:Wh*Cout) = even output columns,
    # lanes [Wh*Cout:2*Wh*Cout) = odd output columns (horizontal half of the pool
    # becomes a lane-boundary split + elementwise max).
    for i, (W, Cin, Cout) in enumerate(enc):
        w = np.asarray(params[f"w{i + 1}"], np.float32)        # HWIO (5,5,Cin,Cout)
        b = np.asarray(params[f"b{i + 1}"], np.float32)
        Wh = W // 2
        band = np.zeros((5, W * Cin, 2 * Wh * Cout), np.float32)
        for dy in range(5):
            for ow in range(W):
                half = 0 if ow % 2 == 0 else 1
                oc = ow // 2
                col0 = half * Wh * Cout + oc * Cout
                for dx in range(5):
                    iw = ow + dx - 2
                    if 0 <= iw < W:
                        band[dy, iw * Cin:(iw + 1) * Cin, col0:col0 + Cout] = w[dy, dx]
        fp[f"eband{i + 1}"] = jnp.asarray(band, band_dtype)
        fp[f"ebias{i + 1}"] = jnp.asarray(np.tile(b, Wh)[None, :], jnp.float32)

    # Decoder: ConvTranspose2d(k=5, s=2, p=2, op=1) via output-row-parity phases.
    # Original 5 phase bands, merged by shared LHS window into 3 RHS matrices whose
    # lanes are [even-phase cols | odd-phase cols].
    combos = [(0, -1, 4), (0, 0, 2), (0, 1, 0), (1, 0, 3), (1, 1, 1)]
    for i, (W, Cin, Cout) in enumerate(dec):
        wt = np.asarray(params[f"wt{i + 1}"], np.float32)      # torch (Cin,Cout,5,5)
        b = np.asarray(params[f"bt{i + 1}"], np.float32)
        Nc = 2 * W * Cout
        band = np.zeros((5, W * Cin, Nc), np.float32)
        for j, (py, t, ky) in enumerate(combos):
            for ox in range(2 * W):
                px, wox = ox % 2, ox // 2
                for s in ([-1, 0, 1] if px == 0 else [0, 1]):
                    kx = px + 2 - 2 * s
                    ix = wox + s
                    if 0 <= ix < W:
                        band[j, ix * Cin:(ix + 1) * Cin,
                             ox * Cout:(ox + 1) * Cout] = wt[:, :, ky, kx]
        zero = np.zeros_like(band[0])
        fp[f"dB1_{i + 1}"] = jnp.asarray(np.concatenate([band[0], zero], axis=1), band_dtype)
        fp[f"dB2_{i + 1}"] = jnp.asarray(np.concatenate([band[1], band[3]], axis=1), band_dtype)
        fp[f"dB3_{i + 1}"] = jnp.asarray(np.concatenate([band[2], band[4]], axis=1), band_dtype)
        fp[f"dbias{i + 1}"] = jnp.asarray(np.tile(b, 4 * W)[None, :], jnp.float32)
    return fp


# --------------------------------------------------------------------------
# Fused whole-network Pallas kernel (one grid step == one batch sample)
# --------------------------------------------------------------------------
def _make_kernel(enc, dec):
    n_enc, n_dec = len(enc), len(dec)
    f32, bf16 = jnp.float32, jnp.bfloat16

    def _place(rows, cols, cond_fn):
        """0/1 bf16 placement matrix built from 2D iotas (MXU row select/scatter)."""
        r = jax.lax.broadcasted_iota(jnp.int32, (rows, cols), 0)
        c = jax.lax.broadcasted_iota(jnp.int32, (rows, cols), 1)
        return jnp.where(cond_fn(r, c), 1.0, 0.0).astype(bf16)

    def kernel(*refs):
        x_ref = refs[0]
        pos = 1
        enc_w = []
        for _ in range(n_enc):
            enc_w.append((refs[pos], refs[pos + 1]))
            pos += 2
        dec_w = []
        for _ in range(n_dec):
            dec_w.append((refs[pos], refs[pos + 1], refs[pos + 2], refs[pos + 3]))
            pos += 4
        o_ref = refs[pos]
        pos += 1
        enc_scr = refs[pos:pos + n_enc - 1]
        pos += n_enc - 1
        dec_scr = refs[pos:pos + n_dec]

        # ------------- encoder: conv5x5(p2)+bias -> maxpool2 -> relu -------------
        src = x_ref
        for li in range(n_enc):
            H, _, Cout = enc[li]
            band, bias = enc_w[li]
            WhC = (H // 2) * Cout                          # == 128 for every layer
            # 5 vertical taps, one merged dot each ([even cols | odd cols] in lanes).
            acc = jnp.dot(src[0:H, :].astype(bf16), band[0],
                          preferred_element_type=f32)
            for dy in range(1, 5):
                acc = acc + jnp.dot(src[dy:dy + H, :].astype(bf16), band[dy],
                                    preferred_element_type=f32)
            acc = jnp.maximum(acc[:, :WhC], acc[:, WhC:])  # horizontal half of pool
            ab = (acc + bias[...]).astype(bf16)            # (H, WhC), bias folded in
            if li + 1 < n_enc:
                nxt, pad = enc_scr[li], 2
            else:                                          # feeds decoder layer 1
                nxt, pad = dec_scr[0], 1
            rows = nxt.shape[0]
            # Placement dots: row pad+m selects conv rows 2m / 2m+1; pad rows -> 0.
            pe = _place(rows, H, lambda r, c, p=pad: c == 2 * (r - p))
            po = _place(rows, H, lambda r, c, p=pad: c == 2 * (r - p) + 1)
            top = jnp.dot(pe, ab, preferred_element_type=f32)
            bot = jnp.dot(po, ab, preferred_element_type=f32)
            # vertical half of pool + ReLU + pad-row zeroing in one full-slab store
            nxt[...] = jnp.maximum(jnp.maximum(top, bot), 0.0)
            src = nxt
            # Dropout2d after encoder layer 2: eval-mode identity (no-op here).

        # ------------- decoder: convT5x5(s2,p2,op1)+bias -> relu / sigmoid --------
        for li in range(n_dec):
            H, _, Cout = dec[li]
            B1, B2, B3, bias2 = dec_w[li]
            Nc = 2 * H * Cout
            comb = (jnp.dot(src[0:H, :].astype(bf16), B1[...],
                            preferred_element_type=f32)
                    + jnp.dot(src[1:H + 1, :].astype(bf16), B2[...],
                              preferred_element_type=f32)
                    + jnp.dot(src[2:H + 2, :].astype(bf16), B3[...],
                              preferred_element_type=f32)
                    + bias2[...])                          # (H, 2*Nc) = [even | odd]
            if li + 1 < n_dec:
                eo = jnp.concatenate([comb[:, :Nc], comb[:, Nc:]],
                                     axis=0).astype(bf16)  # (2H, Nc)
                nxt = dec_scr[li + 1]
                rows = nxt.shape[0]                        # 2H + 2
                pm = _place(rows, 2 * H,
                            lambda r, c, h=H: ((c < h) & (r == 2 * c + 1)) |
                                              ((c >= h) & (r == 2 * (c - h) + 2)))
                # row interleave + ReLU + pad-row zeroing in one dot + store
                nxt[...] = jnp.maximum(jnp.dot(pm, eo, preferred_element_type=f32),
                                       0.0)
                src = nxt
            else:
                # Final layer: keep [even rows | odd rows] in lanes (32-lane store);
                # the row interleave is done by the JAX wrapper.
                o_ref[...] = jax.nn.sigmoid(comb)

    return kernel


def build_forward(spatial=16, channels=(16, 32, 64, 128)):
    assert spatial % 16 == 0 and spatial >= 16, spatial
    enc, dec = _layer_dims(spatial, channels)
    kernel = _make_kernel(enc, dec)

    in_specs = [pl.BlockSpec((None, spatial + 4, spatial), lambda n: (n, 0, 0))]
    for (W, Cin, Cout) in enc:
        Wh = W // 2
        in_specs.append(pl.BlockSpec((5, W * Cin, 2 * Wh * Cout), lambda n: (0, 0, 0)))
        in_specs.append(pl.BlockSpec((1, Wh * Cout), lambda n: (0, 0)))
    for (W, Cin, Cout) in dec:
        Nc = 2 * W * Cout
        for _ in range(3):
            in_specs.append(pl.BlockSpec((W * Cin, 2 * Nc), lambda n: (0, 0)))
        in_specs.append(pl.BlockSpec((1, 2 * Nc), lambda n: (0, 0)))
    out_spec = pl.BlockSpec((None, spatial // 2, 2 * spatial), lambda n: (n, 0, 0))

    scratch = []
    for (H, Cin, _) in enc[1:]:                 # padded inputs of encoder layers 2..4
        scratch.append(pltpu.VMEM((H + 4, H * Cin), jnp.float32))
    for (H, Cin, _) in dec:                     # padded inputs of decoder layers 1..4
        scratch.append(pltpu.VMEM((H + 2, H * Cin), jnp.float32))

    @jax.jit
    def forward(x_nchw, fp):
        N = x_nchw.shape[0]
        x = x_nchw.reshape(N, spatial, spatial)            # Cin == 1
        xpad = jnp.pad(x, ((0, 0), (2, 2), (0, 0)))        # vertical pad only
        args = [xpad]
        for i in range(4):
            args += [fp[f"eband{i + 1}"], fp[f"ebias{i + 1}"]]
        for i in range(4):
            args += [fp[f"dB1_{i + 1}"], fp[f"dB2_{i + 1}"],
                     fp[f"dB3_{i + 1}"], fp[f"dbias{i + 1}"]]
        out = pl.pallas_call(
            kernel,
            out_shape=jax.ShapeDtypeStruct((N, spatial // 2, 2 * spatial), jnp.float32),
            grid=(N,),
            in_specs=in_specs,
            out_specs=out_spec,
            scratch_shapes=scratch,
            compiler_params=pltpu.CompilerParams(
                dimension_semantics=("parallel",)),
        )(*args)
        # out[:, r, :S] = output rows 2r, out[:, r, S:] = output rows 2r+1.
        even = out[:, :, :spatial]
        odd = out[:, :, spatial:]
        img = jnp.stack([even, odd], axis=2).reshape(N, spatial, spatial)
        return img[:, None, :, :]

    return forward


# --------------------------------------------------------------------------
# Pure-JAX (XLA conv) reference for verification
# --------------------------------------------------------------------------
def reference_forward(x_nchw, params):
    dn = ("NHWC", "HWIO", "NHWC")
    prec = jax.lax.Precision.HIGHEST

    def conv(x, w, b):
        y = jax.lax.conv_general_dilated(x, w, (1, 1), ((2, 2), (2, 2)),
                                         dimension_numbers=dn, precision=prec)
        return y + b

    def pool_relu(x):
        N, H, W, C = x.shape
        y = x.reshape(N, H // 2, 2, W // 2, 2, C).max(axis=(2, 4))
        return jnp.maximum(y, 0.0)

    def conv_t(x, wt, b):
        w_eq = jnp.flip(wt, axis=(2, 3)).transpose(2, 3, 0, 1)
        y = jax.lax.conv_general_dilated(x, w_eq, (1, 1), ((2, 3), (2, 3)),
                                         lhs_dilation=(2, 2),
                                         dimension_numbers=dn, precision=prec)
        return y + b

    x = jnp.transpose(x_nchw, (0, 2, 3, 1))
    a = pool_relu(conv(x, params["w1"], params["b1"]))
    a = pool_relu(conv(a, params["w2"], params["b2"]))
    a = pool_relu(conv(a, params["w3"], params["b3"]))
    a = pool_relu(conv(a, params["w4"], params["b4"]))
    a = jnp.maximum(conv_t(a, params["wt1"], params["bt1"]), 0.0)
    a = jnp.maximum(conv_t(a, params["wt2"], params["bt2"]), 0.0)
    a = jnp.maximum(conv_t(a, params["wt3"], params["bt3"]), 0.0)
    a = jax.nn.sigmoid(conv_t(a, params["wt4"], params["bt4"]))
    return jnp.transpose(a, (0, 3, 1, 2))


# --------------------------------------------------------------------------
# Deterministic parameter init (shapes from the module __init__)
# --------------------------------------------------------------------------
def init_params(key, channels=(16, 32, 64, 128)):
    p = {}
    keys = jax.random.split(key, 16)

    def nrm(k, shape, fan_in):
        return jax.random.normal(k, shape, jnp.float32) / jnp.sqrt(float(fan_in))

    cins = (1,) + channels[:3]
    for i in range(4):
        cin, cout = cins[i], channels[i]
        w_oihw = nrm(keys[2 * i], (cout, cin, 5, 5), cin * 25)        # torch Conv2d layout
        p[f"w{i + 1}"] = jnp.transpose(w_oihw, (2, 3, 1, 0))           # -> HWIO
        p[f"b{i + 1}"] = nrm(keys[2 * i + 1], (cout,), cin * 25)
    t_io = [(channels[3], channels[2]), (channels[2], channels[1]),
            (channels[1], channels[0]), (channels[0], 1)]
    for i, (cin, cout) in enumerate(t_io):
        p[f"wt{i + 1}"] = nrm(keys[8 + 2 * i], (cin, cout, 5, 5), cin * 25)  # torch ConvT layout
        p[f"bt{i + 1}"] = nrm(keys[9 + 2 * i], (cout,), cin * 25)
    return p


if __name__ == "__main__":
    key = jax.random.PRNGKey(0)
    k_p, k_x = jax.random.split(key)
    params = init_params(k_p)
    x = jax.random.normal(k_x, (2, 1, 16, 16), jnp.float32)   # NCHW, 1 input channel

    fwd = build_forward(spatial=16)
    fused_params = prepare_params(params)                     # one-time weight prep (bf16 bands)
    out = jax.block_until_ready(fwd(x, fused_params))

    ref = jax.block_until_ready(jax.jit(reference_forward)(x, params))
    assert out.shape == (2, 1, 16, 16), out.shape
    err = float(jnp.max(jnp.abs(out - ref)))
    # bf16 band matrices / bf16 matmul operands -> relaxed tolerance (review item).
    assert jnp.allclose(out, ref, rtol=2e-2, atol=2e-2), err
    print("KERNEL_OK")
</pallas_src>

<mosaic_0001>
module attributes {stable_mosaic.version = 11 : i64} {
  func.func @kernel(%arg0: i32, %arg1: memref<1x20x16xf32, #tpu.memory_space<vmem>>, %arg2: memref<5x16x256xbf16, #tpu.memory_space<vmem>>, %arg3: memref<1x128xf32, #tpu.memory_space<vmem>>, %arg4: memref<5x128x256xbf16, #tpu.memory_space<vmem>>, %arg5: memref<1x128xf32, #tpu.memory_space<vmem>>, %arg6: memref<5x128x256xbf16, #tpu.memory_space<vmem>>, %arg7: memref<1x128xf32, #tpu.memory_space<vmem>>, %arg8: memref<5x128x256xbf16, #tpu.memory_space<vmem>>, %arg9: memref<1x128xf32, #tpu.memory_space<vmem>>, %arg10: memref<128x256xbf16, #tpu.memory_space<vmem>>, %arg11: memref<128x256xbf16, #tpu.memory_space<vmem>>, %arg12: memref<128x256xbf16, #tpu.memory_space<vmem>>, %arg13: memref<1x256xf32, #tpu.memory_space<vmem>>, %arg14: memref<128x256xbf16, #tpu.memory_space<vmem>>, %arg15: memref<128x256xbf16, #tpu.memory_space<vmem>>, %arg16: memref<128x256xbf16, #tpu.memory_space<vmem>>, %arg17: memref<1x256xf32, #tpu.memory_space<vmem>>, %arg18: memref<128x256xbf16, #tpu.memory_space<vmem>>, %arg19: memref<128x256xbf16, #tpu.memory_space<vmem>>, %arg20: memref<128x256xbf16, #tpu.memory_space<vmem>>, %arg21: memref<1x256xf32, #tpu.memory_space<vmem>>, %arg22: memref<128x32xbf16, #tpu.memory_space<vmem>>, %arg23: memref<128x32xbf16, #tpu.memory_space<vmem>>, %arg24: memref<128x32xbf16, #tpu.memory_space<vmem>>, %arg25: memref<1x32xf32, #tpu.memory_space<vmem>>, %arg26: memref<1x8x32xf32, #tpu.memory_space<vmem>>, %arg27: memref<12x128xf32, #tpu.memory_space<vmem>>, %arg28: memref<8x128xf32, #tpu.memory_space<vmem>>, %arg29: memref<6x128xf32, #tpu.memory_space<vmem>>, %arg30: memref<3x128xf32, #tpu.memory_space<vmem>>, %arg31: memref<4x128xf32, #tpu.memory_space<vmem>>, %arg32: memref<6x128xf32, #tpu.memory_space<vmem>>, %arg33: memref<10x128xf32, #tpu.memory_space<vmem>>) attributes {dimension_semantics = [#tpu.dimension_semantics<parallel>], iteration_bounds = array<i64: 2>, scalar_prefetch = 0 : i64, scratch_operands = 7 : i64, tpu.core_type = #tpu.core_type<tc>, window_params = [{transform_indices = @transform_0, window_bounds = array<i64: 1, 20, 16>}, {pipeline_mode = #tpu.pipeline_mode<synchronous>, transform_indices = @transform_1, window_bounds = array<i64: 5, 16, 256>}, {pipeline_mode = #tpu.pipeline_mode<synchronous>, transform_indices = @transform_2, window_bounds = array<i64: 1, 128>}, {pipeline_mode = #tpu.pipeline_mode<synchronous>, transform_indices = @transform_3, window_bounds = array<i64: 5, 128, 256>}, {pipeline_mode = #tpu.pipeline_mode<synchronous>, transform_indices = @transform_4, window_bounds = array<i64: 1, 128>}, {pipeline_mode = #tpu.pipeline_mode<synchronous>, transform_indices = @transform_5, window_bounds = array<i64: 5, 128, 256>}, {pipeline_mode = #tpu.pipeline_mode<synchronous>, transform_indices = @transform_6, window_bounds = array<i64: 1, 128>}, {pipeline_mode = #tpu.pipeline_mode<synchronous>, transform_indices = @transform_7, window_bounds = array<i64: 5, 128, 256>}, {pipeline_mode = #tpu.pipeline_mode<synchronous>, transform_indices = @transform_8, window_bounds = array<i64: 1, 128>}, {pipeline_mode = #tpu.pipeline_mode<synchronous>, transform_indices = @transform_9, window_bounds = array<i64: 128, 256>}, {pipeline_mode = #tpu.pipeline_mode<synchronous>, transform_indices = @transform_10, window_bounds = array<i64: 128, 256>}, {pipeline_mode = #tpu.pipeline_mode<synchronous>, transform_indices = @transform_11, window_bounds = array<i64: 128, 256>}, {pipeline_mode = #tpu.pipeline_mode<synchronous>, transform_indices = @transform_12, window_bounds = array<i64: 1, 256>}, {pipeline_mode = #tpu.pipeline_mode<synchronous>, transform_indices = @transform_13, window_bounds = array<i64: 128, 256>}, {pipeline_mode = #tpu.pipeline_mode<synchronous>, transform_indices = @transform_14, window_bounds = array<i64: 128, 256>}, {pipeline_mode = #tpu.pipeline_mode<synchronous>, transform_indices = @transform_15, window_bounds = array<i64: 128, 256>}, {pipeline_mode = #tpu.pipeline_mode<synchronous>, transform_indices = @transform_16, window_bounds = array<i64: 1, 256>}, {pipeline_mode = #tpu.pipeline_mode<synchronous>, transform_indices = @transform_17, window_bounds = array<i64: 128, 256>}, {pipeline_mode = #tpu.pipeline_mode<synchronous>, transform_indices = @transform_18, window_bounds = array<i64: 128, 256>}, {pipeline_mode = #tpu.pipeline_mode<synchronous>, transform_indices = @transform_19, window_bounds = array<i64: 128, 256>}, {pipeline_mode = #tpu.pipeline_mode<synchronous>, transform_indices = @transform_20, window_bounds = array<i64: 1, 256>}, {pipeline_mode = #tpu.pipeline_mode<synchronous>, transform_indices = @transform_21, window_bounds = array<i64: 128, 32>}, {pipeline_mode = #tpu.pipeline_mode<synchronous>, transform_indices = @transform_22, window_bounds = array<i64: 128, 32>}, {pipeline_mode = #tpu.pipeline_mode<synchronous>, transform_indices = @transform_23, window_bounds = array<i64: 128, 32>}, {pipeline_mode = #tpu.pipeline_mode<synchronous>, transform_indices = @transform_24, window_bounds = array<i64: 1, 32>}, {transform_indices = @transform_25, window_bounds = array<i64: 1, 8, 32>}]} {
    %c0 = arith.constant 0 : index
    %c0_0 = arith.constant 0 : index
    %c0_1 = arith.constant 0 : index
    %0 = vector.load %arg1[%c0, %c0_0, %c0_1] : memref<1x20x16xf32, #tpu.memory_space<vmem>>, vector<1x16x16xf32>
    %1 = vector.shape_cast %0 : vector<1x16x16xf32> to vector<16x16xf32>
    %2 = arith.truncf %1 : vector<16x16xf32> to vector<16x16xbf16>
    %c0_2 = arith.constant 0 : index
    %c0_3 = arith.constant 0 : index
    %c0_4 = arith.constant 0 : index
    %3 = vector.load %arg2[%c0_2, %c0_3, %c0_4] : memref<5x16x256xbf16, #tpu.memory_space<vmem>>, vector<1x16x256xbf16>
    %4 = vector.shape_cast %3 : vector<1x16x256xbf16> to vector<16x256xbf16>
    %cst = arith.constant dense<0.000000e+00> : vector<16x256xf32>
    %5 = tpu.matmul %2, %4, %cst {dimension_numbers = #tpu.dot_dimension_numbers<[1], [0], [0], [1], [0, 0, 1, 1], [], []>} : vector<16x16xbf16>, vector<16x256xbf16>, vector<16x256xf32> -> vector<16x256xf32>
    %c0_5 = arith.constant 0 : index
    %c1 = arith.constant 1 : index
    %c0_6 = arith.constant 0 : index
    %6 = vector.load %arg1[%c0_5, %c1, %c0_6] : memref<1x20x16xf32, #tpu.memory_space<vmem>>, vector<1x16x16xf32>
    %7 = vector.shape_cast %6 : vector<1x16x16xf32> to vector<16x16xf32>
    %8 = arith.truncf %7 : vector<16x16xf32> to vector<16x16xbf16>
    %c1_7 = arith.constant 1 : index
    %c0_8 = arith.constant 0 : index
    %c0_9 = arith.constant 0 : index
    %9 = vector.load %arg2[%c1_7, %c0_8, %c0_9] : memref<5x16x256xbf16, #tpu.memory_space<vmem>>, vector<1x16x256xbf16>
    %10 = vector.shape_cast %9 : vector<1x16x256xbf16> to vector<16x256xbf16>
    %cst_10 = arith.constant dense<0.000000e+00> : vector<16x256xf32>
    %11 = tpu.matmul %8, %10, %cst_10 {dimension_numbers = #tpu.dot_dimension_numbers<[1], [0], [0], [1], [0, 0, 1, 1], [], []>} : vector<16x16xbf16>, vector<16x256xbf16>, vector<16x256xf32> -> vector<16x256xf32>
    %12 = arith.addf %5, %11 : vector<16x256xf32>
    %c0_11 = arith.constant 0 : index
    %c2 = arith.constant 2 : index
    %c0_12 = arith.constant 0 : index
    %13 = vector.load %arg1[%c0_11, %c2, %c0_12] : memref<1x20x16xf32, #tpu.memory_space<vmem>>, vector<1x16x16xf32>
    %14 = vector.shape_cast %13 : vector<1x16x16xf32> to vector<16x16xf32>
    %15 = arith.truncf %14 : vector<16x16xf32> to vector<16x16xbf16>
    %c2_13 = arith.constant 2 : index
    %c0_14 = arith.constant 0 : index
    %c0_15 = arith.constant 0 : index
    %16 = vector.load %arg2[%c2_13, %c0_14, %c0_15] : memref<5x16x256xbf16, #tpu.memory_space<vmem>>, vector<1x16x256xbf16>
    %17 = vector.shape_cast %16 : vector<1x16x256xbf16> to vector<16x256xbf16>
    %cst_16 = arith.constant dense<0.000000e+00> : vector<16x256xf32>
    %18 = tpu.matmul %15, %17, %cst_16 {dimension_numbers = #tpu.dot_dimension_numbers<[1], [0], [0], [1], [0, 0, 1, 1], [], []>} : vector<16x16xbf16>, vector<16x256xbf16>, vector<16x256xf32> -> vector<16x256xf32>
    %19 = arith.addf %12, %18 : vector<16x256xf32>
    %c0_17 = arith.constant 0 : index
    %c3 = arith.constant 3 : index
    %c0_18 = arith.constant 0 : index
    %20 = vector.load %arg1[%c0_17, %c3, %c0_18] : memref<1x20x16xf32, #tpu.memory_space<vmem>>, vector<1x16x16xf32>
    %21 = vector.shape_cast %20 : vector<1x16x16xf32> to vector<16x16xf32>
    %22 = arith.truncf %21 : vector<16x16xf32> to vector<16x16xbf16>
    %c3_19 = arith.constant 3 : index
    %c0_20 = arith.constant 0 : index
    %c0_21 = arith.constant 0 : index
    %23 = vector.load %arg2[%c3_19, %c0_20, %c0_21] : memref<5x16x256xbf16, #tpu.memory_space<vmem>>, vector<1x16x256xbf16>
    %24 = vector.shape_cast %23 : vector<1x16x256xbf16> to vector<16x256xbf16>
    %cst_22 = arith.constant dense<0.000000e+00> : vector<16x256xf32>
    %25 = tpu.matmul %22, %24, %cst_22 {dimension_numbers = #tpu.dot_dimension_numbers<[1], [0], [0], [1], [0, 0, 1, 1], [], []>} : vector<16x16xbf16>, vector<16x256xbf16>, vector<16x256xf32> -> vector<16x256xf32>
    %26 = arith.addf %19, %25 : vector<16x256xf32>
    %c0_23 = arith.constant 0 : index
    %c4 = arith.constant 4 : index
    %c0_24 = arith.constant 0 : index
    %27 = vector.load %arg1[%c0_23, %c4, %c0_24] : memref<1x20x16xf32, #tpu.memory_space<vmem>>, vector<1x16x16xf32>
    %28 = vector.shape_cast %27 : vector<1x16x16xf32> to vector<16x16xf32>
    %29 = arith.truncf %28 : vector<16x16xf32> to vector<16x16xbf16>
    %c4_25 = arith.constant 4 : index
    %c0_26 = arith.constant 0 : index
    %c0_27 = arith.constant 0 : index
    %30 = vector.load %arg2[%c4_25, %c0_26, %c0_27] : memref<5x16x256xbf16, #tpu.memory_space<vmem>>, vector<1x16x256xbf16>
    %31 = vector.shape_cast %30 : vector<1x16x256xbf16> to vector<16x256xbf16>
    %cst_28 = arith.constant dense<0.000000e+00> : vector<16x256xf32>
    %32 = tpu.matmul %29, %31, %cst_28 {dimension_numbers = #tpu.dot_dimension_numbers<[1], [0], [0], [1], [0, 0, 1, 1], [], []>} : vector<16x16xbf16>, vector<16x256xbf16>, vector<16x256xf32> -> vector<16x256xf32>
    %33 = arith.addf %26, %32 : vector<16x256xf32>
    %34 = vector.extract_strided_slice %33 {offsets = [0, 0], sizes = [16, 128], strides = [1, 1]} : vector<16x256xf32> to vector<16x128xf32>
    %35 = vector.extract_strided_slice %33 {offsets = [0, 128], sizes = [16, 128], strides = [1, 1]} : vector<16x256xf32> to vector<16x128xf32>
    %36 = arith.maximumf %34, %35 : vector<16x128xf32>
    %c0_29 = arith.constant 0 : index
    %c0_30 = arith.constant 0 : index
    %37 = vector.load %arg3[%c0_29, %c0_30] : memref<1x128xf32, #tpu.memory_space<vmem>>, vector<1x128xf32>
    %38 = vector.broadcast %37 : vector<1x128xf32> to vector<16x128xf32>
    %39 = arith.addf %36, %38 : vector<16x128xf32>
    %40 = arith.truncf %39 : vector<16x128xf32> to vector<16x128xbf16>
    %41 = tpu.iota {dimensions = array<i32: 0>} : vector<12x16xi32>
    %42 = tpu.iota {dimensions = array<i32: 1>} : vector<12x16xi32>
    %c2_i32 = arith.constant 2 : i32
    %43 = vector.broadcast %c2_i32 : i32 to vector<12x16xi32>
    %44 = arith.subi %41, %43 : vector<12x16xi32>
    %c2_i32_31 = arith.constant 2 : i32
    %45 = vector.broadcast %c2_i32_31 : i32 to vector<12x16xi32>
    %46 = arith.muli %45, %44 : vector<12x16xi32>
    %47 = arith.cmpi eq, %42, %46 : vector<12x16xi32>
    %cst_32 = arith.constant 1.000000e+00 : f32
    %cst_33 = arith.constant 0.000000e+00 : f32
    %48 = vector.broadcast %cst_32 : f32 to vector<12x16xf32>
    %49 = vector.broadcast %cst_33 : f32 to vector<12x16xf32>
    %50 = arith.select %47, %48, %49 : vector<12x16xi1>, vector<12x16xf32>
    %51 = arith.truncf %50 : vector<12x16xf32> to vector<12x16xbf16>
    %52 = tpu.iota {dimensions = array<i32: 0>} : vector<12x16xi32>
    %53 = tpu.iota {dimensions = array<i32: 1>} : vector<12x16xi32>
    %c2_i32_34 = arith.constant 2 : i32
    %54 = vector.broadcast %c2_i32_34 : i32 to vector<12x16xi32>
    %55 = arith.subi %52, %54 : vector<12x16xi32>
    %c2_i32_35 = arith.constant 2 : i32
    %56 = vector.broadcast %c2_i32_35 : i32 to vector<12x16xi32>
    %57 = arith.muli %56, %55 : vector<12x16xi32>
    %c1_i32 = arith.constant 1 : i32
    %58 = vector.broadcast %c1_i32 : i32 to vector<12x16xi32>
    %59 = arith.addi %57, %58 : vector<12x16xi32>
    %60 = arith.cmpi eq, %53, %59 : vector<12x16xi32>
    %cst_36 = arith.constant 1.000000e+00 : f32
    %cst_37 = arith.constant 0.000000e+00 : f32
    %61 = vector.broadcast %cst_36 : f32 to vector<12x16xf32>
    %62 = vector.broadcast %cst_37 : f32 to vector<12x16xf32>
    %63 = arith.select %60, %61, %62 : vector<12x16xi1>, vector<12x16xf32>
    %64 = arith.truncf %63 : vector<12x16xf32> to vector<12x16xbf16>
    %cst_38 = arith.constant dense<0.000000e+00> : vector<12x128xf32>
    %65 = tpu.matmul %51, %40, %cst_38 {dimension_numbers = #tpu.dot_dimension_numbers<[1], [0], [0], [1], [0, 0, 1, 1], [], []>} : vector<12x16xbf16>, vector<16x128xbf16>, vector<12x128xf32> -> vector<12x128xf32>
    %cst_39 = arith.constant dense<0.000000e+00> : vector<12x128xf32>
    %66 = tpu.matmul %64, %40, %cst_39 {dimension_numbers = #tpu.dot_dimension_numbers<[1], [0], [0], [1], [0, 0, 1, 1], [], []>} : vector<12x16xbf16>, vector<16x128xbf16>, vector<12x128xf32> -> vector<12x128xf32>
    %67 = arith.maximumf %65, %66 : vector<12x128xf32>
    %cst_40 = arith.constant 0.000000e+00 : f32
    %68 = vector.broadcast %cst_40 : f32 to vector<12x128xf32>
    %69 = arith.maximumf %67, %68 : vector<12x128xf32>
    %c0_41 = arith.constant 0 : index
    %c0_42 = arith.constant 0 : index
    %70 = vector.load %arg27[%c0_41, %c0_42] : memref<12x128xf32, #tpu.memory_space<vmem>>, vector<12x128xf32>
    tpu.vector_store %arg27[%c0_41, %c0_42], %69 {strides = array<i32>} : memref<12x128xf32, #tpu.memory_space<vmem>>, vector<12x128xf32>,
    %c0_43 = arith.constant 0 : index
    %c0_44 = arith.constant 0 : index
    %71 = vector.load %arg27[%c0_43, %c0_44] : memref<12x128xf32, #tpu.memory_space<vmem>>, vector<8x128xf32>
    %72 = arith.truncf %71 : vector<8x128xf32> to vector<8x128xbf16>
    %c0_45 = arith.constant 0 : index
    %c0_46 = arith.constant 0 : index
    %c0_47 = arith.constant 0 : index
    %73 = vector.load %arg4[%c0_45, %c0_46, %c0_47] : memref<5x128x256xbf16, #tpu.memory_space<vmem>>, vector<1x128x256xbf16>
    %74 = vector.shape_cast %73 : vector<1x128x256xbf16> to vector<128x256xbf16>
    %cst_48 = arith.constant dense<0.000000e+00> : vector<8x256xf32>
    %75 = tpu.matmul %72, %74, %cst_48 {dimension_numbers = #tpu.dot_dimension_numbers<[1], [0], [0], [1], [0, 0, 1, 1], [], []>} : vector<8x128xbf16>, vector<128x256xbf16>, vector<8x256xf32> -> vector<8x256xf32>
    %c1_49 = arith.constant 1 : index
    %c0_50 = arith.constant 0 : index
    %76 = vector.load %arg27[%c1_49, %c0_50] : memref<12x128xf32, #tpu.memory_space<vmem>>, vector<8x128xf32>
    %77 = arith.truncf %76 : vector<8x128xf32> to vector<8x128xbf16>
    %c1_51 = arith.constant 1 : index
    %c0_52 = arith.constant 0 : index
    %c0_53 = arith.constant 0 : index
    %78 = vector.load %arg4[%c1_51, %c0_52, %c0_53] : memref<5x128x256xbf16, #tpu.memory_space<vmem>>, vector<1x128x256xbf16>
    %79 = vector.shape_cast %78 : vector<1x128x256xbf16> to vector<128x256xbf16>
    %cst_54 = arith.constant dense<0.000000e+00> : vector<8x256xf32>
    %80 = tpu.matmul %77, %79, %cst_54 {dimension_numbers = #tpu.dot_dimension_numbers<[1], [0], [0], [1], [0, 0, 1, 1], [], []>} : vector<8x128xbf16>, vector<128x256xbf16>, vector<8x256xf32> -> vector<8x256xf32>
    %81 = arith.addf %75, %80 : vector<8x256xf32>
    %c2_55 = arith.constant 2 : index
    %c0_56 = arith.constant 0 : index
    %82 = vector.load %arg27[%c2_55, %c0_56] : memref<12x128xf32, #tpu.memory_space<vmem>>, vector<8x128xf32>
    %83 = arith.truncf %82 : vector<8x128xf32> to vector<8x128xbf16>
    %c2_57 = arith.constant 2 : index
    %c0_58 = arith.constant 0 : index
    %c0_59 = arith.constant 0 : index
    %84 = vector.load %arg4[%c2_57, %c0_58, %c0_59] : memref<5x128x256xbf16, #tpu.memory_space<vmem>>, vector<1x128x256xbf16>
    %85 = vector.shape_cast %84 : vector<1x128x256xbf16> to vector<128x256xbf16>
    %cst_60 = arith.constant dense<0.000000e+00> : vector<8x256xf32>
    %86 = tpu.matmul %83, %85, %cst_60 {dimension_numbers = #tpu.dot_dimension_numbers<[1], [0], [0], [1], [0, 0, 1, 1], [], []>} : vector<8x128xbf16>, vector<128x256xbf16>, vector<8x256xf32> -> vector<8x256xf32>
    %87 = arith.addf %81, %86 : vector<8x256xf32>
    %c3_61 = arith.constant 3 : index
    %c0_62 = arith.constant 0 : index
    %88 = vector.load %arg27[%c3_61, %c0_62] : memref<12x128xf32, #tpu.memory_space<vmem>>, vector<8x128xf32>
    %89 = arith.truncf %88 : vector<8x128xf32> to vector<8x128xbf16>
    %c3_63 = arith.constant 3 : index
    %c0_64 = arith.constant 0 : index
    %c0_65 = arith.constant 0 : index
    %90 = vector.load %arg4[%c3_63, %c0_64, %c0_65] : memref<5x128x256xbf16, #tpu.memory_space<vmem>>, vector<1x128x256xbf16>
    %91 = vector.shape_cast %90 : vector<1x128x256xbf16> to vector<128x256xbf16>
    %cst_66 = arith.constant dense<0.000000e+00> : vector<8x256xf32>
    %92 = tpu.matmul %89, %91, %cst_66 {dimension_numbers = #tpu.dot_dimension_numbers<[1], [0], [0], [1], [0, 0, 1, 1], [], []>} : vector<8x128xbf16>, vector<128x256xbf16>, vector<8x256xf32> -> vector<8x256xf32>
    %93 = arith.addf %87, %92 : vector<8x256xf32>
    %c4_67 = arith.constant 4 : index
    %c0_68 = arith.constant 0 : index
    %94 = vector.load %arg27[%c4_67, %c0_68] : memref<12x128xf32, #tpu.memory_space<vmem>>, vector<8x128xf32>
    %95 = arith.truncf %94 : vector<8x128xf32> to vector<8x128xbf16>
    %c4_69 = arith.constant 4 : index
    %c0_70 = arith.constant 0 : index
    %c0_71 = arith.constant 0 : index
    %96 = vector.load %arg4[%c4_69, %c0_70, %c0_71] : memref<5x128x256xbf16, #tpu.memory_space<vmem>>, vector<1x128x256xbf16>
    %97 = vector.shape_cast %96 : vector<1x128x256xbf16> to vector<128x256xbf16>
    %cst_72 = arith.constant dense<0.000000e+00> : vector<8x256xf32>
    %98 = tpu.matmul %95, %97, %cst_72 {dimension_numbers = #tpu.dot_dimension_numbers<[1], [0], [0], [1], [0, 0, 1, 1], [], []>} : vector<8x128xbf16>, vector<128x256xbf16>, vector<8x256xf32> -> vector<8x256xf32>
    %99 = arith.addf %93, %98 : vector<8x256xf32>
    %100 = vector.extract_strided_slice %99 {offsets = [0, 0], sizes = [8, 128], strides = [1, 1]} : vector<8x256xf32> to vector<8x128xf32>
    %101 = vector.extract_strided_slice %99 {offsets = [0, 128], sizes = [8, 128], strides = [1, 1]} : vector<8x256xf32> to vector<8x128xf32>
    %102 = arith.maximumf %100, %101 : vector<8x128xf32>
    %c0_73 = arith.constant 0 : index
    %c0_74 = arith.constant 0 : index
    %103 = vector.load %arg5[%c0_73, %c0_74] : memref<1x128xf32, #tpu.memory_space<vmem>>, vector<1x128xf32>
    %104 = vector.broadcast %103 : vector<1x128xf32> to vector<8x128xf32>
    %105 = arith.addf %102, %104 : vector<8x128xf32>
    %106 = arith.truncf %105 : vector<8x128xf32> to vector<8x128xbf16>
    %107 = tpu.iota {dimensions = array<i32: 0>} : vector<8x8xi32>
    %108 = tpu.iota {dimensions = array<i32: 1>} : vector<8x8xi32>
    %c2_i32_75 = arith.constant 2 : i32
    %109 = vector.broadcast %c2_i32_75 : i32 to vector<8x8xi32>
    %110 = arith.subi %107, %109 : vector<8x8xi32>
    %c2_i32_76 = arith.constant 2 : i32
    %111 = vector.broadcast %c2_i32_76 : i32 to vector<8x8xi32>
    %112 = arith.muli %111, %110 : vector<8x8xi32>
    %113 = arith.cmpi eq, %108, %112 : vector<8x8xi32>
    %cst_77 = arith.constant 1.000000e+00 : f32
    %cst_78 = arith.constant 0.000000e+00 : f32
    %114 = vector.broadcast %cst_77 : f32 to vector<8x8xf32>
    %115 = vector.broadcast %cst_78 : f32 to vector<8x8xf32>
    %116 = arith.select %113, %114, %115 : vector<8x8xi1>, vector<8x8xf32>
    %117 = arith.truncf %116 : vector<8x8xf32> to vector<8x8xbf16>
    %118 = tpu.iota {dimensions = array<i32: 0>} : vector<8x8xi32>
    %119 = tpu.iota {dimensions = array<i32: 1>} : vector<8x8xi32>
    %c2_i32_79 = arith.constant 2 : i32
    %120 = vector.broadcast %c2_i32_79 : i32 to vector<8x8xi32>
    %121 = arith.subi %118, %120 : vector<8x8xi32>
    %c2_i32_80 = arith.constant 2 : i32
    %122 = vector.broadcast %c2_i32_80 : i32 to vector<8x8xi32>
    %123 = arith.muli %122, %121 : vector<8x8xi32>
    %c1_i32_81 = arith.constant 1 : i32
    %124 = vector.broadcast %c1_i32_81 : i32 to vector<8x8xi32>
    %125 = arith.addi %123, %124 : vector<8x8xi32>
    %126 = arith.cmpi eq, %119, %125 : vector<8x8xi32>
    %cst_82 = arith.constant 1.000000e+00 : f32
    %cst_83 = arith.constant 0.000000e+00 : f32
    %127 = vector.broadcast %cst_82 : f32 to vector<8x8xf32>
    %128 = vector.broadcast %cst_83 : f32 to vector<8x8xf32>
    %129 = arith.select %126, %127, %128 : vector<8x8xi1>, vector<8x8xf32>
    %130 = arith.truncf %129 : vector<8x8xf32> to vector<8x8xbf16>
    %cst_84 = arith.constant dense<0.000000e+00> : vector<8x128xf32>
    %131 = tpu.matmul %117, %106, %cst_84 {dimension_numbers = #tpu.dot_dimension_numbers<[1], [0], [0], [1], [0, 0, 1, 1], [], []>} : vector<8x8xbf16>, vector<8x128xbf16>, vector<8x128xf32> -> vector<8x128xf32>
    %cst_85 = arith.constant dense<0.000000e+00> : vector<8x128xf32>
    %132 = tpu.matmul %130, %106, %cst_85 {dimension_numbers = #tpu.dot_dimension_numbers<[1], [0], [0], [1], [0, 0, 1, 1], [], []>} : vector<8x8xbf16>, vector<8x128xbf16>, vector<8x128xf32> -> vector<8x128xf32>
    %133 = arith.maximumf %131, %132 : vector<8x128xf32>
    %cst_86 = arith.constant 0.000000e+00 : f32
    %134 = vector.broadcast %cst_86 : f32 to vector<8x128xf32>
    %135 = arith.maximumf %133, %134 : vector<8x128xf32>
    %c0_87 = arith.constant 0 : index
    %c0_88 = arith.constant 0 : index
    %136 = vector.load %arg28[%c0_87, %c0_88] : memref<8x128xf32, #tpu.memory_space<vmem>>, vector<8x128xf32>
    tpu.vector_store %arg28[%c0_87, %c0_88], %135 {strides = array<i32>} : memref<8x128xf32, #tpu.memory_space<vmem>>, vector<8x128xf32>,
    %c0_89 = arith.constant 0 : index
    %c0_90 = arith.constant 0 : index
    %137 = vector.load %arg28[%c0_89, %c0_90] : memref<8x128xf32, #tpu.memory_space<vmem>>, vector<4x128xf32>
    %138 = arith.truncf %137 : vector<4x128xf32> to vector<4x128xbf16>
    %c0_91 = arith.constant 0 : index
    %c0_92 = arith.constant 0 : index
    %c0_93 = arith.constant 0 : index
    %139 = vector.load %arg6[%c0_91, %c0_92, %c0_93] : memref<5x128x256xbf16, #tpu.memory_space<vmem>>, vector<1x128x256xbf16>
    %140 = vector.shape_cast %139 : vector<1x128x256xbf16> to vector<128x256xbf16>
    %cst_94 = arith.constant dense<0.000000e+00> : vector<4x256xf32>
    %141 = tpu.matmul %138, %140, %cst_94 {dimension_numbers = #tpu.dot_dimension_numbers<[1], [0], [0], [1], [0, 0, 1, 1], [], []>} : vector<4x128xbf16>, vector<128x256xbf16>, vector<4x256xf32> -> vector<4x256xf32>
    %c1_95 = arith.constant 1 : index
    %c0_96 = arith.constant 0 : index
    %142 = vector.load %arg28[%c1_95, %c0_96] : memref<8x128xf32, #tpu.memory_space<vmem>>, vector<4x128xf32>
    %143 = arith.truncf %142 : vector<4x128xf32> to vector<4x128xbf16>
    %c1_97 = arith.constant 1 : index
    %c0_98 = arith.constant 0 : index
    %c0_99 = arith.constant 0 : index
    %144 = vector.load %arg6[%c1_97, %c0_98, %c0_99] : memref<5x128x256xbf16, #tpu.memory_space<vmem>>, vector<1x128x256xbf16>
    %145 = vector.shape_cast %144 : vector<1x128x256xbf16> to vector<128x256xbf16>
    %cst_100 = arith.constant dense<0.000000e+00> : vector<4x256xf32>
    %146 = tpu.matmul %143, %145, %cst_100 {dimension_numbers = #tpu.dot_dimension_numbers<[1], [0], [0], [1], [0, 0, 1, 1], [], []>} : vector<4x128xbf16>, vector<128x256xbf16>, vector<4x256xf32> -> vector<4x256xf32>
    %147 = arith.addf %141, %146 : vector<4x256xf32>
    %c2_101 = arith.constant 2 : index
    %c0_102 = arith.constant 0 : index
    %148 = vector.load %arg28[%c2_101, %c0_102] : memref<8x128xf32, #tpu.memory_space<vmem>>, vector<4x128xf32>
    %149 = arith.truncf %148 : vector<4x128xf32> to vector<4x128xbf16>
    %c2_103 = arith.constant 2 : index
    %c0_104 = arith.constant 0 : index
    %c0_105 = arith.constant 0 : index
    %150 = vector.load %arg6[%c2_103, %c0_104, %c0_105] : memref<5x128x256xbf16, #tpu.memory_space<vmem>>, vector<1x128x256xbf16>
    %151 = vector.shape_cast %150 : vector<1x128x256xbf16> to vector<128x256xbf16>
    %cst_106 = arith.constant dense<0.000000e+00> : vector<4x256xf32>
    %152 = tpu.matmul %149, %151, %cst_106 {dimension_numbers = #tpu.dot_dimension_numbers<[1], [0], [0], [1], [0, 0, 1, 1], [], []>} : vector<4x128xbf16>, vector<128x256xbf16>, vector<4x256xf32> -> vector<4x256xf32>
    %153 = arith.addf %147, %152 : vector<4x256xf32>
    %c3_107 = arith.constant 3 : index
    %c0_108 = arith.constant 0 : index
    %154 = vector.load %arg28[%c3_107, %c0_108] : memref<8x128xf32, #tpu.memory_space<vmem>>, vector<4x128xf32>
    %155 = arith.truncf %154 : vector<4x128xf32> to vector<4x128xbf16>
    %c3_109 = arith.constant 3 : index
    %c0_110 = arith.constant 0 : index
    %c0_111 = arith.constant 0 : index
    %156 = vector.load %arg6[%c3_109, %c0_110, %c0_111] : memref<5x128x256xbf16, #tpu.memory_space<vmem>>, vector<1x128x256xbf16>
    %157 = vector.shape_cast %156 : vector<1x128x256xbf16> to vector<128x256xbf16>
    %cst_112 = arith.constant dense<0.000000e+00> : vector<4x256xf32>
    %158 = tpu.matmul %155, %157, %cst_112 {dimension_numbers = #tpu.dot_dimension_numbers<[1], [0], [0], [1], [0, 0, 1, 1], [], []>} : vector<4x128xbf16>, vector<128x256xbf16>, vector<4x256xf32> -> vector<4x256xf32>
    %159 = arith.addf %153, %158 : vector<4x256xf32>
    %c4_113 = arith.constant 4 : index
    %c0_114 = arith.constant 0 : index
    %160 = vector.load %arg28[%c4_113, %c0_114] : memref<8x128xf32, #tpu.memory_space<vmem>>, vector<4x128xf32>
    %161 = arith.truncf %160 : vector<4x128xf32> to vector<4x128xbf16>
    %c4_115 = arith.constant 4 : index
    %c0_116 = arith.constant 0 : index
    %c0_117 = arith.constant 0 : index
    %162 = vector.load %arg6[%c4_115, %c0_116, %c0_117] : memref<5x128x256xbf16, #tpu.memory_space<vmem>>, vector<1x128x256xbf16>
    %163 = vector.shape_cast %162 : vector<1x128x256xbf16> to vector<128x256xbf16>
    %cst_118 = arith.constant dense<0.000000e+00> : vector<4x256xf32>
    %164 = tpu.matmul %161, %163, %cst_118 {dimension_numbers = #tpu.dot_dimension_numbers<[1], [0], [0], [1], [0, 0, 1, 1], [], []>} : vector<4x128xbf16>, vector<128x256xbf16>, vector<4x256xf32> -> vector<4x256xf32>
    %165 = arith.addf %159, %164 : vector<4x256xf32>
    %166 = vector.extract_strided_slice %165 {offsets = [0, 0], sizes = [4, 128], strides = [1, 1]} : vector<4x256xf32> to vector<4x128xf32>
    %167 = vector.extract_strided_slice %165 {offsets = [0, 128], sizes = [4, 128], strides = [1, 1]} : vector<4x256xf32> to vector<4x128xf32>
    %168 = arith.maximumf %166, %167 : vector<4x128xf32>
    %c0_119 = arith.constant 0 : index
    %c0_120 = arith.constant 0 : index
    %169 = vector.load %arg7[%c0_119, %c0_120] : memref<1x128xf32, #tpu.memory_space<vmem>>, vector<1x128xf32>
    %170 = vector.broadcast %169 : vector<1x128xf32> to vector<4x128xf32>
    %171 = arith.addf %168, %170 : vector<4x128xf32>
    %172 = arith.truncf %171 : vector<4x128xf32> to vector<4x128xbf16>
    %173 = tpu.iota {dimensions = array<i32: 0>} : vector<6x4xi32>
    %174 = tpu.iota {dimensions = array<i32: 1>} : vector<6x4xi32>
    %c2_i32_121 = arith.constant 2 : i32
    %175 = vector.broadcast %c2_i32_121 : i32 to vector<6x4xi32>
    %176 = arith.subi %173, %175 : vector<6x4xi32>
    %c2_i32_122 = arith.constant 2 : i32
    %177 = vector.broadcast %c2_i32_122 : i32 to vector<6x4xi32>
    %178 = arith.muli %177, %176 : vector<6x4xi32>
    %179 = arith.cmpi eq, %174, %178 : vector<6x4xi32>
    %cst_123 = arith.constant 1.000000e+00 : f32
    %cst_124 = arith.constant 0.000000e+00 : f32
    %180 = vector.broadcast %cst_123 : f32 to vector<6x4xf32>
    %181 = vector.broadcast %cst_124 : f32 to vector<6x4xf32>
    %182 = arith.select %179, %180, %181 : vector<6x4xi1>, vector<6x4xf32>
    %183 = arith.truncf %182 : vector<6x4xf32> to vector<6x4xbf16>
    %184 = tpu.iota {dimensions = array<i32: 0>} : vector<6x4xi32>
    %185 = tpu.iota {dimensions = array<i32: 1>} : vector<6x4xi32>
    %c2_i32_125 = arith.constant 2 : i32
    %186 = vector.broadcast %c2_i32_125 : i32 to vector<6x4xi32>
    %187 = arith.subi %184, %186 : vector<6x4xi32>
    %c2_i32_126 = arith.constant 2 : i32
    %188 = vector.broadcast %c2_i32_126 : i32 to vector<6x4xi32>
    %189 = arith.muli %188, %187 : vector<6x4xi32>
    %c1_i32_127 = arith.constant 1 : i32
    %190 = vector.broadcast %c1_i32_127 : i32 to vector<6x4xi32>
    %191 = arith.addi %189, %190 : vector<6x4xi32>
    %192 = arith.cmpi eq, %185, %191 : vector<6x4xi32>
    %cst_128 = arith.constant 1.000000e+00 : f32
    %cst_129 = arith.constant 0.000000e+00 : f32
    %193 = vector.broadcast %cst_128 : f32 to vector<6x4xf32>
    %194 = vector.broadcast %cst_129 : f32 to vector<6x4xf32>
    %195 = arith.select %192, %193, %194 : vector<6x4xi1>, vector<6x4xf32>
    %196 = arith.truncf %195 : vector<6x4xf32> to vector<6x4xbf16>
    %cst_130 = arith.constant dense<0.000000e+00> : vector<6x128xf32>
    %197 = tpu.matmul %183, %172, %cst_130 {dimension_numbers = #tpu.dot_dimension_numbers<[1], [0], [0], [1], [0, 0, 1, 1], [], []>} : vector<6x4xbf16>, vector<4x128xbf16>, vector<6x128xf32> -> vector<6x128xf32>
    %cst_131 = arith.constant dense<0.000000e+00> : vector<6x128xf32>
    %198 = tpu.matmul %196, %172, %cst_131 {dimension_numbers = #tpu.dot_dimension_numbers<[1], [0], [0], [1], [0, 0, 1, 1], [], []>} : vector<6x4xbf16>, vector<4x128xbf16>, vector<6x128xf32> -> vector<6x128xf32>
    %199 = arith.maximumf %197, %198 : vector<6x128xf32>
    %cst_132 = arith.constant 0.000000e+00 : f32
    %200 = vector.broadcast %cst_132 : f32 to vector<6x128xf32>
    %201 = arith.maximumf %199, %200 : vector<6x128xf32>
    %c0_133 = arith.constant 0 : index
    %c0_134 = arith.constant 0 : index
    %202 = vector.load %arg29[%c0_133, %c0_134] : memref<6x128xf32, #tpu.memory_space<vmem>>, vector<6x128xf32>
    tpu.vector_store %arg29[%c0_133, %c0_134], %201 {strides = array<i32>} : memref<6x128xf32, #tpu.memory_space<vmem>>, vector<6x128xf32>,
    %c0_135 = arith.constant 0 : index
    %c0_136 = arith.constant 0 : index
    %203 = vector.load %arg29[%c0_135, %c0_136] : memref<6x128xf32, #tpu.memory_space<vmem>>, vector<2x128xf32>
    %204 = arith.truncf %203 : vector<2x128xf32> to vector<2x128xbf16>
    %c0_137 = arith.constant 0 : index
    %c0_138 = arith.constant 0 : index
    %c0_139 = arith.constant 0 : index
    %205 = vector.load %arg8[%c0_137, %c0_138, %c0_139] : memref<5x128x256xbf16, #tpu.memory_space<vmem>>, vector<1x128x256xbf16>
    %206 = vector.shape_cast %205 : vector<1x128x256xbf16> to vector<128x256xbf16>
    %cst_140 = arith.constant dense<0.000000e+00> : vector<2x256xf32>
    %207 = tpu.matmul %204, %206, %cst_140 {dimension_numbers = #tpu.dot_dimension_numbers<[1], [0], [0], [1], [0, 0, 1, 1], [], []>} : vector<2x128xbf16>, vector<128x256xbf16>, vector<2x256xf32> -> vector<2x256xf32>
    %c1_141 = arith.constant 1 : index
    %c0_142 = arith.constant 0 : index
    %208 = vector.load %arg29[%c1_141, %c0_142] : memref<6x128xf32, #tpu.memory_space<vmem>>, vector<2x128xf32>
    %209 = arith.truncf %208 : vector<2x128xf32> to vector<2x128xbf16>
    %c1_143 = arith.constant 1 : index
    %c0_144 = arith.constant 0 : index
    %c0_145 = arith.constant 0 : index
    %210 = vector.load %arg8[%c1_143, %c0_144, %c0_145] : memref<5x128x256xbf16, #tpu.memory_space<vmem>>, vector<1x128x256xbf16>
    %211 = vector.shape_cast %210 : vector<1x128x256xbf16> to vector<128x256xbf16>
    %cst_146 = arith.constant dense<0.000000e+00> : vector<2x256xf32>
    %212 = tpu.matmul %209, %211, %cst_146 {dimension_numbers = #tpu.dot_dimension_numbers<[1], [0], [0], [1], [0, 0, 1, 1], [], []>} : vector<2x128xbf16>, vector<128x256xbf16>, vector<2x256xf32> -> vector<2x256xf32>
    %213 = arith.addf %207, %212 : vector<2x256xf32>
    %c2_147 = arith.constant 2 : index
    %c0_148 = arith.constant 0 : index
    %214 = vector.load %arg29[%c2_147, %c0_148] : memref<6x128xf32, #tpu.memory_space<vmem>>, vector<2x128xf32>
    %215 = arith.truncf %214 : vector<2x128xf32> to vector<2x128xbf16>
    %c2_149 = arith.constant 2 : index
    %c0_150 = arith.constant 0 : index
    %c0_151 = arith.constant 0 : index
    %216 = vector.load %arg8[%c2_149, %c0_150, %c0_151] : memref<5x128x256xbf16, #tpu.memory_space<vmem>>, vector<1x128x256xbf16>
    %217 = vector.shape_cast %216 : vector<1x128x256xbf16> to vector<128x256xbf16>
    %cst_152 = arith.constant dense<0.000000e+00> : vector<2x256xf32>
    %218 = tpu.matmul %215, %217, %cst_152 {dimension_numbers = #tpu.dot_dimension_numbers<[1], [0], [0], [1], [0, 0, 1, 1], [], []>} : vector<2x128xbf16>, vector<128x256xbf16>, vector<2x256xf32> -> vector<2x256xf32>
    %219 = arith.addf %213, %218 : vector<2x256xf32>
    %c3_153 = arith.constant 3 : index
    %c0_154 = arith.constant 0 : index
    %220 = vector.load %arg29[%c3_153, %c0_154] : memref<6x128xf32, #tpu.memory_space<vmem>>, vector<2x128xf32>
    %221 = arith.truncf %220 : vector<2x128xf32> to vector<2x128xbf16>
    %c3_155 = arith.constant 3 : index
    %c0_156 = arith.constant 0 : index
    %c0_157 = arith.constant 0 : index
    %222 = vector.load %arg8[%c3_155, %c0_156, %c0_157] : memref<5x128x256xbf16, #tpu.memory_space<vmem>>, vector<1x128x256xbf16>
    %223 = vector.shape_cast %222 : vector<1x128x256xbf16> to vector<128x256xbf16>
    %cst_158 = arith.constant dense<0.000000e+00> : vector<2x256xf32>
    %224 = tpu.matmul %221, %223, %cst_158 {dimension_numbers = #tpu.dot_dimension_numbers<[1], [0], [0], [1], [0, 0, 1, 1], [], []>} : vector<2x128xbf16>, vector<128x256xbf16>, vector<2x256xf32> -> vector<2x256xf32>
    %225 = arith.addf %219, %224 : vector<2x256xf32>
    %c4_159 = arith.constant 4 : index
    %c0_160 = arith.constant 0 : index
    %226 = vector.load %arg29[%c4_159, %c0_160] : memref<6x128xf32, #tpu.memory_space<vmem>>, vector<2x128xf32>
    %227 = arith.truncf %226 : vector<2x128xf32> to vector<2x128xbf16>
    %c4_161 = arith.constant 4 : index
    %c0_162 = arith.constant 0 : index
    %c0_163 = arith.constant 0 : index
    %228 = vector.load %arg8[%c4_161, %c0_162, %c0_163] : memref<5x128x256xbf16, #tpu.memory_space<vmem>>, vector<1x128x256xbf16>
    %229 = vector.shape_cast %228 : vector<1x128x256xbf16> to vector<128x256xbf16>
    %cst_164 = arith.constant dense<0.000000e+00> : vector<2x256xf32>
    %230 = tpu.matmul %227, %229, %cst_164 {dimension_numbers = #tpu.dot_dimension_numbers<[1], [0], [0], [1], [0, 0, 1, 1], [], []>} : vector<2x128xbf16>, vector<128x256xbf16>, vector<2x256xf32> -> vector<2x256xf32>
    %231 = arith.addf %225, %230 : vector<2x256xf32>
    %232 = vector.extract_strided_slice %231 {offsets = [0, 0], sizes = [2, 128], strides = [1, 1]} : vector<2x256xf32> to vector<2x128xf32>
    %233 = vector.extract_strided_slice %231 {offsets = [0, 128], sizes = [2, 128], strides = [1, 1]} : vector<2x256xf32> to vector<2x128xf32>
    %234 = arith.maximumf %232, %233 : vector<2x128xf32>
    %c0_165 = arith.constant 0 : index
    %c0_166 = arith.constant 0 : index
    %235 = vector.load %arg9[%c0_165, %c0_166] : memref<1x128xf32, #tpu.memory_space<vmem>>, vector<1x128xf32>
    %236 = vector.broadcast %235 : vector<1x128xf32> to vector<2x128xf32>
    %237 = arith.addf %234, %236 : vector<2x128xf32>
    %238 = arith.truncf %237 : vector<2x128xf32> to vector<2x128xbf16>
    %239 = tpu.iota {dimensions = array<i32: 0>} : vector<3x2xi32>
    %240 = tpu.iota {dimensions = array<i32: 1>} : vector<3x2xi32>
    %c1_i32_167 = arith.constant 1 : i32
    %241 = vector.broadcast %c1_i32_167 : i32 to vector<3x2xi32>
    %242 = arith.subi %239, %241 : vector<3x2xi32>
    %c2_i32_168 = arith.constant 2 : i32
    %243 = vector.broadcast %c2_i32_168 : i32 to vector<3x2xi32>
    %244 = arith.muli %243, %242 : vector<3x2xi32>
    %245 = arith.cmpi eq, %240, %244 : vector<3x2xi32>
    %cst_169 = arith.constant 1.000000e+00 : f32
    %cst_170 = arith.constant 0.000000e+00 : f32
    %246 = vector.broadcast %cst_169 : f32 to vector<3x2xf32>
    %247 = vector.broadcast %cst_170 : f32 to vector<3x2xf32>
    %248 = arith.select %245, %246, %247 : vector<3x2xi1>, vector<3x2xf32>
    %249 = arith.truncf %248 : vector<3x2xf32> to vector<3x2xbf16>
    %250 = tpu.iota {dimensions = array<i32: 0>} : vector<3x2xi32>
    %251 = tpu.iota {dimensions = array<i32: 1>} : vector<3x2xi32>
    %c1_i32_171 = arith.constant 1 : i32
    %252 = vector.broadcast %c1_i32_171 : i32 to vector<3x2xi32>
    %253 = arith.subi %250, %252 : vector<3x2xi32>
    %c2_i32_172 = arith.constant 2 : i32
    %254 = vector.broadcast %c2_i32_172 : i32 to vector<3x2xi32>
    %255 = arith.muli %254, %253 : vector<3x2xi32>
    %c1_i32_173 = arith.constant 1 : i32
    %256 = vector.broadcast %c1_i32_173 : i32 to vector<3x2xi32>
    %257 = arith.addi %255, %256 : vector<3x2xi32>
    %258 = arith.cmpi eq, %251, %257 : vector<3x2xi32>
    %cst_174 = arith.constant 1.000000e+00 : f32
    %cst_175 = arith.constant 0.000000e+00 : f32
    %259 = vector.broadcast %cst_174 : f32 to vector<3x2xf32>
    %260 = vector.broadcast %cst_175 : f32 to vector<3x2xf32>
    %261 = arith.select %258, %259, %260 : vector<3x2xi1>, vector<3x2xf32>
    %262 = arith.truncf %261 : vector<3x2xf32> to vector<3x2xbf16>
    %cst_176 = arith.constant dense<0.000000e+00> : vector<3x128xf32>
    %263 = tpu.matmul %249, %238, %cst_176 {dimension_numbers = #tpu.dot_dimension_numbers<[1], [0], [0], [1], [0, 0, 1, 1], [], []>} : vector<3x2xbf16>, vector<2x128xbf16>, vector<3x128xf32> -> vector<3x128xf32>
    %cst_177 = arith.constant dense<0.000000e+00> : vector<3x128xf32>
    %264 = tpu.matmul %262, %238, %cst_177 {dimension_numbers = #tpu.dot_dimension_numbers<[1], [0], [0], [1], [0, 0, 1, 1], [], []>} : vector<3x2xbf16>, vector<2x128xbf16>, vector<3x128xf32> -> vector<3x128xf32>
    %265 = arith.maximumf %263, %264 : vector<3x128xf32>
    %cst_178 = arith.constant 0.000000e+00 : f32
    %266 = vector.broadcast %cst_178 : f32 to vector<3x128xf32>
    %267 = arith.maximumf %265, %266 : vector<3x128xf32>
    %c0_179 = arith.constant 0 : index
    %c0_180 = arith.constant 0 : index
    %268 = vector.load %arg30[%c0_179, %c0_180] : memref<3x128xf32, #tpu.memory_space<vmem>>, vector<3x128xf32>
    tpu.vector_store %arg30[%c0_179, %c0_180], %267 {strides = array<i32>} : memref<3x128xf32, #tpu.memory_space<vmem>>, vector<3x128xf32>,
    %c0_181 = arith.constant 0 : index
    %c0_182 = arith.constant 0 : index
    %269 = vector.load %arg30[%c0_181, %c0_182] : memref<3x128xf32, #tpu.memory_space<vmem>>, vector<1x128xf32>
    %270 = arith.truncf %269 : vector<1x128xf32> to vector<1x128xbf16>
    %c0_183 = arith.constant 0 : index
    %c0_184 = arith.constant 0 : index
    %271 = vector.load %arg10[%c0_183, %c0_184] : memref<128x256xbf16, #tpu.memory_space<vmem>>, vector<128x256xbf16>
    %cst_185 = arith.constant dense<0.000000e+00> : vector<1x256xf32>
    %272 = tpu.matmul %270, %271, %cst_185 {dimension_numbers = #tpu.dot_dimension_numbers<[1], [0], [0], [1], [0, 0, 1, 1], [], []>} : vector<1x128xbf16>, vector<128x256xbf16>, vector<1x256xf32> -> vector<1x256xf32>
    %c1_186 = arith.constant 1 : index
    %c0_187 = arith.constant 0 : index
    %273 = vector.load %arg30[%c1_186, %c0_187] : memref<3x128xf32, #tpu.memory_space<vmem>>, vector<1x128xf32>
    %274 = arith.truncf %273 : vector<1x128xf32> to vector<1x128xbf16>
    %c0_188 = arith.constant 0 : index
    %c0_189 = arith.constant 0 : index
    %275 = vector.load %arg11[%c0_188, %c0_189] : memref<128x256xbf16, #tpu.memory_space<vmem>>, vector<128x256xbf16>
    %cst_190 = arith.constant dense<0.000000e+00> : vector<1x256xf32>
    %276 = tpu.matmul %274, %275, %cst_190 {dimension_numbers = #tpu.dot_dimension_numbers<[1], [0], [0], [1], [0, 0, 1, 1], [], []>} : vector<1x128xbf16>, vector<128x256xbf16>, vector<1x256xf32> -> vector<1x256xf32>
    %277 = arith.addf %272, %276 : vector<1x256xf32>
    %c2_191 = arith.constant 2 : index
    %c0_192 = arith.constant 0 : index
    %278 = vector.load %arg30[%c2_191, %c0_192] : memref<3x128xf32, #tpu.memory_space<vmem>>, vector<1x128xf32>
    %279 = arith.truncf %278 : vector<1x128xf32> to vector<1x128xbf16>
    %c0_193 = arith.constant 0 : index
    %c0_194 = arith.constant 0 : index
    %280 = vector.load %arg12[%c0_193, %c0_194] : memref<128x256xbf16, #tpu.memory_space<vmem>>, vector<128x256xbf16>
    %cst_195 = arith.constant dense<0.000000e+00> : vector<1x256xf32>
    %281 = tpu.matmul %279, %280, %cst_195 {dimension_numbers = #tpu.dot_dimension_numbers<[1], [0], [0], [1], [0, 0, 1, 1], [], []>} : vector<1x128xbf16>, vector<128x256xbf16>, vector<1x256xf32> -> vector<1x256xf32>
    %282 = arith.addf %277, %281 : vector<1x256xf32>
    %c0_196 = arith.constant 0 : index
    %c0_197 = arith.constant 0 : index
    %283 = vector.load %arg13[%c0_196, %c0_197] : memref<1x256xf32, #tpu.memory_space<vmem>>, vector<1x256xf32>
    %284 = arith.addf %282, %283 : vector<1x256xf32>
    %285 = vector.extract_strided_slice %284 {offsets = [0, 0], sizes = [1, 128], strides = [1, 1]} : vector<1x256xf32> to vector<1x128xf32>
    %286 = vector.extract_strided_slice %284 {offsets = [0, 128], sizes = [1, 128], strides = [1, 1]} : vector<1x256xf32> to vector<1x128xf32>
    %287 = tpu.concatenate %285, %286 in 0 : vector<1x128xf32>, vector<1x128xf32> -> vector<2x128xf32>
    %288 = arith.truncf %287 : vector<2x128xf32> to vector<2x128xbf16>
    %289 = tpu.iota {dimensions = array<i32: 0>} : vector<4x2xi32>
    %290 = tpu.iota {dimensions = array<i32: 1>} : vector<4x2xi32>
    %c1_i32_198 = arith.constant 1 : i32
    %291 = vector.broadcast %c1_i32_198 : i32 to vector<4x2xi32>
    %292 = arith.cmpi slt, %290, %291 : vector<4x2xi32>
    %c2_i32_199 = arith.constant 2 : i32
    %293 = vector.broadcast %c2_i32_199 : i32 to vector<4x2xi32>
    %294 = arith.muli %293, %290 : vector<4x2xi32>
    %c1_i32_200 = arith.constant 1 : i32
    %295 = vector.broadcast %c1_i32_200 : i32 to vector<4x2xi32>
    %296 = arith.addi %294, %295 : vector<4x2xi32>
    %297 = arith.cmpi eq, %289, %296 : vector<4x2xi32>
    %298 = arith.andi %292, %297 : vector<4x2xi1>
    %c1_i32_201 = arith.constant 1 : i32
    %299 = vector.broadcast %c1_i32_201 : i32 to vector<4x2xi32>
    %300 = arith.cmpi sge, %290, %299 : vector<4x2xi32>
    %c1_i32_202 = arith.constant 1 : i32
    %301 = vector.broadcast %c1_i32_202 : i32 to vector<4x2xi32>
    %302 = arith.subi %290, %301 : vector<4x2xi32>
    %c2_i32_203 = arith.constant 2 : i32
    %303 = vector.broadcast %c2_i32_203 : i32 to vector<4x2xi32>
    %304 = arith.muli %303, %302 : vector<4x2xi32>
    %c2_i32_204 = arith.constant 2 : i32
    %305 = vector.broadcast %c2_i32_204 : i32 to vector<4x2xi32>
    %306 = arith.addi %304, %305 : vector<4x2xi32>
    %307 = arith.cmpi eq, %289, %306 : vector<4x2xi32>
    %308 = arith.andi %300, %307 : vector<4x2xi1>
    %309 = arith.ori %298, %308 : vector<4x2xi1>
    %cst_205 = arith.constant 1.000000e+00 : f32
    %cst_206 = arith.constant 0.000000e+00 : f32
    %310 = vector.broadcast %cst_205 : f32 to vector<4x2xf32>
    %311 = vector.broadcast %cst_206 : f32 to vector<4x2xf32>
    %312 = arith.select %309, %310, %311 : vector<4x2xi1>, vector<4x2xf32>
    %313 = arith.truncf %312 : vector<4x2xf32> to vector<4x2xbf16>
    %cst_207 = arith.constant dense<0.000000e+00> : vector<4x128xf32>
    %314 = tpu.matmul %313, %288, %cst_207 {dimension_numbers = #tpu.dot_dimension_numbers<[1], [0], [0], [1], [0, 0, 1, 1], [], []>} : vector<4x2xbf16>, vector<2x128xbf16>, vector<4x128xf32> -> vector<4x128xf32>
    %cst_208 = arith.constant 0.000000e+00 : f32
    %315 = vector.broadcast %cst_208 : f32 to vector<4x128xf32>
    %316 = arith.maximumf %314, %315 : vector<4x128xf32>
    %c0_209 = arith.constant 0 : index
    %c0_210 = arith.constant 0 : index
    %317 = vector.load %arg31[%c0_209, %c0_210] : memref<4x128xf32, #tpu.memory_space<vmem>>, vector<4x128xf32>
    tpu.vector_store %arg31[%c0_209, %c0_210], %316 {strides = array<i32>} : memref<4x128xf32, #tpu.memory_space<vmem>>, vector<4x128xf32>,
    %c0_211 = arith.constant 0 : index
    %c0_212 = arith.constant 0 : index
    %318 = vector.load %arg31[%c0_211, %c0_212] : memref<4x128xf32, #tpu.memory_space<vmem>>, vector<2x128xf32>
    %319 = arith.truncf %318 : vector<2x128xf32> to vector<2x128xbf16>
    %c0_213 = arith.constant 0 : index
    %c0_214 = arith.constant 0 : index
    %320 = vector.load %arg14[%c0_213, %c0_214] : memref<128x256xbf16, #tpu.memory_space<vmem>>, vector<128x256xbf16>
    %cst_215 = arith.constant dense<0.000000e+00> : vector<2x256xf32>
    %321 = tpu.matmul %319, %320, %cst_215 {dimension_numbers = #tpu.dot_dimension_numbers<[1], [0], [0], [1], [0, 0, 1, 1], [], []>} : vector<2x128xbf16>, vector<128x256xbf16>, vector<2x256xf32> -> vector<2x256xf32>
    %c1_216 = arith.constant 1 : index
    %c0_217 = arith.constant 0 : index
    %322 = vector.load %arg31[%c1_216, %c0_217] : memref<4x128xf32, #tpu.memory_space<vmem>>, vector<2x128xf32>
    %323 = arith.truncf %322 : vector<2x128xf32> to vector<2x128xbf16>
    %c0_218 = arith.constant 0 : index
    %c0_219 = arith.constant 0 : index
    %324 = vector.load %arg15[%c0_218, %c0_219] : memref<128x256xbf16, #tpu.memory_space<vmem>>, vector<128x256xbf16>
    %cst_220 = arith.constant dense<0.000000e+00> : vector<2x256xf32>
    %325 = tpu.matmul %323, %324, %cst_220 {dimension_numbers = #tpu.dot_dimension_numbers<[1], [0], [0], [1], [0, 0, 1, 1], [], []>} : vector<2x128xbf16>, vector<128x256xbf16>, vector<2x256xf32> -> vector<2x256xf32>
    %326 = arith.addf %321, %325 : vector<2x256xf32>
    %c2_221 = arith.constant 2 : index
    %c0_222 = arith.constant 0 : index
    %327 = vector.load %arg31[%c2_221, %c0_222] : memref<4x128xf32, #tpu.memory_space<vmem>>, vector<2x128xf32>
    %328 = arith.truncf %327 : vector<2x128xf32> to vector<2x128xbf16>
    %c0_223 = arith.constant 0 : index
    %c0_224 = arith.constant 0 : index
    %329 = vector.load %arg16[%c0_223, %c0_224] : memref<128x256xbf16, #tpu.memory_space<vmem>>, vector<128x256xbf16>
    %cst_225 = arith.constant dense<0.000000e+00> : vector<2x256xf32>
    %330 = tpu.matmul %328, %329, %cst_225 {dimension_numbers = #tpu.dot_dimension_numbers<[1], [0], [0], [1], [0, 0, 1, 1], [], []>} : vector<2x128xbf16>, vector<128x256xbf16>, vector<2x256xf32> -> vector<2x256xf32>
    %331 = arith.addf %326, %330 : vector<2x256xf32>
    %c0_226 = arith.constant 0 : index
    %c0_227 = arith.constant 0 : index
    %332 = vector.load %arg17[%c0_226, %c0_227] : memref<1x256xf32, #tpu.memory_space<vmem>>, vector<1x256xf32>
    %333 = vector.broadcast %332 : vector<1x256xf32> to vector<2x256xf32>
    %334 = arith.addf %331, %333 : vector<2x256xf32>
    %335 = vector.extract_strided_slice %334 {offsets = [0, 0], sizes = [2, 128], strides = [1, 1]} : vector<2x256xf32> to vector<2x128xf32>
    %336 = vector.extract_strided_slice %334 {offsets = [0, 128], sizes = [2, 128], strides = [1, 1]} : vector<2x256xf32> to vector<2x128xf32>
    %337 = tpu.concatenate %335, %336 in 0 : vector<2x128xf32>, vector<2x128xf32> -> vector<4x128xf32>
    %338 = arith.truncf %337 : vector<4x128xf32> to vector<4x128xbf16>
    %339 = tpu.iota {dimensions = array<i32: 0>} : vector<6x4xi32>
    %340 = tpu.iota {dimensions = array<i32: 1>} : vector<6x4xi32>
    %c2_i32_228 = arith.constant 2 : i32
    %341 = vector.broadcast %c2_i32_228 : i32 to vector<6x4xi32>
    %342 = arith.cmpi slt, %340, %341 : vector<6x4xi32>
    %c2_i32_229 = arith.constant 2 : i32
    %343 = vector.broadcast %c2_i32_229 : i32 to vector<6x4xi32>
    %344 = arith.muli %343, %340 : vector<6x4xi32>
    %c1_i32_230 = arith.constant 1 : i32
    %345 = vector.broadcast %c1_i32_230 : i32 to vector<6x4xi32>
    %346 = arith.addi %344, %345 : vector<6x4xi32>
    %347 = arith.cmpi eq, %339, %346 : vector<6x4xi32>
    %348 = arith.andi %342, %347 : vector<6x4xi1>
    %c2_i32_231 = arith.constant 2 : i32
    %349 = vector.broadcast %c2_i32_231 : i32 to vector<6x4xi32>
    %350 = arith.cmpi sge, %340, %349 : vector<6x4xi32>
    %c2_i32_232 = arith.constant 2 : i32
    %351 = vector.broadcast %c2_i32_232 : i32 to vector<6x4xi32>
    %352 = arith.subi %340, %351 : vector<6x4xi32>
    %c2_i32_233 = arith.constant 2 : i32
    %353 = vector.broadcast %c2_i32_233 : i32 to vector<6x4xi32>
    %354 = arith.muli %353, %352 : vector<6x4xi32>
    %c2_i32_234 = arith.constant 2 : i32
    %355 = vector.broadcast %c2_i32_234 : i32 to vector<6x4xi32>
    %356 = arith.addi %354, %355 : vector<6x4xi32>
    %357 = arith.cmpi eq, %339, %356 : vector<6x4xi32>
    %358 = arith.andi %350, %357 : vector<6x4xi1>
    %359 = arith.ori %348, %358 : vector<6x4xi1>
    %cst_235 = arith.constant 1.000000e+00 : f32
    %cst_236 = arith.constant 0.000000e+00 : f32
    %360 = vector.broadcast %cst_235 : f32 to vector<6x4xf32>
    %361 = vector.broadcast %cst_236 : f32 to vector<6x4xf32>
    %362 = arith.select %359, %360, %361 : vector<6x4xi1>, vector<6x4xf32>
    %363 = arith.truncf %362 : vector<6x4xf32> to vector<6x4xbf16>
    %cst_237 = arith.constant dense<0.000000e+00> : vector<6x128xf32>
    %364 = tpu.matmul %363, %338, %cst_237 {dimension_numbers = #tpu.dot_dimension_numbers<[1], [0], [0], [1], [0, 0, 1, 1], [], []>} : vector<6x4xbf16>, vector<4x128xbf16>, vector<6x128xf32> -> vector<6x128xf32>
    %cst_238 = arith.constant 0.000000e+00 : f32
    %365 = vector.broadcast %cst_238 : f32 to vector<6x128xf32>
    %366 = arith.maximumf %364, %365 : vector<6x128xf32>
    %c0_239 = arith.constant 0 : index
    %c0_240 = arith.constant 0 : index
    %367 = vector.load %arg32[%c0_239, %c0_240] : memref<6x128xf32, #tpu.memory_space<vmem>>, vector<6x128xf32>
    tpu.vector_store %arg32[%c0_239, %c0_240], %366 {strides = array<i32>} : memref<6x128xf32, #tpu.memory_space<vmem>>, vector<6x128xf32>,
    %c0_241 = arith.constant 0 : index
    %c0_242 = arith.constant 0 : index
    %368 = vector.load %arg32[%c0_241, %c0_242] : memref<6x128xf32, #tpu.memory_space<vmem>>, vector<4x128xf32>
    %369 = arith.truncf %368 : vector<4x128xf32> to vector<4x128xbf16>
    %c0_243 = arith.constant 0 : index
    %c0_244 = arith.constant 0 : index
    %370 = vector.load %arg18[%c0_243, %c0_244] : memref<128x256xbf16, #tpu.memory_space<vmem>>, vector<128x256xbf16>
    %cst_245 = arith.constant dense<0.000000e+00> : vector<4x256xf32>
    %371 = tpu.matmul %369, %370, %cst_245 {dimension_numbers = #tpu.dot_dimension_numbers<[1], [0], [0], [1], [0, 0, 1, 1], [], []>} : vector<4x128xbf16>, vector<128x256xbf16>, vector<4x256xf32> -> vector<4x256xf32>
    %c1_246 = arith.constant 1 : index
    %c0_247 = arith.constant 0 : index
    %372 = vector.load %arg32[%c1_246, %c0_247] : memref<6x128xf32, #tpu.memory_space<vmem>>, vector<4x128xf32>
    %373 = arith.truncf %372 : vector<4x128xf32> to vector<4x128xbf16>
    %c0_248 = arith.constant 0 : index
    %c0_249 = arith.constant 0 : index
    %374 = vector.load %arg19[%c0_248, %c0_249] : memref<128x256xbf16, #tpu.memory_space<vmem>>, vector<128x256xbf16>
    %cst_250 = arith.constant dense<0.000000e+00> : vector<4x256xf32>
    %375 = tpu.matmul %373, %374, %cst_250 {dimension_numbers = #tpu.dot_dimension_numbers<[1], [0], [0], [1], [0, 0, 1, 1], [], []>} : vector<4x128xbf16>, vector<128x256xbf16>, vector<4x256xf32> -> vector<4x256xf32>
    %376 = arith.addf %371, %375 : vector<4x256xf32>
    %c2_251 = arith.constant 2 : index
    %c0_252 = arith.constant 0 : index
    %377 = vector.load %arg32[%c2_251, %c0_252] : memref<6x128xf32, #tpu.memory_space<vmem>>, vector<4x128xf32>
    %378 = arith.truncf %377 : vector<4x128xf32> to vector<4x128xbf16>
    %c0_253 = arith.constant 0 : index
    %c0_254 = arith.constant 0 : index
    %379 = vector.load %arg20[%c0_253, %c0_254] : memref<128x256xbf16, #tpu.memory_space<vmem>>, vector<128x256xbf16>
    %cst_255 = arith.constant dense<0.000000e+00> : vector<4x256xf32>
    %380 = tpu.matmul %378, %379, %cst_255 {dimension_numbers = #tpu.dot_dimension_numbers<[1], [0], [0], [1], [0, 0, 1, 1], [], []>} : vector<4x128xbf16>, vector<128x256xbf16>, vector<4x256xf32> -> vector<4x256xf32>
    %381 = arith.addf %376, %380 : vector<4x256xf32>
    %c0_256 = arith.constant 0 : index
    %c0_257 = arith.constant 0 : index
    %382 = vector.load %arg21[%c0_256, %c0_257] : memref<1x256xf32, #tpu.memory_space<vmem>>, vector<1x256xf32>
    %383 = vector.broadcast %382 : vector<1x256xf32> to vector<4x256xf32>
    %384 = arith.addf %381, %383 : vector<4x256xf32>
    %385 = vector.extract_strided_slice %384 {offsets = [0, 0], sizes = [4, 128], strides = [1, 1]} : vector<4x256xf32> to vector<4x128xf32>
    %386 = vector.extract_strided_slice %384 {offsets = [0, 128], sizes = [4, 128], strides = [1, 1]} : vector<4x256xf32> to vector<4x128xf32>
    %387 = tpu.concatenate %385, %386 in 0 : vector<4x128xf32>, vector<4x128xf32> -> vector<8x128xf32>
    %388 = arith.truncf %387 : vector<8x128xf32> to vector<8x128xbf16>
    %389 = tpu.iota {dimensions = array<i32: 0>} : vector<10x8xi32>
    %390 = tpu.iota {dimensions = array<i32: 1>} : vector<10x8xi32>
    %c4_i32 = arith.constant 4 : i32
    %391 = vector.broadcast %c4_i32 : i32 to vector<10x8xi32>
    %392 = arith.cmpi slt, %390, %391 : vector<10x8xi32>
    %c2_i32_258 = arith.constant 2 : i32
    %393 = vector.broadcast %c2_i32_258 : i32 to vector<10x8xi32>
    %394 = arith.muli %393, %390 : vector<10x8xi32>
    %c1_i32_259 = arith.constant 1 : i32
    %395 = vector.broadcast %c1_i32_259 : i32 to vector<10x8xi32>
    %396 = arith.addi %394, %395 : vector<10x8xi32>
    %397 = arith.cmpi eq, %389, %396 : vector<10x8xi32>
    %398 = arith.andi %392, %397 : vector<10x8xi1>
    %c4_i32_260 = arith.constant 4 : i32
    %399 = vector.broadcast %c4_i32_260 : i32 to vector<10x8xi32>
    %400 = arith.cmpi sge, %390, %399 : vector<10x8xi32>
    %c4_i32_261 = arith.constant 4 : i32
    %401 = vector.broadcast %c4_i32_261 : i32 to vector<10x8xi32>
    %402 = arith.subi %390, %401 : vector<10x8xi32>
    %c2_i32_262 = arith.constant 2 : i32
    %403 = vector.broadcast %c2_i32_262 : i32 to vector<10x8xi32>
    %404 = arith.muli %403, %402 : vector<10x8xi32>
    %c2_i32_263 = arith.constant 2 : i32
    %405 = vector.broadcast %c2_i32_263 : i32 to vector<10x8xi32>
    %406 = arith.addi %404, %405 : vector<10x8xi32>
    %407 = arith.cmpi eq, %389, %406 : vector<10x8xi32>
    %408 = arith.andi %400, %407 : vector<10x8xi1>
    %409 = arith.ori %398, %408 : vector<10x8xi1>
    %cst_264 = arith.constant 1.000000e+00 : f32
    %cst_265 = arith.constant 0.000000e+00 : f32
    %410 = vector.broadcast %cst_264 : f32 to vector<10x8xf32>
    %411 = vector.broadcast %cst_265 : f32 to vector<10x8xf32>
    %412 = arith.select %409, %410, %411 : vector<10x8xi1>, vector<10x8xf32>
    %413 = arith.truncf %412 : vector<10x8xf32> to vector<10x8xbf16>
    %cst_266 = arith.constant dense<0.000000e+00> : vector<10x128xf32>
    %414 = tpu.matmul %413, %388, %cst_266 {dimension_numbers = #tpu.dot_dimension_numbers<[1], [0], [0], [1], [0, 0, 1, 1], [], []>} : vector<10x8xbf16>, vector<8x128xbf16>, vector<10x128xf32> -> vector<10x128xf32>
    %cst_267 = arith.constant 0.000000e+00 : f32
    %415 = vector.broadcast %cst_267 : f32 to vector<10x128xf32>
    %416 = arith.maximumf %414, %415 : vector<10x128xf32>
    %c0_268 = arith.constant 0 : index
    %c0_269 = arith.constant 0 : index
    %417 = vector.load %arg33[%c0_268, %c0_269] : memref<10x128xf32, #tpu.memory_space<vmem>>, vector<10x128xf32>
    tpu.vector_store %arg33[%c0_268, %c0_269], %416 {strides = array<i32>} : memref<10x128xf32, #tpu.memory_space<vmem>>, vector<10x128xf32>,
    %c0_270 = arith.constant 0 : index
    %c0_271 = arith.constant 0 : index
    %418 = vector.load %arg33[%c0_270, %c0_271] : memref<10x128xf32, #tpu.memory_space<vmem>>, vector<8x128xf32>
    %419 = arith.truncf %418 : vector<8x128xf32> to vector<8x128xbf16>
    %c0_272 = arith.constant 0 : index
    %c0_273 = arith.constant 0 : index
    %420 = vector.load %arg22[%c0_272, %c0_273] : memref<128x32xbf16, #tpu.memory_space<vmem>>, vector<128x32xbf16>
    %cst_274 = arith.constant dense<0.000000e+00> : vector<8x32xf32>
    %421 = tpu.matmul %419, %420, %cst_274 {dimension_numbers = #tpu.dot_dimension_numbers<[1], [0], [0], [1], [0, 0, 1, 1], [], []>} : vector<8x128xbf16>, vector<128x32xbf16>, vector<8x32xf32> -> vector<8x32xf32>
    %c1_275 = arith.constant 1 : index
    %c0_276 = arith.constant 0 : index
    %422 = vector.load %arg33[%c1_275, %c0_276] : memref<10x128xf32, #tpu.memory_space<vmem>>, vector<8x128xf32>
    %423 = arith.truncf %422 : vector<8x128xf32> to vector<8x128xbf16>
    %c0_277 = arith.constant 0 : index
    %c0_278 = arith.constant 0 : index
    %424 = vector.load %arg23[%c0_277, %c0_278] : memref<128x32xbf16, #tpu.memory_space<vmem>>, vector<128x32xbf16>
    %cst_279 = arith.constant dense<0.000000e+00> : vector<8x32xf32>
    %425 = tpu.matmul %423, %424, %cst_279 {dimension_numbers = #tpu.dot_dimension_numbers<[1], [0], [0], [1], [0, 0, 1, 1], [], []>} : vector<8x128xbf16>, vector<128x32xbf16>, vector<8x32xf32> -> vector<8x32xf32>
    %426 = arith.addf %421, %425 : vector<8x32xf32>
    %c2_280 = arith.constant 2 : index
    %c0_281 = arith.constant 0 : index
    %427 = vector.load %arg33[%c2_280, %c0_281] : memref<10x128xf32, #tpu.memory_space<vmem>>, vector<8x128xf32>
    %428 = arith.truncf %427 : vector<8x128xf32> to vector<8x128xbf16>
    %c0_282 = arith.constant 0 : index
    %c0_283 = arith.constant 0 : index
    %429 = vector.load %arg24[%c0_282, %c0_283] : memref<128x32xbf16, #tpu.memory_space<vmem>>, vector<128x32xbf16>
    %cst_284 = arith.constant dense<0.000000e+00> : vector<8x32xf32>
    %430 = tpu.matmul %428, %429, %cst_284 {dimension_numbers = #tpu.dot_dimension_numbers<[1], [0], [0], [1], [0, 0, 1, 1], [], []>} : vector<8x128xbf16>, vector<128x32xbf16>, vector<8x32xf32> -> vector<8x32xf32>
    %431 = arith.addf %426, %430 : vector<8x32xf32>
    %c0_285 = arith.constant 0 : index
    %c0_286 = arith.constant 0 : index
    %432 = vector.load %arg25[%c0_285, %c0_286] : memref<1x32xf32, #tpu.memory_space<vmem>>, vector<1x32xf32>
    %433 = vector.broadcast %432 : vector<1x32xf32> to vector<8x32xf32>
    %434 = arith.addf %431, %433 : vector<8x32xf32>
    %435 = arith.negf %434 : vector<8x32xf32>
    %436 = math.exp %435 : vector<8x32xf32>
    %cst_287 = arith.constant 1.000000e+00 : f32
    %437 = vector.broadcast %cst_287 : f32 to vector<8x32xf32>
    %438 = arith.addf %437, %436 : vector<8x32xf32>
    %439 = arith.divf %437, %438 : vector<8x32xf32>
    %c0_288 = arith.constant 0 : index
    %c0_289 = arith.constant 0 : index
    %c0_290 = arith.constant 0 : index
    %440 = vector.load %arg26[%c0_288, %c0_289, %c0_290] : memref<1x8x32xf32, #tpu.memory_space<vmem>>, vector<1x8x32xf32>
    %441 = vector.shape_cast %440 : vector<1x8x32xf32> to vector<8x32xf32>
    %442 = vector.shape_cast %439 : vector<8x32xf32> to vector<1x8x32xf32>
    tpu.vector_store %arg26[%c0_288, %c0_289, %c0_290], %442 {strides = array<i32>} : memref<1x8x32xf32, #tpu.memory_space<vmem>>, vector<1x8x32xf32>,
    return
  }
  func.func @transform_0(%arg0: i32) -> (i32, i32, i32) {
    %c0_i32 = arith.constant 0 : i32
    %c0_i32_0 = arith.constant 0 : i32
    %c0_i32_1 = arith.constant 0 : i32
    return %arg0, %c0_i32, %c0_i32_0 : i32, i32, i32
  }
  func.func @transform_1(%arg0: i32) -> (i32, i32, i32) {
    %c0_i32 = arith.constant 0 : i32
    %c0_i32_0 = arith.constant 0 : i32
    %c0_i32_1 = arith.constant 0 : i32
    %c0_i32_2 = arith.constant 0 : i32
    return %c0_i32, %c0_i32_0, %c0_i32_1 : i32, i32, i32
  }
  func.func @transform_2(%arg0: i32) -> (i32, i32) {
    %c0_i32 = arith.constant 0 : i32
    %c0_i32_0 = arith.constant 0 : i32
    %c0_i32_1 = arith.constant 0 : i32
    return %c0_i32, %c0_i32_0 : i32, i32
  }
  func.func @transform_3(%arg0: i32) -> (i32, i32, i32) {
    %c0_i32 = arith.constant 0 : i32
    %c0_i32_0 = arith.constant 0 : i32
    %c0_i32_1 = arith.constant 0 : i32
    %c0_i32_2 = arith.constant 0 : i32
    return %c0_i32, %c0_i32_0, %c0_i32_1 : i32, i32, i32
  }
  func.func @transform_4(%arg0: i32) -> (i32, i32) {
    %c0_i32 = arith.constant 0 : i32
    %c0_i32_0 = arith.constant 0 : i32
    %c0_i32_1 = arith.constant 0 : i32
    return %c0_i32, %c0_i32_0 : i32, i32
  }
  func.func @transform_5(%arg0: i32) -> (i32, i32, i32) {
    %c0_i32 = arith.constant 0 : i32
    %c0_i32_0 = arith.constant 0 : i32
    %c0_i32_1 = arith.constant 0 : i32
    %c0_i32_2 = arith.constant 0 : i32
    return %c0_i32, %c0_i32_0, %c0_i32_1 : i32, i32, i32
  }
  func.func @transform_6(%arg0: i32) -> (i32, i32) {
    %c0_i32 = arith.constant 0 : i32
    %c0_i32_0 = arith.constant 0 : i32
    %c0_i32_1 = arith.constant 0 : i32
    return %c0_i32, %c0_i32_0 : i32, i32
  }
  func.func @transform_7(%arg0: i32) -> (i32, i32, i32) {
    %c0_i32 = arith.constant 0 : i32
    %c0_i32_0 = arith.constant 0 : i32
    %c0_i32_1 = arith.constant 0 : i32
    %c0_i32_2 = arith.constant 0 : i32
    return %c0_i32, %c0_i32_0, %c0_i32_1 : i32, i32, i32
  }
  func.func @transform_8(%arg0: i32) -> (i32, i32) {
    %c0_i32 = arith.constant 0 : i32
    %c0_i32_0 = arith.constant 0 : i32
    %c0_i32_1 = arith.constant 0 : i32
    return %c0_i32, %c0_i32_0 : i32, i32
  }
  func.func @transform_9(%arg0: i32) -> (i32, i32) {
    %c0_i32 = arith.constant 0 : i32
    %c0_i32_0 = arith.constant 0 : i32
    %c0_i32_1 = arith.constant 0 : i32
    return %c0_i32, %c0_i32_0 : i32, i32
  }
  func.func @transform_10(%arg0: i32) -> (i32, i32) {
    %c0_i32 = arith.constant 0 : i32
    %c0_i32_0 = arith.constant 0 : i32
    %c0_i32_1 = arith.constant 0 : i32
    return %c0_i32, %c0_i32_0 : i32, i32
  }
  func.func @transform_11(%arg0: i32) -> (i32, i32) {
    %c0_i32 = arith.constant 0 : i32
    %c0_i32_0 = arith.constant 0 : i32
    %c0_i32_1 = arith.constant 0 : i32
    return %c0_i32, %c0_i32_0 : i32, i32
  }
  func.func @transform_12(%arg0: i32) -> (i32, i32) {
    %c0_i32 = arith.constant 0 : i32
    %c0_i32_0 = arith.constant 0 : i32
    %c0_i32_1 = arith.constant 0 : i32
    return %c0_i32, %c0_i32_0 : i32, i32
  }
  func.func @transform_13(%arg0: i32) -> (i32, i32) {
    %c0_i32 = arith.constant 0 : i32
    %c0_i32_0 = arith.constant 0 : i32
    %c0_i32_1 = arith.constant 0 : i32
    return %c0_i32, %c0_i32_0 : i32, i32
  }
  func.func @transform_14(%arg0: i32) -> (i32, i32) {
    %c0_i32 = arith.constant 0 : i32
    %c0_i32_0 = arith.constant 0 : i32
    %c0_i32_1 = arith.constant 0 : i32
    return %c0_i32, %c0_i32_0 : i32, i32
  }
  func.func @transform_15(%arg0: i32) -> (i32, i32) {
    %c0_i32 = arith.constant 0 : i32
    %c0_i32_0 = arith.constant 0 : i32
    %c0_i32_1 = arith.constant 0 : i32
    return %c0_i32, %c0_i32_0 : i32, i32
  }
  func.func @transform_16(%arg0: i32) -> (i32, i32) {
    %c0_i32 = arith.constant 0 : i32
    %c0_i32_0 = arith.constant 0 : i32
    %c0_i32_1 = arith.constant 0 : i32
    return %c0_i32, %c0_i32_0 : i32, i32
  }
  func.func @transform_17(%arg0: i32) -> (i32, i32) {
    %c0_i32 = arith.constant 0 : i32
    %c0_i32_0 = arith.constant 0 : i32
    %c0_i32_1 = arith.constant 0 : i32
    return %c0_i32, %c0_i32_0 : i32, i32
  }
  func.func @transform_18(%arg0: i32) -> (i32, i32) {
    %c0_i32 = arith.constant 0 : i32
    %c0_i32_0 = arith.constant 0 : i32
    %c0_i32_1 = arith.constant 0 : i32
    return %c0_i32, %c0_i32_0 : i32, i32
  }
  func.func @transform_19(%arg0: i32) -> (i32, i32) {
    %c0_i32 = arith.constant 0 : i32
    %c0_i32_0 = arith.constant 0 : i32
    %c0_i32_1 = arith.constant 0 : i32
    return %c0_i32, %c0_i32_0 : i32, i32
  }
  func.func @transform_20(%arg0: i32) -> (i32, i32) {
    %c0_i32 = arith.constant 0 : i32
    %c0_i32_0 = arith.constant 0 : i32
    %c0_i32_1 = arith.constant 0 : i32
    return %c0_i32, %c0_i32_0 : i32, i32
  }
  func.func @transform_21(%arg0: i32) -> (i32, i32) {
    %c0_i32 = arith.constant 0 : i32
    %c0_i32_0 = arith.constant 0 : i32
    %c0_i32_1 = arith.constant 0 : i32
    return %c0_i32, %c0_i32_0 : i32, i32
  }
  func.func @transform_22(%arg0: i32) -> (i32, i32) {
    %c0_i32 = arith.constant 0 : i32
    %c0_i32_0 = arith.constant 0 : i32
    %c0_i32_1 = arith.constant 0 : i32
    return %c0_i32, %c0_i32_0 : i32, i32
  }
  func.func @transform_23(%arg0: i32) -> (i32, i32) {
    %c0_i32 = arith.constant 0 : i32
    %c0_i32_0 = arith.constant 0 : i32
    %c0_i32_1 = arith.constant 0 : i32
    return %c0_i32, %c0_i32_0 : i32, i32
  }
  func.func @transform_24(%arg0: i32) -> (i32, i32) {
    %c0_i32 = arith.constant 0 : i32
    %c0_i32_0 = arith.constant 0 : i32
    %c0_i32_1 = arith.constant 0 : i32
    return %c0_i32, %c0_i32_0 : i32, i32
  }
  func.func @transform_25(%arg0: i32) -> (i32, i32, i32) {
    %c0_i32 = arith.constant 0 : i32
    %c0_i32_0 = arith.constant 0 : i32
    %c0_i32_1 = arith.constant 0 : i32
    return %arg0, %c0_i32, %c0_i32_0 : i32, i32, i32
  }
}

</mosaic_0001>

<llo_original>
// kernel: forward.1
$region0: #{forward.1}
  #allocation0 [shape = 'u32[]', space=smem, size = 0x4, offset = 0x4, fixed_abs, tag = 'smem constant byte address 0x4 - core index']
  #allocation1 [shape = 'u32[144,128]{1,0:T(1,128)}', space=vmem, size = 0x12000, scoped, tag = 'internal scratch']
  #allocation2 [shape = 'f32[12,128]{1,0:T(8,128)}', space=vmem, size = 0x2000, scoped, tag = 'scratch operand']
  #allocation3 [shape = 'f32[8,128]{1,0:T(8,128)}', space=vmem, size = 0x1000, scoped, tag = 'scratch operand']
  #allocation4 [shape = 'f32[6,128]{1,0:T(8,128)}', space=vmem, size = 0x1000, scoped, tag = 'scratch operand']
  #allocation5 [shape = 'f32[3,128]{1,0:T(4,128)}', space=vmem, size = 0x800, scoped, tag = 'scratch operand']
  #allocation6 [shape = 'f32[4,128]{1,0:T(4,128)}', space=vmem, size = 0x800, scoped, tag = 'scratch operand']
  #allocation7 [shape = 'f32[6,128]{1,0:T(8,128)}', space=vmem, size = 0x1000, scoped, tag = 'scratch operand']
  #allocation8 [shape = 'f32[10,128]{1,0:T(8,128)}', space=vmem, size = 0x2000, scoped, tag = 'scratch operand']
  %s0 = inlined_call_operand.vmem [shape: f32[2,20,16], index: 0, kind: input, shape index: {}]
  %s1 = inlined_call_operand.vmem [shape: bf16[5,16,256], index: 1, kind: input, shape index: {}]
  %s2 = inlined_call_operand.vmem [shape: f32[1,128], index: 2, kind: input, shape index: {}]
  %s3 = inlined_call_operand.hbm [shape: bf16[5,128,256], index: 3, kind: input, shape index: {}]
  %s4 = inlined_call_operand.vmem [shape: f32[1,128], index: 4, kind: input, shape index: {}]
  %s5 = inlined_call_operand.hbm [shape: bf16[5,128,256], index: 5, kind: input, shape index: {}]
  %s6 = inlined_call_operand.vmem [shape: f32[1,128], index: 6, kind: input, shape index: {}]
  %s7 = inlined_call_operand.hbm [shape: bf16[5,128,256], index: 7, kind: input, shape index: {}]
  %s8 = inlined_call_operand.vmem [shape: f32[1,128], index: 8, kind: input, shape index: {}]
  %s9 = inlined_call_operand.vmem [shape: bf16[128,256], index: 9, kind: input, shape index: {}]
  %s10 = inlined_call_operand.vmem [shape: bf16[128,256], index: 10, kind: input, shape index: {}]
  %s11 = inlined_call_operand.hbm [shape: bf16[128,256], index: 11, kind: input, shape index: {}]
  %s12 = inlined_call_operand.vmem [shape: f32[1,256], index: 12, kind: input, shape index: {}]
  %s13 = inlined_call_operand.hbm [shape: bf16[128,256], index: 13, kind: input, shape index: {}]
  %s14 = inlined_call_operand.hbm [shape: bf16[128,256], index: 14, kind: input, shape index: {}]
  %s15 = inlined_call_operand.hbm [shape: bf16[128,256], index: 15, kind: input, shape index: {}]
  %s16 = inlined_call_operand.vmem [shape: f32[1,256], index: 16, kind: input, shape index: {}]
  %s17 = inlined_call_operand.hbm [shape: bf16[128,256], index: 17, kind: input, shape index: {}]
  %s18 = inlined_call_operand.hbm [shape: bf16[128,256], index: 18, kind: input, shape index: {}]
  %s19 = inlined_call_operand.hbm [shape: bf16[128,256], index: 19, kind: input, shape index: {}]
  %s20 = inlined_call_operand.vmem [shape: f32[1,256], index: 20, kind: input, shape index: {}]
  %s21 = inlined_call_operand.vmem [shape: bf16[128,32], index: 21, kind: input, shape index: {}]
  %s22 = inlined_call_operand.vmem [shape: bf16[128,32], index: 22, kind: input, shape index: {}]
  %s23 = inlined_call_operand.vmem [shape: bf16[128,32], index: 23, kind: input, shape index: {}]
  %s24 = inlined_call_operand.vmem [shape: f32[1,32], index: 24, kind: input, shape index: {}]
  %s25 = inlined_call_operand.vmem [shape: f32[2,8,32], index: 25, kind: output, shape index: {}]
  %s26 = sld [smem:[#allocation0]]
  $region173: #{forward.1} parent=0
    _
  %s28 = ssub.s32 1, %s26
  %s29 = scalar_select 0, %s28, %s26
  $region1: #{forward.1} parent=0
    #allocation9 [shape = 'u8[327680]{0}', space=vmem, size = 0x50000, scoped, tag = 'input window, operand 3, single buffered']
    #allocation10 [shape = 's32[2]{0}', space=sflag, size = 0x8, scoped, tag = 'scoped memory for forward.1']
    #allocation11 [shape = 'u8[327680]{0}', space=vmem, size = 0x50000, scoped, tag = 'input window, operand 5, single buffered']
    #allocation12 [shape = 's32[1]{0}', space=sflag, size = 0x4, scoped, tag = 'scoped memory for forward.1']
    #allocation13 [shape = 'u8[327680]{0}', space=vmem, size = 0x50000, scoped, tag = 'input window, operand 7, single buffered']
    #allocation14 [shape = 'u8[65536]{0}', space=vmem, size = 0x10000, scoped, tag = 'input window, operand 11, single buffered']
    #allocation15 [shape = 's32[1]{0}', space=sflag, size = 0x4, scoped, tag = 'scoped memory for forward.1']
    #allocation16 [shape = 'u8[65536]{0}', space=vmem, size = 0x10000, scoped, tag = 'input window, operand 13, single buffered']
    #allocation17 [shape = 'u8[65536]{0}', space=vmem, size = 0x10000, scoped, tag = 'input window, operand 14, single buffered']
    #allocation18 [shape = 's32[1]{0}', space=sflag, size = 0x4, scoped, tag = 'scoped memory for forward.1']
    #allocation19 [shape = 'u8[65536]{0}', space=vmem, size = 0x10000, scoped, tag = 'input window, operand 15, single buffered']
    #allocation20 [shape = 'u8[65536]{0}', space=vmem, size = 0x10000, scoped, tag = 'input window, operand 17, single buffered']
    #allocation21 [shape = 's32[1]{0}', space=sflag, size = 0x4, scoped, tag = 'scoped memory for forward.1']
    #allocation22 [shape = 'u8[65536]{0}', space=vmem, size = 0x10000, scoped, tag = 'input window, operand 18, single buffered']
    #allocation23 [shape = 'u8[65536]{0}', space=vmem, size = 0x10000, scoped, tag = 'input window, operand 19, single buffered']
    #allocation24 [shape = 's32[1]{0}', space=sflag, size = 0x4, scoped, tag = 'scoped memory for forward.1']
    %30 = vsyncpa [#allocation10], 0
    %31 = vsyncpa [#allocation12], 0
    %32 = vsyncpa [#allocation15], 0
    %33 = vsyncpa [#allocation18], 0
    %34 = vsyncpa [#allocation21], 0
    %35 = vsyncpa [#allocation24], 0
    loop: start=0, step=1, limit=4
    $region2: #{forward.1} parent=1 // loop_pre_header
      _
    $region3: #{forward.1} parent=1 // loop_header
      %s37 = sphi 0, %s41
      %p38 = scmp.ge.s32.totalorder %s37, 4
      %s47 = sphi 0, %s49
      %s50 = sphi 0, %s47
      %s51 = sphi 0, %s50
      %s67 = sphi 0, %s51
      %s71 = sphi 0, %s71
      %s73 = sphi 0, %s71
      %s74 = sphi 0, %s73
      %s88 = sphi 0, %s74
      %s92 = sphi 0, %s92
      %s94 = sphi 0, %s92
      %s95 = sphi 0, %s94
      %s109 = sphi 0, %s95
      %s113 = sphi 0, %s113
      %s115 = sphi 0, %s113
      %s116 = sphi 0, %s115
      %s130 = sphi 0, %s116
      %s134 = sphi 0, %s134
      %s136 = sphi 0, %s134
      %s137 = sphi 0, %s136
      %s151 = sphi 0, %s137
      %s155 = sphi 0, %s155
      %s157 = sphi 0, %s155
      %s158 = sphi 0, %s157
      %s172 = sphi 0, %s158
      %s176 = sphi 0, %s176
      %s178 = sphi 0, %s176
      %s179 = sphi 0, %s178
      %s193 = sphi 0, %s179
      %s197 = sphi 0, %s197
      %s199 = sphi 0, %s197
      %s200 = sphi 0, %s199
      %s214 = sphi 0, %s200
      %s218 = sphi 0, %s218
      %s220 = sphi 0, %s218
      %s221 = sphi 0, %s220
      %s235 = sphi 0, %s221
      %s239 = sphi 0, %s239
      %s241 = sphi 0, %s239
      %s242 = sphi 0, %s241
      %s256 = sphi 0, %s242
      %s260 = sphi 0, %s260
      %s262 = sphi 0, %s260
      %s263 = sphi 0, %s262
      %s277 = sphi 0, %s263
      %s281 = sphi 0, %s281
      %s283 = sphi 0, %s281
      %s284 = sphi 0, %s283
      %s298 = sphi 0, %s284
      %s302 = sphi 0, %s302
      %s304 = sphi 0, %s302
      %s305 = sphi 0, %s304
      %s319 = sphi 0, %s305
      %s323 = sphi 0, %s323
      %s325 = sphi 0, %s323
      %s326 = sphi 0, %s325
      %s340 = sphi 0, %s326
      %s344 = sphi 0, %s344
      %s346 = sphi 0, %s344
      %s347 = sphi 0, %s346
      %s361 = sphi 0, %s347
      %s365 = sphi 0, %s365
      %s367 = sphi 0, %s365
      %s368 = sphi 0, %s367
      %s382 = sphi 0, %s368
      %s386 = sphi 0, %s386
      %s388 = sphi 0, %s386
      %s389 = sphi 0, %s388
      %s403 = sphi 0, %s389
      %s407 = sphi 0, %s407
      %s409 = sphi 0, %s407
      %s410 = sphi 0, %s409
      %s424 = sphi 0, %s410
      %s428 = sphi 0, %s428
      %s430 = sphi 0, %s428
      %s431 = sphi 0, %s430
      %s445 = sphi 0, %s431
      %s449 = sphi 0, %s449
      %s451 = sphi 0, %s449
      %s452 = sphi 0, %s451
      %s466 = sphi 0, %s452
      %s470 = sphi 0, %s470
      %s472 = sphi 0, %s470
      %s473 = sphi 0, %s472
      %s487 = sphi 0, %s473
      %s491 = sphi 0, %s491
      %s493 = sphi 0, %s491
      %s494 = sphi 0, %s493
      %s508 = sphi 0, %s494
      %s512 = sphi 0, %s512
      %s514 = sphi 0, %s512
      %s515 = sphi 0, %s514
      %s529 = sphi 0, %s515
      %s533 = sphi 0, %s533
      %s535 = sphi 0, %s533
      %s536 = sphi 0, %s535
      %s550 = sphi 0, %s536
      %s554 = sphi 0, %s554
      %s556 = sphi 0, %s554
      %s557 = sphi 0, %s556
      %s571 = sphi 0, %s557
      %s577 = sphi 0, %s579
      %s580 = sphi 0, %s577
      %s581 = sphi 0, %s580
      %s597 = sphi 0, %s581
    $region4: #{forward.1} parent=1 // loop_header_branch
      %40 = sbr.rel (%p38) target = $region8
    $region5: #{forward.1} parent=1 // loop_body
      %s42 = ssub.s32 %s37, 1
      %s43 = ssub.s32 %s37, 2
      %s44 = sadd.s32 %s37, 1
      %s45 = ssub.s32 %s37, %s44
      %p46 = scmp.eq.s32.totalorder %s45, 0
      %s48 = sadd.s32 %s47, 1
      %s49 = scalar_select %p46, %s47, %s48
      %p52 = pneg %p46
      %p53 = scmp.eq.s32.totalorder %s37, 1
      %p54 = por %p52, %p53
      %p55 = scmp.ne.s32.totalorder %s47, %s50
      %p56 = scmp.eq.s32.totalorder %s37, 0
      %p57 = por %p55, %p56
      %p58 = scmp.ne.s32.totalorder %s47, %s50
      %p59 = scmp.eq.s32.totalorder %s42, 1
      %p60 = por %p58, %p59
      %p61 = scmp.ne.s32.totalorder %s50, %s51
      %p62 = scmp.eq.s32.totalorder %s42, 0
      %p63 = por %p61, %p62
      %p64 = scmp.ne.s32.totalorder %s50, %s51
      %p65 = scmp.eq.s32.totalorder %s43, 1
      %p66 = por %p64, %p65
      %p68 = scmp.ne.s32.totalorder %s51, %s67
      %p69 = scmp.eq.s32.totalorder %s43, 0
      %p70 = por %p68, %p69
      %s72 = sadd.s32 %s71, 1
      %p75 = scmp.eq.s32.totalorder %s37, 1
      %p76 = scmp.ne.s32.totalorder %s71, %s73
      %p77 = scmp.eq.s32.totalorder %s37, 0
      %p78 = por %p76, %p77
      %p79 = scmp.ne.s32.totalorder %s71, %s73
      %p80 = scmp.eq.s32.totalorder %s42, 1
      %p81 = por %p79, %p80
      %p82 = scmp.ne.s32.totalorder %s73, %s74
      %p83 = scmp.eq.s32.totalorder %s42, 0
      %p84 = por %p82, %p83
      %p85 = scmp.ne.s32.totalorder %s73, %s74
      %p86 = scmp.eq.s32.totalorder %s43, 1
      %p87 = por %p85, %p86
      %p89 = scmp.ne.s32.totalorder %s74, %s88
      %p90 = scmp.eq.s32.totalorder %s43, 0
      %p91 = por %p89, %p90
      %s93 = sadd.s32 %s92, 1
      %p96 = scmp.eq.s32.totalorder %s37, 1
      %p97 = scmp.ne.s32.totalorder %s92, %s94
      %p98 = scmp.eq.s32.totalorder %s37, 0
      %p99 = por %p97, %p98
      %p100 = scmp.ne.s32.totalorder %s92, %s94
      %p101 = scmp.eq.s32.totalorder %s42, 1
      %p102 = por %p100, %p101
      %p103 = scmp.ne.s32.totalorder %s94, %s95
      %p104 = scmp.eq.s32.totalorder %s42, 0
      %p105 = por %p103, %p104
      %p106 = scmp.ne.s32.totalorder %s94, %s95
      %p107 = scmp.eq.s32.totalorder %s43, 1
      %p108 = por %p106, %p107
      %p110 = scmp.ne.s32.totalorder %s95, %s109
      %p111 = scmp.eq.s32.totalorder %s43, 0
      %p112 = por %p110, %p111
      %s114 = sadd.s32 %s113, 1
      %p117 = scmp.eq.s32.totalorder %s37, 1
      %p118 = scmp.ne.s32.totalorder %s113, %s115
      %p119 = scmp.eq.s32.totalorder %s37, 0
      %p120 = por %p118, %p119
      %p121 = scmp.ne.s32.totalorder %s113, %s115
      %p122 = scmp.eq.s32.totalorder %s42, 1
      %p123 = por %p121, %p122
      %p124 = scmp.ne.s32.totalorder %s115, %s116
      %p125 = scmp.eq.s32.totalorder %s42, 0
      %p126 = por %p124, %p125
      %p127 = scmp.ne.s32.totalorder %s115, %s116
      %p128 = scmp.eq.s32.totalorder %s43, 1
      %p129 = por %p127, %p128
      %p131 = scmp.ne.s32.totalorder %s116, %s130
      %p132 = scmp.eq.s32.totalorder %s43, 0
      %p133 = por %p131, %p132
      %s135 = sadd.s32 %s134, 1
      %p138 = scmp.eq.s32.totalorder %s37, 1
      %p139 = scmp.ne.s32.totalorder %s134, %s136
      %p140 = scmp.eq.s32.totalorder %s37, 0
      %p141 = por %p139, %p140
      %p142 = scmp.ne.s32.totalorder %s134, %s136
      %p143 = scmp.eq.s32.totalorder %s42, 1
      %p144 = por %p142, %p143
      %p145 = scmp.ne.s32.totalorder %s136, %s137
      %p146 = scmp.eq.s32.totalorder %s42, 0
      %p147 = por %p145, %p146
      %p148 = scmp.ne.s32.totalorder %s136, %s137
      %p149 = scmp.eq.s32.totalorder %s43, 1
      %p150 = por %p148, %p149
      %p152 = scmp.ne.s32.totalorder %s137, %s151
      %p153 = scmp.eq.s32.totalorder %s43, 0
      %p154 = por %p152, %p153
      %s156 = sadd.s32 %s155, 1
      %p159 = scmp.eq.s32.totalorder %s37, 1
      %p160 = scmp.ne.s32.totalorder %s155, %s157
      %p161 = scmp.eq.s32.totalorder %s37, 0
      %p162 = por %p160, %p161
      %p163 = scmp.ne.s32.totalorder %s155, %s157
      %p164 = scmp.eq.s32.totalorder %s42, 1
      %p165 = por %p163, %p164
      %p166 = scmp.ne.s32.totalorder %s157, %s158
      %p167 = scmp.eq.s32.totalorder %s42, 0
      %p168 = por %p166, %p167
      %p169 = scmp.ne.s32.totalorder %s157, %s158
      %p170 = scmp.eq.s32.totalorder %s43, 1
      %p171 = por %p169, %p170
      %p173 = scmp.ne.s32.totalorder %s158, %s172
      %p174 = scmp.eq.s32.totalorder %s43, 0
      %p175 = por %p173, %p174
      %s177 = sadd.s32 %s176, 1
      %p180 = scmp.eq.s32.totalorder %s37, 1
      %p181 = scmp.ne.s32.totalorder %s176, %s178
      %p182 = scmp.eq.s32.totalorder %s37, 0
      %p183 = por %p181, %p182
      %p184 = scmp.ne.s32.totalorder %s176, %s178
      %p185 = scmp.eq.s32.totalorder %s42, 1
      %p186 = por %p184, %p185
      %p187 = scmp.ne.s32.totalorder %s178, %s179
      %p188 = scmp.eq.s32.totalorder %s42, 0
      %p189 = por %p187, %p188
      %p190 = scmp.ne.s32.totalorder %s178, %s179
      %p191 = scmp.eq.s32.totalorder %s43, 1
      %p192 = por %p190, %p191
      %p194 = scmp.ne.s32.totalorder %s179, %s193
      %p195 = scmp.eq.s32.totalorder %s43, 0
      %p196 = por %p194, %p195
      %s198 = sadd.s32 %s197, 1
      %p201 = scmp.eq.s32.totalorder %s37, 1
      %p202 = scmp.ne.s32.totalorder %s197, %s199
      %p203 = scmp.eq.s32.totalorder %s37, 0
      %p204 = por %p202, %p203
      %p205 = scmp.ne.s32.totalorder %s197, %s199
      %p206 = scmp.eq.s32.totalorder %s42, 1
      %p207 = por %p205, %p206
      %p208 = scmp.ne.s32.totalorder %s199, %s200
      %p209 = scmp.eq.s32.totalorder %s42, 0
      %p210 = por %p208, %p209
      %p211 = scmp.ne.s32.totalorder %s199, %s200
      %p212 = scmp.eq.s32.totalorder %s43, 1
      %p213 = por %p211, %p212
      %p215 = scmp.ne.s32.totalorder %s200, %s214
      %p216 = scmp.eq.s32.totalorder %s43, 0
      %p217 = por %p215, %p216
      %s219 = sadd.s32 %s218, 1
      %p222 = scmp.eq.s32.totalorder %s37, 1
      %p223 = scmp.ne.s32.totalorder %s218, %s220
      %p224 = scmp.eq.s32.totalorder %s37, 0
      %p225 = por %p223, %p224
      %p226 = scmp.ne.s32.totalorder %s218, %s220
      %p227 = scmp.eq.s32.totalorder %s42, 1
      %p228 = por %p226, %p227
      %p229 = scmp.ne.s32.totalorder %s220, %s221
      %p230 = scmp.eq.s32.totalorder %s42, 0
      %p231 = por %p229, %p230
      %p232 = scmp.ne.s32.totalorder %s220, %s221
      %p233 = scmp.eq.s32.totalorder %s43, 1
      %p234 = por %p232, %p233
      %p236 = scmp.ne.s32.totalorder %s221, %s235
      %p237 = scmp.eq.s32.totalorder %s43, 0
      %p238 = por %p236, %p237
      %s240 = sadd.s32 %s239, 1
      %p243 = scmp.eq.s32.totalorder %s37, 1
      %p244 = scmp.ne.s32.totalorder %s239, %s241
      %p245 = scmp.eq.s32.totalorder %s37, 0
      %p246 = por %p244, %p245
      %p247 = scmp.ne.s32.totalorder %s239, %s241
      %p248 = scmp.eq.s32.totalorder %s42, 1
      %p249 = por %p247, %p248
      %p250 = scmp.ne.s32.totalorder %s241, %s242
      %p251 = scmp.eq.s32.totalorder %s42, 0
      %p252 = por %p250, %p251
      %p253 = scmp.ne.s32.totalorder %s241, %s242
      %p254 = scmp.eq.s32.totalorder %s43, 1
      %p255 = por %p253, %p254
      %p257 = scmp.ne.s32.totalorder %s242, %s256
      %p258 = scmp.eq.s32.totalorder %s43, 0
      %p259 = por %p257, %p258
      %s261 = sadd.s32 %s260, 1
      %p264 = scmp.eq.s32.totalorder %s37, 1
      %p265 = scmp.ne.s32.totalorder %s260, %s262
      %p266 = scmp.eq.s32.totalorder %s37, 0
      %p267 = por %p265, %p266
      %p268 = scmp.ne.s32.totalorder %s260, %s262
      %p269 = scmp.eq.s32.totalorder %s42, 1
      %p270 = por %p268, %p269
      %p271 = scmp.ne.s32.totalorder %s262, %s263
      %p272 = scmp.eq.s32.totalorder %s42, 0
      %p273 = por %p271, %p272
      %p274 = scmp.ne.s32.totalorder %s262, %s263
      %p275 = scmp.eq.s32.totalorder %s43, 1
      %p276 = por %p274, %p275
      %p278 = scmp.ne.s32.totalorder %s263, %s277
      %p279 = scmp.eq.s32.totalorder %s43, 0
      %p280 = por %p278, %p279
      %s282 = sadd.s32 %s281, 1
      %p285 = scmp.eq.s32.totalorder %s37, 1
      %p286 = scmp.ne.s32.totalorder %s281, %s283
      %p287 = scmp.eq.s32.totalorder %s37, 0
      %p288 = por %p286, %p287
      %p289 = scmp.ne.s32.totalorder %s281, %s283
      %p290 = scmp.eq.s32.totalorder %s42, 1
      %p291 = por %p289, %p290
      %p292 = scmp.ne.s32.totalorder %s283, %s284
      %p293 = scmp.eq.s32.totalorder %s42, 0
      %p294 = por %p292, %p293
      %p295 = scmp.ne.s32.totalorder %s283, %s284
      %p296 = scmp.eq.s32.totalorder %s43, 1
      %p297 = por %p295, %p296
      %p299 = scmp.ne.s32.totalorder %s284, %s298
      %p300 = scmp.eq.s32.totalorder %s43, 0
      %p301 = por %p299, %p300
      %s303 = sadd.s32 %s302, 1
      %p306 = scmp.eq.s32.totalorder %s37, 1
      %p307 = scmp.ne.s32.totalorder %s302, %s304
      %p308 = scmp.eq.s32.totalorder %s37, 0
      %p309 = por %p307, %p308
      %p310 = scmp.ne.s32.totalorder %s302, %s304
      %p311 = scmp.eq.s32.totalorder %s42, 1
      %p312 = por %p310, %p311
      %p313 = scmp.ne.s32.totalorder %s304, %s305
      %p314 = scmp.eq.s32.totalorder %s42, 0
      %p315 = por %p313, %p314
      %p316 = scmp.ne.s32.totalorder %s304, %s305
      %p317 = scmp.eq.s32.totalorder %s43, 1
      %p318 = por %p316, %p317
      %p320 = scmp.ne.s32.totalorder %s305, %s319
      %p321 = scmp.eq.s32.totalorder %s43, 0
      %p322 = por %p320, %p321
      %s324 = sadd.s32 %s323, 1
      %p327 = scmp.eq.s32.totalorder %s37, 1
      %p328 = scmp.ne.s32.totalorder %s323, %s325
      %p329 = scmp.eq.s32.totalorder %s37, 0
      %p330 = por %p328, %p329
      %p331 = scmp.ne.s32.totalorder %s323, %s325
      %p332 = scmp.eq.s32.totalorder %s42, 1
      %p333 = por %p331, %p332
      %p334 = scmp.ne.s32.totalorder %s325, %s326
      %p335 = scmp.eq.s32.totalorder %s42, 0
      %p336 = por %p334, %p335
      %p337 = scmp.ne.s32.totalorder %s325, %s326
      %p338 = scmp.eq.s32.totalorder %s43, 1
      %p339 = por %p337, %p338
      %p341 = scmp.ne.s32.totalorder %s326, %s340
      %p342 = scmp.eq.s32.totalorder %s43, 0
      %p343 = por %p341, %p342
      %s345 = sadd.s32 %s344, 1
      %p348 = scmp.eq.s32.totalorder %s37, 1
      %p349 = scmp.ne.s32.totalorder %s344, %s346
      %p350 = scmp.eq.s32.totalorder %s37, 0
      %p351 = por %p349, %p350
      %p352 = scmp.ne.s32.totalorder %s344, %s346
      %p353 = scmp.eq.s32.totalorder %s42, 1
      %p354 = por %p352, %p353
      %p355 = scmp.ne.s32.totalorder %s346, %s347
      %p356 = scmp.eq.s32.totalorder %s42, 0
      %p357 = por %p355, %p356
      %p358 = scmp.ne.s32.totalorder %s346, %s347
      %p359 = scmp.eq.s32.totalorder %s43, 1
      %p360 = por %p358, %p359
      %p362 = scmp.ne.s32.totalorder %s347, %s361
      %p363 = scmp.eq.s32.totalorder %s43, 0
      %p364 = por %p362, %p363
      %s366 = sadd.s32 %s365, 1
      %p369 = scmp.eq.s32.totalorder %s37, 1
      %p370 = scmp.ne.s32.totalorder %s365, %s367
      %p371 = scmp.eq.s32.totalorder %s37, 0
      %p372 = por %p370, %p371
      %p373 = scmp.ne.s32.totalorder %s365, %s367
      %p374 = scmp.eq.s32.totalorder %s42, 1
      %p375 = por %p373, %p374
      %p376 = scmp.ne.s32.totalorder %s367, %s368
      %p377 = scmp.eq.s32.totalorder %s42, 0
      %p378 = por %p376, %p377
      %p379 = scmp.ne.s32.totalorder %s367, %s368
      %p380 = scmp.eq.s32.totalorder %s43, 1
      %p381 = por %p379, %p380
      %p383 = scmp.ne.s32.totalorder %s368, %s382
      %p384 = scmp.eq.s32.totalorder %s43, 0
      %p385 = por %p383, %p384
      %s387 = sadd.s32 %s386, 1
      %p390 = scmp.eq.s32.totalorder %s37, 1
      %p391 = scmp.ne.s32.totalorder %s386, %s388
      %p392 = scmp.eq.s32.totalorder %s37, 0
      %p393 = por %p391, %p392
      %p394 = scmp.ne.s32.totalorder %s386, %s388
      %p395 = scmp.eq.s32.totalorder %s42, 1
      %p396 = por %p394, %p395
      %p397 = scmp.ne.s32.totalorder %s388, %s389
      %p398 = scmp.eq.s32.totalorder %s42, 0
      %p399 = por %p397, %p398
      %p400 = scmp.ne.s32.totalorder %s388, %s389
      %p401 = scmp.eq.s32.totalorder %s43, 1
      %p402 = por %p400, %p401
      %p404 = scmp.ne.s32.totalorder %s389, %s403
      %p405 = scmp.eq.s32.totalorder %s43, 0
      %p406 = por %p404, %p405
      %s408 = sadd.s32 %s407, 1
      %p411 = scmp.eq.s32.totalorder %s37, 1
      %p412 = scmp.ne.s32.totalorder %s407, %s409
      %p413 = scmp.eq.s32.totalorder %s37, 0
      %p414 = por %p412, %p413
      %p415 = scmp.ne.s32.totalorder %s407, %s409
      %p416 = scmp.eq.s32.totalorder %s42, 1
      %p417 = por %p415, %p416
      %p418 = scmp.ne.s32.totalorder %s409, %s410
      %p419 = scmp.eq.s32.totalorder %s42, 0
      %p420 = por %p418, %p419
      %p421 = scmp.ne.s32.totalorder %s409, %s410
      %p422 = scmp.eq.s32.totalorder %s43, 1
      %p423 = por %p421, %p422
      %p425 = scmp.ne.s32.totalorder %s410, %s424
      %p426 = scmp.eq.s32.totalorder %s43, 0
      %p427 = por %p425, %p426
      %s429 = sadd.s32 %s428, 1
      %p432 = scmp.eq.s32.totalorder %s37, 1
      %p433 = scmp.ne.s32.totalorder %s428, %s430
      %p434 = scmp.eq.s32.totalorder %s37, 0
      %p435 = por %p433, %p434
      %p436 = scmp.ne.s32.totalorder %s428, %s430
      %p437 = scmp.eq.s32.totalorder %s42, 1
      %p438 = por %p436, %p437
      %p439 = scmp.ne.s32.totalorder %s430, %s431
      %p440 = scmp.eq.s32.totalorder %s42, 0
      %p441 = por %p439, %p440
      %p442 = scmp.ne.s32.totalorder %s430, %s431
      %p443 = scmp.eq.s32.totalorder %s43, 1
      %p444 = por %p442, %p443
      %p446 = scmp.ne.s32.totalorder %s431, %s445
      %p447 = scmp.eq.s32.totalorder %s43, 0
      %p448 = por %p446, %p447
      %s450 = sadd.s32 %s449, 1
      %p453 = scmp.eq.s32.totalorder %s37, 1
      %p454 = scmp.ne.s32.totalorder %s449, %s451
      %p455 = scmp.eq.s32.totalorder %s37, 0
      %p456 = por %p454, %p455
      %p457 = scmp.ne.s32.totalorder %s449, %s451
      %p458 = scmp.eq.s32.totalorder %s42, 1
      %p459 = por %p457, %p458
      %p460 = scmp.ne.s32.totalorder %s451, %s452
      %p461 = scmp.eq.s32.totalorder %s42, 0
      %p462 = por %p460, %p461
      %p463 = scmp.ne.s32.totalorder %s451, %s452
      %p464 = scmp.eq.s32.totalorder %s43, 1
      %p465 = por %p463, %p464
      %p467 = scmp.ne.s32.totalorder %s452, %s466
      %p468 = scmp.eq.s32.totalorder %s43, 0
      %p469 = por %p467, %p468
      %s471 = sadd.s32 %s470, 1
      %p474 = scmp.eq.s32.totalorder %s37, 1
      %p475 = scmp.ne.s32.totalorder %s470, %s472
      %p476 = scmp.eq.s32.totalorder %s37, 0
      %p477 = por %p475, %p476
      %p478 = scmp.ne.s32.totalorder %s470, %s472
      %p479 = scmp.eq.s32.totalorder %s42, 1
      %p480 = por %p478, %p479
      %p481 = scmp.ne.s32.totalorder %s472, %s473
      %p482 = scmp.eq.s32.totalorder %s42, 0
      %p483 = por %p481, %p482
      %p484 = scmp.ne.s32.totalorder %s472, %s473
      %p485 = scmp.eq.s32.totalorder %s43, 1
      %p486 = por %p484, %p485
      %p488 = scmp.ne.s32.totalorder %s473, %s487
      %p489 = scmp.eq.s32.totalorder %s43, 0
      %p490 = por %p488, %p489
      %s492 = sadd.s32 %s491, 1
      %p495 = scmp.eq.s32.totalorder %s37, 1
      %p496 = scmp.ne.s32.totalorder %s491, %s493
      %p497 = scmp.eq.s32.totalorder %s37, 0
      %p498 = por %p496, %p497
      %p499 = scmp.ne.s32.totalorder %s491, %s493
      %p500 = scmp.eq.s32.totalorder %s42, 1
      %p501 = por %p499, %p500
      %p502 = scmp.ne.s32.totalorder %s493, %s494
      %p503 = scmp.eq.s32.totalorder %s42, 0
      %p504 = por %p502, %p503
      %p505 = scmp.ne.s32.totalorder %s493, %s494
      %p506 = scmp.eq.s32.totalorder %s43, 1
      %p507 = por %p505, %p506
      %p509 = scmp.ne.s32.totalorder %s494, %s508
      %p510 = scmp.eq.s32.totalorder %s43, 0
      %p511 = por %p509, %p510
      %s513 = sadd.s32 %s512, 1
      %p516 = scmp.eq.s32.totalorder %s37, 1
      %p517 = scmp.ne.s32.totalorder %s512, %s514
      %p518 = scmp.eq.s32.totalorder %s37, 0
      %p519 = por %p517, %p518
      %p520 = scmp.ne.s32.totalorder %s512, %s514
      %p521 = scmp.eq.s32.totalorder %s42, 1
      %p522 = por %p520, %p521
      %p523 = scmp.ne.s32.totalorder %s514, %s515
      %p524 = scmp.eq.s32.totalorder %s42, 0
      %p525 = por %p523, %p524
      %p526 = scmp.ne.s32.totalorder %s514, %s515
      %p527 = scmp.eq.s32.totalorder %s43, 1
      %p528 = por %p526, %p527
      %p530 = scmp.ne.s32.totalorder %s515, %s529
      %p531 = scmp.eq.s32.totalorder %s43, 0
      %p532 = por %p530, %p531
      %s534 = sadd.s32 %s533, 1
      %p537 = scmp.eq.s32.totalorder %s37, 1
      %p538 = scmp.ne.s32.totalorder %s533, %s535
      %p539 = scmp.eq.s32.totalorder %s37, 0
      %p540 = por %p538, %p539
      %p541 = scmp.ne.s32.totalorder %s533, %s535
      %p542 = scmp.eq.s32.totalorder %s42, 1
      %p543 = por %p541, %p542
      %p544 = scmp.ne.s32.totalorder %s535, %s536
      %p545 = scmp.eq.s32.totalorder %s42, 0
      %p546 = por %p544, %p545
      %p547 = scmp.ne.s32.totalorder %s535, %s536
      %p548 = scmp.eq.s32.totalorder %s43, 1
      %p549 = por %p547, %p548
      %p551 = scmp.ne.s32.totalorder %s536, %s550
      %p552 = scmp.eq.s32.totalorder %s43, 0
      %p553 = por %p551, %p552
      %s555 = sadd.s32 %s554, 1
      %p558 = scmp.eq.s32.totalorder %s37, 1
      %p559 = scmp.ne.s32.totalorder %s554, %s556
      %p560 = scmp.eq.s32.totalorder %s37, 0
      %p561 = por %p559, %p560
      %p562 = scmp.ne.s32.totalorder %s554, %s556
      %p563 = scmp.eq.s32.totalorder %s42, 1
      %p564 = por %p562, %p563
      %p565 = scmp.ne.s32.totalorder %s556, %s557
      %p566 = scmp.eq.s32.totalorder %s42, 0
      %p567 = por %p565, %p566
      %p568 = scmp.ne.s32.totalorder %s556, %s557
      %p569 = scmp.eq.s32.totalorder %s43, 1
      %p570 = por %p568, %p569
      %p572 = scmp.ne.s32.totalorder %s557, %s571
      %p573 = scmp.eq.s32.totalorder %s43, 0
      %p574 = por %p572, %p573
      %s575 = ssub.s32 %s37, %s44
      %p576 = scmp.eq.s32.totalorder %s575, 0
      %s578 = sadd.s32 %s577, 1
      %s579 = scalar_select %p576, %s577, %s578
      %p582 = pneg %p576
      %p583 = scmp.eq.s32.totalorder %s37, 1
      %p584 = por %p582, %p583
      %p585 = scmp.ne.s32.totalorder %s577, %s580
      %p586 = scmp.eq.s32.totalorder %s37, 0
      %p587 = por %p585, %p586
      %p588 = scmp.ne.s32.totalorder %s577, %s580
      %p589 = scmp.eq.s32.totalorder %s42, 1
      %p590 = por %p588, %p589
      %p591 = scmp.ne.s32.totalorder %s580, %s581
      %p592 = scmp.eq.s32.totalorder %s42, 0
      %p593 = por %p591, %p592
      %p594 = scmp.ne.s32.totalorder %s580, %s581
      %p595 = scmp.eq.s32.totalorder %s43, 1
      %p596 = por %p594, %p595
      %p598 = scmp.ne.s32.totalorder %s581, %s597
      %p599 = scmp.eq.s32.totalorder %s43, 0
      %p600 = por %p598, %p599
      %p601 = scmp.le.s32.totalorder 1, %s37
      %p602 = scmp.lt.s32.totalorder %s37, 3
      %p603 = pnand %p601, %p602
      %p604 = pneg %p603
      // Predicated region
      $region9: #{forward.1} parent=5 // pred_check
        _
      $region10: #{forward.1} parent=5 // pred_check_branch
        %606 = sbr.rel (%p603) target = $region12
      $region11: #{forward.1} parent=5 // pred_region
        %s607 = ssub.s32 %s37, 1
        // Predicated region
        $region13: #{forward.1} parent=11 // pred_check
          %p608 = pneg %p84
        $region14: #{forward.1} parent=11 // pred_check_branch
          %610 = sbr.rel (%p608) target = $region16
        $region15: #{forward.1} parent=11 // pred_region
          _
        $region16: #{forward.1} parent=11 // pred_fallthru
          _
        // Predicated region
        $region17: #{forward.1} parent=11 // pred_check
          %p611 = pneg %p105
        $region18: #{forward.1} parent=11 // pred_check_branch
          %613 = sbr.rel (%p611) target = $region20
        $region19: #{forward.1} parent=11 // pred_region
          _
        $region20: #{forward.1} parent=11 // pred_fallthru
          _
        // Predicated region
        $region21: #{forward.1} parent=11 // pred_check
          %p614 = pneg %p126
        $region22: #{forward.1} parent=11 // pred_check_branch
          %616 = sbr.rel (%p614) target = $region24
        $region23: #{forward.1} parent=11 // pred_region
          %s618 = ssub.s32 10240, 10240
          %619 = vsyncadd [#allocation10], %s618
          %s620 = sshll.u32 [#allocation9], 4
          %s621 = int_to_ptr.vmem [resolvable:$true] %s620
          %626 = dma.hbm_to_vmem [thread:$0]  %s3, 10240, %s621, [#allocation10], 128, 128, 8
        $region24: #{forward.1} parent=11 // pred_fallthru
          _
        // Predicated region
        $region25: #{forward.1} parent=11 // pred_check
          %p627 = pneg %p147
        $region26: #{forward.1} parent=11 // pred_check_branch
          %629 = sbr.rel (%p627) target = $region28
        $region27: #{forward.1} parent=11 // pred_region
          _
        $region28: #{forward.1} parent=11 // pred_fallthru
          _
        // Predicated region
        $region29: #{forward.1} parent=11 // pred_check
          %p630 = pneg %p168
        $region30: #{forward.1} parent=11 // pred_check_branch
          %632 = sbr.rel (%p630) target = $region32
        $region31: #{forward.1} parent=11 // pred_region
          %s634 = ssub.s32 10240, 10240
          %635 = vsyncadd [#allocation12], %s634
          %s636 = sshll.u32 [#allocation11], 4
          %s637 = int_to_ptr.vmem [resolvable:$true] %s636
          %642 = dma.hbm_to_vmem [thread:$0]  %s5, 10240, %s637, [#allocation12], 128, 128, 8
        $region32: #{forward.1} parent=11 // pred_fallthru
          _
        // Predicated region
        $region33: #{forward.1} parent=11 // pred_check
          %p643 = pneg %p189
        $region34: #{forward.1} parent=11 // pred_check_branch
          %645 = sbr.rel (%p643) target = $region36
        $region35: #{forward.1} parent=11 // pred_region
          _
        $region36: #{forward.1} parent=11 // pred_fallthru
          _
        // Predicated region
        $region37: #{forward.1} parent=11 // pred_check
          %p646 = pneg %p210
        $region38: #{forward.1} parent=11 // pred_check_branch
          %648 = sbr.rel (%p646) target = $region40
        $region39: #{forward.1} parent=11 // pred_region
          %s650 = ssub.s32 10240, 10240
          %651 = vsyncadd [#allocation12], %s650
          %s652 = sshll.u32 [#allocation13], 4
          %s653 = int_to_ptr.vmem [resolvable:$true] %s652
          %658 = dma.hbm_to_vmem [thread:$0]  %s7, 10240, %s653, [#allocation12], 128, 128, 8
        $region40: #{forward.1} parent=11 // pred_fallthru
          _
        // Predicated region
        $region41: #{forward.1} parent=11 // pred_check
          %p659 = pneg %p231
        $region42: #{forward.1} parent=11 // pred_check_branch
          %661 = sbr.rel (%p659) target = $region44
        $region43: #{forward.1} parent=11 // pred_region
          _
        $region44: #{forward.1} parent=11 // pred_fallthru
          _
        // Predicated region
        $region45: #{forward.1} parent=11 // pred_check
          %p662 = pneg %p252
        $region46: #{forward.1} parent=11 // pred_check_branch
          %664 = sbr.rel (%p662) target = $region48
        $region47: #{forward.1} parent=11 // pred_region
          _
        $region48: #{forward.1} parent=11 // pred_fallthru
          _
        // Predicated region
        $region49: #{forward.1} parent=11 // pred_check
          %p665 = pneg %p273
        $region50: #{forward.1} parent=11 // pred_check_branch
          %667 = sbr.rel (%p665) target = $region52
        $region51: #{forward.1} parent=11 // pred_region
          _
        $region52: #{forward.1} parent=11 // pred_fallthru
          _
        // Predicated region
        $region53: #{forward.1} parent=11 // pred_check
          %p668 = pneg %p294
        $region54: #{forward.1} parent=11 // pred_check_branch
          %670 = sbr.rel (%p668) target = $region56
        $region55: #{forward.1} parent=11 // pred_region
          %s672 = ssub.s32 2048, 2048
          %673 = vsyncadd [#allocation15], %s672
          %s674 = sshll.u32 [#allocation14], 4
          %s675 = int_to_ptr.vmem [resolvable:$true] %s674
          %680 = dma.hbm_to_vmem [thread:$0]  %s11, 2048, %s675, [#allocation15], 128, 128, 8
        $region56: #{forward.1} parent=11 // pred_fallthru
          _
        // Predicated region
        $region57: #{forward.1} parent=11 // pred_check
          %p681 = pneg %p315
        $region58: #{forward.1} parent=11 // pred_check_branch
          %683 = sbr.rel (%p681) target = $region60
        $region59: #{forward.1} parent=11 // pred_region
          _
        $region60: #{forward.1} parent=11 // pred_fallthru
          _
        // Predicated region
        $region61: #{forward.1} parent=11 // pred_check
          %p684 = pneg %p336
        $region62: #{forward.1} parent=11 // pred_check_branch
          %686 = sbr.rel (%p684) target = $region64
        $region63: #{forward.1} parent=11 // pred_region
          %s688 = ssub.s32 2048, 2048
          %689 = vsyncadd [#allocation15], %s688
          %s690 = sshll.u32 [#allocation16], 4
          %s691 = int_to_ptr.vmem [resolvable:$true] %s690
          %696 = dma.hbm_to_vmem [thread:$0]  %s13, 2048, %s691, [#allocation15], 128, 128, 8
        $region64: #{forward.1} parent=11 // pred_fallthru
          _
        // Predicated region
        $region65: #{forward.1} parent=11 // pred_check
          %p697 = pneg %p357
        $region66: #{forward.1} parent=11 // pred_check_branch
          %699 = sbr.rel (%p697) target = $region68
        $region67: #{forward.1} parent=11 // pred_region
          %s701 = ssub.s32 2048, 2048
          %702 = vsyncadd [#allocation18], %s701
          %s703 = sshll.u32 [#allocation17], 4
          %s704 = int_to_ptr.vmem [resolvable:$true] %s703
          %709 = dma.hbm_to_vmem [thread:$0]  %s14, 2048, %s704, [#allocation18], 128, 128, 8
        $region68: #{forward.1} parent=11 // pred_fallthru
          _
        // Predicated region
        $region69: #{forward.1} parent=11 // pred_check
          %p710 = pneg %p378
        $region70: #{forward.1} parent=11 // pred_check_branch
          %712 = sbr.rel (%p710) target = $region72
        $region71: #{forward.1} parent=11 // pred_region
          %s714 = ssub.s32 2048, 2048
          %715 = vsyncadd [#allocation18], %s714
          %s716 = sshll.u32 [#allocation19], 4
          %s717 = int_to_ptr.vmem [resolvable:$true] %s716
          %722 = dma.hbm_to_vmem [thread:$0]  %s15, 2048, %s717, [#allocation18], 128, 128, 8
        $region72: #{forward.1} parent=11 // pred_fallthru
          _
        // Predicated region
        $region73: #{forward.1} parent=11 // pred_check
          %p723 = pneg %p399
        $region74: #{forward.1} parent=11 // pred_check_branch
          %725 = sbr.rel (%p723) target = $region76
        $region75: #{forward.1} parent=11 // pred_region
          _
        $region76: #{forward.1} parent=11 // pred_fallthru
          _
        // Predicated region
        $region77: #{forward.1} parent=11 // pred_check
          %p726 = pneg %p420
        $region78: #{forward.1} parent=11 // pred_check_branch
          %728 = sbr.rel (%p726) target = $region80
        $region79: #{forward.1} parent=11 // pred_region
          %s730 = ssub.s32 2048, 2048
          %731 = vsyncadd [#allocation21], %s730
          %s732 = sshll.u32 [#allocation20], 4
          %s733 = int_to_ptr.vmem [resolvable:$true] %s732
          %738 = dma.hbm_to_vmem [thread:$0]  %s17, 2048, %s733, [#allocation21], 128, 128, 8
        $region80: #{forward.1} parent=11 // pred_fallthru
          _
        // Predicated region
        $region81: #{forward.1} parent=11 // pred_check
          %p739 = pneg %p441
        $region82: #{forward.1} parent=11 // pred_check_branch
          %741 = sbr.rel (%p739) target = $region84
        $region83: #{forward.1} parent=11 // pred_region
          %s743 = ssub.s32 2048, 2048
          %744 = vsyncadd [#allocation21], %s743
          %s745 = sshll.u32 [#allocation22], 4
          %s746 = int_to_ptr.vmem [resolvable:$true] %s745
          %751 = dma.hbm_to_vmem [thread:$0]  %s18, 2048, %s746, [#allocation21], 128, 128, 8
        $region84: #{forward.1} parent=11 // pred_fallthru
          _
        // Predicated region
        $region85: #{forward.1} parent=11 // pred_check
          %p752 = pneg %p462
        $region86: #{forward.1} parent=11 // pred_check_branch
          %754 = sbr.rel (%p752) target = $region88
        $region87: #{forward.1} parent=11 // pred_region
          %s756 = ssub.s32 2048, 2048
          %757 = vsyncadd [#allocation24], %s756
          %s758 = sshll.u32 [#allocation23], 4
          %s759 = int_to_ptr.vmem [resolvable:$true] %s758
          %764 = dma.hbm_to_vmem [thread:$0]  %s19, 2048, %s759, [#allocation24], 128, 128, 8
        $region88: #{forward.1} parent=11 // pred_fallthru
          _
        // Predicated region
        $region89: #{forward.1} parent=11 // pred_check
          %p765 = pneg %p483
        $region90: #{forward.1} parent=11 // pred_check_branch
          %767 = sbr.rel (%p765) target = $region92
        $region91: #{forward.1} parent=11 // pred_region
          _
        $region92: #{forward.1} parent=11 // pred_fallthru
          _
        // Predicated region
        $region93: #{forward.1} parent=11 // pred_check
          %p768 = pneg %p504
        $region94: #{forward.1} parent=11 // pred_check_branch
          %770 = sbr.rel (%p768) target = $region96
        $region95: #{forward.1} parent=11 // pred_region
          _
        $region96: #{forward.1} parent=11 // pred_fallthru
          _
        // Predicated region
        $region97: #{forward.1} parent=11 // pred_check
          %p771 = pneg %p525
        $region98: #{forward.1} parent=11 // pred_check_branch
          %773 = sbr.rel (%p771) target = $region100
        $region99: #{forward.1} parent=11 // pred_region
          _
        $region100: #{forward.1} parent=11 // pred_fallthru
          _
        // Predicated region
        $region101: #{forward.1} parent=11 // pred_check
          %p774 = pneg %p546
        $region102: #{forward.1} parent=11 // pred_check_branch
          %776 = sbr.rel (%p774) target = $region104
        $region103: #{forward.1} parent=11 // pred_region
          _
        $region104: #{forward.1} parent=11 // pred_fallthru
          _
        // Predicated region
        $region105: #{forward.1} parent=11 // pred_check
          %p777 = pneg %p567
        $region106: #{forward.1} parent=11 // pred_check_branch
          %779 = sbr.rel (%p777) target = $region108
        $region107: #{forward.1} parent=11 // pred_region
          _
        $region108: #{forward.1} parent=11 // pred_fallthru
          _
      $region12: #{forward.1} parent=5 // pred_fallthru
        _
      %p780 = scmp.lt.s32.totalorder %s37, 2
      // Predicated region
      $region109: #{forward.1} parent=5 // pred_check
        %p781 = pneg %p780
      $region110: #{forward.1} parent=5 // pred_check_branch
        %783 = sbr.rel (%p781) target = $region112
      $region111: #{forward.1} parent=5 // pred_region
        // Predicated region
        $region113: #{forward.1} parent=111 // pred_check
          %p784 = pneg %p57
        $region114: #{forward.1} parent=111 // pred_check_branch
          %786 = sbr.rel (%p784) target = $region116
        $region115: #{forward.1} parent=111 // pred_region
          %p787 = scmp.lt.s32.totalorder %s37, 1
          %s788 = scalar_select %p787, %s37, 1
          %s789 = smul.addr %s788, 3
          %s790 = smul.addr %s789, 8
          %s791 = scalar_lea.vmem %s0, %s790
        $region116: #{forward.1} parent=111 // pred_fallthru
          _
      $region112: #{forward.1} parent=5 // pred_fallthru
        _
      %p792 = scmp.le.s32.totalorder 1, %s37
      %p793 = scmp.lt.s32.totalorder %s37, 3
      %p794 = pnand %p792, %p793
      %p795 = pneg %p794
      // Predicated region
      $region117: #{forward.1} parent=5 // pred_check
        _
      $region118: #{forward.1} parent=5 // pred_check_branch
        %797 = sbr.rel (%p794) target = $region120
      $region119: #{forward.1} parent=5 // pred_region
        %s798 = ssub.s32 %s37, 1
        // Predicated region
        $region121: #{forward.1} parent=119 // pred_check
          %p799 = pneg %p126
        $region122: #{forward.1} parent=119 // pred_check_branch
          %801 = sbr.rel (%p799) target = $region124
        $region123: #{forward.1} parent=119 // pred_region
          %802 = dma.done [#allocation10], 10240
        $region124: #{forward.1} parent=119 // pred_fallthru
          _
        // Predicated region
        $region125: #{forward.1} parent=119 // pred_check
          %p803 = pneg %p168
        $region126: #{forward.1} parent=119 // pred_check_branch
          %805 = sbr.rel (%p803) target = $region128
        $region127: #{forward.1} parent=119 // pred_region
          %806 = dma.done [#allocation12], 10240
        $region128: #{forward.1} parent=119 // pred_fallthru
          _
        // Predicated region
        $region129: #{forward.1} parent=119 // pred_check
          %p807 = pneg %p210
        $region130: #{forward.1} parent=119 // pred_check_branch
          %809 = sbr.rel (%p807) target = $region132
        $region131: #{forward.1} parent=119 // pred_region
          %810 = dma.done [#allocation12], 10240
        $region132: #{forward.1} parent=119 // pred_fallthru
          _
        // Predicated region
        $region133: #{forward.1} parent=119 // pred_check
          %p811 = pneg %p294
        $region134: #{forward.1} parent=119 // pred_check_branch
          %813 = sbr.rel (%p811) target = $region136
        $region135: #{forward.1} parent=119 // pred_region
          %814 = dma.done [#allocation15], 2048
        $region136: #{forward.1} parent=119 // pred_fallthru
          _
        // Predicated region
        $region137: #{forward.1} parent=119 // pred_check
          %p815 = pneg %p336
        $region138: #{forward.1} parent=119 // pred_check_branch
          %817 = sbr.rel (%p815) target = $region140
        $region139: #{forward.1} parent=119 // pred_region
          %818 = dma.done [#allocation15], 2048
        $region140: #{forward.1} parent=119 // pred_fallthru
          _
        // Predicated region
        $region141: #{forward.1} parent=119 // pred_check
          %p819 = pneg %p357
        $region142: #{forward.1} parent=119 // pred_check_branch
          %821 = sbr.rel (%p819) target = $region144
        $region143: #{forward.1} parent=119 // pred_region
          %822 = dma.done [#allocation18], 2048
        $region144: #{forward.1} parent=119 // pred_fallthru
          _
        // Predicated region
        $region145: #{forward.1} parent=119 // pred_check
          %p823 = pneg %p378
        $region146: #{forward.1} parent=119 // pred_check_branch
          %825 = sbr.rel (%p823) target = $region148
        $region147: #{forward.1} parent=119 // pred_region
          %826 = dma.done [#allocation18], 2048
        $region148: #{forward.1} parent=119 // pred_fallthru
          _
        // Predicated region
        $region149: #{forward.1} parent=119 // pred_check
          %p827 = pneg %p420
        $region150: #{forward.1} parent=119 // pred_check_branch
          %829 = sbr.rel (%p827) target = $region152
        $region151: #{forward.1} parent=119 // pred_region
          %830 = dma.done [#allocation21], 2048
        $region152: #{forward.1} parent=119 // pred_fallthru
          _
        // Predicated region
        $region153: #{forward.1} parent=119 // pred_check
          %p831 = pneg %p441
        $region154: #{forward.1} parent=119 // pred_check_branch
          %833 = sbr.rel (%p831) target = $region156
        $region155: #{forward.1} parent=119 // pred_region
          %834 = dma.done [#allocation21], 2048
        $region156: #{forward.1} parent=119 // pred_fallthru
          _
        // Predicated region
        $region157: #{forward.1} parent=119 // pred_check
          %p835 = pneg %p462
        $region158: #{forward.1} parent=119 // pred_check_branch
          %837 = sbr.rel (%p835) target = $region160
        $region159: #{forward.1} parent=119 // pred_region
          %838 = dma.done [#allocation24], 2048
        $region160: #{forward.1} parent=119 // pred_fallthru
          _
        %p839 = scmp.lt.s32.totalorder %s42, 1
        %s840 = scalar_select %p839, %s42, 1
        %s841 = smul.addr %s840, 3
        %s842 = smul.addr %s841, 8
        %s843 = scalar_lea.vmem %s0, %s842
        %p844 = pneg %p63
        %p845 = pneg %p60
        %p846 = pneg %p84
        %p847 = pneg %p81
        %p848 = pneg %p105
        %p849 = pneg %p102
        %p850 = pneg %p126
        %p851 = pneg %p123
        %p852 = pneg %p147
        %p853 = pneg %p144
        %p854 = pneg %p168
        %p855 = pneg %p165
        %p856 = pneg %p189
        %p857 = pneg %p186
        %p858 = pneg %p210
        %p859 = pneg %p207
        %p860 = pneg %p231
        %p861 = pneg %p228
        %p862 = pneg %p252
        %p863 = pneg %p249
        %p864 = pneg %p273
        %p865 = pneg %p270
        %p866 = pneg %p294
        %p867 = pneg %p291
        %p868 = pneg %p315
        %p869 = pneg %p312
        %p870 = pneg %p336
        %p871 = pneg %p333
        %p872 = pneg %p357
        %p873 = pneg %p354
        %p874 = pneg %p378
        %p875 = pneg %p375
        %p876 = pneg %p399
        %p877 = pneg %p396
        %p878 = pneg %p420
        %p879 = pneg %p417
        %p880 = pneg %p441
        %p881 = pneg %p438
        %p882 = pneg %p462
        %p883 = pneg %p459
        %p884 = pneg %p483
        %p885 = pneg %p480
        %p886 = pneg %p504
        %p887 = pneg %p501
        %p888 = pneg %p525
        %p889 = pneg %p522
        %p890 = pneg %p546
        %p891 = pneg %p543
        %p892 = pneg %p567
        %p893 = pneg %p564
        %p894 = pneg %p593
        %p895 = pneg %p590
        %p896 = scmp.lt.s32.totalorder %s42, 1
        %s897 = scalar_select %p896, %s42, 1
        %s898 = smul.addr %s897, 8
        %s899 = scalar_lea.vmem %s25, %s898
        %p900 = scmp.lt.s32.totalorder %s42, 1
        %s901 = scalar_select %p900, %s42, 1
        %s902 = smul.addr %s901, 3
        %s903 = smul.addr %s902, 8
        %s904 = scalar_lea.vmem %s0, %s903
        %p905 = scmp.lt.s32.totalorder %s42, 1
        %s906 = scalar_select %p905, %s42, 1
        %s907 = smul.addr %s906, 8
        %s908 = scalar_lea.vmem %s25, %s907
        %v910 = vld [vmem:[%s904] sm:$0xff]
        %v911 = vld [vmem:[%s904 + $0x8] sm:$0xff]
        %v912 = vpack.c.bf16 %v911, %v910
        %v913 = vld [vmem:[%s1] sm:$0xff]
        %v914 = vld [vmem:[%s1 + $0x8] sm:$0xff]
        %v915 = vld [vmem:[%s904 + $0x1] sm:$0xff]
        %v916 = vld [vmem:[%s904 + $0x9] sm:$0xff]
        %v917 = vpack.c.bf16 %v916, %v915
        %s918 = scalar_lea.vmem %s1, 16
        %v919 = vld [vmem:[%s918] sm:$0xff]
        %v920 = vld [vmem:[%s918 + $0x8] sm:$0xff]
        %v923 = vunpack.c.l.b16 %v919
        %v924 = vunpack.c.h.b16 %v919
        %v925 = vunpack.c.l.b16 %v920
        %v926 = vunpack.c.h.b16 %v920
        %v927 = vpack.c.b16 %v925, %v923
        %v928 = vpack.c.b16 %v926, %v924
        %vm931 = vcmask 130048
        %v933 = vsel %vm931, %v917, 0
        %935 = vmatprep.subr.bf16.mxu0 %v928
        %936 = vmatpush1.bf16.msra.mxu0 %v927
        %937 = vmatprep.subr.bf16.mxu0 0
        %938 = vmatpush1.bf16.msra.mxu0 0
        %939 = vmatprep.subr.bf16.mxu0 0
        %940 = vmatpush1.bf16.msra.mxu0 0
        %941 = vmatprep.subr.bf16.mxu0 0
        %942 = vmatpush1.bf16.msra.mxu0 0
        %943 = vmatprep.subr.bf16.mxu0 0
        %944 = vmatpush1.bf16.msra.mxu0 0
        %945 = vmatprep.subr.bf16.mxu0 0
        %946 = vmatpush1.bf16.msra.mxu0 0
        %947 = vmatprep.subr.bf16.mxu0 0
        %948 = vmatpush1.bf16.msra.mxu0 0
        %949 = vmatprep.subr.bf16.mxu0 0
        %950 = vmatpush1.bf16.msra.mxu0 0
        %951 = vmatprep.subr.bf16.mxu0 0
        %952 = vmatpush1.bf16.msra.mxu0 0
        %953 = vmatprep.subr.bf16.mxu0 0
        %954 = vmatpush1.bf16.msra.mxu0 0
        %955 = vmatprep.subr.bf16.mxu0 0
        %956 = vmatpush1.bf16.msra.mxu0 0
        %957 = vmatprep.subr.bf16.mxu0 0
        %958 = vmatpush1.bf16.msra.mxu0 0
        %959 = vmatprep.subr.bf16.mxu0 0
        %960 = vmatpush1.bf16.msra.mxu0 0
        %961 = vmatprep.subr.bf16.mxu0 0
        %962 = vmatpush1.bf16.msra.mxu0 0
        %963 = vmatprep.subr.bf16.mxu0 0
        %964 = vmatpush1.bf16.msra.mxu0 0
        %965 = vmatprep.subr.bf16.mxu0 0
        %966 = vmatpush1.bf16.msra.mxu0 0
        %967 = vmatprep.mubr.bf16.mxu0 0
        %968 = vmatmul.mubr.bf16.gmra.mrb[0].mxu0 %v933
        %v969 = vpop.f32.mrb[0].mxu0
        %v970 = vadd.f32 0.0, %v969
        %v971 = vpop.f32.mrb[0].mxu0
        %v972 = vadd.f32 0.0, %v971
        %v973 = vpop.f32.mrb[0].mxu0
        %v974 = vadd.f32 0.0, %v973
        %v975 = vpop.f32.mrb[0].mxu0
        %v976 = vadd.f32 0.0, %v975
        %977 = vdwg.mxu0
        %v980 = vunpack.c.l.b16 %v913
        %v981 = vunpack.c.h.b16 %v913
        %v982 = vunpack.c.l.b16 %v914
        %v983 = vunpack.c.h.b16 %v914
        %v984 = vpack.c.b16 %v982, %v980
        %v985 = vpack.c.b16 %v983, %v981
        %v989 = vsel %vm931, %v912, 0
        %991 = vmatprep.subr.bf16.mxu0 %v985
        %992 = vmatpush1.bf16.msra.mxu0 %v984
        %993 = vmatprep.subr.bf16.mxu0 0
        %994 = vmatpush1.bf16.msra.mxu0 0
        %995 = vmatprep.subr.bf16.mxu0 0
        %996 = vmatpush1.bf16.msra.mxu0 0
        %997 = vmatprep.subr.bf16.mxu0 0
        %998 = vmatpush1.bf16.msra.mxu0 0
        %999 = vmatprep.subr.bf16.mxu0 0
        %1000 = vmatpush1.bf16.msra.mxu0 0
        %1001 = vmatprep.subr.bf16.mxu0 0
        %1002 = vmatpush1.bf16.msra.mxu0 0
        %1003 = vmatprep.subr.bf16.mxu0 0
        %1004 = vmatpush1.bf16.msra.mxu0 0
        %1005 = vmatprep.subr.bf16.mxu0 0
        %1006 = vmatpush1.bf16.msra.mxu0 0
        %1007 = vmatprep.subr.bf16.mxu0 0
        %1008 = vmatpush1.bf16.msra.mxu0 0
        %1009 = vmatprep.subr.bf16.mxu0 0
        %1010 = vmatpush1.bf16.msra.mxu0 0
        %1011 = vmatprep.subr.bf16.mxu0 0
        %1012 = vmatpush1.bf16.msra.mxu0 0
        %1013 = vmatprep.subr.bf16.mxu0 0
        %1014 = vmatpush1.bf16.msra.mxu0 0
        %1015 = vmatprep.subr.bf16.mxu0 0
        %1016 = vmatpush1.bf16.msra.mxu0 0
        %1017 = vmatprep.subr.bf16.mxu0 0
        %1018 = vmatpush1.bf16.msra.mxu0 0
        %1019 = vmatprep.subr.bf16.mxu0 0
        %1020 = vmatpush1.bf16.msra.mxu0 0
        %1021 = vmatprep.subr.bf16.mxu0 0
        %1022 = vmatpush1.bf16.msra.mxu0 0
        %1023 = vmatprep.mubr.bf16.mxu0 0
        %1024 = vmatmul.mubr.bf16.gmra.mrb[0].mxu0 %v989
        %v1025 = vpop.f32.mrb[0].mxu0
        %v1026 = vadd.f32 %v970, %v1025
        %v1027 = vpop.f32.mrb[0].mxu0
        %v1028 = vadd.f32 %v972, %v1027
        %v1029 = vpop.f32.mrb[0].mxu0
        %v1030 = vadd.f32 %v974, %v1029
        %v1031 = vpop.f32.mrb[0].mxu0
        %v1032 = vadd.f32 %v976, %v1031
        %1033 = vdwg.mxu0
        %v1034 = vld [vmem:[%s904 + $0x2] sm:$0xff]
        %v1035 = vld [vmem:[%s904 + $0xa] sm:$0xff]
        %v1036 = vpack.c.bf16 %v1035, %v1034
        %s1037 = scalar_lea.vmem %s1, 32
        %v1038 = vld [vmem:[%s1037] sm:$0xff]
        %v1039 = vld [vmem:[%s1037 + $0x8] sm:$0xff]
        %v1042 = vunpack.c.l.b16 %v1038
        %v1043 = vunpack.c.h.b16 %v1038
        %v1044 = vunpack.c.l.b16 %v1039
        %v1045 = vunpack.c.h.b16 %v1039
        %v1046 = vpack.c.b16 %v1044, %v1042
        %v1047 = vpack.c.b16 %v1045, %v1043
        %v1051 = vsel %vm931, %v1036, 0
        %1053 = vmatprep.subr.bf16.mxu0 %v1047
        %1054 = vmatpush1.bf16.msra.mxu0 %v1046
        %1055 = vmatprep.subr.bf16.mxu0 0
        %1056 = vmatpush1.bf16.msra.mxu0 0
        %1057 = vmatprep.subr.bf16.mxu0 0
        %1058 = vmatpush1.bf16.msra.mxu0 0
        %1059 = vmatprep.subr.bf16.mxu0 0
        %1060 = vmatpush1.bf16.msra.mxu0 0
        %1061 = vmatprep.subr.bf16.mxu0 0
        %1062 = vmatpush1.bf16.msra.mxu0 0
        %1063 = vmatprep.subr.bf16.mxu0 0
        %1064 = vmatpush1.bf16.msra.mxu0 0
        %1065 = vmatprep.subr.bf16.mxu0 0
        %1066 = vmatpush1.bf16.msra.mxu0 0
        %1067 = vmatprep.subr.bf16.mxu0 0
        %1068 = vmatpush1.bf16.msra.mxu0 0
        %1069 = vmatprep.subr.bf16.mxu0 0
        %1070 = vmatpush1.bf16.msra.mxu0 0
        %1071 = vmatprep.subr.bf16.mxu0 0
        %1072 = vmatpush1.bf16.msra.mxu0 0
        %1073 = vmatprep.subr.bf16.mxu0 0
        %1074 = vmatpush1.bf16.msra.mxu0 0
        %1075 = vmatprep.subr.bf16.mxu0 0
        %1076 = vmatpush1.bf16.msra.mxu0 0
        %1077 = vmatprep.subr.bf16.mxu0 0
        %1078 = vmatpush1.bf16.msra.mxu0 0
        %1079 = vmatprep.subr.bf16.mxu0 0
        %1080 = vmatpush1.bf16.msra.mxu0 0
        %1081 = vmatprep.subr.bf16.mxu0 0
        %1082 = vmatpush1.bf16.msra.mxu0 0
        %1083 = vmatprep.subr.bf16.mxu0 0
        %1084 = vmatpush1.bf16.msra.mxu0 0
        %1085 = vmatprep.mubr.bf16.mxu0 0
        %1086 = vmatmul.mubr.bf16.gmra.mrb[0].mxu0 %v1051
        %v1087 = vpop.f32.mrb[0].mxu0
        %v1088 = vadd.f32 0.0, %v1087
        %v1089 = vpop.f32.mrb[0].mxu0
        %v1090 = vadd.f32 0.0, %v1089
        %v1091 = vpop.f32.mrb[0].mxu0
        %v1092 = vadd.f32 0.0, %v1091
        %v1093 = vpop.f32.mrb[0].mxu0
        %v1094 = vadd.f32 0.0, %v1093
        %1095 = vdwg.mxu0
        %v1096 = vadd.f32 %v1026, %v1088
        %v1097 = vadd.f32 %v1028, %v1090
        %v1098 = vadd.f32 %v1030, %v1092
        %v1099 = vadd.f32 %v1032, %v1094
        %v1100 = vld [vmem:[%s904 + $0x3] sm:$0xff]
        %v1101 = vld [vmem:[%s904 + $0xb] sm:$0xff]
        %v1102 = vpack.c.bf16 %v1101, %v1100
        %s1103 = scalar_lea.vmem %s1, 48
        %v1104 = vld [vmem:[%s1103] sm:$0xff]
        %v1105 = vld [vmem:[%s1103 + $0x8] sm:$0xff]
        %v1108 = vunpack.c.l.b16 %v1104
        %v1109 = vunpack.c.h.b16 %v1104
        %v1110 = vunpack.c.l.b16 %v1105
        %v1111 = vunpack.c.h.b16 %v1105
        %v1112 = vpack.c.b16 %v1110, %v1108
        %v1113 = vpack.c.b16 %v1111, %v1109
        %v1117 = vsel %vm931, %v1102, 0
        %1119 = vmatprep.subr.bf16.mxu0 %v1113
        %1120 = vmatpush1.bf16.msra.mxu0 %v1112
        %1121 = vmatprep.subr.bf16.mxu0 0
        %1122 = vmatpush1.bf16.msra.mxu0 0
        %1123 = vmatprep.subr.bf16.mxu0 0
        %1124 = vmatpush1.bf16.msra.mxu0 0
        %1125 = vmatprep.subr.bf16.mxu0 0
        %1126 = vmatpush1.bf16.msra.mxu0 0
        %1127 = vmatprep.subr.bf16.mxu0 0
        %1128 = vmatpush1.bf16.msra.mxu0 0
        %1129 = vmatprep.subr.bf16.mxu0 0
        %1130 = vmatpush1.bf16.msra.mxu0 0
        %1131 = vmatprep.subr.bf16.mxu0 0
        %1132 = vmatpush1.bf16.msra.mxu0 0
        %1133 = vmatprep.subr.bf16.mxu0 0
        %1134 = vmatpush1.bf16.msra.mxu0 0
        %1135 = vmatprep.subr.bf16.mxu0 0
        %1136 = vmatpush1.bf16.msra.mxu0 0
        %1137 = vmatprep.subr.bf16.mxu0 0
        %1138 = vmatpush1.bf16.msra.mxu0 0
        %1139 = vmatprep.subr.bf16.mxu0 0
        %1140 = vmatpush1.bf16.msra.mxu0 0
        %1141 = vmatprep.subr.bf16.mxu0 0
        %1142 = vmatpush1.bf16.msra.mxu0 0
        %1143 = vmatprep.subr.bf16.mxu0 0
        %1144 = vmatpush1.bf16.msra.mxu0 0
        %1145 = vmatprep.subr.bf16.mxu0 0
        %1146 = vmatpush1.bf16.msra.mxu0 0
        %1147 = vmatprep.subr.bf16.mxu0 0
        %1148 = vmatpush1.bf16.msra.mxu0 0
        %1149 = vmatprep.subr.bf16.mxu0 0
        %1150 = vmatpush1.bf16.msra.mxu0 0
        %1151 = vmatprep.mubr.bf16.mxu0 0
        %1152 = vmatmul.mubr.bf16.gmra.mrb[0].mxu0 %v1117
        %v1153 = vpop.f32.mrb[0].mxu0
        %v1154 = vadd.f32 0.0, %v1153
        %v1155 = vpop.f32.mrb[0].mxu0
        %v1156 = vadd.f32 0.0, %v1155
        %v1157 = vpop.f32.mrb[0].mxu0
        %v1158 = vadd.f32 0.0, %v1157
        %v1159 = vpop.f32.mrb[0].mxu0
        %v1160 = vadd.f32 0.0, %v1159
        %1161 = vdwg.mxu0
        %v1162 = vadd.f32 %v1096, %v1154
        %v1163 = vadd.f32 %v1097, %v1156
        %v1164 = vadd.f32 %v1098, %v1158
        %v1165 = vadd.f32 %v1099, %v1160
        %v1166 = vld [vmem:[%s904 + $0x4] sm:$0xff]
        %v1167 = vld [vmem:[%s904 + $0xc] sm:$0xff]
        %v1168 = vpack.c.bf16 %v1167, %v1166
        %s1169 = scalar_lea.vmem %s1, 64
        %v1170 = vld [vmem:[%s1169] sm:$0xff]
        %v1171 = vld [vmem:[%s1169 + $0x8] sm:$0xff]
        %v1174 = vunpack.c.l.b16 %v1170
        %v1175 = vunpack.c.h.b16 %v1170
        %v1176 = vunpack.c.l.b16 %v1171
        %v1177 = vunpack.c.h.b16 %v1171
        %v1178 = vpack.c.b16 %v1176, %v1174
        %v1179 = vpack.c.b16 %v1177, %v1175
        %v1183 = vsel %vm931, %v1168, 0
        %1185 = vmatprep.subr.bf16.mxu0 %v1179
        %1186 = vmatpush1.bf16.msra.mxu0 %v1178
        %1187 = vmatprep.subr.bf16.mxu0 0
        %1188 = vmatpush1.bf16.msra.mxu0 0
        %1189 = vmatprep.subr.bf16.mxu0 0
        %1190 = vmatpush1.bf16.msra.mxu0 0
        %1191 = vmatprep.subr.bf16.mxu0 0
        %1192 = vmatpush1.bf16.msra.mxu0 0
        %1193 = vmatprep.subr.bf16.mxu0 0
        %1194 = vmatpush1.bf16.msra.mxu0 0
        %1195 = vmatprep.subr.bf16.mxu0 0
        %1196 = vmatpush1.bf16.msra.mxu0 0
        %1197 = vmatprep.subr.bf16.mxu0 0
        %1198 = vmatpush1.bf16.msra.mxu0 0
        %1199 = vmatprep.subr.bf16.mxu0 0
        %1200 = vmatpush1.bf16.msra.mxu0 0
        %1201 = vmatprep.subr.bf16.mxu0 0
        %1202 = vmatpush1.bf16.msra.mxu0 0
        %1203 = vmatprep.subr.bf16.mxu0 0
        %1204 = vmatpush1.bf16.msra.mxu0 0
        %1205 = vmatprep.subr.bf16.mxu0 0
        %1206 = vmatpush1.bf16.msra.mxu0 0
        %1207 = vmatprep.subr.bf16.mxu0 0
        %1208 = vmatpush1.bf16.msra.mxu0 0
        %1209 = vmatprep.subr.bf16.mxu0 0
        %1210 = vmatpush1.bf16.msra.mxu0 0
        %1211 = vmatprep.subr.bf16.mxu0 0
        %1212 = vmatpush1.bf16.msra.mxu0 0
        %1213 = vmatprep.subr.bf16.mxu0 0
        %1214 = vmatpush1.bf16.msra.mxu0 0
        %1215 = vmatprep.subr.bf16.mxu0 0
        %1216 = vmatpush1.bf16.msra.mxu0 0
        %1217 = vmatprep.mubr.bf16.mxu0 0
        %1218 = vmatmul.mubr.bf16.gmra.mrb[0].mxu0 %v1183
        %v1219 = vpop.f32.mrb[0].mxu0
        %v1220 = vadd.f32 0.0, %v1219
        %v1221 = vpop.f32.mrb[0].mxu0
        %v1222 = vadd.f32 0.0, %v1221
        %v1223 = vpop.f32.mrb[0].mxu0
        %v1224 = vadd.f32 0.0, %v1223
        %v1225 = vpop.f32.mrb[0].mxu0
        %v1226 = vadd.f32 0.0, %v1225
        %1227 = vdwg.mxu0
        %v1228 = vadd.f32 %v1162, %v1220
        %v1229 = vadd.f32 %v1163, %v1222
        %v1230 = vadd.f32 %v1164, %v1224
        %v1231 = vadd.f32 %v1165, %v1226
        %v1232 = vmax.f32 %v1228, %v1229
        %v1233 = vmax.f32 %v1230, %v1231
        %v1234 = vld [vmem:[%s2] sm:$0x1]
        %v1236 = vlaneseq
        %v1237 = vshrl.u32 %v1236, 7
        %v1238 = vsub.s32 0, %v1237
        %v1239 = vrot.slane %v1234, %v1238
        %v1241 = vadd.f32 %v1232, %v1239
        %v1242 = vadd.f32 %v1233, %v1239
        %v1243 = vpack.c.bf16 %v1242, %v1241
        %v1244 = vlaneseq
        %v1245 = vshrl.u32 %v1244, 7
        %v1246 = vadd.s32 %v1245, 8
        %v1247 = vlaneseq
        %v1248 = vand.u32 %v1247, 127
        %v1249 = vsub.s32 %v1245, 2
        %v1250 = vsub.s32 %v1246, 2
        %v1251 = vmul.u32 %v1249, 2
        %v1252 = vmul.u32 %v1250, 2
        %vm1253 = vcmp.eq.s32.totalorder %v1248, %v1251
        %vm1254 = vcmp.eq.s32.totalorder %v1248, %v1252
        %v1255 = vsel %vm1253, 1.0, 0.0
        %v1256 = vsel %vm1254, 1.0, 0.0
        %v1257 = vpack.c.bf16 %v1256, %v1255
        %v1258 = vadd.s32 %v1251, 1
        %v1259 = vadd.s32 %v1252, 1
        %vm1260 = vcmp.eq.s32.totalorder %v1248, %v1258
        %vm1261 = vcmp.eq.s32.totalorder %v1248, %v1259
        %v1262 = vsel %vm1260, 1.0, 0.0
        %v1263 = vsel %vm1261, 1.0, 0.0
        %v1264 = vpack.c.bf16 %v1263, %v1262
        %v1266 = vsel %vm931, %v1257, 0
        %1268 = vmatprep.subr.bf16.mxu0 0
        %1269 = vmatpush1.bf16.msra.mxu0 %v1243
        %1270 = vmatprep.subr.bf16.mxu0 0
        %1271 = vmatpush1.bf16.msra.mxu0 0
        %1272 = vmatprep.subr.bf16.mxu0 0
        %1273 = vmatpush1.bf16.msra.mxu0 0
        %1274 = vmatprep.subr.bf16.mxu0 0
        %1275 = vmatpush1.bf16.msra.mxu0 0
        %1276 = vmatprep.subr.bf16.mxu0 0
        %1277 = vmatpush1.bf16.msra.mxu0 0
        %1278 = vmatprep.subr.bf16.mxu0 0
        %1279 = vmatpush1.bf16.msra.mxu0 0
        %1280 = vmatprep.subr.bf16.mxu0 0
        %1281 = vmatpush1.bf16.msra.mxu0 0
        %1282 = vmatprep.subr.bf16.mxu0 0
        %1283 = vmatpush1.bf16.msra.mxu0 0
        %1284 = vmatprep.subr.bf16.mxu0 0
        %1285 = vmatpush1.bf16.msra.mxu0 0
        %1286 = vmatprep.subr.bf16.mxu0 0
        %1287 = vmatpush1.bf16.msra.mxu0 0
        %1288 = vmatprep.subr.bf16.mxu0 0
        %1289 = vmatpush1.bf16.msra.mxu0 0
        %1290 = vmatprep.subr.bf16.mxu0 0
        %1291 = vmatpush1.bf16.msra.mxu0 0
        %1292 = vmatprep.subr.bf16.mxu0 0
        %1293 = vmatpush1.bf16.msra.mxu0 0
        %1294 = vmatprep.subr.bf16.mxu0 0
        %1295 = vmatpush1.bf16.msra.mxu0 0
        %1296 = vmatprep.subr.bf16.mxu0 0
        %1297 = vmatpush1.bf16.msra.mxu0 0
        %1298 = vmatprep.subr.bf16.mxu0 0
        %1299 = vmatpush1.bf16.msra.mxu0 0
        %1300 = vmatprep.mubr.bf16.mxu0 0
        %1301 = vmatmul.mubr.bf16.gmra.mrb[0].mxu0 %v1266
        %v1302 = vpop.f32.mrb[0].mxu0
        %v1303 = vadd.f32 0.0, %v1302
        %v1304 = vpop.f32.mrb[0].mxu0
        %v1305 = vpop.f32.mrb[0].mxu0
        %v1306 = vadd.f32 0.0, %v1305
        %v1307 = vpop.f32.mrb[0].mxu0
        %1308 = vdwg.mxu0
        %v1310 = vsel %vm931, %v1264, 0
        %1312 = vmatprep.subr.bf16.mxu0 0
        %1313 = vmatpush1.bf16.msra.mxu0 %v1243
        %1314 = vmatprep.subr.bf16.mxu0 0
        %1315 = vmatpush1.bf16.msra.mxu0 0
        %1316 = vmatprep.subr.bf16.mxu0 0
        %1317 = vmatpush1.bf16.msra.mxu0 0
        %1318 = vmatprep.subr.bf16.mxu0 0
        %1319 = vmatpush1.bf16.msra.mxu0 0
        %1320 = vmatprep.subr.bf16.mxu0 0
        %1321 = vmatpush1.bf16.msra.mxu0 0
        %1322 = vmatprep.subr.bf16.mxu0 0
        %1323 = vmatpush1.bf16.msra.mxu0 0
        %1324 = vmatprep.subr.bf16.mxu0 0
        %1325 = vmatpush1.bf16.msra.mxu0 0
        %1326 = vmatprep.subr.bf16.mxu0 0
        %1327 = vmatpush1.bf16.msra.mxu0 0
        %1328 = vmatprep.subr.bf16.mxu0 0
        %1329 = vmatpush1.bf16.msra.mxu0 0
        %1330 = vmatprep.subr.bf16.mxu0 0
        %1331 = vmatpush1.bf16.msra.mxu0 0
        %1332 = vmatprep.subr.bf16.mxu0 0
        %1333 = vmatpush1.bf16.msra.mxu0 0
        %1334 = vmatprep.subr.bf16.mxu0 0
        %1335 = vmatpush1.bf16.msra.mxu0 0
        %1336 = vmatprep.subr.bf16.mxu0 0
        %1337 = vmatpush1.bf16.msra.mxu0 0
        %1338 = vmatprep.subr.bf16.mxu0 0
        %1339 = vmatpush1.bf16.msra.mxu0 0
        %1340 = vmatprep.subr.bf16.mxu0 0
        %1341 = vmatpush1.bf16.msra.mxu0 0
        %1342 = vmatprep.subr.bf16.mxu0 0
        %1343 = vmatpush1.bf16.msra.mxu0 0
        %1344 = vmatprep.mubr.bf16.mxu0 0
        %1345 = vmatmul.mubr.bf16.gmra.mrb[0].mxu0 %v1310
        %v1346 = vpop.f32.mrb[0].mxu0
        %v1347 = vadd.f32 0.0, %v1346
        %v1348 = vpop.f32.mrb[0].mxu0
        %v1349 = vpop.f32.mrb[0].mxu0
        %v1350 = vadd.f32 0.0, %v1349
        %v1351 = vpop.f32.mrb[0].mxu0
        %1352 = vdwg.mxu0
        %v1353 = vmax.f32 %v1303, %v1347
        %v1354 = vmax.f32 %v1306, %v1350
        %v1355 = vmax.f32 %v1353, 0.0
        %v1356 = vmax.f32 %v1354, 0.0
        %1357 = vst [vmem:[#allocation2] sm:$0xff] %v1355
        %1358 = vst [vmem:[#allocation2 + $0x8] sm:$0xf] %v1356
        %v1359 = vld [vmem:[#allocation2] sm:$0xff]
        %v1360 = vpack.c.bf16 %v1359, %v1359
        %v1361 = vld [vmem:[#allocation9] sm:$0xff]
        %v1362 = vld [vmem:[#allocation9 + $0x8] sm:$0xff]
        %v1363 = vld [vmem:[#allocation9 + $0x10] sm:$0xff]
        %v1364 = vld [vmem:[#allocation9 + $0x18] sm:$0xff]
        %v1365 = vld [vmem:[#allocation9 + $0x20] sm:$0xff]
        %v1366 = vld [vmem:[#allocation9 + $0x28] sm:$0xff]
        %v1367 = vld [vmem:[#allocation9 + $0x30] sm:$0xff]
        %v1368 = vld [vmem:[#allocation9 + $0x38] sm:$0xff]
        %v1369 = vld [vmem:[#allocation9 + $0x40] sm:$0xff]
        %v1370 = vld [vmem:[#allocation9 + $0x48] sm:$0xff]
        %v1371 = vld [vmem:[#allocation9 + $0x50] sm:$0xff]
        %v1372 = vld [vmem:[#allocation9 + $0x58] sm:$0xff]
        %v1373 = vld [vmem:[#allocation9 + $0x60] sm:$0xff]
        %v1374 = vld [vmem:[#allocation9 + $0x68] sm:$0xff]
        %v1375 = vld [vmem:[#allocation9 + $0x70] sm:$0xff]
        %v1376 = vld [vmem:[#allocation9 + $0x78] sm:$0xff]
        %v1377 = vld [vmem:[#allocation2 + $0x1] sm:$0xff]
        %v1378 = vpack.c.bf16 %v1377, %v1377
        %s1379 = scalar_lea.vmem [#allocation9], 128
        %v1380 = vld [vmem:[%s1379] sm:$0xff]
        %v1381 = vld [vmem:[%s1379 + $0x8] sm:$0xff]
        %v1382 = vld [vmem:[%s1379 + $0x10] sm:$0xff]
        %v1383 = vld [vmem:[%s1379 + $0x18] sm:$0xff]
        %v1384 = vld [vmem:[%s1379 + $0x20] sm:$0xff]
        %v1385 = vld [vmem:[%s1379 + $0x28] sm:$0xff]
        %v1386 = vld [vmem:[%s1379 + $0x30] sm:$0xff]
        %v1387 = vld [vmem:[%s1379 + $0x38] sm:$0xff]
        %v1388 = vld [vmem:[%s1379 + $0x40] sm:$0xff]
        %v1389 = vld [vmem:[%s1379 + $0x48] sm:$0xff]
        %v1390 = vld [vmem:[%s1379 + $0x50] sm:$0xff]
        %v1391 = vld [vmem:[%s1379 + $0x58] sm:$0xff]
        %v1392 = vld [vmem:[%s1379 + $0x60] sm:$0xff]
        %v1393 = vld [vmem:[%s1379 + $0x68] sm:$0xff]
        %v1394 = vld [vmem:[%s1379 + $0x70] sm:$0xff]
        %v1395 = vld [vmem:[%s1379 + $0x78] sm:$0xff]
        %v1412 = vunpack.c.l.b16 %v1380
        %v1413 = vunpack.c.h.b16 %v1380
        %v1414 = vunpack.c.l.b16 %v1381
        %v1415 = vunpack.c.h.b16 %v1381
        %v1416 = vunpack.c.l.b16 %v1382
        %v1417 = vunpack.c.h.b16 %v1382
        %v1418 = vunpack.c.l.b16 %v1383
        %v1419 = vunpack.c.h.b16 %v1383
        %v1420 = vunpack.c.l.b16 %v1384
        %v1421 = vunpack.c.h.b16 %v1384
        %v1422 = vunpack.c.l.b16 %v1385
        %v1423 = vunpack.c.h.b16 %v1385
        %v1424 = vunpack.c.l.b16 %v1386
        %v1425 = vunpack.c.h.b16 %v1386
        %v1426 = vunpack.c.l.b16 %v1387
        %v1427 = vunpack.c.h.b16 %v1387
        %v1428 = vunpack.c.l.b16 %v1388
        %v1429 = vunpack.c.h.b16 %v1388
        %v1430 = vunpack.c.l.b16 %v1389
        %v1431 = vunpack.c.h.b16 %v1389
        %v1432 = vunpack.c.l.b16 %v1390
        %v1433 = vunpack.c.h.b16 %v1390
        %v1434 = vunpack.c.l.b16 %v1391
        %v1435 = vunpack.c.h.b16 %v1391
        %v1436 = vunpack.c.l.b16 %v1392
        %v1437 = vunpack.c.h.b16 %v1392
        %v1438 = vunpack.c.l.b16 %v1393
        %v1439 = vunpack.c.h.b16 %v1393
        %v1440 = vunpack.c.l.b16 %v1394
        %v1441 = vunpack.c.h.b16 %v1394
        %v1442 = vunpack.c.l.b16 %v1395
        %v1443 = vunpack.c.h.b16 %v1395
        %v1444 = vpack.c.b16 %v1414, %v1412
        %v1445 = vpack.c.b16 %v1415, %v1413
        %v1446 = vpack.c.b16 %v1418, %v1416
        %v1447 = vpack.c.b16 %v1419, %v1417
        %v1448 = vpack.c.b16 %v1422, %v1420
        %v1449 = vpack.c.b16 %v1423, %v1421
        %v1450 = vpack.c.b16 %v1426, %v1424
        %v1451 = vpack.c.b16 %v1427, %v1425
        %v1452 = vpack.c.b16 %v1430, %v1428
        %v1453 = vpack.c.b16 %v1431, %v1429
        %v1454 = vpack.c.b16 %v1434, %v1432
        %v1455 = vpack.c.b16 %v1435, %v1433
        %v1456 = vpack.c.b16 %v1438, %v1436
        %v1457 = vpack.c.b16 %v1439, %v1437
        %v1458 = vpack.c.b16 %v1442, %v1440
        %v1459 = vpack.c.b16 %v1443, %v1441
        %1476 = vmatprep.subr.bf16.mxu0 %v1445
        %1477 = vmatpush1.bf16.msra.mxu0 %v1444
        %1478 = vmatprep.subr.bf16.mxu0 %v1447
        %1479 = vmatpush1.bf16.msra.mxu0 %v1446
        %1480 = vmatprep.subr.bf16.mxu0 %v1449
        %1481 = vmatpush1.bf16.msra.mxu0 %v1448
        %1482 = vmatprep.subr.bf16.mxu0 %v1451
        %1483 = vmatpush1.bf16.msra.mxu0 %v1450
        %1484 = vmatprep.subr.bf16.mxu0 %v1453
        %1485 = vmatpush1.bf16.msra.mxu0 %v1452
        %1486 = vmatprep.subr.bf16.mxu0 %v1455
        %1487 = vmatpush1.bf16.msra.mxu0 %v1454
        %1488 = vmatprep.subr.bf16.mxu0 %v1457
        %1489 = vmatpush1.bf16.msra.mxu0 %v1456
        %1490 = vmatprep.subr.bf16.mxu0 %v1459
        %1491 = vmatpush1.bf16.msra.mxu0 %v1458
        %1492 = vmatprep.subr.bf16.mxu0 0
        %1493 = vmatpush1.bf16.msra.mxu0 0
        %1494 = vmatprep.subr.bf16.mxu0 0
        %1495 = vmatpush1.bf16.msra.mxu0 0
        %1496 = vmatprep.subr.bf16.mxu0 0
        %1497 = vmatpush1.bf16.msra.mxu0 0
        %1498 = vmatprep.subr.bf16.mxu0 0
        %1499 = vmatpush1.bf16.msra.mxu0 0
        %1500 = vmatprep.subr.bf16.mxu0 0
        %1501 = vmatpush1.bf16.msra.mxu0 0
        %1502 = vmatprep.subr.bf16.mxu0 0
        %1503 = vmatpush1.bf16.msra.mxu0 0
        %1504 = vmatprep.subr.bf16.mxu0 0
        %1505 = vmatpush1.bf16.msra.mxu0 0
        %1506 = vmatprep.subr.bf16.mxu0 0
        %1507 = vmatpush1.bf16.msra.mxu0 0
        %1508 = vmatprep.mubr.bf16.mxu0 0
        %1509 = vmatmul.mubr.bf16.gmra.mrb[0].mxu0 %v1378
        %v1510 = vpop.f32.mrb[0].mxu0
        %v1511 = vadd.f32 0.0, %v1510
        %v1512 = vpop.f32.mrb[0].mxu0
        %v1513 = vadd.f32 0.0, %v1512
        %v1514 = vpop.f32.mrb[0].mxu0
        %v1515 = vpop.f32.mrb[0].mxu0
        %1516 = vdwg.mxu0
        %v1533 = vunpack.c.l.b16 %v1361
        %v1534 = vunpack.c.h.b16 %v1361
        %v1535 = vunpack.c.l.b16 %v1362
        %v1536 = vunpack.c.h.b16 %v1362
        %v1537 = vunpack.c.l.b16 %v1363
        %v1538 = vunpack.c.h.b16 %v1363
        %v1539 = vunpack.c.l.b16 %v1364
        %v1540 = vunpack.c.h.b16 %v1364
        %v1541 = vunpack.c.l.b16 %v1365
        %v1542 = vunpack.c.h.b16 %v1365
        %v1543 = vunpack.c.l.b16 %v1366
        %v1544 = vunpack.c.h.b16 %v1366
        %v1545 = vunpack.c.l.b16 %v1367
        %v1546 = vunpack.c.h.b16 %v1367
        %v1547 = vunpack.c.l.b16 %v1368
        %v1548 = vunpack.c.h.b16 %v1368
        %v1549 = vunpack.c.l.b16 %v1369
        %v1550 = vunpack.c.h.b16 %v1369
        %v1551 = vunpack.c.l.b16 %v1370
        %v1552 = vunpack.c.h.b16 %v1370
        %v1553 = vunpack.c.l.b16 %v1371
        %v1554 = vunpack.c.h.b16 %v1371
        %v1555 = vunpack.c.l.b16 %v1372
        %v1556 = vunpack.c.h.b16 %v1372
        %v1557 = vunpack.c.l.b16 %v1373
        %v1558 = vunpack.c.h.b16 %v1373
        %v1559 = vunpack.c.l.b16 %v1374
        %v1560 = vunpack.c.h.b16 %v1374
        %v1561 = vunpack.c.l.b16 %v1375
        %v1562 = vunpack.c.h.b16 %v1375
        %v1563 = vunpack.c.l.b16 %v1376
        %v1564 = vunpack.c.h.b16 %v1376
        %v1565 = vpack.c.b16 %v1535, %v1533
        %v1566 = vpack.c.b16 %v1536, %v1534
        %v1567 = vpack.c.b16 %v1539, %v1537
        %v1568 = vpack.c.b16 %v1540, %v1538
        %v1569 = vpack.c.b16 %v1543, %v1541
        %v1570 = vpack.c.b16 %v1544, %v1542
        %v1571 = vpack.c.b16 %v1547, %v1545
        %v1572 = vpack.c.b16 %v1548, %v1546
        %v1573 = vpack.c.b16 %v1551, %v1549
        %v1574 = vpack.c.b16 %v1552, %v1550
        %v1575 = vpack.c.b16 %v1555, %v1553
        %v1576 = vpack.c.b16 %v1556, %v1554
        %v1577 = vpack.c.b16 %v1559, %v1557
        %v1578 = vpack.c.b16 %v1560, %v1558
        %v1579 = vpack.c.b16 %v1563, %v1561
        %v1580 = vpack.c.b16 %v1564, %v1562
        %1597 = vmatprep.subr.bf16.mxu0 %v1566
        %1598 = vmatpush1.bf16.msra.mxu0 %v1565
        %1599 = vmatprep.subr.bf16.mxu0 %v1568
        %1600 = vmatpush1.bf16.msra.mxu0 %v1567
        %1601 = vmatprep.subr.bf16.mxu0 %v1570
        %1602 = vmatpush1.bf16.msra.mxu0 %v1569
        %1603 = vmatprep.subr.bf16.mxu0 %v1572
        %1604 = vmatpush1.bf16.msra.mxu0 %v1571
        %1605 = vmatprep.subr.bf16.mxu0 %v1574
        %1606 = vmatpush1.bf16.msra.mxu0 %v1573
        %1607 = vmatprep.subr.bf16.mxu0 %v1576
        %1608 = vmatpush1.bf16.msra.mxu0 %v1575
        %1609 = vmatprep.subr.bf16.mxu0 %v1578
        %1610 = vmatpush1.bf16.msra.mxu0 %v1577
        %1611 = vmatprep.subr.bf16.mxu0 %v1580
        %1612 = vmatpush1.bf16.msra.mxu0 %v1579
        %1613 = vmatprep.subr.bf16.mxu0 0
        %1614 = vmatpush1.bf16.msra.mxu0 0
        %1615 = vmatprep.subr.bf16.mxu0 0
        %1616 = vmatpush1.bf16.msra.mxu0 0
        %1617 = vmatprep.subr.bf16.mxu0 0
        %1618 = vmatpush1.bf16.msra.mxu0 0
        %1619 = vmatprep.subr.bf16.mxu0 0
        %1620 = vmatpush1.bf16.msra.mxu0 0
        %1621 = vmatprep.subr.bf16.mxu0 0
        %1622 = vmatpush1.bf16.msra.mxu0 0
        %1623 = vmatprep.subr.bf16.mxu0 0
        %1624 = vmatpush1.bf16.msra.mxu0 0
        %1625 = vmatprep.subr.bf16.mxu0 0
        %1626 = vmatpush1.bf16.msra.mxu0 0
        %1627 = vmatprep.subr.bf16.mxu0 0
        %1628 = vmatpush1.bf16.msra.mxu0 0
        %1629 = vmatprep.mubr.bf16.mxu0 0
        %1630 = vmatmul.mubr.bf16.gmra.mrb[0].mxu0 %v1360
        %v1631 = vpop.f32.mrb[0].mxu0
        %v1632 = vadd.f32 %v1511, %v1631
        %v1633 = vpop.f32.mrb[0].mxu0
        %v1634 = vadd.f32 %v1513, %v1633
        %v1635 = vpop.f32.mrb[0].mxu0
        %v1636 = vpop.f32.mrb[0].mxu0
        %1637 = vdwg.mxu0
        %v1638 = vld [vmem:[#allocation2 + $0x2] sm:$0xff]
        %v1639 = vpack.c.bf16 %v1638, %v1638
        %s1640 = scalar_lea.vmem [#allocation9], 256
        %v1641 = vld [vmem:[%s1640] sm:$0xff]
        %v1642 = vld [vmem:[%s1640 + $0x8] sm:$0xff]
        %v1643 = vld [vmem:[%s1640 + $0x10] sm:$0xff]
        %v1644 = vld [vmem:[%s1640 + $0x18] sm:$0xff]
        %v1645 = vld [vmem:[%s1640 + $0x20] sm:$0xff]
        %v1646 = vld [vmem:[%s1640 + $0x28] sm:$0xff]
        %v1647 = vld [vmem:[%s1640 + $0x30] sm:$0xff]
        %v1648 = vld [vmem:[%s1640 + $0x38] sm:$0xff]
        %v1649 = vld [vmem:[%s1640 + $0x40] sm:$0xff]
        %v1650 = vld [vmem:[%s1640 + $0x48] sm:$0xff]
        %v1651 = vld [vmem:[%s1640 + $0x50] sm:$0xff]
        %v1652 = vld [vmem:[%s1640 + $0x58] sm:$0xff]
        %v1653 = vld [vmem:[%s1640 + $0x60] sm:$0xff]
        %v1654 = vld [vmem:[%s1640 + $0x68] sm:$0xff]
        %v1655 = vld [vmem:[%s1640 + $0x70] sm:$0xff]
        %v1656 = vld [vmem:[%s1640 + $0x78] sm:$0xff]
        %v1673 = vunpack.c.l.b16 %v1641
        %v1674 = vunpack.c.h.b16 %v1641
        %v1675 = vunpack.c.l.b16 %v1642
        %v1676 = vunpack.c.h.b16 %v1642
        %v1677 = vunpack.c.l.b16 %v1643
        %v1678 = vunpack.c.h.b16 %v1643
        %v1679 = vunpack.c.l.b16 %v1644
        %v1680 = vunpack.c.h.b16 %v1644
        %v1681 = vunpack.c.l.b16 %v1645
        %v1682 = vunpack.c.h.b16 %v1645
        %v1683 = vunpack.c.l.b16 %v1646
        %v1684 = vunpack.c.h.b16 %v1646
        %v1685 = vunpack.c.l.b16 %v1647
        %v1686 = vunpack.c.h.b16 %v1647
        %v1687 = vunpack.c.l.b16 %v1648
        %v1688 = vunpack.c.h.b16 %v1648
        %v1689 = vunpack.c.l.b16 %v1649
        %v1690 = vunpack.c.h.b16 %v1649
        %v1691 = vunpack.c.l.b16 %v1650
        %v1692 = vunpack.c.h.b16 %v1650
        %v1693 = vunpack.c.l.b16 %v1651
        %v1694 = vunpack.c.h.b16 %v1651
        %v1695 = vunpack.c.l.b16 %v1652
        %v1696 = vunpack.c.h.b16 %v1652
        %v1697 = vunpack.c.l.b16 %v1653
        %v1698 = vunpack.c.h.b16 %v1653
        %v1699 = vunpack.c.l.b16 %v1654
        %v1700 = vunpack.c.h.b16 %v1654
        %v1701 = vunpack.c.l.b16 %v1655
        %v1702 = vunpack.c.h.b16 %v1655
        %v1703 = vunpack.c.l.b16 %v1656
        %v1704 = vunpack.c.h.b16 %v1656
        %v1705 = vpack.c.b16 %v1675, %v1673
        %v1706 = vpack.c.b16 %v1676, %v1674
        %v1707 = vpack.c.b16 %v1679, %v1677
        %v1708 = vpack.c.b16 %v1680, %v1678
        %v1709 = vpack.c.b16 %v1683, %v1681
        %v1710 = vpack.c.b16 %v1684, %v1682
        %v1711 = vpack.c.b16 %v1687, %v1685
        %v1712 = vpack.c.b16 %v1688, %v1686
        %v1713 = vpack.c.b16 %v1691, %v1689
        %v1714 = vpack.c.b16 %v1692, %v1690
        %v1715 = vpack.c.b16 %v1695, %v1693
        %v1716 = vpack.c.b16 %v1696, %v1694
        %v1717 = vpack.c.b16 %v1699, %v1697
        %v1718 = vpack.c.b16 %v1700, %v1698
        %v1719 = vpack.c.b16 %v1703, %v1701
        %v1720 = vpack.c.b16 %v1704, %v1702
        %1737 = vmatprep.subr.bf16.mxu0 %v1706
        %1738 = vmatpush1.bf16.msra.mxu0 %v1705
        %1739 = vmatprep.subr.bf16.mxu0 %v1708
        %1740 = vmatpush1.bf16.msra.mxu0 %v1707
        %1741 = vmatprep.subr.bf16.mxu0 %v1710
        %1742 = vmatpush1.bf16.msra.mxu0 %v1709
        %1743 = vmatprep.subr.bf16.mxu0 %v1712
        %1744 = vmatpush1.bf16.msra.mxu0 %v1711
        %1745 = vmatprep.subr.bf16.mxu0 %v1714
        %1746 = vmatpush1.bf16.msra.mxu0 %v1713
        %1747 = vmatprep.subr.bf16.mxu0 %v1716
        %1748 = vmatpush1.bf16.msra.mxu0 %v1715
        %1749 = vmatprep.subr.bf16.mxu0 %v1718
        %1750 = vmatpush1.bf16.msra.mxu0 %v1717
        %1751 = vmatprep.subr.bf16.mxu0 %v1720
        %1752 = vmatpush1.bf16.msra.mxu0 %v1719
        %1753 = vmatprep.subr.bf16.mxu0 0
        %1754 = vmatpush1.bf16.msra.mxu0 0
        %1755 = vmatprep.subr.bf16.mxu0 0
        %1756 = vmatpush1.bf16.msra.mxu0 0
        %1757 = vmatprep.subr.bf16.mxu0 0
        %1758 = vmatpush1.bf16.msra.mxu0 0
        %1759 = vmatprep.subr.bf16.mxu0 0
        %1760 = vmatpush1.bf16.msra.mxu0 0
        %1761 = vmatprep.subr.bf16.mxu0 0
        %1762 = vmatpush1.bf16.msra.mxu0 0
        %1763 = vmatprep.subr.bf16.mxu0 0
        %1764 = vmatpush1.bf16.msra.mxu0 0
        %1765 = vmatprep.subr.bf16.mxu0 0
        %1766 = vmatpush1.bf16.msra.mxu0 0
        %1767 = vmatprep.subr.bf16.mxu0 0
        %1768 = vmatpush1.bf16.msra.mxu0 0
        %1769 = vmatprep.mubr.bf16.mxu0 0
        %1770 = vmatmul.mubr.bf16.gmra.mrb[0].mxu0 %v1639
        %v1771 = vpop.f32.mrb[0].mxu0
        %v1772 = vadd.f32 0.0, %v1771
        %v1773 = vpop.f32.mrb[0].mxu0
        %v1774 = vadd.f32 0.0, %v1773
        %v1775 = vpop.f32.mrb[0].mxu0
        %v1776 = vpop.f32.mrb[0].mxu0
        %1777 = vdwg.mxu0
        %v1778 = vadd.f32 %v1632, %v1772
        %v1779 = vadd.f32 %v1634, %v1774
        %v1780 = vld [vmem:[#allocation2 + $0x3] sm:$0xff]
        %v1781 = vpack.c.bf16 %v1780, %v1780
        %s1782 = scalar_lea.vmem [#allocation9], 384
        %v1783 = vld [vmem:[%s1782] sm:$0xff]
        %v1784 = vld [vmem:[%s1782 + $0x8] sm:$0xff]
        %v1785 = vld [vmem:[%s1782 + $0x10] sm:$0xff]
        %v1786 = vld [vmem:[%s1782 + $0x18] sm:$0xff]
        %v1787 = vld [vmem:[%s1782 + $0x20] sm:$0xff]
        %v1788 = vld [vmem:[%s1782 + $0x28] sm:$0xff]
        %v1789 = vld [vmem:[%s1782 + $0x30] sm:$0xff]
        %v1790 = vld [vmem:[%s1782 + $0x38] sm:$0xff]
        %v1791 = vld [vmem:[%s1782 + $0x40] sm:$0xff]
        %v1792 = vld [vmem:[%s1782 + $0x48] sm:$0xff]
        %v1793 = vld [vmem:[%s1782 + $0x50] sm:$0xff]
        %v1794 = vld [vmem:[%s1782 + $0x58] sm:$0xff]
        %v1795 = vld [vmem:[%s1782 + $0x60] sm:$0xff]
        %v1796 = vld [vmem:[%s1782 + $0x68] sm:$0xff]
        %v1797 = vld [vmem:[%s1782 + $0x70] sm:$0xff]
        %v1798 = vld [vmem:[%s1782 + $0x78] sm:$0xff]
        %v1815 = vunpack.c.l.b16 %v1783
        %v1816 = vunpack.c.h.b16 %v1783
        %v1817 = vunpack.c.l.b16 %v1784
        %v1818 = vunpack.c.h.b16 %v1784
        %v1819 = vunpack.c.l.b16 %v1785
        %v1820 = vunpack.c.h.b16 %v1785
        %v1821 = vunpack.c.l.b16 %v1786
        %v1822 = vunpack.c.h.b16 %v1786
        %v1823 = vunpack.c.l.b16 %v1787
        %v1824 = vunpack.c.h.b16 %v1787
        %v1825 = vunpack.c.l.b16 %v1788
        %v1826 = vunpack.c.h.b16 %v1788
        %v1827 = vunpack.c.l.b16 %v1789
        %v1828 = vunpack.c.h.b16 %v1789
        %v1829 = vunpack.c.l.b16 %v1790
        %v1830 = vunpack.c.h.b16 %v1790
        %v1831 = vunpack.c.l.b16 %v1791
        %v1832 = vunpack.c.h.b16 %v1791
        %v1833 = vunpack.c.l.b16 %v1792
        %v1834 = vunpack.c.h.b16 %v1792
        %v1835 = vunpack.c.l.b16 %v1793
        %v1836 = vunpack.c.h.b16 %v1793
        %v1837 = vunpack.c.l.b16 %v1794
        %v1838 = vunpack.c.h.b16 %v1794
        %v1839 = vunpack.c.l.b16 %v1795
        %v1840 = vunpack.c.h.b16 %v1795
        %v1841 = vunpack.c.l.b16 %v1796
        %v1842 = vunpack.c.h.b16 %v1796
        %v1843 = vunpack.c.l.b16 %v1797
        %v1844 = vunpack.c.h.b16 %v1797
        %v1845 = vunpack.c.l.b16 %v1798
        %v1846 = vunpack.c.h.b16 %v1798
        %v1847 = vpack.c.b16 %v1817, %v1815
        %v1848 = vpack.c.b16 %v1818, %v1816
        %v1849 = vpack.c.b16 %v1821, %v1819
        %v1850 = vpack.c.b16 %v1822, %v1820
        %v1851 = vpack.c.b16 %v1825, %v1823
        %v1852 = vpack.c.b16 %v1826, %v1824
        %v1853 = vpack.c.b16 %v1829, %v1827
        %v1854 = vpack.c.b16 %v1830, %v1828
        %v1855 = vpack.c.b16 %v1833, %v1831
        %v1856 = vpack.c.b16 %v1834, %v1832
        %v1857 = vpack.c.b16 %v1837, %v1835
        %v1858 = vpack.c.b16 %v1838, %v1836
        %v1859 = vpack.c.b16 %v1841, %v1839
        %v1860 = vpack.c.b16 %v1842, %v1840
        %v1861 = vpack.c.b16 %v1845, %v1843
        %v1862 = vpack.c.b16 %v1846, %v1844
        %1879 = vmatprep.subr.bf16.mxu0 %v1848
        %1880 = vmatpush1.bf16.msra.mxu0 %v1847
        %1881 = vmatprep.subr.bf16.mxu0 %v1850
        %1882 = vmatpush1.bf16.msra.mxu0 %v1849
        %1883 = vmatprep.subr.bf16.mxu0 %v1852
        %1884 = vmatpush1.bf16.msra.mxu0 %v1851
        %1885 = vmatprep.subr.bf16.mxu0 %v1854
        %1886 = vmatpush1.bf16.msra.mxu0 %v1853
        %1887 = vmatprep.subr.bf16.mxu0 %v1856
        %1888 = vmatpush1.bf16.msra.mxu0 %v1855
        %1889 = vmatprep.subr.bf16.mxu0 %v1858
        %1890 = vmatpush1.bf16.msra.mxu0 %v1857
        %1891 = vmatprep.subr.bf16.mxu0 %v1860
        %1892 = vmatpush1.bf16.msra.mxu0 %v1859
        %1893 = vmatprep.subr.bf16.mxu0 %v1862
        %1894 = vmatpush1.bf16.msra.mxu0 %v1861
        %1895 = vmatprep.subr.bf16.mxu0 0
        %1896 = vmatpush1.bf16.msra.mxu0 0
        %1897 = vmatprep.subr.bf16.mxu0 0
        %1898 = vmatpush1.bf16.msra.mxu0 0
        %1899 = vmatprep.subr.bf16.mxu0 0
        %1900 = vmatpush1.bf16.msra.mxu0 0
        %1901 = vmatprep.subr.bf16.mxu0 0
        %1902 = vmatpush1.bf16.msra.mxu0 0
        %1903 = vmatprep.subr.bf16.mxu0 0
        %1904 = vmatpush1.bf16.msra.mxu0 0
        %1905 = vmatprep.subr.bf16.mxu0 0
        %1906 = vmatpush1.bf16.msra.mxu0 0
        %1907 = vmatprep.subr.bf16.mxu0 0
        %1908 = vmatpush1.bf16.msra.mxu0 0
        %1909 = vmatprep.subr.bf16.mxu0 0
        %1910 = vmatpush1.bf16.msra.mxu0 0
        %1911 = vmatprep.mubr.bf16.mxu0 0
        %1912 = vmatmul.mubr.bf16.gmra.mrb[0].mxu0 %v1781
        %v1913 = vpop.f32.mrb[0].mxu0
        %v1914 = vadd.f32 0.0, %v1913
        %v1915 = vpop.f32.mrb[0].mxu0
        %v1916 = vadd.f32 0.0, %v1915
        %v1917 = vpop.f32.mrb[0].mxu0
        %v1918 = vpop.f32.mrb[0].mxu0
        %1919 = vdwg.mxu0
        %v1920 = vadd.f32 %v1778, %v1914
        %v1921 = vadd.f32 %v1779, %v1916
        %v1922 = vld [vmem:[#allocation2 + $0x4] sm:$0xff]
        %v1923 = vpack.c.bf16 %v1922, %v1922
        %s1924 = scalar_lea.vmem [#allocation9], 512
        %v1925 = vld [vmem:[%s1924] sm:$0xff]
        %v1926 = vld [vmem:[%s1924 + $0x8] sm:$0xff]
        %v1927 = vld [vmem:[%s1924 + $0x10] sm:$0xff]
        %v1928 = vld [vmem:[%s1924 + $0x18] sm:$0xff]
        %v1929 = vld [vmem:[%s1924 + $0x20] sm:$0xff]
        %v1930 = vld [vmem:[%s1924 + $0x28] sm:$0xff]
        %v1931 = vld [vmem:[%s1924 + $0x30] sm:$0xff]
        %v1932 = vld [vmem:[%s1924 + $0x38] sm:$0xff]
        %v1933 = vld [vmem:[%s1924 + $0x40] sm:$0xff]
        %v1934 = vld [vmem:[%s1924 + $0x48] sm:$0xff]
        %v1935 = vld [vmem:[%s1924 + $0x50] sm:$0xff]
        %v1936 = vld [vmem:[%s1924 + $0x58] sm:$0xff]
        %v1937 = vld [vmem:[%s1924 + $0x60] sm:$0xff]
        %v1938 = vld [vmem:[%s1924 + $0x68] sm:$0xff]
        %v1939 = vld [vmem:[%s1924 + $0x70] sm:$0xff]
        %v1940 = vld [vmem:[%s1924 + $0x78] sm:$0xff]
        %v1957 = vunpack.c.l.b16 %v1925
        %v1958 = vunpack.c.h.b16 %v1925
        %v1959 = vunpack.c.l.b16 %v1926
        %v1960 = vunpack.c.h.b16 %v1926
        %v1961 = vunpack.c.l.b16 %v1927
        %v1962 = vunpack.c.h.b16 %v1927
        %v1963 = vunpack.c.l.b16 %v1928
        %v1964 = vunpack.c.h.b16 %v1928
        %v1965 = vunpack.c.l.b16 %v1929
        %v1966 = vunpack.c.h.b16 %v1929
        %v1967 = vunpack.c.l.b16 %v1930
        %v1968 = vunpack.c.h.b16 %v1930
        %v1969 = vunpack.c.l.b16 %v1931
        %v1970 = vunpack.c.h.b16 %v1931
        %v1971 = vunpack.c.l.b16 %v1932
        %v1972 = vunpack.c.h.b16 %v1932
        %v1973 = vunpack.c.l.b16 %v1933
        %v1974 = vunpack.c.h.b16 %v1933
        %v1975 = vunpack.c.l.b16 %v1934
        %v1976 = vunpack.c.h.b16 %v1934
        %v1977 = vunpack.c.l.b16 %v1935
        %v1978 = vunpack.c.h.b16 %v1935
        %v1979 = vunpack.c.l.b16 %v1936
        %v1980 = vunpack.c.h.b16 %v1936
        %v1981 = vunpack.c.l.b16 %v1937
        %v1982 = vunpack.c.h.b16 %v1937
        %v1983 = vunpack.c.l.b16 %v1938
        %v1984 = vunpack.c.h.b16 %v1938
        %v1985 = vunpack.c.l.b16 %v1939
        %v1986 = vunpack.c.h.b16 %v1939
        %v1987 = vunpack.c.l.b16 %v1940
        %v1988 = vunpack.c.h.b16 %v1940
        %v1989 = vpack.c.b16 %v1959, %v1957
        %v1990 = vpack.c.b16 %v1960, %v1958
        %v1991 = vpack.c.b16 %v1963, %v1961
        %v1992 = vpack.c.b16 %v1964, %v1962
        %v1993 = vpack.c.b16 %v1967, %v1965
        %v1994 = vpack.c.b16 %v1968, %v1966
        %v1995 = vpack.c.b16 %v1971, %v1969
        %v1996 = vpack.c.b16 %v1972, %v1970
        %v1997 = vpack.c.b16 %v1975, %v1973
        %v1998 = vpack.c.b16 %v1976, %v1974
        %v1999 = vpack.c.b16 %v1979, %v1977
        %v2000 = vpack.c.b16 %v1980, %v1978
        %v2001 = vpack.c.b16 %v1983, %v1981
        %v2002 = vpack.c.b16 %v1984, %v1982
        %v2003 = vpack.c.b16 %v1987, %v1985
        %v2004 = vpack.c.b16 %v1988, %v1986
        %2021 = vmatprep.subr.bf16.mxu0 %v1990
        %2022 = vmatpush1.bf16.msra.mxu0 %v1989
        %2023 = vmatprep.subr.bf16.mxu0 %v1992
        %2024 = vmatpush1.bf16.msra.mxu0 %v1991
        %2025 = vmatprep.subr.bf16.mxu0 %v1994
        %2026 = vmatpush1.bf16.msra.mxu0 %v1993
        %2027 = vmatprep.subr.bf16.mxu0 %v1996
        %2028 = vmatpush1.bf16.msra.mxu0 %v1995
        %2029 = vmatprep.subr.bf16.mxu0 %v1998
        %2030 = vmatpush1.bf16.msra.mxu0 %v1997
        %2031 = vmatprep.subr.bf16.mxu0 %v2000
        %2032 = vmatpush1.bf16.msra.mxu0 %v1999
        %2033 = vmatprep.subr.bf16.mxu0 %v2002
        %2034 = vmatpush1.bf16.msra.mxu0 %v2001
        %2035 = vmatprep.subr.bf16.mxu0 %v2004
        %2036 = vmatpush1.bf16.msra.mxu0 %v2003
        %2037 = vmatprep.subr.bf16.mxu0 0
        %2038 = vmatpush1.bf16.msra.mxu0 0
        %2039 = vmatprep.subr.bf16.mxu0 0
        %2040 = vmatpush1.bf16.msra.mxu0 0
        %2041 = vmatprep.subr.bf16.mxu0 0
        %2042 = vmatpush1.bf16.msra.mxu0 0
        %2043 = vmatprep.subr.bf16.mxu0 0
        %2044 = vmatpush1.bf16.msra.mxu0 0
        %2045 = vmatprep.subr.bf16.mxu0 0
        %2046 = vmatpush1.bf16.msra.mxu0 0
        %2047 = vmatprep.subr.bf16.mxu0 0
        %2048 = vmatpush1.bf16.msra.mxu0 0
        %2049 = vmatprep.subr.bf16.mxu0 0
        %2050 = vmatpush1.bf16.msra.mxu0 0
        %2051 = vmatprep.subr.bf16.mxu0 0
        %2052 = vmatpush1.bf16.msra.mxu0 0
        %2053 = vmatprep.mubr.bf16.mxu0 0
        %2054 = vmatmul.mubr.bf16.gmra.mrb[0].mxu0 %v1923
        %v2055 = vpop.f32.mrb[0].mxu0
        %v2056 = vadd.f32 0.0, %v2055
        %v2057 = vpop.f32.mrb[0].mxu0
        %v2058 = vadd.f32 0.0, %v2057
        %v2059 = vpop.f32.mrb[0].mxu0
        %v2060 = vpop.f32.mrb[0].mxu0
        %2061 = vdwg.mxu0
        %v2062 = vadd.f32 %v1920, %v2056
        %v2063 = vadd.f32 %v1921, %v2058
        %v2064 = vmax.f32 %v2062, %v2063
        %v2065 = vld [vmem:[%s4] sm:$0x1]
        %v2067 = vlaneseq
        %v2068 = vshrl.u32 %v2067, 7
        %v2069 = vsub.s32 0, %v2068
        %v2070 = vrot.slane %v2065, %v2069
        %v2072 = vadd.f32 %v2064, %v2070
        %v2073 = vpack.c.bf16 %v2072, %v2072
        %v2074 = vpack.c.bf16 %v1255, %v1255
        %v2075 = vpack.c.bf16 %v1262, %v1262
        %vm2076 = vcmask 64512
        %v2078 = vsel %vm2076, %v2074, 0
        %vm2080 = vcmask 1043456
        %v2082 = vsel %vm2080, %v2073, 0
        %2084 = vmatprep.subr.bf16.mxu0 0
        %2085 = vmatpush1.bf16.msra.mxu0 %v2082
        %2086 = vmatprep.subr.bf16.mxu0 0
        %2087 = vmatpush1.bf16.msra.mxu0 0
        %2088 = vmatprep.subr.bf16.mxu0 0
        %2089 = vmatpush1.bf16.msra.mxu0 0
        %2090 = vmatprep.subr.bf16.mxu0 0
        %2091 = vmatpush1.bf16.msra.mxu0 0
        %2092 = vmatprep.subr.bf16.mxu0 0
        %2093 = vmatpush1.bf16.msra.mxu0 0
        %2094 = vmatprep.subr.bf16.mxu0 0
        %2095 = vmatpush1.bf16.msra.mxu0 0
        %2096 = vmatprep.subr.bf16.mxu0 0
        %2097 = vmatpush1.bf16.msra.mxu0 0
        %2098 = vmatprep.subr.bf16.mxu0 0
        %2099 = vmatpush1.bf16.msra.mxu0 0
        %2100 = vmatprep.subr.bf16.mxu0 0
        %2101 = vmatpush1.bf16.msra.mxu0 0
        %2102 = vmatprep.subr.bf16.mxu0 0
        %2103 = vmatpush1.bf16.msra.mxu0 0
        %2104 = vmatprep.subr.bf16.mxu0 0
        %2105 = vmatpush1.bf16.msra.mxu0 0
        %2106 = vmatprep.subr.bf16.mxu0 0
        %2107 = vmatpush1.bf16.msra.mxu0 0
        %2108 = vmatprep.subr.bf16.mxu0 0
        %2109 = vmatpush1.bf16.msra.mxu0 0
        %2110 = vmatprep.subr.bf16.mxu0 0
        %2111 = vmatpush1.bf16.msra.mxu0 0
        %2112 = vmatprep.subr.bf16.mxu0 0
        %2113 = vmatpush1.bf16.msra.mxu0 0
        %2114 = vmatprep.subr.bf16.mxu0 0
        %2115 = vmatpush1.bf16.msra.mxu0 0
        %2116 = vmatprep.mubr.bf16.mxu0 0
        %2117 = vmatmul.mubr.bf16.gmra.mrb[0].mxu0 %v2078
        %v2118 = vpop.f32.mrb[0].mxu0
        %v2119 = vadd.f32 0.0, %v2118
        %v2120 = vpop.f32.mrb[0].mxu0
        %v2121 = vpop.f32.mrb[0].mxu0
        %v2122 = vpop.f32.mrb[0].mxu0
        %2123 = vdwg.mxu0
        %v2125 = vsel %vm2076, %v2075, 0
        %2127 = vmatprep.subr.bf16.mxu0 0
        %2128 = vmatpush1.bf16.msra.mxu0 %v2082
        %2129 = vmatprep.subr.bf16.mxu0 0
        %2130 = vmatpush1.bf16.msra.mxu0 0
        %2131 = vmatprep.subr.bf16.mxu0 0
        %2132 = vmatpush1.bf16.msra.mxu0 0
        %2133 = vmatprep.subr.bf16.mxu0 0
        %2134 = vmatpush1.bf16.msra.mxu0 0
        %2135 = vmatprep.subr.bf16.mxu0 0
        %2136 = vmatpush1.bf16.msra.mxu0 0
        %2137 = vmatprep.subr.bf16.mxu0 0
        %2138 = vmatpush1.bf16.msra.mxu0 0
        %2139 = vmatprep.subr.bf16.mxu0 0
        %2140 = vmatpush1.bf16.msra.mxu0 0
        %2141 = vmatprep.subr.bf16.mxu0 0
        %2142 = vmatpush1.bf16.msra.mxu0 0
        %2143 = vmatprep.subr.bf16.mxu0 0
        %2144 = vmatpush1.bf16.msra.mxu0 0
        %2145 = vmatprep.subr.bf16.mxu0 0
        %2146 = vmatpush1.bf16.msra.mxu0 0
        %2147 = vmatprep.subr.bf16.mxu0 0
        %2148 = vmatpush1.bf16.msra.mxu0 0
        %2149 = vmatprep.subr.bf16.mxu0 0
        %2150 = vmatpush1.bf16.msra.mxu0 0
        %2151 = vmatprep.subr.bf16.mxu0 0
        %2152 = vmatpush1.bf16.msra.mxu0 0
        %2153 = vmatprep.subr.bf16.mxu0 0
        %2154 = vmatpush1.bf16.msra.mxu0 0
        %2155 = vmatprep.subr.bf16.mxu0 0
        %2156 = vmatpush1.bf16.msra.mxu0 0
        %2157 = vmatprep.subr.bf16.mxu0 0
        %2158 = vmatpush1.bf16.msra.mxu0 0
        %2159 = vmatprep.mubr.bf16.mxu0 0
        %2160 = vmatmul.mubr.bf16.gmra.mrb[0].mxu0 %v2125
        %v2161 = vpop.f32.mrb[0].mxu0
        %v2162 = vadd.f32 0.0, %v2161
        %v2163 = vpop.f32.mrb[0].mxu0
        %v2164 = vpop.f32.mrb[0].mxu0
        %v2165 = vpop.f32.mrb[0].mxu0
        %2166 = vdwg.mxu0
        %v2167 = vmax.f32 %v2119, %v2162
        %v2168 = vmax.f32 %v2167, 0.0
        %2169 = vst [vmem:[#allocation3] sm:$0xff] %v2168
        %v2170 = vld [vmem:[#allocation3] sm:$0xf]
        %v2171 = vpack.c.bf16 %v2170, %v2170
        %v2172 = vld [vmem:[#allocation11] sm:$0xff]
        %v2173 = vld [vmem:[#allocation11 + $0x8] sm:$0xff]
        %v2174 = vld [vmem:[#allocation11 + $0x10] sm:$0xff]
        %v2175 = vld [vmem:[#allocation11 + $0x18] sm:$0xff]
        %v2176 = vld [vmem:[#allocation11 + $0x20] sm:$0xff]
        %v2177 = vld [vmem:[#allocation11 + $0x28] sm:$0xff]
        %v2178 = vld [vmem:[#allocation11 + $0x30] sm:$0xff]
        %v2179 = vld [vmem:[#allocation11 + $0x38] sm:$0xff]
        %v2180 = vld [vmem:[#allocation11 + $0x40] sm:$0xff]
        %v2181 = vld [vmem:[#allocation11 + $0x48] sm:$0xff]
        %v2182 = vld [vmem:[#allocation11 + $0x50] sm:$0xff]
        %v2183 = vld [vmem:[#allocation11 + $0x58] sm:$0xff]
        %v2184 = vld [vmem:[#allocation11 + $0x60] sm:$0xff]
        %v2185 = vld [vmem:[#allocation11 + $0x68] sm:$0xff]
        %v2186 = vld [vmem:[#allocation11 + $0x70] sm:$0xff]
        %v2187 = vld [vmem:[#allocation11 + $0x78] sm:$0xff]
        %v2188 = vld [vmem:[#allocation3 + $0x1] sm:$0xf]
        %v2189 = vpack.c.bf16 %v2188, %v2188
        %s2190 = scalar_lea.vmem [#allocation11], 128
        %v2191 = vld [vmem:[%s2190] sm:$0xff]
        %v2192 = vld [vmem:[%s2190 + $0x8] sm:$0xff]
        %v2193 = vld [vmem:[%s2190 + $0x10] sm:$0xff]
        %v2194 = vld [vmem:[%s2190 + $0x18] sm:$0xff]
        %v2195 = vld [vmem:[%s2190 + $0x20] sm:$0xff]
        %v2196 = vld [vmem:[%s2190 + $0x28] sm:$0xff]
        %v2197 = vld [vmem:[%s2190 + $0x30] sm:$0xff]
        %v2198 = vld [vmem:[%s2190 + $0x38] sm:$0xff]
        %v2199 = vld [vmem:[%s2190 + $0x40] sm:$0xff]
        %v2200 = vld [vmem:[%s2190 + $0x48] sm:$0xff]
        %v2201 = vld [vmem:[%s2190 + $0x50] sm:$0xff]
        %v2202 = vld [vmem:[%s2190 + $0x58] sm:$0xff]
        %v2203 = vld [vmem:[%s2190 + $0x60] sm:$0xff]
        %v2204 = vld [vmem:[%s2190 + $0x68] sm:$0xff]
        %v2205 = vld [vmem:[%s2190 + $0x70] sm:$0xff]
        %v2206 = vld [vmem:[%s2190 + $0x78] sm:$0xff]
        %v2223 = vunpack.c.l.b16 %v2191
        %v2224 = vunpack.c.h.b16 %v2191
        %v2225 = vunpack.c.l.b16 %v2192
        %v2226 = vunpack.c.h.b16 %v2192
        %v2227 = vunpack.c.l.b16 %v2193
        %v2228 = vunpack.c.h.b16 %v2193
        %v2229 = vunpack.c.l.b16 %v2194
        %v2230 = vunpack.c.h.b16 %v2194
        %v2231 = vunpack.c.l.b16 %v2195
        %v2232 = vunpack.c.h.b16 %v2195
        %v2233 = vunpack.c.l.b16 %v2196
        %v2234 = vunpack.c.h.b16 %v2196
        %v2235 = vunpack.c.l.b16 %v2197
        %v2236 = vunpack.c.h.b16 %v2197
        %v2237 = vunpack.c.l.b16 %v2198
        %v2238 = vunpack.c.h.b16 %v2198
        %v2239 = vunpack.c.l.b16 %v2199
        %v2240 = vunpack.c.h.b16 %v2199
        %v2241 = vunpack.c.l.b16 %v2200
        %v2242 = vunpack.c.h.b16 %v2200
        %v2243 = vunpack.c.l.b16 %v2201
        %v2244 = vunpack.c.h.b16 %v2201
        %v2245 = vunpack.c.l.b16 %v2202
        %v2246 = vunpack.c.h.b16 %v2202
        %v2247 = vunpack.c.l.b16 %v2203
        %v2248 = vunpack.c.h.b16 %v2203
        %v2249 = vunpack.c.l.b16 %v2204
        %v2250 = vunpack.c.h.b16 %v2204
        %v2251 = vunpack.c.l.b16 %v2205
        %v2252 = vunpack.c.h.b16 %v2205
        %v2253 = vunpack.c.l.b16 %v2206
        %v2254 = vunpack.c.h.b16 %v2206
        %v2255 = vpack.c.b16 %v2225, %v2223
        %v2256 = vpack.c.b16 %v2226, %v2224
        %v2257 = vpack.c.b16 %v2229, %v2227
        %v2258 = vpack.c.b16 %v2230, %v2228
        %v2259 = vpack.c.b16 %v2233, %v2231
        %v2260 = vpack.c.b16 %v2234, %v2232
        %v2261 = vpack.c.b16 %v2237, %v2235
        %v2262 = vpack.c.b16 %v2238, %v2236
        %v2263 = vpack.c.b16 %v2241, %v2239
        %v2264 = vpack.c.b16 %v2242, %v2240
        %v2265 = vpack.c.b16 %v2245, %v2243
        %v2266 = vpack.c.b16 %v2246, %v2244
        %v2267 = vpack.c.b16 %v2249, %v2247
        %v2268 = vpack.c.b16 %v2250, %v2248
        %v2269 = vpack.c.b16 %v2253, %v2251
        %v2270 = vpack.c.b16 %v2254, %v2252
        %2287 = vmatprep.subr.bf16.mxu0 %v2256
        %2288 = vmatpush1.bf16.msra.mxu0 %v2255
        %2289 = vmatprep.subr.bf16.mxu0 %v2258
        %2290 = vmatpush1.bf16.msra.mxu0 %v2257
        %2291 = vmatprep.subr.bf16.mxu0 %v2260
        %2292 = vmatpush1.bf16.msra.mxu0 %v2259
        %2293 = vmatprep.subr.bf16.mxu0 %v2262
        %2294 = vmatpush1.bf16.msra.mxu0 %v2261
        %2295 = vmatprep.subr.bf16.mxu0 %v2264
        %2296 = vmatpush1.bf16.msra.mxu0 %v2263
        %2297 = vmatprep.subr.bf16.mxu0 %v2266
        %2298 = vmatpush1.bf16.msra.mxu0 %v2265
        %2299 = vmatprep.subr.bf16.mxu0 %v2268
        %2300 = vmatpush1.bf16.msra.mxu0 %v2267
        %2301 = vmatprep.subr.bf16.mxu0 %v2270
        %2302 = vmatpush1.bf16.msra.mxu0 %v2269
        %2303 = vmatprep.subr.bf16.mxu0 0
        %2304 = vmatpush1.bf16.msra.mxu0 0
        %2305 = vmatprep.subr.bf16.mxu0 0
        %2306 = vmatpush1.bf16.msra.mxu0 0
        %2307 = vmatprep.subr.bf16.mxu0 0
        %2308 = vmatpush1.bf16.msra.mxu0 0
        %2309 = vmatprep.subr.bf16.mxu0 0
        %2310 = vmatpush1.bf16.msra.mxu0 0
        %2311 = vmatprep.subr.bf16.mxu0 0
        %2312 = vmatpush1.bf16.msra.mxu0 0
        %2313 = vmatprep.subr.bf16.mxu0 0
        %2314 = vmatpush1.bf16.msra.mxu0 0
        %2315 = vmatprep.subr.bf16.mxu0 0
        %2316 = vmatpush1.bf16.msra.mxu0 0
        %2317 = vmatprep.subr.bf16.mxu0 0
        %2318 = vmatpush1.bf16.msra.mxu0 0
        %2319 = vmatprep.mubr.bf16.mxu0 0
        %2320 = vmatmul.mubr.bf16.gmra.mrb[0].mxu0 %v2189
        %v2321 = vpop.f32.mrb[0].mxu0
        %v2322 = vadd.f32 0.0, %v2321
        %v2323 = vpop.f32.mrb[0].mxu0
        %v2324 = vadd.f32 0.0, %v2323
        %v2325 = vpop.f32.mrb[0].mxu0
        %v2326 = vpop.f32.mrb[0].mxu0
        %2327 = vdwg.mxu0
        %v2344 = vunpack.c.l.b16 %v2172
        %v2345 = vunpack.c.h.b16 %v2172
        %v2346 = vunpack.c.l.b16 %v2173
        %v2347 = vunpack.c.h.b16 %v2173
        %v2348 = vunpack.c.l.b16 %v2174
        %v2349 = vunpack.c.h.b16 %v2174
        %v2350 = vunpack.c.l.b16 %v2175
        %v2351 = vunpack.c.h.b16 %v2175
        %v2352 = vunpack.c.l.b16 %v2176
        %v2353 = vunpack.c.h.b16 %v2176
        %v2354 = vunpack.c.l.b16 %v2177
        %v2355 = vunpack.c.h.b16 %v2177
        %v2356 = vunpack.c.l.b16 %v2178
        %v2357 = vunpack.c.h.b16 %v2178
        %v2358 = vunpack.c.l.b16 %v2179
        %v2359 = vunpack.c.h.b16 %v2179
        %v2360 = vunpack.c.l.b16 %v2180
        %v2361 = vunpack.c.h.b16 %v2180
        %v2362 = vunpack.c.l.b16 %v2181
        %v2363 = vunpack.c.h.b16 %v2181
        %v2364 = vunpack.c.l.b16 %v2182
        %v2365 = vunpack.c.h.b16 %v2182
        %v2366 = vunpack.c.l.b16 %v2183
        %v2367 = vunpack.c.h.b16 %v2183
        %v2368 = vunpack.c.l.b16 %v2184
        %v2369 = vunpack.c.h.b16 %v2184
        %v2370 = vunpack.c.l.b16 %v2185
        %v2371 = vunpack.c.h.b16 %v2185
        %v2372 = vunpack.c.l.b16 %v2186
        %v2373 = vunpack.c.h.b16 %v2186
        %v2374 = vunpack.c.l.b16 %v2187
        %v2375 = vunpack.c.h.b16 %v2187
        %v2376 = vpack.c.b16 %v2346, %v2344
        %v2377 = vpack.c.b16 %v2347, %v2345
        %v2378 = vpack.c.b16 %v2350, %v2348
        %v2379 = vpack.c.b16 %v2351, %v2349
        %v2380 = vpack.c.b16 %v2354, %v2352
        %v2381 = vpack.c.b16 %v2355, %v2353
        %v2382 = vpack.c.b16 %v2358, %v2356
        %v2383 = vpack.c.b16 %v2359, %v2357
        %v2384 = vpack.c.b16 %v2362, %v2360
        %v2385 = vpack.c.b16 %v2363, %v2361
        %v2386 = vpack.c.b16 %v2366, %v2364
        %v2387 = vpack.c.b16 %v2367, %v2365
        %v2388 = vpack.c.b16 %v2370, %v2368
        %v2389 = vpack.c.b16 %v2371, %v2369
        %v2390 = vpack.c.b16 %v2374, %v2372
        %v2391 = vpack.c.b16 %v2375, %v2373
        %2408 = vmatprep.subr.bf16.mxu0 %v2377
        %2409 = vmatpush1.bf16.msra.mxu0 %v2376
        %2410 = vmatprep.subr.bf16.mxu0 %v2379
        %2411 = vmatpush1.bf16.msra.mxu0 %v2378
        %2412 = vmatprep.subr.bf16.mxu0 %v2381
        %2413 = vmatpush1.bf16.msra.mxu0 %v2380
        %2414 = vmatprep.subr.bf16.mxu0 %v2383
        %2415 = vmatpush1.bf16.msra.mxu0 %v2382
        %2416 = vmatprep.subr.bf16.mxu0 %v2385
        %2417 = vmatpush1.bf16.msra.mxu0 %v2384
        %2418 = vmatprep.subr.bf16.mxu0 %v2387
        %2419 = vmatpush1.bf16.msra.mxu0 %v2386
        %2420 = vmatprep.subr.bf16.mxu0 %v2389
        %2421 = vmatpush1.bf16.msra.mxu0 %v2388
        %2422 = vmatprep.subr.bf16.mxu0 %v2391
        %2423 = vmatpush1.bf16.msra.mxu0 %v2390
        %2424 = vmatprep.subr.bf16.mxu0 0
        %2425 = vmatpush1.bf16.msra.mxu0 0
        %2426 = vmatprep.subr.bf16.mxu0 0
        %2427 = vmatpush1.bf16.msra.mxu0 0
        %2428 = vmatprep.subr.bf16.mxu0 0
        %2429 = vmatpush1.bf16.msra.mxu0 0
        %2430 = vmatprep.subr.bf16.mxu0 0
        %2431 = vmatpush1.bf16.msra.mxu0 0
        %2432 = vmatprep.subr.bf16.mxu0 0
        %2433 = vmatpush1.bf16.msra.mxu0 0
        %2434 = vmatprep.subr.bf16.mxu0 0
        %2435 = vmatpush1.bf16.msra.mxu0 0
        %2436 = vmatprep.subr.bf16.mxu0 0
        %2437 = vmatpush1.bf16.msra.mxu0 0
        %2438 = vmatprep.subr.bf16.mxu0 0
        %2439 = vmatpush1.bf16.msra.mxu0 0
        %2440 = vmatprep.mubr.bf16.mxu0 0
        %2441 = vmatmul.mubr.bf16.gmra.mrb[0].mxu0 %v2171
        %v2442 = vpop.f32.mrb[0].mxu0
        %v2443 = vadd.f32 %v2322, %v2442
        %v2444 = vpop.f32.mrb[0].mxu0
        %v2445 = vadd.f32 %v2324, %v2444
        %v2446 = vpop.f32.mrb[0].mxu0
        %v2447 = vpop.f32.mrb[0].mxu0
        %2448 = vdwg.mxu0
        %v2449 = vld [vmem:[#allocation3 + $0x2] sm:$0xf]
        %v2450 = vpack.c.bf16 %v2449, %v2449
        %s2451 = scalar_lea.vmem [#allocation11], 256
        %v2452 = vld [vmem:[%s2451] sm:$0xff]
        %v2453 = vld [vmem:[%s2451 + $0x8] sm:$0xff]
        %v2454 = vld [vmem:[%s2451 + $0x10] sm:$0xff]
        %v2455 = vld [vmem:[%s2451 + $0x18] sm:$0xff]
        %v2456 = vld [vmem:[%s2451 + $0x20] sm:$0xff]
        %v2457 = vld [vmem:[%s2451 + $0x28] sm:$0xff]
        %v2458 = vld [vmem:[%s2451 + $0x30] sm:$0xff]
        %v2459 = vld [vmem:[%s2451 + $0x38] sm:$0xff]
        %v2460 = vld [vmem:[%s2451 + $0x40] sm:$0xff]
        %v2461 = vld [vmem:[%s2451 + $0x48] sm:$0xff]
        %v2462 = vld [vmem:[%s2451 + $0x50] sm:$0xff]
        %v2463 = vld [vmem:[%s2451 + $0x58] sm:$0xff]
        %v2464 = vld [vmem:[%s2451 + $0x60] sm:$0xff]
        %v2465 = vld [vmem:[%s2451 + $0x68] sm:$0xff]
        %v2466 = vld [vmem:[%s2451 + $0x70] sm:$0xff]
        %v2467 = vld [vmem:[%s2451 + $0x78] sm:$0xff]
        %v2484 = vunpack.c.l.b16 %v2452
        %v2485 = vunpack.c.h.b16 %v2452
        %v2486 = vunpack.c.l.b16 %v2453
        %v2487 = vunpack.c.h.b16 %v2453
        %v2488 = vunpack.c.l.b16 %v2454
        %v2489 = vunpack.c.h.b16 %v2454
        %v2490 = vunpack.c.l.b16 %v2455
        %v2491 = vunpack.c.h.b16 %v2455
        %v2492 = vunpack.c.l.b16 %v2456
        %v2493 = vunpack.c.h.b16 %v2456
        %v2494 = vunpack.c.l.b16 %v2457
        %v2495 = vunpack.c.h.b16 %v2457
        %v2496 = vunpack.c.l.b16 %v2458
        %v2497 = vunpack.c.h.b16 %v2458
        %v2498 = vunpack.c.l.b16 %v2459
        %v2499 = vunpack.c.h.b16 %v2459
        %v2500 = vunpack.c.l.b16 %v2460
        %v2501 = vunpack.c.h.b16 %v2460
        %v2502 = vunpack.c.l.b16 %v2461
        %v2503 = vunpack.c.h.b16 %v2461
        %v2504 = vunpack.c.l.b16 %v2462
        %v2505 = vunpack.c.h.b16 %v2462
        %v2506 = vunpack.c.l.b16 %v2463
        %v2507 = vunpack.c.h.b16 %v2463
        %v2508 = vunpack.c.l.b16 %v2464
        %v2509 = vunpack.c.h.b16 %v2464
        %v2510 = vunpack.c.l.b16 %v2465
        %v2511 = vunpack.c.h.b16 %v2465
        %v2512 = vunpack.c.l.b16 %v2466
        %v2513 = vunpack.c.h.b16 %v2466
        %v2514 = vunpack.c.l.b16 %v2467
        %v2515 = vunpack.c.h.b16 %v2467
        %v2516 = vpack.c.b16 %v2486, %v2484
        %v2517 = vpack.c.b16 %v2487, %v2485
        %v2518 = vpack.c.b16 %v2490, %v2488
        %v2519 = vpack.c.b16 %v2491, %v2489
        %v2520 = vpack.c.b16 %v2494, %v2492
        %v2521 = vpack.c.b16 %v2495, %v2493
        %v2522 = vpack.c.b16 %v2498, %v2496
        %v2523 = vpack.c.b16 %v2499, %v2497
        %v2524 = vpack.c.b16 %v2502, %v2500
        %v2525 = vpack.c.b16 %v2503, %v2501
        %v2526 = vpack.c.b16 %v2506, %v2504
        %v2527 = vpack.c.b16 %v2507, %v2505
        %v2528 = vpack.c.b16 %v2510, %v2508
        %v2529 = vpack.c.b16 %v2511, %v2509
        %v2530 = vpack.c.b16 %v2514, %v2512
        %v2531 = vpack.c.b16 %v2515, %v2513
        %2548 = vmatprep.subr.bf16.mxu0 %v2517
        %2549 = vmatpush1.bf16.msra.mxu0 %v2516
        %2550 = vmatprep.subr.bf16.mxu0 %v2519
        %2551 = vmatpush1.bf16.msra.mxu0 %v2518
        %2552 = vmatprep.subr.bf16.mxu0 %v2521
        %2553 = vmatpush1.bf16.msra.mxu0 %v2520
        %2554 = vmatprep.subr.bf16.mxu0 %v2523
        %2555 = vmatpush1.bf16.msra.mxu0 %v2522
        %2556 = vmatprep.subr.bf16.mxu0 %v2525
        %2557 = vmatpush1.bf16.msra.mxu0 %v2524
        %2558 = vmatprep.subr.bf16.mxu0 %v2527
        %2559 = vmatpush1.bf16.msra.mxu0 %v2526
        %2560 = vmatprep.subr.bf16.mxu0 %v2529
        %2561 = vmatpush1.bf16.msra.mxu0 %v2528
        %2562 = vmatprep.subr.bf16.mxu0 %v2531
        %2563 = vmatpush1.bf16.msra.mxu0 %v2530
        %2564 = vmatprep.subr.bf16.mxu0 0
        %2565 = vmatpush1.bf16.msra.mxu0 0
        %2566 = vmatprep.subr.bf16.mxu0 0
        %2567 = vmatpush1.bf16.msra.mxu0 0
        %2568 = vmatprep.subr.bf16.mxu0 0
        %2569 = vmatpush1.bf16.msra.mxu0 0
        %2570 = vmatprep.subr.bf16.mxu0 0
        %2571 = vmatpush1.bf16.msra.mxu0 0
        %2572 = vmatprep.subr.bf16.mxu0 0
        %2573 = vmatpush1.bf16.msra.mxu0 0
        %2574 = vmatprep.subr.bf16.mxu0 0
        %2575 = vmatpush1.bf16.msra.mxu0 0
        %2576 = vmatprep.subr.bf16.mxu0 0
        %2577 = vmatpush1.bf16.msra.mxu0 0
        %2578 = vmatprep.subr.bf16.mxu0 0
        %2579 = vmatpush1.bf16.msra.mxu0 0
        %2580 = vmatprep.mubr.bf16.mxu0 0
        %2581 = vmatmul.mubr.bf16.gmra.mrb[0].mxu0 %v2450
        %v2582 = vpop.f32.mrb[0].mxu0
        %v2583 = vadd.f32 0.0, %v2582
        %v2584 = vpop.f32.mrb[0].mxu0
        %v2585 = vadd.f32 0.0, %v2584
        %v2586 = vpop.f32.mrb[0].mxu0
        %v2587 = vpop.f32.mrb[0].mxu0
        %2588 = vdwg.mxu0
        %v2589 = vadd.f32 %v2443, %v2583
        %v2590 = vadd.f32 %v2445, %v2585
        %v2591 = vld [vmem:[#allocation3 + $0x3] sm:$0xf]
        %v2592 = vpack.c.bf16 %v2591, %v2591
        %s2593 = scalar_lea.vmem [#allocation11], 384
        %v2594 = vld [vmem:[%s2593] sm:$0xff]
        %v2595 = vld [vmem:[%s2593 + $0x8] sm:$0xff]
        %v2596 = vld [vmem:[%s2593 + $0x10] sm:$0xff]
        %v2597 = vld [vmem:[%s2593 + $0x18] sm:$0xff]
        %v2598 = vld [vmem:[%s2593 + $0x20] sm:$0xff]
        %v2599 = vld [vmem:[%s2593 + $0x28] sm:$0xff]
        %v2600 = vld [vmem:[%s2593 + $0x30] sm:$0xff]
        %v2601 = vld [vmem:[%s2593 + $0x38] sm:$0xff]
        %v2602 = vld [vmem:[%s2593 + $0x40] sm:$0xff]
        %v2603 = vld [vmem:[%s2593 + $0x48] sm:$0xff]
        %v2604 = vld [vmem:[%s2593 + $0x50] sm:$0xff]
        %v2605 = vld [vmem:[%s2593 + $0x58] sm:$0xff]
        %v2606 = vld [vmem:[%s2593 + $0x60] sm:$0xff]
        %v2607 = vld [vmem:[%s2593 + $0x68] sm:$0xff]
        %v2608 = vld [vmem:[%s2593 + $0x70] sm:$0xff]
        %v2609 = vld [vmem:[%s2593 + $0x78] sm:$0xff]
        %v2626 = vunpack.c.l.b16 %v2594
        %v2627 = vunpack.c.h.b16 %v2594
        %v2628 = vunpack.c.l.b16 %v2595
        %v2629 = vunpack.c.h.b16 %v2595
        %v2630 = vunpack.c.l.b16 %v2596
        %v2631 = vunpack.c.h.b16 %v2596
        %v2632 = vunpack.c.l.b16 %v2597
        %v2633 = vunpack.c.h.b16 %v2597
        %v2634 = vunpack.c.l.b16 %v2598
        %v2635 = vunpack.c.h.b16 %v2598
        %v2636 = vunpack.c.l.b16 %v2599
        %v2637 = vunpack.c.h.b16 %v2599
        %v2638 = vunpack.c.l.b16 %v2600
        %v2639 = vunpack.c.h.b16 %v2600
        %v2640 = vunpack.c.l.b16 %v2601
        %v2641 = vunpack.c.h.b16 %v2601
        %v2642 = vunpack.c.l.b16 %v2602
        %v2643 = vunpack.c.h.b16 %v2602
        %v2644 = vunpack.c.l.b16 %v2603
        %v2645 = vunpack.c.h.b16 %v2603
        %v2646 = vunpack.c.l.b16 %v2604
        %v2647 = vunpack.c.h.b16 %v2604
        %v2648 = vunpack.c.l.b16 %v2605
        %v2649 = vunpack.c.h.b16 %v2605
        %v2650 = vunpack.c.l.b16 %v2606
        %v2651 = vunpack.c.h.b16 %v2606
        %v2652 = vunpack.c.l.b16 %v2607
        %v2653 = vunpack.c.h.b16 %v2607
        %v2654 = vunpack.c.l.b16 %v2608
        %v2655 = vunpack.c.h.b16 %v2608
        %v2656 = vunpack.c.l.b16 %v2609
        %v2657 = vunpack.c.h.b16 %v2609
        %v2658 = vpack.c.b16 %v2628, %v2626
        %v2659 = vpack.c.b16 %v2629, %v2627
        %v2660 = vpack.c.b16 %v2632, %v2630
        %v2661 = vpack.c.b16 %v2633, %v2631
        %v2662 = vpack.c.b16 %v2636, %v2634
        %v2663 = vpack.c.b16 %v2637, %v2635
        %v2664 = vpack.c.b16 %v2640, %v2638
        %v2665 = vpack.c.b16 %v2641, %v2639
        %v2666 = vpack.c.b16 %v2644, %v2642
        %v2667 = vpack.c.b16 %v2645, %v2643
        %v2668 = vpack.c.b16 %v2648, %v2646
        %v2669 = vpack.c.b16 %v2649, %v2647
        %v2670 = vpack.c.b16 %v2652, %v2650
        %v2671 = vpack.c.b16 %v2653, %v2651
        %v2672 = vpack.c.b16 %v2656, %v2654
        %v2673 = vpack.c.b16 %v2657, %v2655
        %2690 = vmatprep.subr.bf16.mxu0 %v2659
        %2691 = vmatpush1.bf16.msra.mxu0 %v2658
        %2692 = vmatprep.subr.bf16.mxu0 %v2661
        %2693 = vmatpush1.bf16.msra.mxu0 %v2660
        %2694 = vmatprep.subr.bf16.mxu0 %v2663
        %2695 = vmatpush1.bf16.msra.mxu0 %v2662
        %2696 = vmatprep.subr.bf16.mxu0 %v2665
        %2697 = vmatpush1.bf16.msra.mxu0 %v2664
        %2698 = vmatprep.subr.bf16.mxu0 %v2667
        %2699 = vmatpush1.bf16.msra.mxu0 %v2666
        %2700 = vmatprep.subr.bf16.mxu0 %v2669
        %2701 = vmatpush1.bf16.msra.mxu0 %v2668
        %2702 = vmatprep.subr.bf16.mxu0 %v2671
        %2703 = vmatpush1.bf16.msra.mxu0 %v2670
        %2704 = vmatprep.subr.bf16.mxu0 %v2673
        %2705 = vmatpush1.bf16.msra.mxu0 %v2672
        %2706 = vmatprep.subr.bf16.mxu0 0
        %2707 = vmatpush1.bf16.msra.mxu0 0
        %2708 = vmatprep.subr.bf16.mxu0 0
        %2709 = vmatpush1.bf16.msra.mxu0 0
        %2710 = vmatprep.subr.bf16.mxu0 0
        %2711 = vmatpush1.bf16.msra.mxu0 0
        %2712 = vmatprep.subr.bf16.mxu0 0
        %2713 = vmatpush1.bf16.msra.mxu0 0
        %2714 = vmatprep.subr.bf16.mxu0 0
        %2715 = vmatpush1.bf16.msra.mxu0 0
        %2716 = vmatprep.subr.bf16.mxu0 0
        %2717 = vmatpush1.bf16.msra.mxu0 0
        %2718 = vmatprep.subr.bf16.mxu0 0
        %2719 = vmatpush1.bf16.msra.mxu0 0
        %2720 = vmatprep.subr.bf16.mxu0 0
        %2721 = vmatpush1.bf16.msra.mxu0 0
        %2722 = vmatprep.mubr.bf16.mxu0 0
        %2723 = vmatmul.mubr.bf16.gmra.mrb[0].mxu0 %v2592
        %v2724 = vpop.f32.mrb[0].mxu0
        %v2725 = vadd.f32 0.0, %v2724
        %v2726 = vpop.f32.mrb[0].mxu0
        %v2727 = vadd.f32 0.0, %v2726
        %v2728 = vpop.f32.mrb[0].mxu0
        %v2729 = vpop.f32.mrb[0].mxu0
        %2730 = vdwg.mxu0
        %v2731 = vadd.f32 %v2589, %v2725
        %v2732 = vadd.f32 %v2590, %v2727
        %v2733 = vld [vmem:[#allocation3 + $0x4] sm:$0xf]
        %v2734 = vpack.c.bf16 %v2733, %v2733
        %s2735 = scalar_lea.vmem [#allocation11], 512
        %v2736 = vld [vmem:[%s2735] sm:$0xff]
        %v2737 = vld [vmem:[%s2735 + $0x8] sm:$0xff]
        %v2738 = vld [vmem:[%s2735 + $0x10] sm:$0xff]
        %v2739 = vld [vmem:[%s2735 + $0x18] sm:$0xff]
        %v2740 = vld [vmem:[%s2735 + $0x20] sm:$0xff]
        %v2741 = vld [vmem:[%s2735 + $0x28] sm:$0xff]
        %v2742 = vld [vmem:[%s2735 + $0x30] sm:$0xff]
        %v2743 = vld [vmem:[%s2735 + $0x38] sm:$0xff]
        %v2744 = vld [vmem:[%s2735 + $0x40] sm:$0xff]
        %v2745 = vld [vmem:[%s2735 + $0x48] sm:$0xff]
        %v2746 = vld [vmem:[%s2735 + $0x50] sm:$0xff]
        %v2747 = vld [vmem:[%s2735 + $0x58] sm:$0xff]
        %v2748 = vld [vmem:[%s2735 + $0x60] sm:$0xff]
        %v2749 = vld [vmem:[%s2735 + $0x68] sm:$0xff]
        %v2750 = vld [vmem:[%s2735 + $0x70] sm:$0xff]
        %v2751 = vld [vmem:[%s2735 + $0x78] sm:$0xff]
        %v2768 = vunpack.c.l.b16 %v2736
        %v2769 = vunpack.c.h.b16 %v2736
        %v2770 = vunpack.c.l.b16 %v2737
        %v2771 = vunpack.c.h.b16 %v2737
        %v2772 = vunpack.c.l.b16 %v2738
        %v2773 = vunpack.c.h.b16 %v2738
        %v2774 = vunpack.c.l.b16 %v2739
        %v2775 = vunpack.c.h.b16 %v2739
        %v2776 = vunpack.c.l.b16 %v2740
        %v2777 = vunpack.c.h.b16 %v2740
        %v2778 = vunpack.c.l.b16 %v2741
        %v2779 = vunpack.c.h.b16 %v2741
        %v2780 = vunpack.c.l.b16 %v2742
        %v2781 = vunpack.c.h.b16 %v2742
        %v2782 = vunpack.c.l.b16 %v2743
        %v2783 = vunpack.c.h.b16 %v2743
        %v2784 = vunpack.c.l.b16 %v2744
        %v2785 = vunpack.c.h.b16 %v2744
        %v2786 = vunpack.c.l.b16 %v2745
        %v2787 = vunpack.c.h.b16 %v2745
        %v2788 = vunpack.c.l.b16 %v2746
        %v2789 = vunpack.c.h.b16 %v2746
        %v2790 = vunpack.c.l.b16 %v2747
        %v2791 = vunpack.c.h.b16 %v2747
        %v2792 = vunpack.c.l.b16 %v2748
        %v2793 = vunpack.c.h.b16 %v2748
        %v2794 = vunpack.c.l.b16 %v2749
        %v2795 = vunpack.c.h.b16 %v2749
        %v2796 = vunpack.c.l.b16 %v2750
        %v2797 = vunpack.c.h.b16 %v2750
        %v2798 = vunpack.c.l.b16 %v2751
        %v2799 = vunpack.c.h.b16 %v2751
        %v2800 = vpack.c.b16 %v2770, %v2768
        %v2801 = vpack.c.b16 %v2771, %v2769
        %v2802 = vpack.c.b16 %v2774, %v2772
        %v2803 = vpack.c.b16 %v2775, %v2773
        %v2804 = vpack.c.b16 %v2778, %v2776
        %v2805 = vpack.c.b16 %v2779, %v2777
        %v2806 = vpack.c.b16 %v2782, %v2780
        %v2807 = vpack.c.b16 %v2783, %v2781
        %v2808 = vpack.c.b16 %v2786, %v2784
        %v2809 = vpack.c.b16 %v2787, %v2785
        %v2810 = vpack.c.b16 %v2790, %v2788
        %v2811 = vpack.c.b16 %v2791, %v2789
        %v2812 = vpack.c.b16 %v2794, %v2792
        %v2813 = vpack.c.b16 %v2795, %v2793
        %v2814 = vpack.c.b16 %v2798, %v2796
        %v2815 = vpack.c.b16 %v2799, %v2797
        %2832 = vmatprep.subr.bf16.mxu0 %v2801
        %2833 = vmatpush1.bf16.msra.mxu0 %v2800
        %2834 = vmatprep.subr.bf16.mxu0 %v2803
        %2835 = vmatpush1.bf16.msra.mxu0 %v2802
        %2836 = vmatprep.subr.bf16.mxu0 %v2805
        %2837 = vmatpush1.bf16.msra.mxu0 %v2804
        %2838 = vmatprep.subr.bf16.mxu0 %v2807
        %2839 = vmatpush1.bf16.msra.mxu0 %v2806
        %2840 = vmatprep.subr.bf16.mxu0 %v2809
        %2841 = vmatpush1.bf16.msra.mxu0 %v2808
        %2842 = vmatprep.subr.bf16.mxu0 %v2811
        %2843 = vmatpush1.bf16.msra.mxu0 %v2810
        %2844 = vmatprep.subr.bf16.mxu0 %v2813
        %2845 = vmatpush1.bf16.msra.mxu0 %v2812
        %2846 = vmatprep.subr.bf16.mxu0 %v2815
        %2847 = vmatpush1.bf16.msra.mxu0 %v2814
        %2848 = vmatprep.subr.bf16.mxu0 0
        %2849 = vmatpush1.bf16.msra.mxu0 0
        %2850 = vmatprep.subr.bf16.mxu0 0
        %2851 = vmatpush1.bf16.msra.mxu0 0
        %2852 = vmatprep.subr.bf16.mxu0 0
        %2853 = vmatpush1.bf16.msra.mxu0 0
        %2854 = vmatprep.subr.bf16.mxu0 0
        %2855 = vmatpush1.bf16.msra.mxu0 0
        %2856 = vmatprep.subr.bf16.mxu0 0
        %2857 = vmatpush1.bf16.msra.mxu0 0
        %2858 = vmatprep.subr.bf16.mxu0 0
        %2859 = vmatpush1.bf16.msra.mxu0 0
        %2860 = vmatprep.subr.bf16.mxu0 0
        %2861 = vmatpush1.bf16.msra.mxu0 0
        %2862 = vmatprep.subr.bf16.mxu0 0
        %2863 = vmatpush1.bf16.msra.mxu0 0
        %2864 = vmatprep.mubr.bf16.mxu0 0
        %2865 = vmatmul.mubr.bf16.gmra.mrb[0].mxu0 %v2734
        %v2866 = vpop.f32.mrb[0].mxu0
        %v2867 = vadd.f32 0.0, %v2866
        %v2868 = vpop.f32.mrb[0].mxu0
        %v2869 = vadd.f32 0.0, %v2868
        %v2870 = vpop.f32.mrb[0].mxu0
        %v2871 = vpop.f32.mrb[0].mxu0
        %2872 = vdwg.mxu0
        %v2873 = vadd.f32 %v2731, %v2867
        %v2874 = vadd.f32 %v2732, %v2869
        %v2875 = vmax.f32 %v2873, %v2874
        %v2876 = vld [vmem:[%s6] sm:$0x1]
        %v2878 = vlaneseq
        %v2879 = vshrl.u32 %v2878, 7
        %v2880 = vsub.s32 0, %v2879
        %v2881 = vrot.slane %v2876, %v2880
        %v2883 = vadd.f32 %v2875, %v2881
        %v2884 = vpack.c.bf16 %v2883, %v2883
        %vm2885 = vcmask 31744
        %v2886 = vsel %vm2885, %v2074, 0
        %vm2888 = vcmask 1041408
        %v2890 = vsel %vm2888, %v2884, 0
        %2892 = vmatprep.subr.bf16.mxu0 0
        %2893 = vmatpush1.bf16.msra.mxu0 %v2890
        %2894 = vmatprep.subr.bf16.mxu0 0
        %2895 = vmatpush1.bf16.msra.mxu0 0
        %2896 = vmatprep.subr.bf16.mxu0 0
        %2897 = vmatpush1.bf16.msra.mxu0 0
        %2898 = vmatprep.subr.bf16.mxu0 0
        %2899 = vmatpush1.bf16.msra.mxu0 0
        %2900 = vmatprep.subr.bf16.mxu0 0
        %2901 = vmatpush1.bf16.msra.mxu0 0
        %2902 = vmatprep.subr.bf16.mxu0 0
        %2903 = vmatpush1.bf16.msra.mxu0 0
        %2904 = vmatprep.subr.bf16.mxu0 0
        %2905 = vmatpush1.bf16.msra.mxu0 0
        %2906 = vmatprep.subr.bf16.mxu0 0
        %2907 = vmatpush1.bf16.msra.mxu0 0
        %2908 = vmatprep.subr.bf16.mxu0 0
        %2909 = vmatpush1.bf16.msra.mxu0 0
        %2910 = vmatprep.subr.bf16.mxu0 0
        %2911 = vmatpush1.bf16.msra.mxu0 0
        %2912 = vmatprep.subr.bf16.mxu0 0
        %2913 = vmatpush1.bf16.msra.mxu0 0
        %2914 = vmatprep.subr.bf16.mxu0 0
        %2915 = vmatpush1.bf16.msra.mxu0 0
        %2916 = vmatprep.subr.bf16.mxu0 0
        %2917 = vmatpush1.bf16.msra.mxu0 0
        %2918 = vmatprep.subr.bf16.mxu0 0
        %2919 = vmatpush1.bf16.msra.mxu0 0
        %2920 = vmatprep.subr.bf16.mxu0 0
        %2921 = vmatpush1.bf16.msra.mxu0 0
        %2922 = vmatprep.subr.bf16.mxu0 0
        %2923 = vmatpush1.bf16.msra.mxu0 0
        %2924 = vmatprep.mubr.bf16.mxu0 0
        %2925 = vmatmul.mubr.bf16.gmra.mrb[0].mxu0 %v2886
        %v2926 = vpop.f32.mrb[0].mxu0
        %v2927 = vadd.f32 0.0, %v2926
        %v2928 = vpop.f32.mrb[0].mxu0
        %v2929 = vpop.f32.mrb[0].mxu0
        %v2930 = vpop.f32.mrb[0].mxu0
        %2931 = vdwg.mxu0
        %v2932 = vsel %vm2885, %v2075, 0
        %2934 = vmatprep.subr.bf16.mxu0 0
        %2935 = vmatpush1.bf16.msra.mxu0 %v2890
        %2936 = vmatprep.subr.bf16.mxu0 0
        %2937 = vmatpush1.bf16.msra.mxu0 0
        %2938 = vmatprep.subr.bf16.mxu0 0
        %2939 = vmatpush1.bf16.msra.mxu0 0
        %2940 = vmatprep.subr.bf16.mxu0 0
        %2941 = vmatpush1.bf16.msra.mxu0 0
        %2942 = vmatprep.subr.bf16.mxu0 0
        %2943 = vmatpush1.bf16.msra.mxu0 0
        %2944 = vmatprep.subr.bf16.mxu0 0
        %2945 = vmatpush1.bf16.msra.mxu0 0
        %2946 = vmatprep.subr.bf16.mxu0 0
        %2947 = vmatpush1.bf16.msra.mxu0 0
        %2948 = vmatprep.subr.bf16.mxu0 0
        %2949 = vmatpush1.bf16.msra.mxu0 0
        %2950 = vmatprep.subr.bf16.mxu0 0
        %2951 = vmatpush1.bf16.msra.mxu0 0
        %2952 = vmatprep.subr.bf16.mxu0 0
        %2953 = vmatpush1.bf16.msra.mxu0 0
        %2954 = vmatprep.subr.bf16.mxu0 0
        %2955 = vmatpush1.bf16.msra.mxu0 0
        %2956 = vmatprep.subr.bf16.mxu0 0
        %2957 = vmatpush1.bf16.msra.mxu0 0
        %2958 = vmatprep.subr.bf16.mxu0 0
        %2959 = vmatpush1.bf16.msra.mxu0 0
        %2960 = vmatprep.subr.bf16.mxu0 0
        %2961 = vmatpush1.bf16.msra.mxu0 0
        %2962 = vmatprep.subr.bf16.mxu0 0
        %2963 = vmatpush1.bf16.msra.mxu0 0
        %2964 = vmatprep.subr.bf16.mxu0 0
        %2965 = vmatpush1.bf16.msra.mxu0 0
        %2966 = vmatprep.mubr.bf16.mxu0 0
        %2967 = vmatmul.mubr.bf16.gmra.mrb[0].mxu0 %v2932
        %v2968 = vpop.f32.mrb[0].mxu0
        %v2969 = vadd.f32 0.0, %v2968
        %v2970 = vpop.f32.mrb[0].mxu0
        %v2971 = vpop.f32.mrb[0].mxu0
        %v2972 = vpop.f32.mrb[0].mxu0
        %2973 = vdwg.mxu0
        %v2974 = vmax.f32 %v2927, %v2969
        %v2975 = vmax.f32 %v2974, 0.0
        %2976 = vst [vmem:[#allocation4] sm:$0x3f] %v2975
        %v2977 = vld [vmem:[#allocation4] sm:$0x3]
        %v2978 = vpack.c.bf16 %v2977, %v2977
        %v2979 = vld [vmem:[#allocation13] sm:$0xff]
        %v2980 = vld [vmem:[#allocation13 + $0x8] sm:$0xff]
        %v2981 = vld [vmem:[#allocation13 + $0x10] sm:$0xff]
        %v2982 = vld [vmem:[#allocation13 + $0x18] sm:$0xff]
        %v2983 = vld [vmem:[#allocation13 + $0x20] sm:$0xff]
        %v2984 = vld [vmem:[#allocation13 + $0x28] sm:$0xff]
        %v2985 = vld [vmem:[#allocation13 + $0x30] sm:$0xff]
        %v2986 = vld [vmem:[#allocation13 + $0x38] sm:$0xff]
        %v2987 = vld [vmem:[#allocation13 + $0x40] sm:$0xff]
        %v2988 = vld [vmem:[#allocation13 + $0x48] sm:$0xff]
        %v2989 = vld [vmem:[#allocation13 + $0x50] sm:$0xff]
        %v2990 = vld [vmem:[#allocation13 + $0x58] sm:$0xff]
        %v2991 = vld [vmem:[#allocation13 + $0x60] sm:$0xff]
        %v2992 = vld [vmem:[#allocation13 + $0x68] sm:$0xff]
        %v2993 = vld [vmem:[#allocation13 + $0x70] sm:$0xff]
        %v2994 = vld [vmem:[#allocation13 + $0x78] sm:$0xff]
        %v2995 = vld [vmem:[#allocation4 + $0x1] sm:$0x3]
        %v2996 = vpack.c.bf16 %v2995, %v2995
        %s2997 = scalar_lea.vmem [#allocation13], 128
        %v2998 = vld [vmem:[%s2997] sm:$0xff]
        %v2999 = vld [vmem:[%s2997 + $0x8] sm:$0xff]
        %v3000 = vld [vmem:[%s2997 + $0x10] sm:$0xff]
        %v3001 = vld [vmem:[%s2997 + $0x18] sm:$0xff]
        %v3002 = vld [vmem:[%s2997 + $0x20] sm:$0xff]
        %v3003 = vld [vmem:[%s2997 + $0x28] sm:$0xff]
        %v3004 = vld [vmem:[%s2997 + $0x30] sm:$0xff]
        %v3005 = vld [vmem:[%s2997 + $0x38] sm:$0xff]
        %v3006 = vld [vmem:[%s2997 + $0x40] sm:$0xff]
        %v3007 = vld [vmem:[%s2997 + $0x48] sm:$0xff]
        %v3008 = vld [vmem:[%s2997 + $0x50] sm:$0xff]
        %v3009 = vld [vmem:[%s2997 + $0x58] sm:$0xff]
        %v3010 = vld [vmem:[%s2997 + $0x60] sm:$0xff]
        %v3011 = vld [vmem:[%s2997 + $0x68] sm:$0xff]
        %v3012 = vld [vmem:[%s2997 + $0x70] sm:$0xff]
        %v3013 = vld [vmem:[%s2997 + $0x78] sm:$0xff]
        %v3030 = vunpack.c.l.b16 %v2998
        %v3031 = vunpack.c.h.b16 %v2998
        %v3032 = vunpack.c.l.b16 %v2999
        %v3033 = vunpack.c.h.b16 %v2999
        %v3034 = vunpack.c.l.b16 %v3000
        %v3035 = vunpack.c.h.b16 %v3000
        %v3036 = vunpack.c.l.b16 %v3001
        %v3037 = vunpack.c.h.b16 %v3001
        %v3038 = vunpack.c.l.b16 %v3002
        %v3039 = vunpack.c.h.b16 %v3002
        %v3040 = vunpack.c.l.b16 %v3003
        %v3041 = vunpack.c.h.b16 %v3003
        %v3042 = vunpack.c.l.b16 %v3004
        %v3043 = vunpack.c.h.b16 %v3004
        %v3044 = vunpack.c.l.b16 %v3005
        %v3045 = vunpack.c.h.b16 %v3005
        %v3046 = vunpack.c.l.b16 %v3006
        %v3047 = vunpack.c.h.b16 %v3006
        %v3048 = vunpack.c.l.b16 %v3007
        %v3049 = vunpack.c.h.b16 %v3007
        %v3050 = vunpack.c.l.b16 %v3008
        %v3051 = vunpack.c.h.b16 %v3008
        %v3052 = vunpack.c.l.b16 %v3009
        %v3053 = vunpack.c.h.b16 %v3009
        %v3054 = vunpack.c.l.b16 %v3010
        %v3055 = vunpack.c.h.b16 %v3010
        %v3056 = vunpack.c.l.b16 %v3011
        %v3057 = vunpack.c.h.b16 %v3011
        %v3058 = vunpack.c.l.b16 %v3012
        %v3059 = vunpack.c.h.b16 %v3012
        %v3060 = vunpack.c.l.b16 %v3013
        %v3061 = vunpack.c.h.b16 %v3013
        %v3062 = vpack.c.b16 %v3032, %v3030
        %v3063 = vpack.c.b16 %v3033, %v3031
        %v3064 = vpack.c.b16 %v3036, %v3034
        %v3065 = vpack.c.b16 %v3037, %v3035
        %v3066 = vpack.c.b16 %v3040, %v3038
        %v3067 = vpack.c.b16 %v3041, %v3039
        %v3068 = vpack.c.b16 %v3044, %v3042
        %v3069 = vpack.c.b16 %v3045, %v3043
        %v3070 = vpack.c.b16 %v3048, %v3046
        %v3071 = vpack.c.b16 %v3049, %v3047
        %v3072 = vpack.c.b16 %v3052, %v3050
        %v3073 = vpack.c.b16 %v3053, %v3051
        %v3074 = vpack.c.b16 %v3056, %v3054
        %v3075 = vpack.c.b16 %v3057, %v3055
        %v3076 = vpack.c.b16 %v3060, %v3058
        %v3077 = vpack.c.b16 %v3061, %v3059
        %3094 = vmatprep.subr.bf16.mxu0 %v3063
        %3095 = vmatpush1.bf16.msra.mxu0 %v3062
        %3096 = vmatprep.subr.bf16.mxu0 %v3065
        %3097 = vmatpush1.bf16.msra.mxu0 %v3064
        %3098 = vmatprep.subr.bf16.mxu0 %v3067
        %3099 = vmatpush1.bf16.msra.mxu0 %v3066
        %3100 = vmatprep.subr.bf16.mxu0 %v3069
        %3101 = vmatpush1.bf16.msra.mxu0 %v3068
        %3102 = vmatprep.subr.bf16.mxu0 %v3071
        %3103 = vmatpush1.bf16.msra.mxu0 %v3070
        %3104 = vmatprep.subr.bf16.mxu0 %v3073
        %3105 = vmatpush1.bf16.msra.mxu0 %v3072
        %3106 = vmatprep.subr.bf16.mxu0 %v3075
        %3107 = vmatpush1.bf16.msra.mxu0 %v3074
        %3108 = vmatprep.subr.bf16.mxu0 %v3077
        %3109 = vmatpush1.bf16.msra.mxu0 %v3076
        %3110 = vmatprep.subr.bf16.mxu0 0
        %3111 = vmatpush1.bf16.msra.mxu0 0
        %3112 = vmatprep.subr.bf16.mxu0 0
        %3113 = vmatpush1.bf16.msra.mxu0 0
        %3114 = vmatprep.subr.bf16.mxu0 0
        %3115 = vmatpush1.bf16.msra.mxu0 0
        %3116 = vmatprep.subr.bf16.mxu0 0
        %3117 = vmatpush1.bf16.msra.mxu0 0
        %3118 = vmatprep.subr.bf16.mxu0 0
        %3119 = vmatpush1.bf16.msra.mxu0 0
        %3120 = vmatprep.subr.bf16.mxu0 0
        %3121 = vmatpush1.bf16.msra.mxu0 0
        %3122 = vmatprep.subr.bf16.mxu0 0
        %3123 = vmatpush1.bf16.msra.mxu0 0
        %3124 = vmatprep.subr.bf16.mxu0 0
        %3125 = vmatpush1.bf16.msra.mxu0 0
        %3126 = vmatprep.mubr.bf16.mxu0 0
        %3127 = vmatmul.mubr.bf16.gmra.mrb[0].mxu0 %v2996
        %v3128 = vpop.f32.mrb[0].mxu0
        %v3129 = vadd.f32 0.0, %v3128
        %v3130 = vpop.f32.mrb[0].mxu0
        %v3131 = vadd.f32 0.0, %v3130
        %v3132 = vpop.f32.mrb[0].mxu0
        %v3133 = vpop.f32.mrb[0].mxu0
        %3134 = vdwg.mxu0
        %v3151 = vunpack.c.l.b16 %v2979
        %v3152 = vunpack.c.h.b16 %v2979
        %v3153 = vunpack.c.l.b16 %v2980
        %v3154 = vunpack.c.h.b16 %v2980
        %v3155 = vunpack.c.l.b16 %v2981
        %v3156 = vunpack.c.h.b16 %v2981
        %v3157 = vunpack.c.l.b16 %v2982
        %v3158 = vunpack.c.h.b16 %v2982
        %v3159 = vunpack.c.l.b16 %v2983
        %v3160 = vunpack.c.h.b16 %v2983
        %v3161 = vunpack.c.l.b16 %v2984
        %v3162 = vunpack.c.h.b16 %v2984
        %v3163 = vunpack.c.l.b16 %v2985
        %v3164 = vunpack.c.h.b16 %v2985
        %v3165 = vunpack.c.l.b16 %v2986
        %v3166 = vunpack.c.h.b16 %v2986
        %v3167 = vunpack.c.l.b16 %v2987
        %v3168 = vunpack.c.h.b16 %v2987
        %v3169 = vunpack.c.l.b16 %v2988
        %v3170 = vunpack.c.h.b16 %v2988
        %v3171 = vunpack.c.l.b16 %v2989
        %v3172 = vunpack.c.h.b16 %v2989
        %v3173 = vunpack.c.l.b16 %v2990
        %v3174 = vunpack.c.h.b16 %v2990
        %v3175 = vunpack.c.l.b16 %v2991
        %v3176 = vunpack.c.h.b16 %v2991
        %v3177 = vunpack.c.l.b16 %v2992
        %v3178 = vunpack.c.h.b16 %v2992
        %v3179 = vunpack.c.l.b16 %v2993
        %v3180 = vunpack.c.h.b16 %v2993
        %v3181 = vunpack.c.l.b16 %v2994
        %v3182 = vunpack.c.h.b16 %v2994
        %v3183 = vpack.c.b16 %v3153, %v3151
        %v3184 = vpack.c.b16 %v3154, %v3152
        %v3185 = vpack.c.b16 %v3157, %v3155
        %v3186 = vpack.c.b16 %v3158, %v3156
        %v3187 = vpack.c.b16 %v3161, %v3159
        %v3188 = vpack.c.b16 %v3162, %v3160
        %v3189 = vpack.c.b16 %v3165, %v3163
        %v3190 = vpack.c.b16 %v3166, %v3164
        %v3191 = vpack.c.b16 %v3169, %v3167
        %v3192 = vpack.c.b16 %v3170, %v3168
        %v3193 = vpack.c.b16 %v3173, %v3171
        %v3194 = vpack.c.b16 %v3174, %v3172
        %v3195 = vpack.c.b16 %v3177, %v3175
        %v3196 = vpack.c.b16 %v3178, %v3176
        %v3197 = vpack.c.b16 %v3181, %v3179
        %v3198 = vpack.c.b16 %v3182, %v3180
        %3215 = vmatprep.subr.bf16.mxu0 %v3184
        %3216 = vmatpush1.bf16.msra.mxu0 %v3183
        %3217 = vmatprep.subr.bf16.mxu0 %v3186
        %3218 = vmatpush1.bf16.msra.mxu0 %v3185
        %3219 = vmatprep.subr.bf16.mxu0 %v3188
        %3220 = vmatpush1.bf16.msra.mxu0 %v3187
        %3221 = vmatprep.subr.bf16.mxu0 %v3190
        %3222 = vmatpush1.bf16.msra.mxu0 %v3189
        %3223 = vmatprep.subr.bf16.mxu0 %v3192
        %3224 = vmatpush1.bf16.msra.mxu0 %v3191
        %3225 = vmatprep.subr.bf16.mxu0 %v3194
        %3226 = vmatpush1.bf16.msra.mxu0 %v3193
        %3227 = vmatprep.subr.bf16.mxu0 %v3196
        %3228 = vmatpush1.bf16.msra.mxu0 %v3195
        %3229 = vmatprep.subr.bf16.mxu0 %v3198
        %3230 = vmatpush1.bf16.msra.mxu0 %v3197
        %3231 = vmatprep.subr.bf16.mxu0 0
        %3232 = vmatpush1.bf16.msra.mxu0 0
        %3233 = vmatprep.subr.bf16.mxu0 0
        %3234 = vmatpush1.bf16.msra.mxu0 0
        %3235 = vmatprep.subr.bf16.mxu0 0
        %3236 = vmatpush1.bf16.msra.mxu0 0
        %3237 = vmatprep.subr.bf16.mxu0 0
        %3238 = vmatpush1.bf16.msra.mxu0 0
        %3239 = vmatprep.subr.bf16.mxu0 0
        %3240 = vmatpush1.bf16.msra.mxu0 0
        %3241 = vmatprep.subr.bf16.mxu0 0
        %3242 = vmatpush1.bf16.msra.mxu0 0
        %3243 = vmatprep.subr.bf16.mxu0 0
        %3244 = vmatpush1.bf16.msra.mxu0 0
        %3245 = vmatprep.subr.bf16.mxu0 0
        %3246 = vmatpush1.bf16.msra.mxu0 0
        %3247 = vmatprep.mubr.bf16.mxu0 0
        %3248 = vmatmul.mubr.bf16.gmra.mrb[0].mxu0 %v2978
        %v3249 = vpop.f32.mrb[0].mxu0
        %v3250 = vadd.f32 %v3129, %v3249
        %v3251 = vpop.f32.mrb[0].mxu0
        %v3252 = vadd.f32 %v3131, %v3251
        %v3253 = vpop.f32.mrb[0].mxu0
        %v3254 = vpop.f32.mrb[0].mxu0
        %3255 = vdwg.mxu0
        %v3256 = vld [vmem:[#allocation4 + $0x2] sm:$0x3]
        %v3257 = vpack.c.bf16 %v3256, %v3256
        %s3258 = scalar_lea.vmem [#allocation13], 256
        %v3259 = vld [vmem:[%s3258] sm:$0xff]
        %v3260 = vld [vmem:[%s3258 + $0x8] sm:$0xff]
        %v3261 = vld [vmem:[%s3258 + $0x10] sm:$0xff]
        %v3262 = vld [vmem:[%s3258 + $0x18] sm:$0xff]
        %v3263 = vld [vmem:[%s3258 + $0x20] sm:$0xff]
        %v3264 = vld [vmem:[%s3258 + $0x28] sm:$0xff]
        %v3265 = vld [vmem:[%s3258 + $0x30] sm:$0xff]
        %v3266 = vld [vmem:[%s3258 + $0x38] sm:$0xff]
        %v3267 = vld [vmem:[%s3258 + $0x40] sm:$0xff]
        %v3268 = vld [vmem:[%s3258 + $0x48] sm:$0xff]
        %v3269 = vld [vmem:[%s3258 + $0x50] sm:$0xff]
        %v3270 = vld [vmem:[%s3258 + $0x58] sm:$0xff]
        %v3271 = vld [vmem:[%s3258 + $0x60] sm:$0xff]
        %v3272 = vld [vmem:[%s3258 + $0x68] sm:$0xff]
        %v3273 = vld [vmem:[%s3258 + $0x70] sm:$0xff]
        %v3274 = vld [vmem:[%s3258 + $0x78] sm:$0xff]
        %v3291 = vunpack.c.l.b16 %v3259
        %v3292 = vunpack.c.h.b16 %v3259
        %v3293 = vunpack.c.l.b16 %v3260
        %v3294 = vunpack.c.h.b16 %v3260
        %v3295 = vunpack.c.l.b16 %v3261
        %v3296 = vunpack.c.h.b16 %v3261
        %v3297 = vunpack.c.l.b16 %v3262
        %v3298 = vunpack.c.h.b16 %v3262
        %v3299 = vunpack.c.l.b16 %v3263
        %v3300 = vunpack.c.h.b16 %v3263
        %v3301 = vunpack.c.l.b16 %v3264
        %v3302 = vunpack.c.h.b16 %v3264
        %v3303 = vunpack.c.l.b16 %v3265
        %v3304 = vunpack.c.h.b16 %v3265
        %v3305 = vunpack.c.l.b16 %v3266
        %v3306 = vunpack.c.h.b16 %v3266
        %v3307 = vunpack.c.l.b16 %v3267
        %v3308 = vunpack.c.h.b16 %v3267
        %v3309 = vunpack.c.l.b16 %v3268
        %v3310 = vunpack.c.h.b16 %v3268
        %v3311 = vunpack.c.l.b16 %v3269
        %v3312 = vunpack.c.h.b16 %v3269
        %v3313 = vunpack.c.l.b16 %v3270
        %v3314 = vunpack.c.h.b16 %v3270
        %v3315 = vunpack.c.l.b16 %v3271
        %v3316 = vunpack.c.h.b16 %v3271
        %v3317 = vunpack.c.l.b16 %v3272
        %v3318 = vunpack.c.h.b16 %v3272
        %v3319 = vunpack.c.l.b16 %v3273
        %v3320 = vunpack.c.h.b16 %v3273
        %v3321 = vunpack.c.l.b16 %v3274
        %v3322 = vunpack.c.h.b16 %v3274
        %v3323 = vpack.c.b16 %v3293, %v3291
        %v3324 = vpack.c.b16 %v3294, %v3292
        %v3325 = vpack.c.b16 %v3297, %v3295
        %v3326 = vpack.c.b16 %v3298, %v3296
        %v3327 = vpack.c.b16 %v3301, %v3299
        %v3328 = vpack.c.b16 %v3302, %v3300
        %v3329 = vpack.c.b16 %v3305, %v3303
        %v3330 = vpack.c.b16 %v3306, %v3304
        %v3331 = vpack.c.b16 %v3309, %v3307
        %v3332 = vpack.c.b16 %v3310, %v3308
        %v3333 = vpack.c.b16 %v3313, %v3311
        %v3334 = vpack.c.b16 %v3314, %v3312
        %v3335 = vpack.c.b16 %v3317, %v3315
        %v3336 = vpack.c.b16 %v3318, %v3316
        %v3337 = vpack.c.b16 %v3321, %v3319
        %v3338 = vpack.c.b16 %v3322, %v3320
        %3355 = vmatprep.subr.bf16.mxu0 %v3324
        %3356 = vmatpush1.bf16.msra.mxu0 %v3323
        %3357 = vmatprep.subr.bf16.mxu0 %v3326
        %3358 = vmatpush1.bf16.msra.mxu0 %v3325
        %3359 = vmatprep.subr.bf16.mxu0 %v3328
        %3360 = vmatpush1.bf16.msra.mxu0 %v3327
        %3361 = vmatprep.subr.bf16.mxu0 %v3330
        %3362 = vmatpush1.bf16.msra.mxu0 %v3329
        %3363 = vmatprep.subr.bf16.mxu0 %v3332
        %3364 = vmatpush1.bf16.msra.mxu0 %v3331
        %3365 = vmatprep.subr.bf16.mxu0 %v3334
        %3366 = vmatpush1.bf16.msra.mxu0 %v3333
        %3367 = vmatprep.subr.bf16.mxu0 %v3336
        %3368 = vmatpush1.bf16.msra.mxu0 %v3335
        %3369 = vmatprep.subr.bf16.mxu0 %v3338
        %3370 = vmatpush1.bf16.msra.mxu0 %v3337
        %3371 = vmatprep.subr.bf16.mxu0 0
        %3372 = vmatpush1.bf16.msra.mxu0 0
        %3373 = vmatprep.subr.bf16.mxu0 0
        %3374 = vmatpush1.bf16.msra.mxu0 0
        %3375 = vmatprep.subr.bf16.mxu0 0
        %3376 = vmatpush1.bf16.msra.mxu0 0
        %3377 = vmatprep.subr.bf16.mxu0 0
        %3378 = vmatpush1.bf16.msra.mxu0 0
        %3379 = vmatprep.subr.bf16.mxu0 0
        %3380 = vmatpush1.bf16.msra.mxu0 0
        %3381 = vmatprep.subr.bf16.mxu0 0
        %3382 = vmatpush1.bf16.msra.mxu0 0
        %3383 = vmatprep.subr.bf16.mxu0 0
        %3384 = vmatpush1.bf16.msra.mxu0 0
        %3385 = vmatprep.subr.bf16.mxu0 0
        %3386 = vmatpush1.bf16.msra.mxu0 0
        %3387 = vmatprep.mubr.bf16.mxu0 0
        %3388 = vmatmul.mubr.bf16.gmra.mrb[0].mxu0 %v3257
        %v3389 = vpop.f32.mrb[0].mxu0
        %v3390 = vadd.f32 0.0, %v3389
        %v3391 = vpop.f32.mrb[0].mxu0
        %v3392 = vadd.f32 0.0, %v3391
        %v3393 = vpop.f32.mrb[0].mxu0
        %v3394 = vpop.f32.mrb[0].mxu0
        %3395 = vdwg.mxu0
        %v3396 = vadd.f32 %v3250, %v3390
        %v3397 = vadd.f32 %v3252, %v3392
        %v3398 = vld [vmem:[#allocation4 + $0x3] sm:$0x3]
        %v3399 = vpack.c.bf16 %v3398, %v3398
        %s3400 = scalar_lea.vmem [#allocation13], 384
        %v3401 = vld [vmem:[%s3400] sm:$0xff]
        %v3402 = vld [vmem:[%s3400 + $0x8] sm:$0xff]
        %v3403 = vld [vmem:[%s3400 + $0x10] sm:$0xff]
        %v3404 = vld [vmem:[%s3400 + $0x18] sm:$0xff]
        %v3405 = vld [vmem:[%s3400 + $0x20] sm:$0xff]
        %v3406 = vld [vmem:[%s3400 + $0x28] sm:$0xff]
        %v3407 = vld [vmem:[%s3400 + $0x30] sm:$0xff]
        %v3408 = vld [vmem:[%s3400 + $0x38] sm:$0xff]
        %v3409 = vld [vmem:[%s3400 + $0x40] sm:$0xff]
        %v3410 = vld [vmem:[%s3400 + $0x48] sm:$0xff]
        %v3411 = vld [vmem:[%s3400 + $0x50] sm:$0xff]
        %v3412 = vld [vmem:[%s3400 + $0x58] sm:$0xff]
        %v3413 = vld [vmem:[%s3400 + $0x60] sm:$0xff]
        %v3414 = vld [vmem:[%s3400 + $0x68] sm:$0xff]
        %v3415 = vld [vmem:[%s3400 + $0x70] sm:$0xff]
        %v3416 = vld [vmem:[%s3400 + $0x78] sm:$0xff]
        %v3433 = vunpack.c.l.b16 %v3401
        %v3434 = vunpack.c.h.b16 %v3401
        %v3435 = vunpack.c.l.b16 %v3402
        %v3436 = vunpack.c.h.b16 %v3402
        %v3437 = vunpack.c.l.b16 %v3403
        %v3438 = vunpack.c.h.b16 %v3403
        %v3439 = vunpack.c.l.b16 %v3404
        %v3440 = vunpack.c.h.b16 %v3404
        %v3441 = vunpack.c.l.b16 %v3405
        %v3442 = vunpack.c.h.b16 %v3405
        %v3443 = vunpack.c.l.b16 %v3406
        %v3444 = vunpack.c.h.b16 %v3406
        %v3445 = vunpack.c.l.b16 %v3407
        %v3446 = vunpack.c.h.b16 %v3407
        %v3447 = vunpack.c.l.b16 %v3408
        %v3448 = vunpack.c.h.b16 %v3408
        %v3449 = vunpack.c.l.b16 %v3409
        %v3450 = vunpack.c.h.b16 %v3409
        %v3451 = vunpack.c.l.b16 %v3410
        %v3452 = vunpack.c.h.b16 %v3410
        %v3453 = vunpack.c.l.b16 %v3411
        %v3454 = vunpack.c.h.b16 %v3411
        %v3455 = vunpack.c.l.b16 %v3412
        %v3456 = vunpack.c.h.b16 %v3412
        %v3457 = vunpack.c.l.b16 %v3413
        %v3458 = vunpack.c.h.b16 %v3413
        %v3459 = vunpack.c.l.b16 %v3414
        %v3460 = vunpack.c.h.b16 %v3414
        %v3461 = vunpack.c.l.b16 %v3415
        %v3462 = vunpack.c.h.b16 %v3415
        %v3463 = vunpack.c.l.b16 %v3416
        %v3464 = vunpack.c.h.b16 %v3416
        %v3465 = vpack.c.b16 %v3435, %v3433
        %v3466 = vpack.c.b16 %v3436, %v3434
        %v3467 = vpack.c.b16 %v3439, %v3437
        %v3468 = vpack.c.b16 %v3440, %v3438
        %v3469 = vpack.c.b16 %v3443, %v3441
        %v3470 = vpack.c.b16 %v3444, %v3442
        %v3471 = vpack.c.b16 %v3447, %v3445
        %v3472 = vpack.c.b16 %v3448, %v3446
        %v3473 = vpack.c.b16 %v3451, %v3449
        %v3474 = vpack.c.b16 %v3452, %v3450
        %v3475 = vpack.c.b16 %v3455, %v3453
        %v3476 = vpack.c.b16 %v3456, %v3454
        %v3477 = vpack.c.b16 %v3459, %v3457
        %v3478 = vpack.c.b16 %v3460, %v3458
        %v3479 = vpack.c.b16 %v3463, %v3461
        %v3480 = vpack.c.b16 %v3464, %v3462
        %3497 = vmatprep.subr.bf16.mxu0 %v3466
        %3498 = vmatpush1.bf16.msra.mxu0 %v3465
        %3499 = vmatprep.subr.bf16.mxu0 %v3468
        %3500 = vmatpush1.bf16.msra.mxu0 %v3467
        %3501 = vmatprep.subr.bf16.mxu0 %v3470
        %3502 = vmatpush1.bf16.msra.mxu0 %v3469
        %3503 = vmatprep.subr.bf16.mxu0 %v3472
        %3504 = vmatpush1.bf16.msra.mxu0 %v3471
        %3505 = vmatprep.subr.bf16.mxu0 %v3474
        %3506 = vmatpush1.bf16.msra.mxu0 %v3473
        %3507 = vmatprep.subr.bf16.mxu0 %v3476
        %3508 = vmatpush1.bf16.msra.mxu0 %v3475
        %3509 = vmatprep.subr.bf16.mxu0 %v3478
        %3510 = vmatpush1.bf16.msra.mxu0 %v3477
        %3511 = vmatprep.subr.bf16.mxu0 %v3480
        %3512 = vmatpush1.bf16.msra.mxu0 %v3479
        %3513 = vmatprep.subr.bf16.mxu0 0
        %3514 = vmatpush1.bf16.msra.mxu0 0
        %3515 = vmatprep.subr.bf16.mxu0 0
        %3516 = vmatpush1.bf16.msra.mxu0 0
        %3517 = vmatprep.subr.bf16.mxu0 0
        %3518 = vmatpush1.bf16.msra.mxu0 0
        %3519 = vmatprep.subr.bf16.mxu0 0
        %3520 = vmatpush1.bf16.msra.mxu0 0
        %3521 = vmatprep.subr.bf16.mxu0 0
        %3522 = vmatpush1.bf16.msra.mxu0 0
        %3523 = vmatprep.subr.bf16.mxu0 0
        %3524 = vmatpush1.bf16.msra.mxu0 0
        %3525 = vmatprep.subr.bf16.mxu0 0
        %3526 = vmatpush1.bf16.msra.mxu0 0
        %3527 = vmatprep.subr.bf16.mxu0 0
        %3528 = vmatpush1.bf16.msra.mxu0 0
        %3529 = vmatprep.mubr.bf16.mxu0 0
        %3530 = vmatmul.mubr.bf16.gmra.mrb[0].mxu0 %v3399
        %v3531 = vpop.f32.mrb[0].mxu0
        %v3532 = vadd.f32 0.0, %v3531
        %v3533 = vpop.f32.mrb[0].mxu0
        %v3534 = vadd.f32 0.0, %v3533
        %v3535 = vpop.f32.mrb[0].mxu0
        %v3536 = vpop.f32.mrb[0].mxu0
        %3537 = vdwg.mxu0
        %v3538 = vadd.f32 %v3396, %v3532
        %v3539 = vadd.f32 %v3397, %v3534
        %v3540 = vld [vmem:[#allocation4 + $0x4] sm:$0x3]
        %v3541 = vpack.c.bf16 %v3540, %v3540
        %s3542 = scalar_lea.vmem [#allocation13], 512
        %v3543 = vld [vmem:[%s3542] sm:$0xff]
        %v3544 = vld [vmem:[%s3542 + $0x8] sm:$0xff]
        %v3545 = vld [vmem:[%s3542 + $0x10] sm:$0xff]
        %v3546 = vld [vmem:[%s3542 + $0x18] sm:$0xff]
        %v3547 = vld [vmem:[%s3542 + $0x20] sm:$0xff]
        %v3548 = vld [vmem:[%s3542 + $0x28] sm:$0xff]
        %v3549 = vld [vmem:[%s3542 + $0x30] sm:$0xff]
        %v3550 = vld [vmem:[%s3542 + $0x38] sm:$0xff]
        %v3551 = vld [vmem:[%s3542 + $0x40] sm:$0xff]
        %v3552 = vld [vmem:[%s3542 + $0x48] sm:$0xff]
        %v3553 = vld [vmem:[%s3542 + $0x50] sm:$0xff]
        %v3554 = vld [vmem:[%s3542 + $0x58] sm:$0xff]
        %v3555 = vld [vmem:[%s3542 + $0x60] sm:$0xff]
        %v3556 = vld [vmem:[%s3542 + $0x68] sm:$0xff]
        %v3557 = vld [vmem:[%s3542 + $0x70] sm:$0xff]
        %v3558 = vld [vmem:[%s3542 + $0x78] sm:$0xff]
        %v3575 = vunpack.c.l.b16 %v3543
        %v3576 = vunpack.c.h.b16 %v3543
        %v3577 = vunpack.c.l.b16 %v3544
        %v3578 = vunpack.c.h.b16 %v3544
        %v3579 = vunpack.c.l.b16 %v3545
        %v3580 = vunpack.c.h.b16 %v3545
        %v3581 = vunpack.c.l.b16 %v3546
        %v3582 = vunpack.c.h.b16 %v3546
        %v3583 = vunpack.c.l.b16 %v3547
        %v3584 = vunpack.c.h.b16 %v3547
        %v3585 = vunpack.c.l.b16 %v3548
        %v3586 = vunpack.c.h.b16 %v3548
        %v3587 = vunpack.c.l.b16 %v3549
        %v3588 = vunpack.c.h.b16 %v3549
        %v3589 = vunpack.c.l.b16 %v3550
        %v3590 = vunpack.c.h.b16 %v3550
        %v3591 = vunpack.c.l.b16 %v3551
        %v3592 = vunpack.c.h.b16 %v3551
        %v3593 = vunpack.c.l.b16 %v3552
        %v3594 = vunpack.c.h.b16 %v3552
        %v3595 = vunpack.c.l.b16 %v3553
        %v3596 = vunpack.c.h.b16 %v3553
        %v3597 = vunpack.c.l.b16 %v3554
        %v3598 = vunpack.c.h.b16 %v3554
        %v3599 = vunpack.c.l.b16 %v3555
        %v3600 = vunpack.c.h.b16 %v3555
        %v3601 = vunpack.c.l.b16 %v3556
        %v3602 = vunpack.c.h.b16 %v3556
        %v3603 = vunpack.c.l.b16 %v3557
        %v3604 = vunpack.c.h.b16 %v3557
        %v3605 = vunpack.c.l.b16 %v3558
        %v3606 = vunpack.c.h.b16 %v3558
        %v3607 = vpack.c.b16 %v3577, %v3575
        %v3608 = vpack.c.b16 %v3578, %v3576
        %v3609 = vpack.c.b16 %v3581, %v3579
        %v3610 = vpack.c.b16 %v3582, %v3580
        %v3611 = vpack.c.b16 %v3585, %v3583
        %v3612 = vpack.c.b16 %v3586, %v3584
        %v3613 = vpack.c.b16 %v3589, %v3587
        %v3614 = vpack.c.b16 %v3590, %v3588
        %v3615 = vpack.c.b16 %v3593, %v3591
        %v3616 = vpack.c.b16 %v3594, %v3592
        %v3617 = vpack.c.b16 %v3597, %v3595
        %v3618 = vpack.c.b16 %v3598, %v3596
        %v3619 = vpack.c.b16 %v3601, %v3599
        %v3620 = vpack.c.b16 %v3602, %v3600
        %v3621 = vpack.c.b16 %v3605, %v3603
        %v3622 = vpack.c.b16 %v3606, %v3604
        %3639 = vmatprep.subr.bf16.mxu0 %v3608
        %3640 = vmatpush1.bf16.msra.mxu0 %v3607
        %3641 = vmatprep.subr.bf16.mxu0 %v3610
        %3642 = vmatpush1.bf16.msra.mxu0 %v3609
        %3643 = vmatprep.subr.bf16.mxu0 %v3612
        %3644 = vmatpush1.bf16.msra.mxu0 %v3611
        %3645 = vmatprep.subr.bf16.mxu0 %v3614
        %3646 = vmatpush1.bf16.msra.mxu0 %v3613
        %3647 = vmatprep.subr.bf16.mxu0 %v3616
        %3648 = vmatpush1.bf16.msra.mxu0 %v3615
        %3649 = vmatprep.subr.bf16.mxu0 %v3618
        %3650 = vmatpush1.bf16.msra.mxu0 %v3617
        %3651 = vmatprep.subr.bf16.mxu0 %v3620
        %3652 = vmatpush1.bf16.msra.mxu0 %v3619
        %3653 = vmatprep.subr.bf16.mxu0 %v3622
        %3654 = vmatpush1.bf16.msra.mxu0 %v3621
        %3655 = vmatprep.subr.bf16.mxu0 0
        %3656 = vmatpush1.bf16.msra.mxu0 0
        %3657 = vmatprep.subr.bf16.mxu0 0
        %3658 = vmatpush1.bf16.msra.mxu0 0
        %3659 = vmatprep.subr.bf16.mxu0 0
        %3660 = vmatpush1.bf16.msra.mxu0 0
        %3661 = vmatprep.subr.bf16.mxu0 0
        %3662 = vmatpush1.bf16.msra.mxu0 0
        %3663 = vmatprep.subr.bf16.mxu0 0
        %3664 = vmatpush1.bf16.msra.mxu0 0
        %3665 = vmatprep.subr.bf16.mxu0 0
        %3666 = vmatpush1.bf16.msra.mxu0 0
        %3667 = vmatprep.subr.bf16.mxu0 0
        %3668 = vmatpush1.bf16.msra.mxu0 0
        %3669 = vmatprep.subr.bf16.mxu0 0
        %3670 = vmatpush1.bf16.msra.mxu0 0
        %3671 = vmatprep.mubr.bf16.mxu0 0
        %3672 = vmatmul.mubr.bf16.gmra.mrb[0].mxu0 %v3541
        %v3673 = vpop.f32.mrb[0].mxu0
        %v3674 = vadd.f32 0.0, %v3673
        %v3675 = vpop.f32.mrb[0].mxu0
        %v3676 = vadd.f32 0.0, %v3675
        %v3677 = vpop.f32.mrb[0].mxu0
        %v3678 = vpop.f32.mrb[0].mxu0
        %3679 = vdwg.mxu0
        %v3680 = vadd.f32 %v3538, %v3674
        %v3681 = vadd.f32 %v3539, %v3676
        %v3682 = vmax.f32 %v3680, %v3681
        %v3683 = vld [vmem:[%s8] sm:$0x1]
        %v3685 = vlaneseq
        %v3686 = vshrl.u32 %v3685, 7
        %v3687 = vsub.s32 0, %v3686
        %v3688 = vrot.slane %v3683, %v3687
        %v3690 = vadd.f32 %v3682, %v3688
        %v3691 = vpack.c.bf16 %v3690, %v3690
        %v3692 = vsub.s32 %v1245, 1
        %v3693 = vmul.u32 %v3692, 2
        %vm3694 = vcmp.eq.s32.totalorder %v1248, %v3693
        %v3695 = vsel %vm3694, 1.0, 0.0
        %v3696 = vpack.c.bf16 %v3695, %v3695
        %v3697 = vadd.s32 %v3693, 1
        %vm3698 = vcmp.eq.s32.totalorder %v1248, %v3697
        %v3699 = vsel %vm3698, 1.0, 0.0
        %v3700 = vpack.c.bf16 %v3699, %v3699
        %vm3701 = vcmask 15360
        %v3703 = vsel %vm3701, %v3696, 0
        %vm3705 = vcmask 1040384
        %v3707 = vsel %vm3705, %v3691, 0
        %3709 = vmatprep.subr.bf16.mxu0 0
        %3710 = vmatpush1.bf16.msra.mxu0 %v3707
        %3711 = vmatprep.subr.bf16.mxu0 0
        %3712 = vmatpush1.bf16.msra.mxu0 0
        %3713 = vmatprep.subr.bf16.mxu0 0
        %3714 = vmatpush1.bf16.msra.mxu0 0
        %3715 = vmatprep.subr.bf16.mxu0 0
        %3716 = vmatpush1.bf16.msra.mxu0 0
        %3717 = vmatprep.subr.bf16.mxu0 0
        %3718 = vmatpush1.bf16.msra.mxu0 0
        %3719 = vmatprep.subr.bf16.mxu0 0
        %3720 = vmatpush1.bf16.msra.mxu0 0
        %3721 = vmatprep.subr.bf16.mxu0 0
        %3722 = vmatpush1.bf16.msra.mxu0 0
        %3723 = vmatprep.subr.bf16.mxu0 0
        %3724 = vmatpush1.bf16.msra.mxu0 0
        %3725 = vmatprep.subr.bf16.mxu0 0
        %3726 = vmatpush1.bf16.msra.mxu0 0
        %3727 = vmatprep.subr.bf16.mxu0 0
        %3728 = vmatpush1.bf16.msra.mxu0 0
        %3729 = vmatprep.subr.bf16.mxu0 0
        %3730 = vmatpush1.bf16.msra.mxu0 0
        %3731 = vmatprep.subr.bf16.mxu0 0
        %3732 = vmatpush1.bf16.msra.mxu0 0
        %3733 = vmatprep.subr.bf16.mxu0 0
        %3734 = vmatpush1.bf16.msra.mxu0 0
        %3735 = vmatprep.subr.bf16.mxu0 0
        %3736 = vmatpush1.bf16.msra.mxu0 0
        %3737 = vmatprep.subr.bf16.mxu0 0
        %3738 = vmatpush1.bf16.msra.mxu0 0
        %3739 = vmatprep.subr.bf16.mxu0 0
        %3740 = vmatpush1.bf16.msra.mxu0 0
        %3741 = vmatprep.mubr.bf16.mxu0 0
        %3742 = vmatmul.mubr.bf16.gmra.mrb[0].mxu0 %v3703
        %v3743 = vpop.f32.mrb[0].mxu0
        %v3744 = vadd.f32 0.0, %v3743
        %v3745 = vpop.f32.mrb[0].mxu0
        %v3746 = vpop.f32.mrb[0].mxu0
        %v3747 = vpop.f32.mrb[0].mxu0
        %3748 = vdwg.mxu0
        %v3750 = vsel %vm3701, %v3700, 0
        %3752 = vmatprep.subr.bf16.mxu0 0
        %3753 = vmatpush1.bf16.msra.mxu0 %v3707
        %3754 = vmatprep.subr.bf16.mxu0 0
        %3755 = vmatpush1.bf16.msra.mxu0 0
        %3756 = vmatprep.subr.bf16.mxu0 0
        %3757 = vmatpush1.bf16.msra.mxu0 0
        %3758 = vmatprep.subr.bf16.mxu0 0
        %3759 = vmatpush1.bf16.msra.mxu0 0
        %3760 = vmatprep.subr.bf16.mxu0 0
        %3761 = vmatpush1.bf16.msra.mxu0 0
        %3762 = vmatprep.subr.bf16.mxu0 0
        %3763 = vmatpush1.bf16.msra.mxu0 0
        %3764 = vmatprep.subr.bf16.mxu0 0
        %3765 = vmatpush1.bf16.msra.mxu0 0
        %3766 = vmatprep.subr.bf16.mxu0 0
        %3767 = vmatpush1.bf16.msra.mxu0 0
        %3768 = vmatprep.subr.bf16.mxu0 0
        %3769 = vmatpush1.bf16.msra.mxu0 0
        %3770 = vmatprep.subr.bf16.mxu0 0
        %3771 = vmatpush1.bf16.msra.mxu0 0
        %3772 = vmatprep.subr.bf16.mxu0 0
        %3773 = vmatpush1.bf16.msra.mxu0 0
        %3774 = vmatprep.subr.bf16.mxu0 0
        %3775 = vmatpush1.bf16.msra.mxu0 0
        %3776 = vmatprep.subr.bf16.mxu0 0
        %3777 = vmatpush1.bf16.msra.mxu0 0
        %3778 = vmatprep.subr.bf16.mxu0 0
        %3779 = vmatpush1.bf16.msra.mxu0 0
        %3780 = vmatprep.subr.bf16.mxu0 0
        %3781 = vmatpush1.bf16.msra.mxu0 0
        %3782 = vmatprep.subr.bf16.mxu0 0
        %3783 = vmatpush1.bf16.msra.mxu0 0
        %3784 = vmatprep.mubr.bf16.mxu0 0
        %3785 = vmatmul.mubr.bf16.gmra.mrb[0].mxu0 %v3750
        %v3786 = vpop.f32.mrb[0].mxu0
        %v3787 = vadd.f32 0.0, %v3786
        %v3788 = vpop.f32.mrb[0].mxu0
        %v3789 = vpop.f32.mrb[0].mxu0
        %v3790 = vpop.f32.mrb[0].mxu0
        %3791 = vdwg.mxu0
        %v3792 = vmax.f32 %v3744, %v3787
        %v3793 = vmax.f32 %v3792, 0.0
        %3794 = vst [vmem:[#allocation5] sm:$0x7] %v3793
        %v3795 = vld [vmem:[#allocation5] sm:$0x1]
        %v3796 = vpack.c.bf16 %v3795, %v3795
        %v3797 = vld [vmem:[%s9] sm:$0xff]
        %v3798 = vld [vmem:[%s9 + $0x8] sm:$0xff]
        %v3799 = vld [vmem:[%s9 + $0x10] sm:$0xff]
        %v3800 = vld [vmem:[%s9 + $0x18] sm:$0xff]
        %v3801 = vld [vmem:[%s9 + $0x20] sm:$0xff]
        %v3802 = vld [vmem:[%s9 + $0x28] sm:$0xff]
        %v3803 = vld [vmem:[%s9 + $0x30] sm:$0xff]
        %v3804 = vld [vmem:[%s9 + $0x38] sm:$0xff]
        %v3805 = vld [vmem:[%s9 + $0x40] sm:$0xff]
        %v3806 = vld [vmem:[%s9 + $0x48] sm:$0xff]
        %v3807 = vld [vmem:[%s9 + $0x50] sm:$0xff]
        %v3808 = vld [vmem:[%s9 + $0x58] sm:$0xff]
        %v3809 = vld [vmem:[%s9 + $0x60] sm:$0xff]
        %v3810 = vld [vmem:[%s9 + $0x68] sm:$0xff]
        %v3811 = vld [vmem:[%s9 + $0x70] sm:$0xff]
        %v3812 = vld [vmem:[%s9 + $0x78] sm:$0xff]
        %v3813 = vld [vmem:[#allocation5 + $0x1] sm:$0x1]
        %v3814 = vpack.c.bf16 %v3813, %v3813
        %v3815 = vld [vmem:[%s10] sm:$0xff]
        %v3816 = vld [vmem:[%s10 + $0x8] sm:$0xff]
        %v3817 = vld [vmem:[%s10 + $0x10] sm:$0xff]
        %v3818 = vld [vmem:[%s10 + $0x18] sm:$0xff]
        %v3819 = vld [vmem:[%s10 + $0x20] sm:$0xff]
        %v3820 = vld [vmem:[%s10 + $0x28] sm:$0xff]
        %v3821 = vld [vmem:[%s10 + $0x30] sm:$0xff]
        %v3822 = vld [vmem:[%s10 + $0x38] sm:$0xff]
        %v3823 = vld [vmem:[%s10 + $0x40] sm:$0xff]
        %v3824 = vld [vmem:[%s10 + $0x48] sm:$0xff]
        %v3825 = vld [vmem:[%s10 + $0x50] sm:$0xff]
        %v3826 = vld [vmem:[%s10 + $0x58] sm:$0xff]
        %v3827 = vld [vmem:[%s10 + $0x60] sm:$0xff]
        %v3828 = vld [vmem:[%s10 + $0x68] sm:$0xff]
        %v3829 = vld [vmem:[%s10 + $0x70] sm:$0xff]
        %v3830 = vld [vmem:[%s10 + $0x78] sm:$0xff]
        %v3847 = vunpack.c.l.b16 %v3815
        %v3848 = vunpack.c.h.b16 %v3815
        %v3849 = vunpack.c.l.b16 %v3816
        %v3850 = vunpack.c.h.b16 %v3816
        %v3851 = vunpack.c.l.b16 %v3817
        %v3852 = vunpack.c.h.b16 %v3817
        %v3853 = vunpack.c.l.b16 %v3818
        %v3854 = vunpack.c.h.b16 %v3818
        %v3855 = vunpack.c.l.b16 %v3819
        %v3856 = vunpack.c.h.b16 %v3819
        %v3857 = vunpack.c.l.b16 %v3820
        %v3858 = vunpack.c.h.b16 %v3820
        %v3859 = vunpack.c.l.b16 %v3821
        %v3860 = vunpack.c.h.b16 %v3821
        %v3861 = vunpack.c.l.b16 %v3822
        %v3862 = vunpack.c.h.b16 %v3822
        %v3863 = vunpack.c.l.b16 %v3823
        %v3864 = vunpack.c.h.b16 %v3823
        %v3865 = vunpack.c.l.b16 %v3824
        %v3866 = vunpack.c.h.b16 %v3824
        %v3867 = vunpack.c.l.b16 %v3825
        %v3868 = vunpack.c.h.b16 %v3825
        %v3869 = vunpack.c.l.b16 %v3826
        %v3870 = vunpack.c.h.b16 %v3826
        %v3871 = vunpack.c.l.b16 %v3827
        %v3872 = vunpack.c.h.b16 %v3827
        %v3873 = vunpack.c.l.b16 %v3828
        %v3874 = vunpack.c.h.b16 %v3828
        %v3875 = vunpack.c.l.b16 %v3829
        %v3876 = vunpack.c.h.b16 %v3829
        %v3877 = vunpack.c.l.b16 %v3830
        %v3878 = vunpack.c.h.b16 %v3830
        %v3879 = vpack.c.b16 %v3849, %v3847
        %v3880 = vpack.c.b16 %v3850, %v3848
        %v3881 = vpack.c.b16 %v3853, %v3851
        %v3882 = vpack.c.b16 %v3854, %v3852
        %v3883 = vpack.c.b16 %v3857, %v3855
        %v3884 = vpack.c.b16 %v3858, %v3856
        %v3885 = vpack.c.b16 %v3861, %v3859
        %v3886 = vpack.c.b16 %v3862, %v3860
        %v3887 = vpack.c.b16 %v3865, %v3863
        %v3888 = vpack.c.b16 %v3866, %v3864
        %v3889 = vpack.c.b16 %v3869, %v3867
        %v3890 = vpack.c.b16 %v3870, %v3868
        %v3891 = vpack.c.b16 %v3873, %v3871
        %v3892 = vpack.c.b16 %v3874, %v3872
        %v3893 = vpack.c.b16 %v3877, %v3875
        %v3894 = vpack.c.b16 %v3878, %v3876
        %3911 = vmatprep.subr.bf16.mxu0 %v3880
        %3912 = vmatpush1.bf16.msra.mxu0 %v3879
        %3913 = vmatprep.subr.bf16.mxu0 %v3882
        %3914 = vmatpush1.bf16.msra.mxu0 %v3881
        %3915 = vmatprep.subr.bf16.mxu0 %v3884
        %3916 = vmatpush1.bf16.msra.mxu0 %v3883
        %3917 = vmatprep.subr.bf16.mxu0 %v3886
        %3918 = vmatpush1.bf16.msra.mxu0 %v3885
        %3919 = vmatprep.subr.bf16.mxu0 %v3888
        %3920 = vmatpush1.bf16.msra.mxu0 %v3887
        %3921 = vmatprep.subr.bf16.mxu0 %v3890
        %3922 = vmatpush1.bf16.msra.mxu0 %v3889
        %3923 = vmatprep.subr.bf16.mxu0 %v3892
        %3924 = vmatpush1.bf16.msra.mxu0 %v3891
        %3925 = vmatprep.subr.bf16.mxu0 %v3894
        %3926 = vmatpush1.bf16.msra.mxu0 %v3893
        %3927 = vmatprep.subr.bf16.mxu0 0
        %3928 = vmatpush1.bf16.msra.mxu0 0
        %3929 = vmatprep.subr.bf16.mxu0 0
        %3930 = vmatpush1.bf16.msra.mxu0 0
        %3931 = vmatprep.subr.bf16.mxu0 0
        %3932 = vmatpush1.bf16.msra.mxu0 0
        %3933 = vmatprep.subr.bf16.mxu0 0
        %3934 = vmatpush1.bf16.msra.mxu0 0
        %3935 = vmatprep.subr.bf16.mxu0 0
        %3936 = vmatpush1.bf16.msra.mxu0 0
        %3937 = vmatprep.subr.bf16.mxu0 0
        %3938 = vmatpush1.bf16.msra.mxu0 0
        %3939 = vmatprep.subr.bf16.mxu0 0
        %3940 = vmatpush1.bf16.msra.mxu0 0
        %3941 = vmatprep.subr.bf16.mxu0 0
        %3942 = vmatpush1.bf16.msra.mxu0 0
        %3943 = vmatprep.mubr.bf16.mxu0 0
        %3944 = vmatmul.mubr.bf16.gmra.mrb[0].mxu0 %v3814
        %v3945 = vpop.f32.mrb[0].mxu0
        %v3946 = vadd.f32 0.0, %v3945
        %v3947 = vpop.f32.mrb[0].mxu0
        %v3948 = vadd.f32 0.0, %v3947
        %v3949 = vpop.f32.mrb[0].mxu0
        %v3950 = vpop.f32.mrb[0].mxu0
        %3951 = vdwg.mxu0
        %v3968 = vunpack.c.l.b16 %v3797
        %v3969 = vunpack.c.h.b16 %v3797
        %v3970 = vunpack.c.l.b16 %v3798
        %v3971 = vunpack.c.h.b16 %v3798
        %v3972 = vunpack.c.l.b16 %v3799
        %v3973 = vunpack.c.h.b16 %v3799
        %v3974 = vunpack.c.l.b16 %v3800
        %v3975 = vunpack.c.h.b16 %v3800
        %v3976 = vunpack.c.l.b16 %v3801
        %v3977 = vunpack.c.h.b16 %v3801
        %v3978 = vunpack.c.l.b16 %v3802
        %v3979 = vunpack.c.h.b16 %v3802
        %v3980 = vunpack.c.l.b16 %v3803
        %v3981 = vunpack.c.h.b16 %v3803
        %v3982 = vunpack.c.l.b16 %v3804
        %v3983 = vunpack.c.h.b16 %v3804
        %v3984 = vunpack.c.l.b16 %v3805
        %v3985 = vunpack.c.h.b16 %v3805
        %v3986 = vunpack.c.l.b16 %v3806
        %v3987 = vunpack.c.h.b16 %v3806
        %v3988 = vunpack.c.l.b16 %v3807
        %v3989 = vunpack.c.h.b16 %v3807
        %v3990 = vunpack.c.l.b16 %v3808
        %v3991 = vunpack.c.h.b16 %v3808
        %v3992 = vunpack.c.l.b16 %v3809
        %v3993 = vunpack.c.h.b16 %v3809
        %v3994 = vunpack.c.l.b16 %v3810
        %v3995 = vunpack.c.h.b16 %v3810
        %v3996 = vunpack.c.l.b16 %v3811
        %v3997 = vunpack.c.h.b16 %v3811
        %v3998 = vunpack.c.l.b16 %v3812
        %v3999 = vunpack.c.h.b16 %v3812
        %v4000 = vpack.c.b16 %v3970, %v3968
        %v4001 = vpack.c.b16 %v3971, %v3969
        %v4002 = vpack.c.b16 %v3974, %v3972
        %v4003 = vpack.c.b16 %v3975, %v3973
        %v4004 = vpack.c.b16 %v3978, %v3976
        %v4005 = vpack.c.b16 %v3979, %v3977
        %v4006 = vpack.c.b16 %v3982, %v3980
        %v4007 = vpack.c.b16 %v3983, %v3981
        %v4008 = vpack.c.b16 %v3986, %v3984
        %v4009 = vpack.c.b16 %v3987, %v3985
        %v4010 = vpack.c.b16 %v3990, %v3988
        %v4011 = vpack.c.b16 %v3991, %v3989
        %v4012 = vpack.c.b16 %v3994, %v3992
        %v4013 = vpack.c.b16 %v3995, %v3993
        %v4014 = vpack.c.b16 %v3998, %v3996
        %v4015 = vpack.c.b16 %v3999, %v3997
        %4032 = vmatprep.subr.bf16.mxu0 %v4001
        %4033 = vmatpush1.bf16.msra.mxu0 %v4000
        %4034 = vmatprep.subr.bf16.mxu0 %v4003
        %4035 = vmatpush1.bf16.msra.mxu0 %v4002
        %4036 = vmatprep.subr.bf16.mxu0 %v4005
        %4037 = vmatpush1.bf16.msra.mxu0 %v4004
        %4038 = vmatprep.subr.bf16.mxu0 %v4007
        %4039 = vmatpush1.bf16.msra.mxu0 %v4006
        %4040 = vmatprep.subr.bf16.mxu0 %v4009
        %4041 = vmatpush1.bf16.msra.mxu0 %v4008
        %4042 = vmatprep.subr.bf16.mxu0 %v4011
        %4043 = vmatpush1.bf16.msra.mxu0 %v4010
        %4044 = vmatprep.subr.bf16.mxu0 %v4013
        %4045 = vmatpush1.bf16.msra.mxu0 %v4012
        %4046 = vmatprep.subr.bf16.mxu0 %v4015
        %4047 = vmatpush1.bf16.msra.mxu0 %v4014
        %4048 = vmatprep.subr.bf16.mxu0 0
        %4049 = vmatpush1.bf16.msra.mxu0 0
        %4050 = vmatprep.subr.bf16.mxu0 0
        %4051 = vmatpush1.bf16.msra.mxu0 0
        %4052 = vmatprep.subr.bf16.mxu0 0
        %4053 = vmatpush1.bf16.msra.mxu0 0
        %4054 = vmatprep.subr.bf16.mxu0 0
        %4055 = vmatpush1.bf16.msra.mxu0 0
        %4056 = vmatprep.subr.bf16.mxu0 0
        %4057 = vmatpush1.bf16.msra.mxu0 0
        %4058 = vmatprep.subr.bf16.mxu0 0
        %4059 = vmatpush1.bf16.msra.mxu0 0
        %4060 = vmatprep.subr.bf16.mxu0 0
        %4061 = vmatpush1.bf16.msra.mxu0 0
        %4062 = vmatprep.subr.bf16.mxu0 0
        %4063 = vmatpush1.bf16.msra.mxu0 0
        %4064 = vmatprep.mubr.bf16.mxu0 0
        %4065 = vmatmul.mubr.bf16.gmra.mrb[0].mxu0 %v3796
        %v4066 = vpop.f32.mrb[0].mxu0
        %v4067 = vadd.f32 %v3946, %v4066
        %v4068 = vpop.f32.mrb[0].mxu0
        %v4069 = vadd.f32 %v3948, %v4068
        %v4070 = vpop.f32.mrb[0].mxu0
        %v4071 = vpop.f32.mrb[0].mxu0
        %4072 = vdwg.mxu0
        %v4073 = vld [vmem:[#allocation5 + $0x2] sm:$0x1]
        %v4074 = vpack.c.bf16 %v4073, %v4073
        %v4075 = vld [vmem:[#allocation14] sm:$0xff]
        %v4076 = vld [vmem:[#allocation14 + $0x8] sm:$0xff]
        %v4077 = vld [vmem:[#allocation14 + $0x10] sm:$0xff]
        %v4078 = vld [vmem:[#allocation14 + $0x18] sm:$0xff]
        %v4079 = vld [vmem:[#allocation14 + $0x20] sm:$0xff]
        %v4080 = vld [vmem:[#allocation14 + $0x28] sm:$0xff]
        %v4081 = vld [vmem:[#allocation14 + $0x30] sm:$0xff]
        %v4082 = vld [vmem:[#allocation14 + $0x38] sm:$0xff]
        %v4083 = vld [vmem:[#allocation14 + $0x40] sm:$0xff]
        %v4084 = vld [vmem:[#allocation14 + $0x48] sm:$0xff]
        %v4085 = vld [vmem:[#allocation14 + $0x50] sm:$0xff]
        %v4086 = vld [vmem:[#allocation14 + $0x58] sm:$0xff]
        %v4087 = vld [vmem:[#allocation14 + $0x60] sm:$0xff]
        %v4088 = vld [vmem:[#allocation14 + $0x68] sm:$0xff]
        %v4089 = vld [vmem:[#allocation14 + $0x70] sm:$0xff]
        %v4090 = vld [vmem:[#allocation14 + $0x78] sm:$0xff]
        %v4107 = vunpack.c.l.b16 %v4075
        %v4108 = vunpack.c.h.b16 %v4075
        %v4109 = vunpack.c.l.b16 %v4076
        %v4110 = vunpack.c.h.b16 %v4076
        %v4111 = vunpack.c.l.b16 %v4077
        %v4112 = vunpack.c.h.b16 %v4077
        %v4113 = vunpack.c.l.b16 %v4078
        %v4114 = vunpack.c.h.b16 %v4078
        %v4115 = vunpack.c.l.b16 %v4079
        %v4116 = vunpack.c.h.b16 %v4079
        %v4117 = vunpack.c.l.b16 %v4080
        %v4118 = vunpack.c.h.b16 %v4080
        %v4119 = vunpack.c.l.b16 %v4081
        %v4120 = vunpack.c.h.b16 %v4081
        %v4121 = vunpack.c.l.b16 %v4082
        %v4122 = vunpack.c.h.b16 %v4082
        %v4123 = vunpack.c.l.b16 %v4083
        %v4124 = vunpack.c.h.b16 %v4083
        %v4125 = vunpack.c.l.b16 %v4084
        %v4126 = vunpack.c.h.b16 %v4084
        %v4127 = vunpack.c.l.b16 %v4085
        %v4128 = vunpack.c.h.b16 %v4085
        %v4129 = vunpack.c.l.b16 %v4086
        %v4130 = vunpack.c.h.b16 %v4086
        %v4131 = vunpack.c.l.b16 %v4087
        %v4132 = vunpack.c.h.b16 %v4087
        %v4133 = vunpack.c.l.b16 %v4088
        %v4134 = vunpack.c.h.b16 %v4088
        %v4135 = vunpack.c.l.b16 %v4089
        %v4136 = vunpack.c.h.b16 %v4089
        %v4137 = vunpack.c.l.b16 %v4090
        %v4138 = vunpack.c.h.b16 %v4090
        %v4139 = vpack.c.b16 %v4109, %v4107
        %v4140 = vpack.c.b16 %v4110, %v4108
        %v4141 = vpack.c.b16 %v4113, %v4111
        %v4142 = vpack.c.b16 %v4114, %v4112
        %v4143 = vpack.c.b16 %v4117, %v4115
        %v4144 = vpack.c.b16 %v4118, %v4116
        %v4145 = vpack.c.b16 %v4121, %v4119
        %v4146 = vpack.c.b16 %v4122, %v4120
        %v4147 = vpack.c.b16 %v4125, %v4123
        %v4148 = vpack.c.b16 %v4126, %v4124
        %v4149 = vpack.c.b16 %v4129, %v4127
        %v4150 = vpack.c.b16 %v4130, %v4128
        %v4151 = vpack.c.b16 %v4133, %v4131
        %v4152 = vpack.c.b16 %v4134, %v4132
        %v4153 = vpack.c.b16 %v4137, %v4135
        %v4154 = vpack.c.b16 %v4138, %v4136
        %4171 = vmatprep.subr.bf16.mxu0 %v4140
        %4172 = vmatpush1.bf16.msra.mxu0 %v4139
        %4173 = vmatprep.subr.bf16.mxu0 %v4142
        %4174 = vmatpush1.bf16.msra.mxu0 %v4141
        %4175 = vmatprep.subr.bf16.mxu0 %v4144
        %4176 = vmatpush1.bf16.msra.mxu0 %v4143
        %4177 = vmatprep.subr.bf16.mxu0 %v4146
        %4178 = vmatpush1.bf16.msra.mxu0 %v4145
        %4179 = vmatprep.subr.bf16.mxu0 %v4148
        %4180 = vmatpush1.bf16.msra.mxu0 %v4147
        %4181 = vmatprep.subr.bf16.mxu0 %v4150
        %4182 = vmatpush1.bf16.msra.mxu0 %v4149
        %4183 = vmatprep.subr.bf16.mxu0 %v4152
        %4184 = vmatpush1.bf16.msra.mxu0 %v4151
        %4185 = vmatprep.subr.bf16.mxu0 %v4154
        %4186 = vmatpush1.bf16.msra.mxu0 %v4153
        %4187 = vmatprep.subr.bf16.mxu0 0
        %4188 = vmatpush1.bf16.msra.mxu0 0
        %4189 = vmatprep.subr.bf16.mxu0 0
        %4190 = vmatpush1.bf16.msra.mxu0 0
        %4191 = vmatprep.subr.bf16.mxu0 0
        %4192 = vmatpush1.bf16.msra.mxu0 0
        %4193 = vmatprep.subr.bf16.mxu0 0
        %4194 = vmatpush1.bf16.msra.mxu0 0
        %4195 = vmatprep.subr.bf16.mxu0 0
        %4196 = vmatpush1.bf16.msra.mxu0 0
        %4197 = vmatprep.subr.bf16.mxu0 0
        %4198 = vmatpush1.bf16.msra.mxu0 0
        %4199 = vmatprep.subr.bf16.mxu0 0
        %4200 = vmatpush1.bf16.msra.mxu0 0
        %4201 = vmatprep.subr.bf16.mxu0 0
        %4202 = vmatpush1.bf16.msra.mxu0 0
        %4203 = vmatprep.mubr.bf16.mxu0 0
        %4204 = vmatmul.mubr.bf16.gmra.mrb[0].mxu0 %v4074
        %v4205 = vpop.f32.mrb[0].mxu0
        %v4206 = vadd.f32 0.0, %v4205
        %v4207 = vpop.f32.mrb[0].mxu0
        %v4208 = vadd.f32 0.0, %v4207
        %v4209 = vpop.f32.mrb[0].mxu0
        %v4210 = vpop.f32.mrb[0].mxu0
        %4211 = vdwg.mxu0
        %v4212 = vadd.f32 %v4067, %v4206
        %v4213 = vadd.f32 %v4069, %v4208
        %v4214 = vld [vmem:[%s12] sm:$0x3]
        %v4216 = vlaneseq
        %v4217 = vshrl.u32 %v4216, 7
        %v4218 = vsub.s32 0, %v4217
        %v4219 = vrot.slane %v4214, %v4218
        %v4220 = vlaneseq
        %v4221 = vshrl.u32 %v4220, 7
        %v4222 = vsub.s32 1, %v4221
        %v4223 = vrot.slane %v4214, %v4222
        %v4226 = vadd.f32 %v4212, %v4219
        %v4227 = vadd.f32 %v4213, %v4223
        %v4229 = vrot.slane %v4227, 7
        %v4231 = vsel %vm3705, %v4226, %v4229
        %v4232 = vpack.c.bf16 %v4231, %v4231
        %vm4233 = vcmp.lt.s32.totalorder %v1248, 1
        %v4234 = vmul.u32 %v1248, 2
        %v4235 = vadd.s32 %v4234, 1
        %vm4236 = vcmp.eq.s32.totalorder %v1245, %v4235
        %vm4237 = vmand %vm4233, %vm4236
        %vm4238 = vcmp.ge.s32.totalorder %v1248, 1
        %v4239 = vsub.s32 %v1248, 1
        %v4240 = vmul.u32 %v4239, 2
        %v4241 = vadd.s32 %v4240, 2
        %vm4242 = vcmp.eq.s32.totalorder %v1245, %v4241
        %vm4243 = vmand %vm4238, %vm4242
        %vm4244 = vmor %vm4237, %vm4243
        %v4245 = vsel %vm4244, 1.0, 0.0
        %v4246 = vpack.c.bf16 %v4245, %v4245
        %v4248 = vsel %vm3701, %v4246, 0
        %v4251 = vsel %vm3705, %v4232, 0
        %4253 = vmatprep.subr.bf16.mxu0 0
        %4254 = vmatpush1.bf16.msra.mxu0 %v4251
        %4255 = vmatprep.subr.bf16.mxu0 0
        %4256 = vmatpush1.bf16.msra.mxu0 0
        %4257 = vmatprep.subr.bf16.mxu0 0
        %4258 = vmatpush1.bf16.msra.mxu0 0
        %4259 = vmatprep.subr.bf16.mxu0 0
        %4260 = vmatpush1.bf16.msra.mxu0 0
        %4261 = vmatprep.subr.bf16.mxu0 0
        %4262 = vmatpush1.bf16.msra.mxu0 0
        %4263 = vmatprep.subr.bf16.mxu0 0
        %4264 = vmatpush1.bf16.msra.mxu0 0
        %4265 = vmatprep.subr.bf16.mxu0 0
        %4266 = vmatpush1.bf16.msra.mxu0 0
        %4267 = vmatprep.subr.bf16.mxu0 0
        %4268 = vmatpush1.bf16.msra.mxu0 0
        %4269 = vmatprep.subr.bf16.mxu0 0
        %4270 = vmatpush1.bf16.msra.mxu0 0
        %4271 = vmatprep.subr.bf16.mxu0 0
        %4272 = vmatpush1.bf16.msra.mxu0 0
        %4273 = vmatprep.subr.bf16.mxu0 0
        %4274 = vmatpush1.bf16.msra.mxu0 0
        %4275 = vmatprep.subr.bf16.mxu0 0
        %4276 = vmatpush1.bf16.msra.mxu0 0
        %4277 = vmatprep.subr.bf16.mxu0 0
        %4278 = vmatpush1.bf16.msra.mxu0 0
        %4279 = vmatprep.subr.bf16.mxu0 0
        %4280 = vmatpush1.bf16.msra.mxu0 0
        %4281 = vmatprep.subr.bf16.mxu0 0
        %4282 = vmatpush1.bf16.msra.mxu0 0
        %4283 = vmatprep.subr.bf16.mxu0 0
        %4284 = vmatpush1.bf16.msra.mxu0 0
        %4285 = vmatprep.mubr.bf16.mxu0 0
        %4286 = vmatmul.mubr.bf16.gmra.mrb[0].mxu0 %v4248
        %v4287 = vpop.f32.mrb[0].mxu0
        %v4288 = vadd.f32 0.0, %v4287
        %v4289 = vpop.f32.mrb[0].mxu0
        %v4290 = vpop.f32.mrb[0].mxu0
        %v4291 = vpop.f32.mrb[0].mxu0
        %4292 = vdwg.mxu0
        %v4293 = vmax.f32 %v4288, 0.0
        %4294 = vst [vmem:[#allocation6] sm:$0xf] %v4293
        %v4295 = vld [vmem:[#allocation6] sm:$0x3]
        %v4296 = vpack.c.bf16 %v4295, %v4295
        %v4297 = vld [vmem:[#allocation16] sm:$0xff]
        %v4298 = vld [vmem:[#allocation16 + $0x8] sm:$0xff]
        %v4299 = vld [vmem:[#allocation16 + $0x10] sm:$0xff]
        %v4300 = vld [vmem:[#allocation16 + $0x18] sm:$0xff]
        %v4301 = vld [vmem:[#allocation16 + $0x20] sm:$0xff]
        %v4302 = vld [vmem:[#allocation16 + $0x28] sm:$0xff]
        %v4303 = vld [vmem:[#allocation16 + $0x30] sm:$0xff]
        %v4304 = vld [vmem:[#allocation16 + $0x38] sm:$0xff]
        %v4305 = vld [vmem:[#allocation16 + $0x40] sm:$0xff]
        %v4306 = vld [vmem:[#allocation16 + $0x48] sm:$0xff]
        %v4307 = vld [vmem:[#allocation16 + $0x50] sm:$0xff]
        %v4308 = vld [vmem:[#allocation16 + $0x58] sm:$0xff]
        %v4309 = vld [vmem:[#allocation16 + $0x60] sm:$0xff]
        %v4310 = vld [vmem:[#allocation16 + $0x68] sm:$0xff]
        %v4311 = vld [vmem:[#allocation16 + $0x70] sm:$0xff]
        %v4312 = vld [vmem:[#allocation16 + $0x78] sm:$0xff]
        %v4313 = vld [vmem:[#allocation6 + $0x1] sm:$0x3]
        %v4314 = vpack.c.bf16 %v4313, %v4313
        %v4315 = vld [vmem:[#allocation17] sm:$0xff]
        %v4316 = vld [vmem:[#allocation17 + $0x8] sm:$0xff]
        %v4317 = vld [vmem:[#allocation17 + $0x10] sm:$0xff]
        %v4318 = vld [vmem:[#allocation17 + $0x18] sm:$0xff]
        %v4319 = vld [vmem:[#allocation17 + $0x20] sm:$0xff]
        %v4320 = vld [vmem:[#allocation17 + $0x28] sm:$0xff]
        %v4321 = vld [vmem:[#allocation17 + $0x30] sm:$0xff]
        %v4322 = vld [vmem:[#allocation17 + $0x38] sm:$0xff]
        %v4323 = vld [vmem:[#allocation17 + $0x40] sm:$0xff]
        %v4324 = vld [vmem:[#allocation17 + $0x48] sm:$0xff]
        %v4325 = vld [vmem:[#allocation17 + $0x50] sm:$0xff]
        %v4326 = vld [vmem:[#allocation17 + $0x58] sm:$0xff]
        %v4327 = vld [vmem:[#allocation17 + $0x60] sm:$0xff]
        %v4328 = vld [vmem:[#allocation17 + $0x68] sm:$0xff]
        %v4329 = vld [vmem:[#allocation17 + $0x70] sm:$0xff]
        %v4330 = vld [vmem:[#allocation17 + $0x78] sm:$0xff]
        %v4347 = vunpack.c.l.b16 %v4315
        %v4348 = vunpack.c.h.b16 %v4315
        %v4349 = vunpack.c.l.b16 %v4316
        %v4350 = vunpack.c.h.b16 %v4316
        %v4351 = vunpack.c.l.b16 %v4317
        %v4352 = vunpack.c.h.b16 %v4317
        %v4353 = vunpack.c.l.b16 %v4318
        %v4354 = vunpack.c.h.b16 %v4318
        %v4355 = vunpack.c.l.b16 %v4319
        %v4356 = vunpack.c.h.b16 %v4319
        %v4357 = vunpack.c.l.b16 %v4320
        %v4358 = vunpack.c.h.b16 %v4320
        %v4359 = vunpack.c.l.b16 %v4321
        %v4360 = vunpack.c.h.b16 %v4321
        %v4361 = vunpack.c.l.b16 %v4322
        %v4362 = vunpack.c.h.b16 %v4322
        %v4363 = vunpack.c.l.b16 %v4323
        %v4364 = vunpack.c.h.b16 %v4323
        %v4365 = vunpack.c.l.b16 %v4324
        %v4366 = vunpack.c.h.b16 %v4324
        %v4367 = vunpack.c.l.b16 %v4325
        %v4368 = vunpack.c.h.b16 %v4325
        %v4369 = vunpack.c.l.b16 %v4326
        %v4370 = vunpack.c.h.b16 %v4326
        %v4371 = vunpack.c.l.b16 %v4327
        %v4372 = vunpack.c.h.b16 %v4327
        %v4373 = vunpack.c.l.b16 %v4328
        %v4374 = vunpack.c.h.b16 %v4328
        %v4375 = vunpack.c.l.b16 %v4329
        %v4376 = vunpack.c.h.b16 %v4329
        %v4377 = vunpack.c.l.b16 %v4330
        %v4378 = vunpack.c.h.b16 %v4330
        %v4379 = vpack.c.b16 %v4349, %v4347
        %v4380 = vpack.c.b16 %v4350, %v4348
        %v4381 = vpack.c.b16 %v4353, %v4351
        %v4382 = vpack.c.b16 %v4354, %v4352
        %v4383 = vpack.c.b16 %v4357, %v4355
        %v4384 = vpack.c.b16 %v4358, %v4356
        %v4385 = vpack.c.b16 %v4361, %v4359
        %v4386 = vpack.c.b16 %v4362, %v4360
        %v4387 = vpack.c.b16 %v4365, %v4363
        %v4388 = vpack.c.b16 %v4366, %v4364
        %v4389 = vpack.c.b16 %v4369, %v4367
        %v4390 = vpack.c.b16 %v4370, %v4368
        %v4391 = vpack.c.b16 %v4373, %v4371
        %v4392 = vpack.c.b16 %v4374, %v4372
        %v4393 = vpack.c.b16 %v4377, %v4375
        %v4394 = vpack.c.b16 %v4378, %v4376
        %4411 = vmatprep.subr.bf16.mxu0 %v4380
        %4412 = vmatpush1.bf16.msra.mxu0 %v4379
        %4413 = vmatprep.subr.bf16.mxu0 %v4382
        %4414 = vmatpush1.bf16.msra.mxu0 %v4381
        %4415 = vmatprep.subr.bf16.mxu0 %v4384
        %4416 = vmatpush1.bf16.msra.mxu0 %v4383
        %4417 = vmatprep.subr.bf16.mxu0 %v4386
        %4418 = vmatpush1.bf16.msra.mxu0 %v4385
        %4419 = vmatprep.subr.bf16.mxu0 %v4388
        %4420 = vmatpush1.bf16.msra.mxu0 %v4387
        %4421 = vmatprep.subr.bf16.mxu0 %v4390
        %4422 = vmatpush1.bf16.msra.mxu0 %v4389
        %4423 = vmatprep.subr.bf16.mxu0 %v4392
        %4424 = vmatpush1.bf16.msra.mxu0 %v4391
        %4425 = vmatprep.subr.bf16.mxu0 %v4394
        %4426 = vmatpush1.bf16.msra.mxu0 %v4393
        %4427 = vmatprep.subr.bf16.mxu0 0
        %4428 = vmatpush1.bf16.msra.mxu0 0
        %4429 = vmatprep.subr.bf16.mxu0 0
        %4430 = vmatpush1.bf16.msra.mxu0 0
        %4431 = vmatprep.subr.bf16.mxu0 0
        %4432 = vmatpush1.bf16.msra.mxu0 0
        %4433 = vmatprep.subr.bf16.mxu0 0
        %4434 = vmatpush1.bf16.msra.mxu0 0
        %4435 = vmatprep.subr.bf16.mxu0 0
        %4436 = vmatpush1.bf16.msra.mxu0 0
        %4437 = vmatprep.subr.bf16.mxu0 0
        %4438 = vmatpush1.bf16.msra.mxu0 0
        %4439 = vmatprep.subr.bf16.mxu0 0
        %4440 = vmatpush1.bf16.msra.mxu0 0
        %4441 = vmatprep.subr.bf16.mxu0 0
        %4442 = vmatpush1.bf16.msra.mxu0 0
        %4443 = vmatprep.mubr.bf16.mxu0 0
        %4444 = vmatmul.mubr.bf16.gmra.mrb[0].mxu0 %v4314
        %v4445 = vpop.f32.mrb[0].mxu0
        %v4446 = vadd.f32 0.0, %v4445
        %v4447 = vpop.f32.mrb[0].mxu0
        %v4448 = vadd.f32 0.0, %v4447
        %v4449 = vpop.f32.mrb[0].mxu0
        %v4450 = vpop.f32.mrb[0].mxu0
        %4451 = vdwg.mxu0
        %v4468 = vunpack.c.l.b16 %v4297
        %v4469 = vunpack.c.h.b16 %v4297
        %v4470 = vunpack.c.l.b16 %v4298
        %v4471 = vunpack.c.h.b16 %v4298
        %v4472 = vunpack.c.l.b16 %v4299
        %v4473 = vunpack.c.h.b16 %v4299
        %v4474 = vunpack.c.l.b16 %v4300
        %v4475 = vunpack.c.h.b16 %v4300
        %v4476 = vunpack.c.l.b16 %v4301
        %v4477 = vunpack.c.h.b16 %v4301
        %v4478 = vunpack.c.l.b16 %v4302
        %v4479 = vunpack.c.h.b16 %v4302
        %v4480 = vunpack.c.l.b16 %v4303
        %v4481 = vunpack.c.h.b16 %v4303
        %v4482 = vunpack.c.l.b16 %v4304
        %v4483 = vunpack.c.h.b16 %v4304
        %v4484 = vunpack.c.l.b16 %v4305
        %v4485 = vunpack.c.h.b16 %v4305
        %v4486 = vunpack.c.l.b16 %v4306
        %v4487 = vunpack.c.h.b16 %v4306
        %v4488 = vunpack.c.l.b16 %v4307
        %v4489 = vunpack.c.h.b16 %v4307
        %v4490 = vunpack.c.l.b16 %v4308
        %v4491 = vunpack.c.h.b16 %v4308
        %v4492 = vunpack.c.l.b16 %v4309
        %v4493 = vunpack.c.h.b16 %v4309
        %v4494 = vunpack.c.l.b16 %v4310
        %v4495 = vunpack.c.h.b16 %v4310
        %v4496 = vunpack.c.l.b16 %v4311
        %v4497 = vunpack.c.h.b16 %v4311
        %v4498 = vunpack.c.l.b16 %v4312
        %v4499 = vunpack.c.h.b16 %v4312
        %v4500 = vpack.c.b16 %v4470, %v4468
        %v4501 = vpack.c.b16 %v4471, %v4469
        %v4502 = vpack.c.b16 %v4474, %v4472
        %v4503 = vpack.c.b16 %v4475, %v4473
        %v4504 = vpack.c.b16 %v4478, %v4476
        %v4505 = vpack.c.b16 %v4479, %v4477
        %v4506 = vpack.c.b16 %v4482, %v4480
        %v4507 = vpack.c.b16 %v4483, %v4481
        %v4508 = vpack.c.b16 %v4486, %v4484
        %v4509 = vpack.c.b16 %v4487, %v4485
        %v4510 = vpack.c.b16 %v4490, %v4488
        %v4511 = vpack.c.b16 %v4491, %v4489
        %v4512 = vpack.c.b16 %v4494, %v4492
        %v4513 = vpack.c.b16 %v4495, %v4493
        %v4514 = vpack.c.b16 %v4498, %v4496
        %v4515 = vpack.c.b16 %v4499, %v4497
        %4532 = vmatprep.subr.bf16.mxu0 %v4501
        %4533 = vmatpush1.bf16.msra.mxu0 %v4500
        %4534 = vmatprep.subr.bf16.mxu0 %v4503
        %4535 = vmatpush1.bf16.msra.mxu0 %v4502
        %4536 = vmatprep.subr.bf16.mxu0 %v4505
        %4537 = vmatpush1.bf16.msra.mxu0 %v4504
        %4538 = vmatprep.subr.bf16.mxu0 %v4507
        %4539 = vmatpush1.bf16.msra.mxu0 %v4506
        %4540 = vmatprep.subr.bf16.mxu0 %v4509
        %4541 = vmatpush1.bf16.msra.mxu0 %v4508
        %4542 = vmatprep.subr.bf16.mxu0 %v4511
        %4543 = vmatpush1.bf16.msra.mxu0 %v4510
        %4544 = vmatprep.subr.bf16.mxu0 %v4513
        %4545 = vmatpush1.bf16.msra.mxu0 %v4512
        %4546 = vmatprep.subr.bf16.mxu0 %v4515
        %4547 = vmatpush1.bf16.msra.mxu0 %v4514
        %4548 = vmatprep.subr.bf16.mxu0 0
        %4549 = vmatpush1.bf16.msra.mxu0 0
        %4550 = vmatprep.subr.bf16.mxu0 0
        %4551 = vmatpush1.bf16.msra.mxu0 0
        %4552 = vmatprep.subr.bf16.mxu0 0
        %4553 = vmatpush1.bf16.msra.mxu0 0
        %4554 = vmatprep.subr.bf16.mxu0 0
        %4555 = vmatpush1.bf16.msra.mxu0 0
        %4556 = vmatprep.subr.bf16.mxu0 0
        %4557 = vmatpush1.bf16.msra.mxu0 0
        %4558 = vmatprep.subr.bf16.mxu0 0
        %4559 = vmatpush1.bf16.msra.mxu0 0
        %4560 = vmatprep.subr.bf16.mxu0 0
        %4561 = vmatpush1.bf16.msra.mxu0 0
        %4562 = vmatprep.subr.bf16.mxu0 0
        %4563 = vmatpush1.bf16.msra.mxu0 0
        %4564 = vmatprep.mubr.bf16.mxu0 0
        %4565 = vmatmul.mubr.bf16.gmra.mrb[0].mxu0 %v4296
        %v4566 = vpop.f32.mrb[0].mxu0
        %v4567 = vadd.f32 %v4446, %v4566
        %v4568 = vpop.f32.mrb[0].mxu0
        %v4569 = vadd.f32 %v4448, %v4568
        %v4570 = vpop.f32.mrb[0].mxu0
        %v4571 = vpop.f32.mrb[0].mxu0
        %4572 = vdwg.mxu0
        %v4573 = vld [vmem:[#allocation6 + $0x2] sm:$0x3]
        %v4574 = vpack.c.bf16 %v4573, %v4573
        %v4575 = vld [vmem:[#allocation19] sm:$0xff]
        %v4576 = vld [vmem:[#allocation19 + $0x8] sm:$0xff]
        %v4577 = vld [vmem:[#allocation19 + $0x10] sm:$0xff]
        %v4578 = vld [vmem:[#allocation19 + $0x18] sm:$0xff]
        %v4579 = vld [vmem:[#allocation19 + $0x20] sm:$0xff]
        %v4580 = vld [vmem:[#allocation19 + $0x28] sm:$0xff]
        %v4581 = vld [vmem:[#allocation19 + $0x30] sm:$0xff]
        %v4582 = vld [vmem:[#allocation19 + $0x38] sm:$0xff]
        %v4583 = vld [vmem:[#allocation19 + $0x40] sm:$0xff]
        %v4584 = vld [vmem:[#allocation19 + $0x48] sm:$0xff]
        %v4585 = vld [vmem:[#allocation19 + $0x50] sm:$0xff]
        %v4586 = vld [vmem:[#allocation19 + $0x58] sm:$0xff]
        %v4587 = vld [vmem:[#allocation19 + $0x60] sm:$0xff]
        %v4588 = vld [vmem:[#allocation19 + $0x68] sm:$0xff]
        %v4589 = vld [vmem:[#allocation19 + $0x70] sm:$0xff]
        %v4590 = vld [vmem:[#allocation19 + $0x78] sm:$0xff]
        %v4607 = vunpack.c.l.b16 %v4575
        %v4608 = vunpack.c.h.b16 %v4575
        %v4609 = vunpack.c.l.b16 %v4576
        %v4610 = vunpack.c.h.b16 %v4576
        %v4611 = vunpack.c.l.b16 %v4577
        %v4612 = vunpack.c.h.b16 %v4577
        %v4613 = vunpack.c.l.b16 %v4578
        %v4614 = vunpack.c.h.b16 %v4578
        %v4615 = vunpack.c.l.b16 %v4579
        %v4616 = vunpack.c.h.b16 %v4579
        %v4617 = vunpack.c.l.b16 %v4580
        %v4618 = vunpack.c.h.b16 %v4580
        %v4619 = vunpack.c.l.b16 %v4581
        %v4620 = vunpack.c.h.b16 %v4581
        %v4621 = vunpack.c.l.b16 %v4582
        %v4622 = vunpack.c.h.b16 %v4582
        %v4623 = vunpack.c.l.b16 %v4583
        %v4624 = vunpack.c.h.b16 %v4583
        %v4625 = vunpack.c.l.b16 %v4584
        %v4626 = vunpack.c.h.b16 %v4584
        %v4627 = vunpack.c.l.b16 %v4585
        %v4628 = vunpack.c.h.b16 %v4585
        %v4629 = vunpack.c.l.b16 %v4586
        %v4630 = vunpack.c.h.b16 %v4586
        %v4631 = vunpack.c.l.b16 %v4587
        %v4632 = vunpack.c.h.b16 %v4587
        %v4633 = vunpack.c.l.b16 %v4588
        %v4634 = vunpack.c.h.b16 %v4588
        %v4635 = vunpack.c.l.b16 %v4589
        %v4636 = vunpack.c.h.b16 %v4589
        %v4637 = vunpack.c.l.b16 %v4590
        %v4638 = vunpack.c.h.b16 %v4590
        %v4639 = vpack.c.b16 %v4609, %v4607
        %v4640 = vpack.c.b16 %v4610, %v4608
        %v4641 = vpack.c.b16 %v4613, %v4611
        %v4642 = vpack.c.b16 %v4614, %v4612
        %v4643 = vpack.c.b16 %v4617, %v4615
        %v4644 = vpack.c.b16 %v4618, %v4616
        %v4645 = vpack.c.b16 %v4621, %v4619
        %v4646 = vpack.c.b16 %v4622, %v4620
        %v4647 = vpack.c.b16 %v4625, %v4623
        %v4648 = vpack.c.b16 %v4626, %v4624
        %v4649 = vpack.c.b16 %v4629, %v4627
        %v4650 = vpack.c.b16 %v4630, %v4628
        %v4651 = vpack.c.b16 %v4633, %v4631
        %v4652 = vpack.c.b16 %v4634, %v4632
        %v4653 = vpack.c.b16 %v4637, %v4635
        %v4654 = vpack.c.b16 %v4638, %v4636
        %4671 = vmatprep.subr.bf16.mxu0 %v4640
        %4672 = vmatpush1.bf16.msra.mxu0 %v4639
        %4673 = vmatprep.subr.bf16.mxu0 %v4642
        %4674 = vmatpush1.bf16.msra.mxu0 %v4641
        %4675 = vmatprep.subr.bf16.mxu0 %v4644
        %4676 = vmatpush1.bf16.msra.mxu0 %v4643
        %4677 = vmatprep.subr.bf16.mxu0 %v4646
        %4678 = vmatpush1.bf16.msra.mxu0 %v4645
        %4679 = vmatprep.subr.bf16.mxu0 %v4648
        %4680 = vmatpush1.bf16.msra.mxu0 %v4647
        %4681 = vmatprep.subr.bf16.mxu0 %v4650
        %4682 = vmatpush1.bf16.msra.mxu0 %v4649
        %4683 = vmatprep.subr.bf16.mxu0 %v4652
        %4684 = vmatpush1.bf16.msra.mxu0 %v4651
        %4685 = vmatprep.subr.bf16.mxu0 %v4654
        %4686 = vmatpush1.bf16.msra.mxu0 %v4653
        %4687 = vmatprep.subr.bf16.mxu0 0
        %4688 = vmatpush1.bf16.msra.mxu0 0
        %4689 = vmatprep.subr.bf16.mxu0 0
        %4690 = vmatpush1.bf16.msra.mxu0 0
        %4691 = vmatprep.subr.bf16.mxu0 0
        %4692 = vmatpush1.bf16.msra.mxu0 0
        %4693 = vmatprep.subr.bf16.mxu0 0
        %4694 = vmatpush1.bf16.msra.mxu0 0
        %4695 = vmatprep.subr.bf16.mxu0 0
        %4696 = vmatpush1.bf16.msra.mxu0 0
        %4697 = vmatprep.subr.bf16.mxu0 0
        %4698 = vmatpush1.bf16.msra.mxu0 0
        %4699 = vmatprep.subr.bf16.mxu0 0
        %4700 = vmatpush1.bf16.msra.mxu0 0
        %4701 = vmatprep.subr.bf16.mxu0 0
        %4702 = vmatpush1.bf16.msra.mxu0 0
        %4703 = vmatprep.mubr.bf16.mxu0 0
        %4704 = vmatmul.mubr.bf16.gmra.mrb[0].mxu0 %v4574
        %v4705 = vpop.f32.mrb[0].mxu0
        %v4706 = vadd.f32 0.0, %v4705
        %v4707 = vpop.f32.mrb[0].mxu0
        %v4708 = vadd.f32 0.0, %v4707
        %v4709 = vpop.f32.mrb[0].mxu0
        %v4710 = vpop.f32.mrb[0].mxu0
        %4711 = vdwg.mxu0
        %v4712 = vadd.f32 %v4567, %v4706
        %v4713 = vadd.f32 %v4569, %v4708
        %v4714 = vld [vmem:[%s16] sm:$0x3]
        %v4716 = vlaneseq
        %v4717 = vshrl.u32 %v4716, 7
        %v4718 = vsub.s32 0, %v4717
        %v4719 = vrot.slane %v4714, %v4718
        %v4720 = vlaneseq
        %v4721 = vshrl.u32 %v4720, 7
        %v4722 = vsub.s32 1, %v4721
        %v4723 = vrot.slane %v4714, %v4722
        %v4726 = vadd.f32 %v4712, %v4719
        %v4727 = vadd.f32 %v4713, %v4723
        %v4729 = vrot.slane %v4727, 6
        %v4731 = vsel %vm2888, %v4726, %v4729
        %v4732 = vpack.c.bf16 %v4731, %v4731
        %vm4733 = vcmp.lt.s32.totalorder %v1248, 2
        %vm4734 = vmand %vm4733, %vm4236
        %vm4735 = vcmp.ge.s32.totalorder %v1248, 2
        %v4736 = vsub.s32 %v1248, 2
        %v4737 = vmul.u32 %v4736, 2
        %v4738 = vadd.s32 %v4737, 2
        %vm4739 = vcmp.eq.s32.totalorder %v1245, %v4738
        %vm4740 = vmand %vm4735, %vm4739
        %vm4741 = vmor %vm4734, %vm4740
        %v4742 = vsel %vm4741, 1.0, 0.0
        %v4743 = vpack.c.bf16 %v4742, %v4742
        %v4745 = vsel %vm2885, %v4743, 0
        %v4748 = vsel %vm2888, %v4732, 0
        %4750 = vmatprep.subr.bf16.mxu0 0
        %4751 = vmatpush1.bf16.msra.mxu0 %v4748
        %4752 = vmatprep.subr.bf16.mxu0 0
        %4753 = vmatpush1.bf16.msra.mxu0 0
        %4754 = vmatprep.subr.bf16.mxu0 0
        %4755 = vmatpush1.bf16.msra.mxu0 0
        %4756 = vmatprep.subr.bf16.mxu0 0
        %4757 = vmatpush1.bf16.msra.mxu0 0
        %4758 = vmatprep.subr.bf16.mxu0 0
        %4759 = vmatpush1.bf16.msra.mxu0 0
        %4760 = vmatprep.subr.bf16.mxu0 0
        %4761 = vmatpush1.bf16.msra.mxu0 0
        %4762 = vmatprep.subr.bf16.mxu0 0
        %4763 = vmatpush1.bf16.msra.mxu0 0
        %4764 = vmatprep.subr.bf16.mxu0 0
        %4765 = vmatpush1.bf16.msra.mxu0 0
        %4766 = vmatprep.subr.bf16.mxu0 0
        %4767 = vmatpush1.bf16.msra.mxu0 0
        %4768 = vmatprep.subr.bf16.mxu0 0
        %4769 = vmatpush1.bf16.msra.mxu0 0
        %4770 = vmatprep.subr.bf16.mxu0 0
        %4771 = vmatpush1.bf16.msra.mxu0 0
        %4772 = vmatprep.subr.bf16.mxu0 0
        %4773 = vmatpush1.bf16.msra.mxu0 0
        %4774 = vmatprep.subr.bf16.mxu0 0
        %4775 = vmatpush1.bf16.msra.mxu0 0
        %4776 = vmatprep.subr.bf16.mxu0 0
        %4777 = vmatpush1.bf16.msra.mxu0 0
        %4778 = vmatprep.subr.bf16.mxu0 0
        %4779 = vmatpush1.bf16.msra.mxu0 0
        %4780 = vmatprep.subr.bf16.mxu0 0
        %4781 = vmatpush1.bf16.msra.mxu0 0
        %4782 = vmatprep.mubr.bf16.mxu0 0
        %4783 = vmatmul.mubr.bf16.gmra.mrb[0].mxu0 %v4745
        %v4784 = vpop.f32.mrb[0].mxu0
        %v4785 = vadd.f32 0.0, %v4784
        %v4786 = vpop.f32.mrb[0].mxu0
        %v4787 = vpop.f32.mrb[0].mxu0
        %v4788 = vpop.f32.mrb[0].mxu0
        %4789 = vdwg.mxu0
        %v4790 = vmax.f32 %v4785, 0.0
        %4791 = vst [vmem:[#allocation7] sm:$0x3f] %v4790
        %v4792 = vld [vmem:[#allocation7] sm:$0xf]
        %v4793 = vpack.c.bf16 %v4792, %v4792
        %v4794 = vld [vmem:[#allocation20] sm:$0xff]
        %v4795 = vld [vmem:[#allocation20 + $0x8] sm:$0xff]
        %v4796 = vld [vmem:[#allocation20 + $0x10] sm:$0xff]
        %v4797 = vld [vmem:[#allocation20 + $0x18] sm:$0xff]
        %v4798 = vld [vmem:[#allocation20 + $0x20] sm:$0xff]
        %v4799 = vld [vmem:[#allocation20 + $0x28] sm:$0xff]
        %v4800 = vld [vmem:[#allocation20 + $0x30] sm:$0xff]
        %v4801 = vld [vmem:[#allocation20 + $0x38] sm:$0xff]
        %v4802 = vld [vmem:[#allocation20 + $0x40] sm:$0xff]
        %v4803 = vld [vmem:[#allocation20 + $0x48] sm:$0xff]
        %v4804 = vld [vmem:[#allocation20 + $0x50] sm:$0xff]
        %v4805 = vld [vmem:[#allocation20 + $0x58] sm:$0xff]
        %v4806 = vld [vmem:[#allocation20 + $0x60] sm:$0xff]
        %v4807 = vld [vmem:[#allocation20 + $0x68] sm:$0xff]
        %v4808 = vld [vmem:[#allocation20 + $0x70] sm:$0xff]
        %v4809 = vld [vmem:[#allocation20 + $0x78] sm:$0xff]
        %v4810 = vld [vmem:[#allocation7 + $0x1] sm:$0xf]
        %v4811 = vpack.c.bf16 %v4810, %v4810
        %v4812 = vld [vmem:[#allocation22] sm:$0xff]
        %v4813 = vld [vmem:[#allocation22 + $0x8] sm:$0xff]
        %v4814 = vld [vmem:[#allocation22 + $0x10] sm:$0xff]
        %v4815 = vld [vmem:[#allocation22 + $0x18] sm:$0xff]
        %v4816 = vld [vmem:[#allocation22 + $0x20] sm:$0xff]
        %v4817 = vld [vmem:[#allocation22 + $0x28] sm:$0xff]
        %v4818 = vld [vmem:[#allocation22 + $0x30] sm:$0xff]
        %v4819 = vld [vmem:[#allocation22 + $0x38] sm:$0xff]
        %v4820 = vld [vmem:[#allocation22 + $0x40] sm:$0xff]
        %v4821 = vld [vmem:[#allocation22 + $0x48] sm:$0xff]
        %v4822 = vld [vmem:[#allocation22 + $0x50] sm:$0xff]
        %v4823 = vld [vmem:[#allocation22 + $0x58] sm:$0xff]
        %v4824 = vld [vmem:[#allocation22 + $0x60] sm:$0xff]
        %v4825 = vld [vmem:[#allocation22 + $0x68] sm:$0xff]
        %v4826 = vld [vmem:[#allocation22 + $0x70] sm:$0xff]
        %v4827 = vld [vmem:[#allocation22 + $0x78] sm:$0xff]
        %v4844 = vunpack.c.l.b16 %v4812
        %v4845 = vunpack.c.h.b16 %v4812
        %v4846 = vunpack.c.l.b16 %v4813
        %v4847 = vunpack.c.h.b16 %v4813
        %v4848 = vunpack.c.l.b16 %v4814
        %v4849 = vunpack.c.h.b16 %v4814
        %v4850 = vunpack.c.l.b16 %v4815
        %v4851 = vunpack.c.h.b16 %v4815
        %v4852 = vunpack.c.l.b16 %v4816
        %v4853 = vunpack.c.h.b16 %v4816
        %v4854 = vunpack.c.l.b16 %v4817
        %v4855 = vunpack.c.h.b16 %v4817
        %v4856 = vunpack.c.l.b16 %v4818
        %v4857 = vunpack.c.h.b16 %v4818
        %v4858 = vunpack.c.l.b16 %v4819
        %v4859 = vunpack.c.h.b16 %v4819
        %v4860 = vunpack.c.l.b16 %v4820
        %v4861 = vunpack.c.h.b16 %v4820
        %v4862 = vunpack.c.l.b16 %v4821
        %v4863 = vunpack.c.h.b16 %v4821
        %v4864 = vunpack.c.l.b16 %v4822
        %v4865 = vunpack.c.h.b16 %v4822
        %v4866 = vunpack.c.l.b16 %v4823
        %v4867 = vunpack.c.h.b16 %v4823
        %v4868 = vunpack.c.l.b16 %v4824
        %v4869 = vunpack.c.h.b16 %v4824
        %v4870 = vunpack.c.l.b16 %v4825
        %v4871 = vunpack.c.h.b16 %v4825
        %v4872 = vunpack.c.l.b16 %v4826
        %v4873 = vunpack.c.h.b16 %v4826
        %v4874 = vunpack.c.l.b16 %v4827
        %v4875 = vunpack.c.h.b16 %v4827
        %v4876 = vpack.c.b16 %v4846, %v4844
        %v4877 = vpack.c.b16 %v4847, %v4845
        %v4878 = vpack.c.b16 %v4850, %v4848
        %v4879 = vpack.c.b16 %v4851, %v4849
        %v4880 = vpack.c.b16 %v4854, %v4852
        %v4881 = vpack.c.b16 %v4855, %v4853
        %v4882 = vpack.c.b16 %v4858, %v4856
        %v4883 = vpack.c.b16 %v4859, %v4857
        %v4884 = vpack.c.b16 %v4862, %v4860
        %v4885 = vpack.c.b16 %v4863, %v4861
        %v4886 = vpack.c.b16 %v4866, %v4864
        %v4887 = vpack.c.b16 %v4867, %v4865
        %v4888 = vpack.c.b16 %v4870, %v4868
        %v4889 = vpack.c.b16 %v4871, %v4869
        %v4890 = vpack.c.b16 %v4874, %v4872
        %v4891 = vpack.c.b16 %v4875, %v4873
        %4908 = vmatprep.subr.bf16.mxu0 %v4877
        %4909 = vmatpush1.bf16.msra.mxu0 %v4876
        %4910 = vmatprep.subr.bf16.mxu0 %v4879
        %4911 = vmatpush1.bf16.msra.mxu0 %v4878
        %4912 = vmatprep.subr.bf16.mxu0 %v4881
        %4913 = vmatpush1.bf16.msra.mxu0 %v4880
        %4914 = vmatprep.subr.bf16.mxu0 %v4883
        %4915 = vmatpush1.bf16.msra.mxu0 %v4882
        %4916 = vmatprep.subr.bf16.mxu0 %v4885
        %4917 = vmatpush1.bf16.msra.mxu0 %v4884
        %4918 = vmatprep.subr.bf16.mxu0 %v4887
        %4919 = vmatpush1.bf16.msra.mxu0 %v4886
        %4920 = vmatprep.subr.bf16.mxu0 %v4889
        %4921 = vmatpush1.bf16.msra.mxu0 %v4888
        %4922 = vmatprep.subr.bf16.mxu0 %v4891
        %4923 = vmatpush1.bf16.msra.mxu0 %v4890
        %4924 = vmatprep.subr.bf16.mxu0 0
        %4925 = vmatpush1.bf16.msra.mxu0 0
        %4926 = vmatprep.subr.bf16.mxu0 0
        %4927 = vmatpush1.bf16.msra.mxu0 0
        %4928 = vmatprep.subr.bf16.mxu0 0
        %4929 = vmatpush1.bf16.msra.mxu0 0
        %4930 = vmatprep.subr.bf16.mxu0 0
        %4931 = vmatpush1.bf16.msra.mxu0 0
        %4932 = vmatprep.subr.bf16.mxu0 0
        %4933 = vmatpush1.bf16.msra.mxu0 0
        %4934 = vmatprep.subr.bf16.mxu0 0
        %4935 = vmatpush1.bf16.msra.mxu0 0
        %4936 = vmatprep.subr.bf16.mxu0 0
        %4937 = vmatpush1.bf16.msra.mxu0 0
        %4938 = vmatprep.subr.bf16.mxu0 0
        %4939 = vmatpush1.bf16.msra.mxu0 0
        %4940 = vmatprep.mubr.bf16.mxu0 0
        %4941 = vmatmul.mubr.bf16.gmra.mrb[0].mxu0 %v4811
        %v4942 = vpop.f32.mrb[0].mxu0
        %v4943 = vadd.f32 0.0, %v4942
        %v4944 = vpop.f32.mrb[0].mxu0
        %v4945 = vadd.f32 0.0, %v4944
        %v4946 = vpop.f32.mrb[0].mxu0
        %v4947 = vpop.f32.mrb[0].mxu0
        %4948 = vdwg.mxu0
        %v4965 = vunpack.c.l.b16 %v4794
        %v4966 = vunpack.c.h.b16 %v4794
        %v4967 = vunpack.c.l.b16 %v4795
        %v4968 = vunpack.c.h.b16 %v4795
        %v4969 = vunpack.c.l.b16 %v4796
        %v4970 = vunpack.c.h.b16 %v4796
        %v4971 = vunpack.c.l.b16 %v4797
        %v4972 = vunpack.c.h.b16 %v4797
        %v4973 = vunpack.c.l.b16 %v4798
        %v4974 = vunpack.c.h.b16 %v4798
        %v4975 = vunpack.c.l.b16 %v4799
        %v4976 = vunpack.c.h.b16 %v4799
        %v4977 = vunpack.c.l.b16 %v4800
        %v4978 = vunpack.c.h.b16 %v4800
        %v4979 = vunpack.c.l.b16 %v4801
        %v4980 = vunpack.c.h.b16 %v4801
        %v4981 = vunpack.c.l.b16 %v4802
        %v4982 = vunpack.c.h.b16 %v4802
        %v4983 = vunpack.c.l.b16 %v4803
        %v4984 = vunpack.c.h.b16 %v4803
        %v4985 = vunpack.c.l.b16 %v4804
        %v4986 = vunpack.c.h.b16 %v4804
        %v4987 = vunpack.c.l.b16 %v4805
        %v4988 = vunpack.c.h.b16 %v4805
        %v4989 = vunpack.c.l.b16 %v4806
        %v4990 = vunpack.c.h.b16 %v4806
        %v4991 = vunpack.c.l.b16 %v4807
        %v4992 = vunpack.c.h.b16 %v4807
        %v4993 = vunpack.c.l.b16 %v4808
        %v4994 = vunpack.c.h.b16 %v4808
        %v4995 = vunpack.c.l.b16 %v4809
        %v4996 = vunpack.c.h.b16 %v4809
        %v4997 = vpack.c.b16 %v4967, %v4965
        %v4998 = vpack.c.b16 %v4968, %v4966
        %v4999 = vpack.c.b16 %v4971, %v4969
        %v5000 = vpack.c.b16 %v4972, %v4970
        %v5001 = vpack.c.b16 %v4975, %v4973
        %v5002 = vpack.c.b16 %v4976, %v4974
        %v5003 = vpack.c.b16 %v4979, %v4977
        %v5004 = vpack.c.b16 %v4980, %v4978
        %v5005 = vpack.c.b16 %v4983, %v4981
        %v5006 = vpack.c.b16 %v4984, %v4982
        %v5007 = vpack.c.b16 %v4987, %v4985
        %v5008 = vpack.c.b16 %v4988, %v4986
        %v5009 = vpack.c.b16 %v4991, %v4989
        %v5010 = vpack.c.b16 %v4992, %v4990
        %v5011 = vpack.c.b16 %v4995, %v4993
        %v5012 = vpack.c.b16 %v4996, %v4994
        %5029 = vmatprep.subr.bf16.mxu0 %v4998
        %5030 = vmatpush1.bf16.msra.mxu0 %v4997
        %5031 = vmatprep.subr.bf16.mxu0 %v5000
        %5032 = vmatpush1.bf16.msra.mxu0 %v4999
        %5033 = vmatprep.subr.bf16.mxu0 %v5002
        %5034 = vmatpush1.bf16.msra.mxu0 %v5001
        %5035 = vmatprep.subr.bf16.mxu0 %v5004
        %5036 = vmatpush1.bf16.msra.mxu0 %v5003
        %5037 = vmatprep.subr.bf16.mxu0 %v5006
        %5038 = vmatpush1.bf16.msra.mxu0 %v5005
        %5039 = vmatprep.subr.bf16.mxu0 %v5008
        %5040 = vmatpush1.bf16.msra.mxu0 %v5007
        %5041 = vmatprep.subr.bf16.mxu0 %v5010
        %5042 = vmatpush1.bf16.msra.mxu0 %v5009
        %5043 = vmatprep.subr.bf16.mxu0 %v5012
        %5044 = vmatpush1.bf16.msra.mxu0 %v5011
        %5045 = vmatprep.subr.bf16.mxu0 0
        %5046 = vmatpush1.bf16.msra.mxu0 0
        %5047 = vmatprep.subr.bf16.mxu0 0
        %5048 = vmatpush1.bf16.msra.mxu0 0
        %5049 = vmatprep.subr.bf16.mxu0 0
        %5050 = vmatpush1.bf16.msra.mxu0 0
        %5051 = vmatprep.subr.bf16.mxu0 0
        %5052 = vmatpush1.bf16.msra.mxu0 0
        %5053 = vmatprep.subr.bf16.mxu0 0
        %5054 = vmatpush1.bf16.msra.mxu0 0
        %5055 = vmatprep.subr.bf16.mxu0 0
        %5056 = vmatpush1.bf16.msra.mxu0 0
        %5057 = vmatprep.subr.bf16.mxu0 0
        %5058 = vmatpush1.bf16.msra.mxu0 0
        %5059 = vmatprep.subr.bf16.mxu0 0
        %5060 = vmatpush1.bf16.msra.mxu0 0
        %5061 = vmatprep.mubr.bf16.mxu0 0
        %5062 = vmatmul.mubr.bf16.gmra.mrb[0].mxu0 %v4793
        %v5063 = vpop.f32.mrb[0].mxu0
        %v5064 = vadd.f32 %v4943, %v5063
        %v5065 = vpop.f32.mrb[0].mxu0
        %v5066 = vadd.f32 %v4945, %v5065
        %v5067 = vpop.f32.mrb[0].mxu0
        %v5068 = vpop.f32.mrb[0].mxu0
        %5069 = vdwg.mxu0
        %v5070 = vld [vmem:[#allocation7 + $0x2] sm:$0xf]
        %v5071 = vpack.c.bf16 %v5070, %v5070
        %v5072 = vld [vmem:[#allocation23] sm:$0xff]
        %v5073 = vld [vmem:[#allocation23 + $0x8] sm:$0xff]
        %v5074 = vld [vmem:[#allocation23 + $0x10] sm:$0xff]
        %v5075 = vld [vmem:[#allocation23 + $0x18] sm:$0xff]
        %v5076 = vld [vmem:[#allocation23 + $0x20] sm:$0xff]
        %v5077 = vld [vmem:[#allocation23 + $0x28] sm:$0xff]
        %v5078 = vld [vmem:[#allocation23 + $0x30] sm:$0xff]
        %v5079 = vld [vmem:[#allocation23 + $0x38] sm:$0xff]
        %v5080 = vld [vmem:[#allocation23 + $0x40] sm:$0xff]
        %v5081 = vld [vmem:[#allocation23 + $0x48] sm:$0xff]
        %v5082 = vld [vmem:[#allocation23 + $0x50] sm:$0xff]
        %v5083 = vld [vmem:[#allocation23 + $0x58] sm:$0xff]
        %v5084 = vld [vmem:[#allocation23 + $0x60] sm:$0xff]
        %v5085 = vld [vmem:[#allocation23 + $0x68] sm:$0xff]
        %v5086 = vld [vmem:[#allocation23 + $0x70] sm:$0xff]
        %v5087 = vld [vmem:[#allocation23 + $0x78] sm:$0xff]
        %v5104 = vunpack.c.l.b16 %v5072
        %v5105 = vunpack.c.h.b16 %v5072
        %v5106 = vunpack.c.l.b16 %v5073
        %v5107 = vunpack.c.h.b16 %v5073
        %v5108 = vunpack.c.l.b16 %v5074
        %v5109 = vunpack.c.h.b16 %v5074
        %v5110 = vunpack.c.l.b16 %v5075
        %v5111 = vunpack.c.h.b16 %v5075
        %v5112 = vunpack.c.l.b16 %v5076
        %v5113 = vunpack.c.h.b16 %v5076
        %v5114 = vunpack.c.l.b16 %v5077
        %v5115 = vunpack.c.h.b16 %v5077
        %v5116 = vunpack.c.l.b16 %v5078
        %v5117 = vunpack.c.h.b16 %v5078
        %v5118 = vunpack.c.l.b16 %v5079
        %v5119 = vunpack.c.h.b16 %v5079
        %v5120 = vunpack.c.l.b16 %v5080
        %v5121 = vunpack.c.h.b16 %v5080
        %v5122 = vunpack.c.l.b16 %v5081
        %v5123 = vunpack.c.h.b16 %v5081
        %v5124 = vunpack.c.l.b16 %v5082
        %v5125 = vunpack.c.h.b16 %v5082
        %v5126 = vunpack.c.l.b16 %v5083
        %v5127 = vunpack.c.h.b16 %v5083
        %v5128 = vunpack.c.l.b16 %v5084
        %v5129 = vunpack.c.h.b16 %v5084
        %v5130 = vunpack.c.l.b16 %v5085
        %v5131 = vunpack.c.h.b16 %v5085
        %v5132 = vunpack.c.l.b16 %v5086
        %v5133 = vunpack.c.h.b16 %v5086
        %v5134 = vunpack.c.l.b16 %v5087
        %v5135 = vunpack.c.h.b16 %v5087
        %v5136 = vpack.c.b16 %v5106, %v5104
        %v5137 = vpack.c.b16 %v5107, %v5105
        %v5138 = vpack.c.b16 %v5110, %v5108
        %v5139 = vpack.c.b16 %v5111, %v5109
        %v5140 = vpack.c.b16 %v5114, %v5112
        %v5141 = vpack.c.b16 %v5115, %v5113
        %v5142 = vpack.c.b16 %v5118, %v5116
        %v5143 = vpack.c.b16 %v5119, %v5117
        %v5144 = vpack.c.b16 %v5122, %v5120
        %v5145 = vpack.c.b16 %v5123, %v5121
        %v5146 = vpack.c.b16 %v5126, %v5124
        %v5147 = vpack.c.b16 %v5127, %v5125
        %v5148 = vpack.c.b16 %v5130, %v5128
        %v5149 = vpack.c.b16 %v5131, %v5129
        %v5150 = vpack.c.b16 %v5134, %v5132
        %v5151 = vpack.c.b16 %v5135, %v5133
        %5168 = vmatprep.subr.bf16.mxu0 %v5137
        %5169 = vmatpush1.bf16.msra.mxu0 %v5136
        %5170 = vmatprep.subr.bf16.mxu0 %v5139
        %5171 = vmatpush1.bf16.msra.mxu0 %v5138
        %5172 = vmatprep.subr.bf16.mxu0 %v5141
        %5173 = vmatpush1.bf16.msra.mxu0 %v5140
        %5174 = vmatprep.subr.bf16.mxu0 %v5143
        %5175 = vmatpush1.bf16.msra.mxu0 %v5142
        %5176 = vmatprep.subr.bf16.mxu0 %v5145
        %5177 = vmatpush1.bf16.msra.mxu0 %v5144
        %5178 = vmatprep.subr.bf16.mxu0 %v5147
        %5179 = vmatpush1.bf16.msra.mxu0 %v5146
        %5180 = vmatprep.subr.bf16.mxu0 %v5149
        %5181 = vmatpush1.bf16.msra.mxu0 %v5148
        %5182 = vmatprep.subr.bf16.mxu0 %v5151
        %5183 = vmatpush1.bf16.msra.mxu0 %v5150
        %5184 = vmatprep.subr.bf16.mxu0 0
        %5185 = vmatpush1.bf16.msra.mxu0 0
        %5186 = vmatprep.subr.bf16.mxu0 0
        %5187 = vmatpush1.bf16.msra.mxu0 0
        %5188 = vmatprep.subr.bf16.mxu0 0
        %5189 = vmatpush1.bf16.msra.mxu0 0
        %5190 = vmatprep.subr.bf16.mxu0 0
        %5191 = vmatpush1.bf16.msra.mxu0 0
        %5192 = vmatprep.subr.bf16.mxu0 0
        %5193 = vmatpush1.bf16.msra.mxu0 0
        %5194 = vmatprep.subr.bf16.mxu0 0
        %5195 = vmatpush1.bf16.msra.mxu0 0
        %5196 = vmatprep.subr.bf16.mxu0 0
        %5197 = vmatpush1.bf16.msra.mxu0 0
        %5198 = vmatprep.subr.bf16.mxu0 0
        %5199 = vmatpush1.bf16.msra.mxu0 0
        %5200 = vmatprep.mubr.bf16.mxu0 0
        %5201 = vmatmul.mubr.bf16.gmra.mrb[0].mxu0 %v5071
        %v5202 = vpop.f32.mrb[0].mxu0
        %v5203 = vadd.f32 0.0, %v5202
        %v5204 = vpop.f32.mrb[0].mxu0
        %v5205 = vadd.f32 0.0, %v5204
        %v5206 = vpop.f32.mrb[0].mxu0
        %v5207 = vpop.f32.mrb[0].mxu0
        %5208 = vdwg.mxu0
        %v5209 = vadd.f32 %v5064, %v5203
        %v5210 = vadd.f32 %v5066, %v5205
        %v5211 = vld [vmem:[%s20] sm:$0x3]
        %v5213 = vlaneseq
        %v5214 = vshrl.u32 %v5213, 7
        %v5215 = vsub.s32 0, %v5214
        %v5216 = vrot.slane %v5211, %v5215
        %v5217 = vlaneseq
        %v5218 = vshrl.u32 %v5217, 7
        %v5219 = vsub.s32 1, %v5218
        %v5220 = vrot.slane %v5211, %v5219
        %v5223 = vadd.f32 %v5209, %v5216
        %v5224 = vadd.f32 %v5210, %v5220
        %v5226 = vrot.slane %v5224, 4
        %v5228 = vsel %vm2080, %v5223, %v5226
        %v5229 = vpack.c.bf16 %v5228, %v5228
        %vm5230 = vcmp.lt.s32.totalorder %v1248, 4
        %vm5231 = vcmp.eq.s32.totalorder %v1246, %v4235
        %vm5232 = vmand %vm5230, %vm4236
        %vm5233 = vmand %vm5230, %vm5231
        %vm5234 = vcmp.ge.s32.totalorder %v1248, 4
        %v5235 = vsub.s32 %v1248, 4
        %v5236 = vmul.u32 %v5235, 2
        %v5237 = vadd.s32 %v5236, 2
        %vm5238 = vcmp.eq.s32.totalorder %v1245, %v5237
        %vm5239 = vcmp.eq.s32.totalorder %v1246, %v5237
        %vm5240 = vmand %vm5234, %vm5238
        %vm5241 = vmand %vm5234, %vm5239
        %vm5242 = vmor %vm5232, %vm5240
        %vm5243 = vmor %vm5233, %vm5241
        %v5244 = vsel %vm5242, 1.0, 0.0
        %v5245 = vsel %vm5243, 1.0, 0.0
        %v5246 = vpack.c.bf16 %v5245, %v5244
        %v5248 = vsel %vm2076, %v5246, 0
        %v5251 = vsel %vm2080, %v5229, 0
        %5253 = vmatprep.subr.bf16.mxu0 0
        %5254 = vmatpush1.bf16.msra.mxu0 %v5251
        %5255 = vmatprep.subr.bf16.mxu0 0
        %5256 = vmatpush1.bf16.msra.mxu0 0
        %5257 = vmatprep.subr.bf16.mxu0 0
        %5258 = vmatpush1.bf16.msra.mxu0 0
        %5259 = vmatprep.subr.bf16.mxu0 0
        %5260 = vmatpush1.bf16.msra.mxu0 0
        %5261 = vmatprep.subr.bf16.mxu0 0
        %5262 = vmatpush1.bf16.msra.mxu0 0
        %5263 = vmatprep.subr.bf16.mxu0 0
        %5264 = vmatpush1.bf16.msra.mxu0 0
        %5265 = vmatprep.subr.bf16.mxu0 0
        %5266 = vmatpush1.bf16.msra.mxu0 0
        %5267 = vmatprep.subr.bf16.mxu0 0
        %5268 = vmatpush1.bf16.msra.mxu0 0
        %5269 = vmatprep.subr.bf16.mxu0 0
        %5270 = vmatpush1.bf16.msra.mxu0 0
        %5271 = vmatprep.subr.bf16.mxu0 0
        %5272 = vmatpush1.bf16.msra.mxu0 0
        %5273 = vmatprep.subr.bf16.mxu0 0
        %5274 = vmatpush1.bf16.msra.mxu0 0
        %5275 = vmatprep.subr.bf16.mxu0 0
        %5276 = vmatpush1.bf16.msra.mxu0 0
        %5277 = vmatprep.subr.bf16.mxu0 0
        %5278 = vmatpush1.bf16.msra.mxu0 0
        %5279 = vmatprep.subr.bf16.mxu0 0
        %5280 = vmatpush1.bf16.msra.mxu0 0
        %5281 = vmatprep.subr.bf16.mxu0 0
        %5282 = vmatpush1.bf16.msra.mxu0 0
        %5283 = vmatprep.subr.bf16.mxu0 0
        %5284 = vmatpush1.bf16.msra.mxu0 0
        %5285 = vmatprep.mubr.bf16.mxu0 0
        %5286 = vmatmul.mubr.bf16.gmra.mrb[0].mxu0 %v5248
        %v5287 = vpop.f32.mrb[0].mxu0
        %v5288 = vadd.f32 0.0, %v5287
        %v5289 = vpop.f32.mrb[0].mxu0
        %v5290 = vpop.f32.mrb[0].mxu0
        %v5291 = vadd.f32 0.0, %v5290
        %v5292 = vpop.f32.mrb[0].mxu0
        %5293 = vdwg.mxu0
        %v5294 = vmax.f32 %v5288, 0.0
        %v5295 = vmax.f32 %v5291, 0.0
        %5296 = vst [vmem:[#allocation8] sm:$0xff] %v5294
        %5297 = vst [vmem:[#allocation8 + $0x8] sm:$0x3] %v5295
        %v5298 = vld [vmem:[#allocation8] sm:$0xff]
        %v5299 = vpack.c.bf16 %v5298, %v5298
        %v5300 = vld [vmem:[%s21] sm:$0xf]
        %v5301 = vld [vmem:[%s21 + $0x4] sm:$0xf]
        %v5302 = vld [vmem:[%s21 + $0x8] sm:$0xf]
        %v5303 = vld [vmem:[%s21 + $0xc] sm:$0xf]
        %v5304 = vld [vmem:[%s21 + $0x10] sm:$0xf]
        %v5305 = vld [vmem:[%s21 + $0x14] sm:$0xf]
        %v5306 = vld [vmem:[%s21 + $0x18] sm:$0xf]
        %v5307 = vld [vmem:[%s21 + $0x1c] sm:$0xf]
        %v5308 = vld [vmem:[%s21 + $0x20] sm:$0xf]
        %v5309 = vld [vmem:[%s21 + $0x24] sm:$0xf]
        %v5310 = vld [vmem:[%s21 + $0x28] sm:$0xf]
        %v5311 = vld [vmem:[%s21 + $0x2c] sm:$0xf]
        %v5312 = vld [vmem:[%s21 + $0x30] sm:$0xf]
        %v5313 = vld [vmem:[%s21 + $0x34] sm:$0xf]
        %v5314 = vld [vmem:[%s21 + $0x38] sm:$0xf]
        %v5315 = vld [vmem:[%s21 + $0x3c] sm:$0xf]
        %v5316 = vld [vmem:[#allocation8 + $0x1] sm:$0xff]
        %v5317 = vpack.c.bf16 %v5316, %v5316
        %v5318 = vld [vmem:[%s22] sm:$0xf]
        %v5319 = vld [vmem:[%s22 + $0x4] sm:$0xf]
        %v5320 = vld [vmem:[%s22 + $0x8] sm:$0xf]
        %v5321 = vld [vmem:[%s22 + $0xc] sm:$0xf]
        %v5322 = vld [vmem:[%s22 + $0x10] sm:$0xf]
        %v5323 = vld [vmem:[%s22 + $0x14] sm:$0xf]
        %v5324 = vld [vmem:[%s22 + $0x18] sm:$0xf]
        %v5325 = vld [vmem:[%s22 + $0x1c] sm:$0xf]
        %v5326 = vld [vmem:[%s22 + $0x20] sm:$0xf]
        %v5327 = vld [vmem:[%s22 + $0x24] sm:$0xf]
        %v5328 = vld [vmem:[%s22 + $0x28] sm:$0xf]
        %v5329 = vld [vmem:[%s22 + $0x2c] sm:$0xf]
        %v5330 = vld [vmem:[%s22 + $0x30] sm:$0xf]
        %v5331 = vld [vmem:[%s22 + $0x34] sm:$0xf]
        %v5332 = vld [vmem:[%s22 + $0x38] sm:$0xf]
        %v5333 = vld [vmem:[%s22 + $0x3c] sm:$0xf]
        %v5350 = vunpack.c.l.b16 %v5318
        %v5351 = vunpack.c.l.b16 %v5319
        %v5352 = vunpack.c.l.b16 %v5320
        %v5353 = vunpack.c.l.b16 %v5321
        %v5354 = vunpack.c.l.b16 %v5322
        %v5355 = vunpack.c.l.b16 %v5323
        %v5356 = vunpack.c.l.b16 %v5324
        %v5357 = vunpack.c.l.b16 %v5325
        %v5358 = vunpack.c.l.b16 %v5326
        %v5359 = vunpack.c.l.b16 %v5327
        %v5360 = vunpack.c.l.b16 %v5328
        %v5361 = vunpack.c.l.b16 %v5329
        %v5362 = vunpack.c.l.b16 %v5330
        %v5363 = vunpack.c.l.b16 %v5331
        %v5364 = vunpack.c.l.b16 %v5332
        %v5365 = vunpack.c.l.b16 %v5333
        %v5366 = vpack.c.b16 %v5351, %v5350
        %v5367 = vpack.c.b16 %v5353, %v5352
        %v5368 = vpack.c.b16 %v5355, %v5354
        %v5369 = vpack.c.b16 %v5357, %v5356
        %v5370 = vpack.c.b16 %v5359, %v5358
        %v5371 = vpack.c.b16 %v5361, %v5360
        %v5372 = vpack.c.b16 %v5363, %v5362
        %v5373 = vpack.c.b16 %v5365, %v5364
        %5382 = vmatprep.subr.bf16.mxu0 0
        %5383 = vmatpush1.bf16.msra.mxu0 %v5366
        %5384 = vmatprep.subr.bf16.mxu0 0
        %5385 = vmatpush1.bf16.msra.mxu0 %v5367
        %5386 = vmatprep.subr.bf16.mxu0 0
        %5387 = vmatpush1.bf16.msra.mxu0 %v5368
        %5388 = vmatprep.subr.bf16.mxu0 0
        %5389 = vmatpush1.bf16.msra.mxu0 %v5369
        %5390 = vmatprep.subr.bf16.mxu0 0
        %5391 = vmatpush1.bf16.msra.mxu0 %v5370
        %5392 = vmatprep.subr.bf16.mxu0 0
        %5393 = vmatpush1.bf16.msra.mxu0 %v5371
        %5394 = vmatprep.subr.bf16.mxu0 0
        %5395 = vmatpush1.bf16.msra.mxu0 %v5372
        %5396 = vmatprep.subr.bf16.mxu0 0
        %5397 = vmatpush1.bf16.msra.mxu0 %v5373
        %5398 = vmatprep.subr.bf16.mxu0 0
        %5399 = vmatpush1.bf16.msra.mxu0 0
        %5400 = vmatprep.subr.bf16.mxu0 0
        %5401 = vmatpush1.bf16.msra.mxu0 0
        %5402 = vmatprep.subr.bf16.mxu0 0
        %5403 = vmatpush1.bf16.msra.mxu0 0
        %5404 = vmatprep.subr.bf16.mxu0 0
        %5405 = vmatpush1.bf16.msra.mxu0 0
        %5406 = vmatprep.subr.bf16.mxu0 0
        %5407 = vmatpush1.bf16.msra.mxu0 0
        %5408 = vmatprep.subr.bf16.mxu0 0
        %5409 = vmatpush1.bf16.msra.mxu0 0
        %5410 = vmatprep.subr.bf16.mxu0 0
        %5411 = vmatpush1.bf16.msra.mxu0 0
        %5412 = vmatprep.subr.bf16.mxu0 0
        %5413 = vmatpush1.bf16.msra.mxu0 0
        %5414 = vmatprep.mubr.bf16.mxu0 0
        %5415 = vmatmul.mubr.bf16.gmra.mrb[0].mxu0 %v5317
        %v5416 = vpop.f32.mrb[0].mxu0
        %v5417 = vadd.f32 0.0, %v5416
        %v5418 = vpop.f32.mrb[0].mxu0
        %v5419 = vpop.f32.mrb[0].mxu0
        %v5420 = vpop.f32.mrb[0].mxu0
        %5421 = vdwg.mxu0
        %v5438 = vunpack.c.l.b16 %v5300
        %v5439 = vunpack.c.l.b16 %v5301
        %v5440 = vunpack.c.l.b16 %v5302
        %v5441 = vunpack.c.l.b16 %v5303
        %v5442 = vunpack.c.l.b16 %v5304
        %v5443 = vunpack.c.l.b16 %v5305
        %v5444 = vunpack.c.l.b16 %v5306
        %v5445 = vunpack.c.l.b16 %v5307
        %v5446 = vunpack.c.l.b16 %v5308
        %v5447 = vunpack.c.l.b16 %v5309
        %v5448 = vunpack.c.l.b16 %v5310
        %v5449 = vunpack.c.l.b16 %v5311
        %v5450 = vunpack.c.l.b16 %v5312
        %v5451 = vunpack.c.l.b16 %v5313
        %v5452 = vunpack.c.l.b16 %v5314
        %v5453 = vunpack.c.l.b16 %v5315
        %v5454 = vpack.c.b16 %v5439, %v5438
        %v5455 = vpack.c.b16 %v5441, %v5440
        %v5456 = vpack.c.b16 %v5443, %v5442
        %v5457 = vpack.c.b16 %v5445, %v5444
        %v5458 = vpack.c.b16 %v5447, %v5446
        %v5459 = vpack.c.b16 %v5449, %v5448
        %v5460 = vpack.c.b16 %v5451, %v5450
        %v5461 = vpack.c.b16 %v5453, %v5452
        %5470 = vmatprep.subr.bf16.mxu0 0
        %5471 = vmatpush1.bf16.msra.mxu0 %v5454
        %5472 = vmatprep.subr.bf16.mxu0 0
        %5473 = vmatpush1.bf16.msra.mxu0 %v5455
        %5474 = vmatprep.subr.bf16.mxu0 0
        %5475 = vmatpush1.bf16.msra.mxu0 %v5456
        %5476 = vmatprep.subr.bf16.mxu0 0
        %5477 = vmatpush1.bf16.msra.mxu0 %v5457
        %5478 = vmatprep.subr.bf16.mxu0 0
        %5479 = vmatpush1.bf16.msra.mxu0 %v5458
        %5480 = vmatprep.subr.bf16.mxu0 0
        %5481 = vmatpush1.bf16.msra.mxu0 %v5459
        %5482 = vmatprep.subr.bf16.mxu0 0
        %5483 = vmatpush1.bf16.msra.mxu0 %v5460
        %5484 = vmatprep.subr.bf16.mxu0 0
        %5485 = vmatpush1.bf16.msra.mxu0 %v5461
        %5486 = vmatprep.subr.bf16.mxu0 0
        %5487 = vmatpush1.bf16.msra.mxu0 0
        %5488 = vmatprep.subr.bf16.mxu0 0
        %5489 = vmatpush1.bf16.msra.mxu0 0
        %5490 = vmatprep.subr.bf16.mxu0 0
        %5491 = vmatpush1.bf16.msra.mxu0 0
        %5492 = vmatprep.subr.bf16.mxu0 0
        %5493 = vmatpush1.bf16.msra.mxu0 0
        %5494 = vmatprep.subr.bf16.mxu0 0
        %5495 = vmatpush1.bf16.msra.mxu0 0
        %5496 = vmatprep.subr.bf16.mxu0 0
        %5497 = vmatpush1.bf16.msra.mxu0 0
        %5498 = vmatprep.subr.bf16.mxu0 0
        %5499 = vmatpush1.bf16.msra.mxu0 0
        %5500 = vmatprep.subr.bf16.mxu0 0
        %5501 = vmatpush1.bf16.msra.mxu0 0
        %5502 = vmatprep.mubr.bf16.mxu0 0
        %5503 = vmatmul.mubr.bf16.gmra.mrb[0].mxu0 %v5299
        %v5504 = vpop.f32.mrb[0].mxu0
        %v5505 = vadd.f32 %v5417, %v5504
        %v5506 = vpop.f32.mrb[0].mxu0
        %v5507 = vpop.f32.mrb[0].mxu0
        %v5508 = vpop.f32.mrb[0].mxu0
        %5509 = vdwg.mxu0
        %v5510 = vld [vmem:[#allocation8 + $0x2] sm:$0xff]
        %v5511 = vpack.c.bf16 %v5510, %v5510
        %v5512 = vld [vmem:[%s23] sm:$0xf]
        %v5513 = vld [vmem:[%s23 + $0x4] sm:$0xf]
        %v5514 = vld [vmem:[%s23 + $0x8] sm:$0xf]
        %v5515 = vld [vmem:[%s23 + $0xc] sm:$0xf]
        %v5516 = vld [vmem:[%s23 + $0x10] sm:$0xf]
        %v5517 = vld [vmem:[%s23 + $0x14] sm:$0xf]
        %v5518 = vld [vmem:[%s23 + $0x18] sm:$0xf]
        %v5519 = vld [vmem:[%s23 + $0x1c] sm:$0xf]
        %v5520 = vld [vmem:[%s23 + $0x20] sm:$0xf]
        %v5521 = vld [vmem:[%s23 + $0x24] sm:$0xf]
        %v5522 = vld [vmem:[%s23 + $0x28] sm:$0xf]
        %v5523 = vld [vmem:[%s23 + $0x2c] sm:$0xf]
        %v5524 = vld [vmem:[%s23 + $0x30] sm:$0xf]
        %v5525 = vld [vmem:[%s23 + $0x34] sm:$0xf]
        %v5526 = vld [vmem:[%s23 + $0x38] sm:$0xf]
        %v5527 = vld [vmem:[%s23 + $0x3c] sm:$0xf]
        %v5544 = vunpack.c.l.b16 %v5512
        %v5545 = vunpack.c.l.b16 %v5513
        %v5546 = vunpack.c.l.b16 %v5514
        %v5547 = vunpack.c.l.b16 %v5515
        %v5548 = vunpack.c.l.b16 %v5516
        %v5549 = vunpack.c.l.b16 %v5517
        %v5550 = vunpack.c.l.b16 %v5518
        %v5551 = vunpack.c.l.b16 %v5519
        %v5552 = vunpack.c.l.b16 %v5520
        %v5553 = vunpack.c.l.b16 %v5521
        %v5554 = vunpack.c.l.b16 %v5522
        %v5555 = vunpack.c.l.b16 %v5523
        %v5556 = vunpack.c.l.b16 %v5524
        %v5557 = vunpack.c.l.b16 %v5525
        %v5558 = vunpack.c.l.b16 %v5526
        %v5559 = vunpack.c.l.b16 %v5527
        %v5560 = vpack.c.b16 %v5545, %v5544
        %v5561 = vpack.c.b16 %v5547, %v5546
        %v5562 = vpack.c.b16 %v5549, %v5548
        %v5563 = vpack.c.b16 %v5551, %v5550
        %v5564 = vpack.c.b16 %v5553, %v5552
        %v5565 = vpack.c.b16 %v5555, %v5554
        %v5566 = vpack.c.b16 %v5557, %v5556
        %v5567 = vpack.c.b16 %v5559, %v5558
        %5576 = vmatprep.subr.bf16.mxu0 0
        %5577 = vmatpush1.bf16.msra.mxu0 %v5560
        %5578 = vmatprep.subr.bf16.mxu0 0
        %5579 = vmatpush1.bf16.msra.mxu0 %v5561
        %5580 = vmatprep.subr.bf16.mxu0 0
        %5581 = vmatpush1.bf16.msra.mxu0 %v5562
        %5582 = vmatprep.subr.bf16.mxu0 0
        %5583 = vmatpush1.bf16.msra.mxu0 %v5563
        %5584 = vmatprep.subr.bf16.mxu0 0
        %5585 = vmatpush1.bf16.msra.mxu0 %v5564
        %5586 = vmatprep.subr.bf16.mxu0 0
        %5587 = vmatpush1.bf16.msra.mxu0 %v5565
        %5588 = vmatprep.subr.bf16.mxu0 0
        %5589 = vmatpush1.bf16.msra.mxu0 %v5566
        %5590 = vmatprep.subr.bf16.mxu0 0
        %5591 = vmatpush1.bf16.msra.mxu0 %v5567
        %5592 = vmatprep.subr.bf16.mxu0 0
        %5593 = vmatpush1.bf16.msra.mxu0 0
        %5594 = vmatprep.subr.bf16.mxu0 0
        %5595 = vmatpush1.bf16.msra.mxu0 0
        %5596 = vmatprep.subr.bf16.mxu0 0
        %5597 = vmatpush1.bf16.msra.mxu0 0
        %5598 = vmatprep.subr.bf16.mxu0 0
        %5599 = vmatpush1.bf16.msra.mxu0 0
        %5600 = vmatprep.subr.bf16.mxu0 0
        %5601 = vmatpush1.bf16.msra.mxu0 0
        %5602 = vmatprep.subr.bf16.mxu0 0
        %5603 = vmatpush1.bf16.msra.mxu0 0
        %5604 = vmatprep.subr.bf16.mxu0 0
        %5605 = vmatpush1.bf16.msra.mxu0 0
        %5606 = vmatprep.subr.bf16.mxu0 0
        %5607 = vmatpush1.bf16.msra.mxu0 0
        %5608 = vmatprep.mubr.bf16.mxu0 0
        %5609 = vmatmul.mubr.bf16.gmra.mrb[0].mxu0 %v5511
        %v5610 = vpop.f32.mrb[0].mxu0
        %v5611 = vadd.f32 0.0, %v5610
        %v5612 = vpop.f32.mrb[0].mxu0
        %v5613 = vpop.f32.mrb[0].mxu0
        %v5614 = vpop.f32.mrb[0].mxu0
        %5615 = vdwg.mxu0
        %v5616 = vadd.f32 %v5505, %v5611
        %v5617 = vld [vmem:[%s24] sm:$0x1]
        %v5619 = vlaneseq
        %v5620 = vshrl.u32 %v5619, 7
        %v5621 = vsub.s32 0, %v5620
        %v5622 = vrot.slane %v5617, %v5621
        %v5624 = vadd.f32 %v5616, %v5622
        %v5625 = vxor.u32 %v5624, 2147483648
        %v5626 = vmul.f32 %v5625, 1.442695
        %v5627 = vpow.pop %v5626
        %v5628 = vadd.f32 %v5627, 1.0
        %v5629 = vrcp.pop %v5628
        %v5630 = vmul.f32 1.0, %v5629
        %vm5631 = vcmask 261120
        %5632 = vst.msk [vmem:[%s908] sm:$0xff] %vm5631, %v5630
        %p5633 = scmp.lt.s32.totalorder %s42, 1
        %s5634 = scalar_select %p5633, %s42, 1
        %s5635 = smul.addr %s5634, 8
        %s5636 = scalar_lea.vmem %s25, %s5635
        // Predicated region
        $region161: #{forward.1} parent=119 // pred_check
          %p5637 = pneg %p590
        $region162: #{forward.1} parent=119 // pred_check_branch
          %5639 = sbr.rel (%p5637) target = $region164
        $region163: #{forward.1} parent=119 // pred_region
          _
        $region164: #{forward.1} parent=119 // pred_fallthru
          _
      $region120: #{forward.1} parent=5 // pred_fallthru
        _
      %p5640 = scmp.le.s32.totalorder 2, %s37
      // Predicated region
      $region165: #{forward.1} parent=5 // pred_check
        %p5641 = pneg %p5640
      $region166: #{forward.1} parent=5 // pred_check_branch
        %5643 = sbr.rel (%p5641) target = $region168
      $region167: #{forward.1} parent=5 // pred_region
        %s5644 = ssub.s32 %s37, 2
        // Predicated region
        $region169: #{forward.1} parent=167 // pred_check
          %p5645 = pneg %p596
        $region170: #{forward.1} parent=167 // pred_check_branch
          %5647 = sbr.rel (%p5645) target = $region172
        $region171: #{forward.1} parent=167 // pred_region
          %p5648 = scmp.lt.s32.totalorder %s43, 1
          %s5649 = scalar_select %p5648, %s43, 1
          %s5650 = smul.addr %s5649, 8
          %s5651 = scalar_lea.vmem %s25, %s5650
        $region172: #{forward.1} parent=167 // pred_fallthru
          _
      $region168: #{forward.1} parent=5 // pred_fallthru
        _
    $region6: #{forward.1} parent=1 // loop_footer
      %s41 = sadd.s32 1, %s37
    $region7: #{forward.1} parent=1 // loop_footer_branch
      %36 = sbr.rel target = $region3
    $region8: #{forward.1} parent=1 // loop_exit
      _
    %5652 = vsyncpa [#allocation10], 1
    %s5653 = scalar_lea.sflag [#allocation10], 1
    %5654 = vsyncpa %s5653, 1
    %5655 = vsyncpa [#allocation12], 1
    %5656 = vsyncpa [#allocation15], 1
    %5657 = vsyncpa [#allocation18], 1
    %5658 = vsyncpa [#allocation21], 1
    %5659 = vsyncpa [#allocation24], 1

</llo_original>
